<compile_context>
chip_gen: v7x
topology: tpu7x:2x2x1
jax: 0.10.0
libtpu: 0.0.40
codegen_flags: <defaults>
</compile_context>

<pallas_src>
import jax
import jax.numpy as jnp
from jax import lax
from jax.experimental import pallas as pl
from jax.experimental.pallas import tpu as pltpu


# ---------------------------------------------------------------------------
# Helpers
# ---------------------------------------------------------------------------
def _vmem_capacity_bytes():
    """Physical VMEM of the current generation (v5e/v6e: 128 MiB, v7x: 64 MiB)."""
    try:
        return int(pltpu.get_tpu_info().vmem_capacity_bytes)
    except Exception:
        return 64 * 1024 * 1024   # conservative default (v7x per-TensorCore)


def _accumulate_slabs(z, sum_acc, sq_acc):
    """Accumulate per-channel sum / sum-of-squares of z (d_out, tl) into (d_out, 128)
    scratches using VPU adds on 128-lane slabs; the single cross-lane (XLU) reduce is
    deferred to the flush step."""
    tl = z.shape[1]
    for k in range(tl // 128):
        slab = z[:, k * 128:(k + 1) * 128]
        sum_acc[...] += slab
        sq_acc[...] += slab * slab


# ---------------------------------------------------------------------------
# Fused single-pass kernel: conv tile -> resident y -> stats -> in-place BN+ReLU
# ---------------------------------------------------------------------------
def _make_fused_kernel(N, tl, n_l_tiles, inv_M, eps, mm_dtype):
    def kernel(x_ref, w_ref, gamma_ref, beta_ref, o_ref, sum_acc, sq_acc):
        j = pl.program_id(0)

        @pl.when(j == 0)
        def _():
            sum_acc[...] = jnp.zeros_like(sum_acc)
            sq_acc[...] = jnp.zeros_like(sq_acc)

        start = pl.multiple_of(j * tl, 128)
        w = w_ref[...].astype(mm_dtype)
        for bb in range(N):                                   # N is small & static
            z = jnp.dot(w, x_ref[bb].astype(mm_dtype),
                        preferred_element_type=jnp.float32)   # (d_out, tl)
            _accumulate_slabs(z, sum_acc, sq_acc)
            o_ref[bb, :, pl.ds(start, tl)] = z                # resident y, no HBM trip

        @pl.when(j == n_l_tiles - 1)
        def _():
            s1 = jnp.sum(sum_acc[...], axis=1, keepdims=True)   # (d_out, 1)
            s2 = jnp.sum(sq_acc[...], axis=1, keepdims=True)    # (d_out, 1)
            mean = s1 * inv_M
            var = jnp.maximum(s2 * inv_M - mean * mean, 0.0)
            inv_std = lax.rsqrt(var + eps)
            scale = gamma_ref[...] * inv_std                     # (d_out, 1)
            shift = beta_ref[...] - mean * scale                 # (d_out, 1)
            for bb in range(N):
                o_ref[bb] = jnp.maximum(o_ref[bb] * scale + shift, 0.0)
    return kernel


# ---------------------------------------------------------------------------
# Two-pass fallback: pass 1 = per-batch partial Wx statistics
# ---------------------------------------------------------------------------
def _make_stats_kernel(mm_dtype):
    def kernel(x_ref, w_ref, s1_ref, s2_ref, sum_acc, sq_acc):
        j = pl.program_id(1)

        @pl.when(j == 0)
        def _():
            sum_acc[...] = jnp.zeros_like(sum_acc)
            sq_acc[...] = jnp.zeros_like(sq_acc)

        z = jnp.dot(w_ref[...].astype(mm_dtype), x_ref[0].astype(mm_dtype),
                    preferred_element_type=jnp.float32)        # (d_out, tl)
        _accumulate_slabs(z, sum_acc, sq_acc)

        @pl.when(j == pl.num_programs(1) - 1)
        def _():
            s1_ref[0] = jnp.sum(sum_acc[...], axis=1, keepdims=True)
            s2_ref[0] = jnp.sum(sq_acc[...], axis=1, keepdims=True)
    return kernel


# ---------------------------------------------------------------------------
# Two-pass fallback: pass 2 = 1x1 conv with BN folded into (w_eff, b_eff) + ReLU
# ---------------------------------------------------------------------------
def _make_conv_affine_relu_kernel(mm_dtype):
    def kernel(x_ref, w_ref, b_ref, o_ref):
        z = jnp.dot(w_ref[...].astype(mm_dtype), x_ref[0].astype(mm_dtype),
                    preferred_element_type=jnp.float32)
        o_ref[0] = jnp.maximum(z + b_ref[...], 0.0).astype(o_ref.dtype)
    return kernel


# ---------------------------------------------------------------------------
# Wrapper
# ---------------------------------------------------------------------------
def mlp_block_forward(x_ncl, w, b, gamma, beta, eps=1e-5,
                      force_two_pass=False, matmul_dtype=jnp.float32):
    """Forward of MLP_block: ReLU(BatchNorm1d(Conv1d_k1(x))), training-mode BN.

    x_ncl: (N, d_in, L) f32;  w: (d_out, d_in);  b: (d_out,);  gamma/beta: (d_out,)
    Returns (N, d_out, L) f32.

    Note: under training-mode BatchNorm the conv bias `b` cancels exactly from the
    forward value, so the kernels compute statistics on W @ x only (better numerics,
    less VPU work); `b` is accepted for interface parity but unused.
    """
    del b  # cancels exactly: (Wx + b - mean(Wx + b)) == (Wx - mean(Wx))

    x_ncl = jnp.asarray(x_ncl, jnp.float32)
    w = jnp.asarray(w, jnp.float32)
    gamma = jnp.asarray(gamma, jnp.float32)
    beta = jnp.asarray(beta, jnp.float32)

    N, d_in, L = x_ncl.shape
    d_out = w.shape[0]

    # --- zero-pad L up to a multiple of 128 (stats stay exact: W@0 == 0) ---
    L_pad = ((L + 127) // 128) * 128
    if L_pad != L:
        x_ncl = jnp.pad(x_ncl, ((0, 0), (0, 0), (0, L_pad - L)))

    M = float(N * L)            # true element count (padding excluded)
    inv_M = 1.0 / M
    eps = float(eps)

    # --- generation-aware VMEM budgeting ---
    vmem_cap = _vmem_capacity_bytes()
    scoped_cap = max(16 << 20, min(vmem_cap - (16 << 20), 100 << 20))
    vmem_budget = int(scoped_cap * 0.8)

    def _pick_lane_tile(per_lane_bytes):
        # Largest lane-dense tile dividing L_pad that fits the budget and keeps the
        # (d_out, tl) matmul result small enough to stay vreg/VMEM-spill friendly.
        for c in (2048, 1024, 512, 256, 128):
            if (L_pad % c == 0
                    and c * per_lane_bytes <= vmem_budget // 4
                    and d_out * c * 4 <= (512 << 10)):
                return c
        return 128

    gamma_col = gamma.reshape(d_out, 1)
    beta_col = beta.reshape(d_out, 1)

    # =========================== fused single-pass ==========================
    fused_tl = _pick_lane_tile(2 * N * d_in * 4)          # double-buffered x tile
    fused_need = (2 * N * d_out * L_pad * 4               # resident out (x2, safety)
                  + 2 * N * d_in * fused_tl * 4           # double-buffered x tile
                  + d_out * d_in * 4 + 2 * d_out * 4      # weights + affine
                  + 2 * d_out * 128 * 4                   # stats scratch
                  + (2 << 20))                            # slack
    use_fused = (not force_two_pass) and (fused_need <= vmem_budget)

    if use_fused:
        n_l_tiles = L_pad // fused_tl
        kernel = _make_fused_kernel(N, fused_tl, n_l_tiles, inv_M, eps, matmul_dtype)
        out = pl.pallas_call(
            kernel,
            out_shape=jax.ShapeDtypeStruct((N, d_out, L_pad), jnp.float32),
            grid_spec=pltpu.PrefetchScalarGridSpec(
                num_scalar_prefetch=0,
                grid=(n_l_tiles,),
                in_specs=[
                    pl.BlockSpec((N, d_in, fused_tl), lambda j: (0, 0, j)),
                    pl.BlockSpec((d_out, d_in), lambda j: (0, 0)),
                    pl.BlockSpec((d_out, 1), lambda j: (0, 0)),
                    pl.BlockSpec((d_out, 1), lambda j: (0, 0)),
                ],
                out_specs=pl.BlockSpec((N, d_out, L_pad), lambda j: (0, 0, 0)),
                scratch_shapes=[pltpu.VMEM((d_out, 128), jnp.float32),
                                pltpu.VMEM((d_out, 128), jnp.float32)],
            ),
            compiler_params=pltpu.CompilerParams(
                dimension_semantics=("arbitrary",),
                vmem_limit_bytes=int(min(scoped_cap,
                                         max(32 << 20, fused_need + (8 << 20)))),
            ),
        )(x_ncl, w, gamma_col, beta_col)
        return out[:, :, :L] if L_pad != L else out

    # ======================= two-pass recompute fallback ====================
    two_pass_limit = int(min(scoped_cap, 64 << 20))

    # ---- Pass 1: per-batch partial Wx statistics (batch axis megacore-parallel) ----
    tl1 = _pick_lane_tile(2 * d_in * 4)
    n1 = L_pad // tl1
    s1, s2 = pl.pallas_call(
        _make_stats_kernel(matmul_dtype),
        out_shape=(jax.ShapeDtypeStruct((N, d_out, 1), jnp.float32),
                   jax.ShapeDtypeStruct((N, d_out, 1), jnp.float32)),
        grid_spec=pltpu.PrefetchScalarGridSpec(
            num_scalar_prefetch=0,
            grid=(N, n1),
            in_specs=[
                pl.BlockSpec((1, d_in, tl1), lambda bb, j: (bb, 0, j)),
                pl.BlockSpec((d_out, d_in), lambda bb, j: (0, 0)),
            ],
            out_specs=[
                pl.BlockSpec((1, d_out, 1), lambda bb, j: (bb, 0, 0)),
                pl.BlockSpec((1, d_out, 1), lambda bb, j: (bb, 0, 0)),
            ],
            scratch_shapes=[pltpu.VMEM((d_out, 128), jnp.float32),
                            pltpu.VMEM((d_out, 128), jnp.float32)],
        ),
        compiler_params=pltpu.CompilerParams(
            dimension_semantics=("parallel", "arbitrary"),
            vmem_limit_bytes=two_pass_limit),
    )(x_ncl, w)

    # ---- tiny per-channel math: fold BN into w_eff / b_eff ----
    total = jnp.sum(s1, axis=0)[:, 0]          # (d_out,)
    total_sq = jnp.sum(s2, axis=0)[:, 0]       # (d_out,)
    mean = total * inv_M
    var = jnp.maximum(total_sq * inv_M - mean * mean, 0.0)
    inv_std = lax.rsqrt(var + eps)
    scale = gamma * inv_std
    w_eff = w * scale[:, None]
    b_eff = (beta - mean * scale).reshape(d_out, 1)

    # ---- Pass 2: folded conv + ReLU, lane-dense output tiles ----
    tl2 = _pick_lane_tile(2 * (d_in + d_out) * 4)
    n2 = L_pad // tl2
    out = pl.pallas_call(
        _make_conv_affine_relu_kernel(matmul_dtype),
        out_shape=jax.ShapeDtypeStruct((N, d_out, L_pad), jnp.float32),
        grid_spec=pltpu.PrefetchScalarGridSpec(
            num_scalar_prefetch=0,
            grid=(N, n2),
            in_specs=[
                pl.BlockSpec((1, d_in, tl2), lambda bb, j: (bb, 0, j)),
                pl.BlockSpec((d_out, d_in), lambda bb, j: (0, 0)),
                pl.BlockSpec((d_out, 1), lambda bb, j: (0, 0)),
            ],
            out_specs=pl.BlockSpec((1, d_out, tl2), lambda bb, j: (bb, 0, j)),
        ),
        compiler_params=pltpu.CompilerParams(
            dimension_semantics=("parallel", "parallel"),
            vmem_limit_bytes=two_pass_limit),
    )(x_ncl, w_eff, b_eff)
    return out[:, :, :L] if L_pad != L else out


# ---------------------------------------------------------------------------
# Pure-JAX reference: Conv1d(k=1) + BatchNorm1d(training, biased var) + ReLU
# ---------------------------------------------------------------------------
def reference_forward(x_ncl, w, b, gamma, beta, eps=1e-5):
    y = jnp.einsum('ncl,oc->nol', x_ncl, w) + b[None, :, None]
    mean = jnp.mean(y, axis=(0, 2), keepdims=True)
    var = jnp.mean((y - mean) ** 2, axis=(0, 2), keepdims=True)
    yhat = (y - mean) / jnp.sqrt(var + eps)
    return jnp.maximum(yhat * gamma[None, :, None] + beta[None, :, None], 0.0)


if __name__ == "__main__":
    # Shapes matching the first MLP_block(32, 128) inside Network.
    N, d_in, d_out, L = 2, 32, 128, 1024

    key = jax.random.PRNGKey(0)
    kx, kw, kb, kg, kbeta = jax.random.split(key, 5)

    x = jax.random.normal(kx, (N, d_in, L), dtype=jnp.float32)
    # Conv1d weight is (d_out, d_in, 1) in PyTorch; kernel dim squeezed here.
    w = jax.random.normal(kw, (d_out, d_in), dtype=jnp.float32) * 0.5
    b = jax.random.normal(kb, (d_out,), dtype=jnp.float32) * 0.1
    gamma = 1.0 + 0.1 * jax.random.normal(kg, (d_out,), dtype=jnp.float32)
    beta = 0.1 * jax.random.normal(kbeta, (d_out,), dtype=jnp.float32)

    ref = reference_forward(x, w, b, gamma, beta)

    # Fused single-pass path (resident y in VMEM).
    out_fused = jax.block_until_ready(mlp_block_forward(x, w, b, gamma, beta))
    assert out_fused.shape == (N, d_out, L)
    assert jnp.allclose(out_fused, ref, atol=1e-3, rtol=1e-3)

    # Two-pass recompute fallback (used for shapes too large to keep y resident).
    out_2p = jax.block_until_ready(
        mlp_block_forward(x, w, b, gamma, beta, force_two_pass=True))
    assert jnp.allclose(out_2p, ref, atol=1e-3, rtol=1e-3)

    # Non-128-aligned L exercises the zero-pad + slice-off tail path.
    L2 = 1000
    x2 = x[:, :, :L2]
    ref2 = reference_forward(x2, w, b, gamma, beta)
    out2 = jax.block_until_ready(mlp_block_forward(x2, w, b, gamma, beta))
    assert out2.shape == (N, d_out, L2)
    assert jnp.allclose(out2, ref2, atol=1e-3, rtol=1e-3)

    print("KERNEL_OK")
</pallas_src>

<mosaic_0001>
module attributes {stable_mosaic.version = 11 : i64} {
  func.func @kernel(%arg0: i32, %arg1: memref<2x32x1024xf32, #tpu.memory_space<vmem>>, %arg2: memref<128x32xf32, #tpu.memory_space<vmem>>, %arg3: memref<128x1xf32, #tpu.memory_space<vmem>>, %arg4: memref<128x1xf32, #tpu.memory_space<vmem>>, %arg5: memref<2x128x1024xf32, #tpu.memory_space<vmem>>, %arg6: memref<128x128xf32, #tpu.memory_space<vmem>>, %arg7: memref<128x128xf32, #tpu.memory_space<vmem>>) attributes {dimension_semantics = [#tpu.dimension_semantics<arbitrary>], iteration_bounds = array<i64: 1>, scalar_prefetch = 0 : i64, scratch_operands = 2 : i64, tpu.core_type = #tpu.core_type<tc>, window_params = [{transform_indices = @transform_0, window_bounds = array<i64: 2, 32, 1024>}, {pipeline_mode = #tpu.pipeline_mode<synchronous>, transform_indices = @transform_1, window_bounds = array<i64: 128, 32>}, {pipeline_mode = #tpu.pipeline_mode<synchronous>, transform_indices = @transform_2, window_bounds = array<i64: 128, 1>}, {pipeline_mode = #tpu.pipeline_mode<synchronous>, transform_indices = @transform_3, window_bounds = array<i64: 128, 1>}, {pipeline_mode = #tpu.pipeline_mode<synchronous>, transform_indices = @transform_4, window_bounds = array<i64: 2, 128, 1024>}]} {
    %c0_i32 = arith.constant 0 : i32
    %0 = arith.cmpi eq, %arg0, %c0_i32 : i32
    %1 = arith.extui %0 : i1 to i32
    %c0_i32_0 = arith.constant 0 : i32
    %2 = arith.cmpi ne, %1, %c0_i32_0 : i32
    scf.if %2 {
      %cst_142 = arith.constant 0.000000e+00 : f32
      %151 = vector.broadcast %cst_142 : f32 to vector<128x128xf32>
      %c0_143 = arith.constant 0 : index
      %c0_144 = arith.constant 0 : index
      %152 = vector.load %arg6[%c0_143, %c0_144] : memref<128x128xf32, #tpu.memory_space<vmem>>, vector<128x128xf32>
      tpu.vector_store %arg6[%c0_143, %c0_144], %151 {strides = array<i32>} : memref<128x128xf32, #tpu.memory_space<vmem>>, vector<128x128xf32>,
      %cst_145 = arith.constant 0.000000e+00 : f32
      %153 = vector.broadcast %cst_145 : f32 to vector<128x128xf32>
      %c0_146 = arith.constant 0 : index
      %c0_147 = arith.constant 0 : index
      %154 = vector.load %arg7[%c0_146, %c0_147] : memref<128x128xf32, #tpu.memory_space<vmem>>, vector<128x128xf32>
      tpu.vector_store %arg7[%c0_146, %c0_147], %153 {strides = array<i32>} : memref<128x128xf32, #tpu.memory_space<vmem>>, vector<128x128xf32>,
    } else {
    }
    %c1024_i32 = arith.constant 1024 : i32
    %3 = arith.muli %arg0, %c1024_i32 : i32
    %4 = tpu.assume_multiple %3, 128 : i32
    %c0 = arith.constant 0 : index
    %c0_1 = arith.constant 0 : index
    %5 = vector.load %arg2[%c0, %c0_1] : memref<128x32xf32, #tpu.memory_space<vmem>>, vector<128x32xf32>
    %c0_2 = arith.constant 0 : index
    %c0_3 = arith.constant 0 : index
    %c0_4 = arith.constant 0 : index
    %6 = vector.load %arg1[%c0_2, %c0_3, %c0_4] : memref<2x32x1024xf32, #tpu.memory_space<vmem>>, vector<1x32x1024xf32>
    %7 = vector.shape_cast %6 : vector<1x32x1024xf32> to vector<32x1024xf32>
    %cst = arith.constant dense<0.000000e+00> : vector<128x1024xf32>
    %8 = tpu.matmul %5, %7, %cst {dimension_numbers = #tpu.dot_dimension_numbers<[1], [0], [0], [1], [0, 0, 1, 1], [], []>} : vector<128x32xf32>, vector<32x1024xf32>, vector<128x1024xf32> -> vector<128x1024xf32>
    %9 = vector.extract_strided_slice %8 {offsets = [0, 0], sizes = [128, 128], strides = [1, 1]} : vector<128x1024xf32> to vector<128x128xf32>
    %c0_5 = arith.constant 0 : index
    %c0_6 = arith.constant 0 : index
    %10 = vector.load %arg6[%c0_5, %c0_6] : memref<128x128xf32, #tpu.memory_space<vmem>>, vector<128x128xf32>
    %11 = arith.addf %10, %9 : vector<128x128xf32>
    %c0_7 = arith.constant 0 : index
    %c0_8 = arith.constant 0 : index
    %12 = vector.load %arg6[%c0_7, %c0_8] : memref<128x128xf32, #tpu.memory_space<vmem>>, vector<128x128xf32>
    tpu.vector_store %arg6[%c0_7, %c0_8], %11 {strides = array<i32>} : memref<128x128xf32, #tpu.memory_space<vmem>>, vector<128x128xf32>,
    %c0_9 = arith.constant 0 : index
    %c0_10 = arith.constant 0 : index
    %13 = vector.load %arg7[%c0_9, %c0_10] : memref<128x128xf32, #tpu.memory_space<vmem>>, vector<128x128xf32>
    %14 = arith.mulf %9, %9 : vector<128x128xf32>
    %15 = arith.addf %13, %14 : vector<128x128xf32>
    %c0_11 = arith.constant 0 : index
    %c0_12 = arith.constant 0 : index
    %16 = vector.load %arg7[%c0_11, %c0_12] : memref<128x128xf32, #tpu.memory_space<vmem>>, vector<128x128xf32>
    tpu.vector_store %arg7[%c0_11, %c0_12], %15 {strides = array<i32>} : memref<128x128xf32, #tpu.memory_space<vmem>>, vector<128x128xf32>,
    %17 = vector.extract_strided_slice %8 {offsets = [0, 128], sizes = [128, 128], strides = [1, 1]} : vector<128x1024xf32> to vector<128x128xf32>
    %c0_13 = arith.constant 0 : index
    %c0_14 = arith.constant 0 : index
    %18 = vector.load %arg6[%c0_13, %c0_14] : memref<128x128xf32, #tpu.memory_space<vmem>>, vector<128x128xf32>
    %19 = arith.addf %18, %17 : vector<128x128xf32>
    %c0_15 = arith.constant 0 : index
    %c0_16 = arith.constant 0 : index
    %20 = vector.load %arg6[%c0_15, %c0_16] : memref<128x128xf32, #tpu.memory_space<vmem>>, vector<128x128xf32>
    tpu.vector_store %arg6[%c0_15, %c0_16], %19 {strides = array<i32>} : memref<128x128xf32, #tpu.memory_space<vmem>>, vector<128x128xf32>,
    %c0_17 = arith.constant 0 : index
    %c0_18 = arith.constant 0 : index
    %21 = vector.load %arg7[%c0_17, %c0_18] : memref<128x128xf32, #tpu.memory_space<vmem>>, vector<128x128xf32>
    %22 = arith.mulf %17, %17 : vector<128x128xf32>
    %23 = arith.addf %21, %22 : vector<128x128xf32>
    %c0_19 = arith.constant 0 : index
    %c0_20 = arith.constant 0 : index
    %24 = vector.load %arg7[%c0_19, %c0_20] : memref<128x128xf32, #tpu.memory_space<vmem>>, vector<128x128xf32>
    tpu.vector_store %arg7[%c0_19, %c0_20], %23 {strides = array<i32>} : memref<128x128xf32, #tpu.memory_space<vmem>>, vector<128x128xf32>,
    %25 = vector.extract_strided_slice %8 {offsets = [0, 256], sizes = [128, 128], strides = [1, 1]} : vector<128x1024xf32> to vector<128x128xf32>
    %c0_21 = arith.constant 0 : index
    %c0_22 = arith.constant 0 : index
    %26 = vector.load %arg6[%c0_21, %c0_22] : memref<128x128xf32, #tpu.memory_space<vmem>>, vector<128x128xf32>
    %27 = arith.addf %26, %25 : vector<128x128xf32>
    %c0_23 = arith.constant 0 : index
    %c0_24 = arith.constant 0 : index
    %28 = vector.load %arg6[%c0_23, %c0_24] : memref<128x128xf32, #tpu.memory_space<vmem>>, vector<128x128xf32>
    tpu.vector_store %arg6[%c0_23, %c0_24], %27 {strides = array<i32>} : memref<128x128xf32, #tpu.memory_space<vmem>>, vector<128x128xf32>,
    %c0_25 = arith.constant 0 : index
    %c0_26 = arith.constant 0 : index
    %29 = vector.load %arg7[%c0_25, %c0_26] : memref<128x128xf32, #tpu.memory_space<vmem>>, vector<128x128xf32>
    %30 = arith.mulf %25, %25 : vector<128x128xf32>
    %31 = arith.addf %29, %30 : vector<128x128xf32>
    %c0_27 = arith.constant 0 : index
    %c0_28 = arith.constant 0 : index
    %32 = vector.load %arg7[%c0_27, %c0_28] : memref<128x128xf32, #tpu.memory_space<vmem>>, vector<128x128xf32>
    tpu.vector_store %arg7[%c0_27, %c0_28], %31 {strides = array<i32>} : memref<128x128xf32, #tpu.memory_space<vmem>>, vector<128x128xf32>,
    %33 = vector.extract_strided_slice %8 {offsets = [0, 384], sizes = [128, 128], strides = [1, 1]} : vector<128x1024xf32> to vector<128x128xf32>
    %c0_29 = arith.constant 0 : index
    %c0_30 = arith.constant 0 : index
    %34 = vector.load %arg6[%c0_29, %c0_30] : memref<128x128xf32, #tpu.memory_space<vmem>>, vector<128x128xf32>
    %35 = arith.addf %34, %33 : vector<128x128xf32>
    %c0_31 = arith.constant 0 : index
    %c0_32 = arith.constant 0 : index
    %36 = vector.load %arg6[%c0_31, %c0_32] : memref<128x128xf32, #tpu.memory_space<vmem>>, vector<128x128xf32>
    tpu.vector_store %arg6[%c0_31, %c0_32], %35 {strides = array<i32>} : memref<128x128xf32, #tpu.memory_space<vmem>>, vector<128x128xf32>,
    %c0_33 = arith.constant 0 : index
    %c0_34 = arith.constant 0 : index
    %37 = vector.load %arg7[%c0_33, %c0_34] : memref<128x128xf32, #tpu.memory_space<vmem>>, vector<128x128xf32>
    %38 = arith.mulf %33, %33 : vector<128x128xf32>
    %39 = arith.addf %37, %38 : vector<128x128xf32>
    %c0_35 = arith.constant 0 : index
    %c0_36 = arith.constant 0 : index
    %40 = vector.load %arg7[%c0_35, %c0_36] : memref<128x128xf32, #tpu.memory_space<vmem>>, vector<128x128xf32>
    tpu.vector_store %arg7[%c0_35, %c0_36], %39 {strides = array<i32>} : memref<128x128xf32, #tpu.memory_space<vmem>>, vector<128x128xf32>,
    %41 = vector.extract_strided_slice %8 {offsets = [0, 512], sizes = [128, 128], strides = [1, 1]} : vector<128x1024xf32> to vector<128x128xf32>
    %c0_37 = arith.constant 0 : index
    %c0_38 = arith.constant 0 : index
    %42 = vector.load %arg6[%c0_37, %c0_38] : memref<128x128xf32, #tpu.memory_space<vmem>>, vector<128x128xf32>
    %43 = arith.addf %42, %41 : vector<128x128xf32>
    %c0_39 = arith.constant 0 : index
    %c0_40 = arith.constant 0 : index
    %44 = vector.load %arg6[%c0_39, %c0_40] : memref<128x128xf32, #tpu.memory_space<vmem>>, vector<128x128xf32>
    tpu.vector_store %arg6[%c0_39, %c0_40], %43 {strides = array<i32>} : memref<128x128xf32, #tpu.memory_space<vmem>>, vector<128x128xf32>,
    %c0_41 = arith.constant 0 : index
    %c0_42 = arith.constant 0 : index
    %45 = vector.load %arg7[%c0_41, %c0_42] : memref<128x128xf32, #tpu.memory_space<vmem>>, vector<128x128xf32>
    %46 = arith.mulf %41, %41 : vector<128x128xf32>
    %47 = arith.addf %45, %46 : vector<128x128xf32>
    %c0_43 = arith.constant 0 : index
    %c0_44 = arith.constant 0 : index
    %48 = vector.load %arg7[%c0_43, %c0_44] : memref<128x128xf32, #tpu.memory_space<vmem>>, vector<128x128xf32>
    tpu.vector_store %arg7[%c0_43, %c0_44], %47 {strides = array<i32>} : memref<128x128xf32, #tpu.memory_space<vmem>>, vector<128x128xf32>,
    %49 = vector.extract_strided_slice %8 {offsets = [0, 640], sizes = [128, 128], strides = [1, 1]} : vector<128x1024xf32> to vector<128x128xf32>
    %c0_45 = arith.constant 0 : index
    %c0_46 = arith.constant 0 : index
    %50 = vector.load %arg6[%c0_45, %c0_46] : memref<128x128xf32, #tpu.memory_space<vmem>>, vector<128x128xf32>
    %51 = arith.addf %50, %49 : vector<128x128xf32>
    %c0_47 = arith.constant 0 : index
    %c0_48 = arith.constant 0 : index
    %52 = vector.load %arg6[%c0_47, %c0_48] : memref<128x128xf32, #tpu.memory_space<vmem>>, vector<128x128xf32>
    tpu.vector_store %arg6[%c0_47, %c0_48], %51 {strides = array<i32>} : memref<128x128xf32, #tpu.memory_space<vmem>>, vector<128x128xf32>,
    %c0_49 = arith.constant 0 : index
    %c0_50 = arith.constant 0 : index
    %53 = vector.load %arg7[%c0_49, %c0_50] : memref<128x128xf32, #tpu.memory_space<vmem>>, vector<128x128xf32>
    %54 = arith.mulf %49, %49 : vector<128x128xf32>
    %55 = arith.addf %53, %54 : vector<128x128xf32>
    %c0_51 = arith.constant 0 : index
    %c0_52 = arith.constant 0 : index
    %56 = vector.load %arg7[%c0_51, %c0_52] : memref<128x128xf32, #tpu.memory_space<vmem>>, vector<128x128xf32>
    tpu.vector_store %arg7[%c0_51, %c0_52], %55 {strides = array<i32>} : memref<128x128xf32, #tpu.memory_space<vmem>>, vector<128x128xf32>,
    %57 = vector.extract_strided_slice %8 {offsets = [0, 768], sizes = [128, 128], strides = [1, 1]} : vector<128x1024xf32> to vector<128x128xf32>
    %c0_53 = arith.constant 0 : index
    %c0_54 = arith.constant 0 : index
    %58 = vector.load %arg6[%c0_53, %c0_54] : memref<128x128xf32, #tpu.memory_space<vmem>>, vector<128x128xf32>
    %59 = arith.addf %58, %57 : vector<128x128xf32>
    %c0_55 = arith.constant 0 : index
    %c0_56 = arith.constant 0 : index
    %60 = vector.load %arg6[%c0_55, %c0_56] : memref<128x128xf32, #tpu.memory_space<vmem>>, vector<128x128xf32>
    tpu.vector_store %arg6[%c0_55, %c0_56], %59 {strides = array<i32>} : memref<128x128xf32, #tpu.memory_space<vmem>>, vector<128x128xf32>,
    %c0_57 = arith.constant 0 : index
    %c0_58 = arith.constant 0 : index
    %61 = vector.load %arg7[%c0_57, %c0_58] : memref<128x128xf32, #tpu.memory_space<vmem>>, vector<128x128xf32>
    %62 = arith.mulf %57, %57 : vector<128x128xf32>
    %63 = arith.addf %61, %62 : vector<128x128xf32>
    %c0_59 = arith.constant 0 : index
    %c0_60 = arith.constant 0 : index
    %64 = vector.load %arg7[%c0_59, %c0_60] : memref<128x128xf32, #tpu.memory_space<vmem>>, vector<128x128xf32>
    tpu.vector_store %arg7[%c0_59, %c0_60], %63 {strides = array<i32>} : memref<128x128xf32, #tpu.memory_space<vmem>>, vector<128x128xf32>,
    %65 = vector.extract_strided_slice %8 {offsets = [0, 896], sizes = [128, 128], strides = [1, 1]} : vector<128x1024xf32> to vector<128x128xf32>
    %c0_61 = arith.constant 0 : index
    %c0_62 = arith.constant 0 : index
    %66 = vector.load %arg6[%c0_61, %c0_62] : memref<128x128xf32, #tpu.memory_space<vmem>>, vector<128x128xf32>
    %67 = arith.addf %66, %65 : vector<128x128xf32>
    %c0_63 = arith.constant 0 : index
    %c0_64 = arith.constant 0 : index
    %68 = vector.load %arg6[%c0_63, %c0_64] : memref<128x128xf32, #tpu.memory_space<vmem>>, vector<128x128xf32>
    tpu.vector_store %arg6[%c0_63, %c0_64], %67 {strides = array<i32>} : memref<128x128xf32, #tpu.memory_space<vmem>>, vector<128x128xf32>,
    %c0_65 = arith.constant 0 : index
    %c0_66 = arith.constant 0 : index
    %69 = vector.load %arg7[%c0_65, %c0_66] : memref<128x128xf32, #tpu.memory_space<vmem>>, vector<128x128xf32>
    %70 = arith.mulf %65, %65 : vector<128x128xf32>
    %71 = arith.addf %69, %70 : vector<128x128xf32>
    %c0_67 = arith.constant 0 : index
    %c0_68 = arith.constant 0 : index
    %72 = vector.load %arg7[%c0_67, %c0_68] : memref<128x128xf32, #tpu.memory_space<vmem>>, vector<128x128xf32>
    tpu.vector_store %arg7[%c0_67, %c0_68], %71 {strides = array<i32>} : memref<128x128xf32, #tpu.memory_space<vmem>>, vector<128x128xf32>,
    %c0_69 = arith.constant 0 : index
    %c0_70 = arith.constant 0 : index
    %73 = arith.index_cast %4 : i32 to index
    %74 = vector.load %arg5[%c0_69, %c0_70, %73] : memref<2x128x1024xf32, #tpu.memory_space<vmem>>, vector<1x128x1024xf32>
    %75 = vector.shape_cast %74 : vector<1x128x1024xf32> to vector<128x1024xf32>
    %76 = vector.shape_cast %8 : vector<128x1024xf32> to vector<1x128x1024xf32>
    tpu.vector_store %arg5[%c0_69, %c0_70, %73], %76 {strides = array<i32>} : memref<2x128x1024xf32, #tpu.memory_space<vmem>>, vector<1x128x1024xf32>,
    %c1 = arith.constant 1 : index
    %c0_71 = arith.constant 0 : index
    %c0_72 = arith.constant 0 : index
    %77 = vector.load %arg1[%c1, %c0_71, %c0_72] : memref<2x32x1024xf32, #tpu.memory_space<vmem>>, vector<1x32x1024xf32>
    %78 = vector.shape_cast %77 : vector<1x32x1024xf32> to vector<32x1024xf32>
    %cst_73 = arith.constant dense<0.000000e+00> : vector<128x1024xf32>
    %79 = tpu.matmul %5, %78, %cst_73 {dimension_numbers = #tpu.dot_dimension_numbers<[1], [0], [0], [1], [0, 0, 1, 1], [], []>} : vector<128x32xf32>, vector<32x1024xf32>, vector<128x1024xf32> -> vector<128x1024xf32>
    %80 = vector.extract_strided_slice %79 {offsets = [0, 0], sizes = [128, 128], strides = [1, 1]} : vector<128x1024xf32> to vector<128x128xf32>
    %c0_74 = arith.constant 0 : index
    %c0_75 = arith.constant 0 : index
    %81 = vector.load %arg6[%c0_74, %c0_75] : memref<128x128xf32, #tpu.memory_space<vmem>>, vector<128x128xf32>
    %82 = arith.addf %81, %80 : vector<128x128xf32>
    %c0_76 = arith.constant 0 : index
    %c0_77 = arith.constant 0 : index
    %83 = vector.load %arg6[%c0_76, %c0_77] : memref<128x128xf32, #tpu.memory_space<vmem>>, vector<128x128xf32>
    tpu.vector_store %arg6[%c0_76, %c0_77], %82 {strides = array<i32>} : memref<128x128xf32, #tpu.memory_space<vmem>>, vector<128x128xf32>,
    %c0_78 = arith.constant 0 : index
    %c0_79 = arith.constant 0 : index
    %84 = vector.load %arg7[%c0_78, %c0_79] : memref<128x128xf32, #tpu.memory_space<vmem>>, vector<128x128xf32>
    %85 = arith.mulf %80, %80 : vector<128x128xf32>
    %86 = arith.addf %84, %85 : vector<128x128xf32>
    %c0_80 = arith.constant 0 : index
    %c0_81 = arith.constant 0 : index
    %87 = vector.load %arg7[%c0_80, %c0_81] : memref<128x128xf32, #tpu.memory_space<vmem>>, vector<128x128xf32>
    tpu.vector_store %arg7[%c0_80, %c0_81], %86 {strides = array<i32>} : memref<128x128xf32, #tpu.memory_space<vmem>>, vector<128x128xf32>,
    %88 = vector.extract_strided_slice %79 {offsets = [0, 128], sizes = [128, 128], strides = [1, 1]} : vector<128x1024xf32> to vector<128x128xf32>
    %c0_82 = arith.constant 0 : index
    %c0_83 = arith.constant 0 : index
    %89 = vector.load %arg6[%c0_82, %c0_83] : memref<128x128xf32, #tpu.memory_space<vmem>>, vector<128x128xf32>
    %90 = arith.addf %89, %88 : vector<128x128xf32>
    %c0_84 = arith.constant 0 : index
    %c0_85 = arith.constant 0 : index
    %91 = vector.load %arg6[%c0_84, %c0_85] : memref<128x128xf32, #tpu.memory_space<vmem>>, vector<128x128xf32>
    tpu.vector_store %arg6[%c0_84, %c0_85], %90 {strides = array<i32>} : memref<128x128xf32, #tpu.memory_space<vmem>>, vector<128x128xf32>,
    %c0_86 = arith.constant 0 : index
    %c0_87 = arith.constant 0 : index
    %92 = vector.load %arg7[%c0_86, %c0_87] : memref<128x128xf32, #tpu.memory_space<vmem>>, vector<128x128xf32>
    %93 = arith.mulf %88, %88 : vector<128x128xf32>
    %94 = arith.addf %92, %93 : vector<128x128xf32>
    %c0_88 = arith.constant 0 : index
    %c0_89 = arith.constant 0 : index
    %95 = vector.load %arg7[%c0_88, %c0_89] : memref<128x128xf32, #tpu.memory_space<vmem>>, vector<128x128xf32>
    tpu.vector_store %arg7[%c0_88, %c0_89], %94 {strides = array<i32>} : memref<128x128xf32, #tpu.memory_space<vmem>>, vector<128x128xf32>,
    %96 = vector.extract_strided_slice %79 {offsets = [0, 256], sizes = [128, 128], strides = [1, 1]} : vector<128x1024xf32> to vector<128x128xf32>
    %c0_90 = arith.constant 0 : index
    %c0_91 = arith.constant 0 : index
    %97 = vector.load %arg6[%c0_90, %c0_91] : memref<128x128xf32, #tpu.memory_space<vmem>>, vector<128x128xf32>
    %98 = arith.addf %97, %96 : vector<128x128xf32>
    %c0_92 = arith.constant 0 : index
    %c0_93 = arith.constant 0 : index
    %99 = vector.load %arg6[%c0_92, %c0_93] : memref<128x128xf32, #tpu.memory_space<vmem>>, vector<128x128xf32>
    tpu.vector_store %arg6[%c0_92, %c0_93], %98 {strides = array<i32>} : memref<128x128xf32, #tpu.memory_space<vmem>>, vector<128x128xf32>,
    %c0_94 = arith.constant 0 : index
    %c0_95 = arith.constant 0 : index
    %100 = vector.load %arg7[%c0_94, %c0_95] : memref<128x128xf32, #tpu.memory_space<vmem>>, vector<128x128xf32>
    %101 = arith.mulf %96, %96 : vector<128x128xf32>
    %102 = arith.addf %100, %101 : vector<128x128xf32>
    %c0_96 = arith.constant 0 : index
    %c0_97 = arith.constant 0 : index
    %103 = vector.load %arg7[%c0_96, %c0_97] : memref<128x128xf32, #tpu.memory_space<vmem>>, vector<128x128xf32>
    tpu.vector_store %arg7[%c0_96, %c0_97], %102 {strides = array<i32>} : memref<128x128xf32, #tpu.memory_space<vmem>>, vector<128x128xf32>,
    %104 = vector.extract_strided_slice %79 {offsets = [0, 384], sizes = [128, 128], strides = [1, 1]} : vector<128x1024xf32> to vector<128x128xf32>
    %c0_98 = arith.constant 0 : index
    %c0_99 = arith.constant 0 : index
    %105 = vector.load %arg6[%c0_98, %c0_99] : memref<128x128xf32, #tpu.memory_space<vmem>>, vector<128x128xf32>
    %106 = arith.addf %105, %104 : vector<128x128xf32>
    %c0_100 = arith.constant 0 : index
    %c0_101 = arith.constant 0 : index
    %107 = vector.load %arg6[%c0_100, %c0_101] : memref<128x128xf32, #tpu.memory_space<vmem>>, vector<128x128xf32>
    tpu.vector_store %arg6[%c0_100, %c0_101], %106 {strides = array<i32>} : memref<128x128xf32, #tpu.memory_space<vmem>>, vector<128x128xf32>,
    %c0_102 = arith.constant 0 : index
    %c0_103 = arith.constant 0 : index
    %108 = vector.load %arg7[%c0_102, %c0_103] : memref<128x128xf32, #tpu.memory_space<vmem>>, vector<128x128xf32>
    %109 = arith.mulf %104, %104 : vector<128x128xf32>
    %110 = arith.addf %108, %109 : vector<128x128xf32>
    %c0_104 = arith.constant 0 : index
    %c0_105 = arith.constant 0 : index
    %111 = vector.load %arg7[%c0_104, %c0_105] : memref<128x128xf32, #tpu.memory_space<vmem>>, vector<128x128xf32>
    tpu.vector_store %arg7[%c0_104, %c0_105], %110 {strides = array<i32>} : memref<128x128xf32, #tpu.memory_space<vmem>>, vector<128x128xf32>,
    %112 = vector.extract_strided_slice %79 {offsets = [0, 512], sizes = [128, 128], strides = [1, 1]} : vector<128x1024xf32> to vector<128x128xf32>
    %c0_106 = arith.constant 0 : index
    %c0_107 = arith.constant 0 : index
    %113 = vector.load %arg6[%c0_106, %c0_107] : memref<128x128xf32, #tpu.memory_space<vmem>>, vector<128x128xf32>
    %114 = arith.addf %113, %112 : vector<128x128xf32>
    %c0_108 = arith.constant 0 : index
    %c0_109 = arith.constant 0 : index
    %115 = vector.load %arg6[%c0_108, %c0_109] : memref<128x128xf32, #tpu.memory_space<vmem>>, vector<128x128xf32>
    tpu.vector_store %arg6[%c0_108, %c0_109], %114 {strides = array<i32>} : memref<128x128xf32, #tpu.memory_space<vmem>>, vector<128x128xf32>,
    %c0_110 = arith.constant 0 : index
    %c0_111 = arith.constant 0 : index
    %116 = vector.load %arg7[%c0_110, %c0_111] : memref<128x128xf32, #tpu.memory_space<vmem>>, vector<128x128xf32>
    %117 = arith.mulf %112, %112 : vector<128x128xf32>
    %118 = arith.addf %116, %117 : vector<128x128xf32>
    %c0_112 = arith.constant 0 : index
    %c0_113 = arith.constant 0 : index
    %119 = vector.load %arg7[%c0_112, %c0_113] : memref<128x128xf32, #tpu.memory_space<vmem>>, vector<128x128xf32>
    tpu.vector_store %arg7[%c0_112, %c0_113], %118 {strides = array<i32>} : memref<128x128xf32, #tpu.memory_space<vmem>>, vector<128x128xf32>,
    %120 = vector.extract_strided_slice %79 {offsets = [0, 640], sizes = [128, 128], strides = [1, 1]} : vector<128x1024xf32> to vector<128x128xf32>
    %c0_114 = arith.constant 0 : index
    %c0_115 = arith.constant 0 : index
    %121 = vector.load %arg6[%c0_114, %c0_115] : memref<128x128xf32, #tpu.memory_space<vmem>>, vector<128x128xf32>
    %122 = arith.addf %121, %120 : vector<128x128xf32>
    %c0_116 = arith.constant 0 : index
    %c0_117 = arith.constant 0 : index
    %123 = vector.load %arg6[%c0_116, %c0_117] : memref<128x128xf32, #tpu.memory_space<vmem>>, vector<128x128xf32>
    tpu.vector_store %arg6[%c0_116, %c0_117], %122 {strides = array<i32>} : memref<128x128xf32, #tpu.memory_space<vmem>>, vector<128x128xf32>,
    %c0_118 = arith.constant 0 : index
    %c0_119 = arith.constant 0 : index
    %124 = vector.load %arg7[%c0_118, %c0_119] : memref<128x128xf32, #tpu.memory_space<vmem>>, vector<128x128xf32>
    %125 = arith.mulf %120, %120 : vector<128x128xf32>
    %126 = arith.addf %124, %125 : vector<128x128xf32>
    %c0_120 = arith.constant 0 : index
    %c0_121 = arith.constant 0 : index
    %127 = vector.load %arg7[%c0_120, %c0_121] : memref<128x128xf32, #tpu.memory_space<vmem>>, vector<128x128xf32>
    tpu.vector_store %arg7[%c0_120, %c0_121], %126 {strides = array<i32>} : memref<128x128xf32, #tpu.memory_space<vmem>>, vector<128x128xf32>,
    %128 = vector.extract_strided_slice %79 {offsets = [0, 768], sizes = [128, 128], strides = [1, 1]} : vector<128x1024xf32> to vector<128x128xf32>
    %c0_122 = arith.constant 0 : index
    %c0_123 = arith.constant 0 : index
    %129 = vector.load %arg6[%c0_122, %c0_123] : memref<128x128xf32, #tpu.memory_space<vmem>>, vector<128x128xf32>
    %130 = arith.addf %129, %128 : vector<128x128xf32>
    %c0_124 = arith.constant 0 : index
    %c0_125 = arith.constant 0 : index
    %131 = vector.load %arg6[%c0_124, %c0_125] : memref<128x128xf32, #tpu.memory_space<vmem>>, vector<128x128xf32>
    tpu.vector_store %arg6[%c0_124, %c0_125], %130 {strides = array<i32>} : memref<128x128xf32, #tpu.memory_space<vmem>>, vector<128x128xf32>,
    %c0_126 = arith.constant 0 : index
    %c0_127 = arith.constant 0 : index
    %132 = vector.load %arg7[%c0_126, %c0_127] : memref<128x128xf32, #tpu.memory_space<vmem>>, vector<128x128xf32>
    %133 = arith.mulf %128, %128 : vector<128x128xf32>
    %134 = arith.addf %132, %133 : vector<128x128xf32>
    %c0_128 = arith.constant 0 : index
    %c0_129 = arith.constant 0 : index
    %135 = vector.load %arg7[%c0_128, %c0_129] : memref<128x128xf32, #tpu.memory_space<vmem>>, vector<128x128xf32>
    tpu.vector_store %arg7[%c0_128, %c0_129], %134 {strides = array<i32>} : memref<128x128xf32, #tpu.memory_space<vmem>>, vector<128x128xf32>,
    %136 = vector.extract_strided_slice %79 {offsets = [0, 896], sizes = [128, 128], strides = [1, 1]} : vector<128x1024xf32> to vector<128x128xf32>
    %c0_130 = arith.constant 0 : index
    %c0_131 = arith.constant 0 : index
    %137 = vector.load %arg6[%c0_130, %c0_131] : memref<128x128xf32, #tpu.memory_space<vmem>>, vector<128x128xf32>
    %138 = arith.addf %137, %136 : vector<128x128xf32>
    %c0_132 = arith.constant 0 : index
    %c0_133 = arith.constant 0 : index
    %139 = vector.load %arg6[%c0_132, %c0_133] : memref<128x128xf32, #tpu.memory_space<vmem>>, vector<128x128xf32>
    tpu.vector_store %arg6[%c0_132, %c0_133], %138 {strides = array<i32>} : memref<128x128xf32, #tpu.memory_space<vmem>>, vector<128x128xf32>,
    %c0_134 = arith.constant 0 : index
    %c0_135 = arith.constant 0 : index
    %140 = vector.load %arg7[%c0_134, %c0_135] : memref<128x128xf32, #tpu.memory_space<vmem>>, vector<128x128xf32>
    %141 = arith.mulf %136, %136 : vector<128x128xf32>
    %142 = arith.addf %140, %141 : vector<128x128xf32>
    %c0_136 = arith.constant 0 : index
    %c0_137 = arith.constant 0 : index
    %143 = vector.load %arg7[%c0_136, %c0_137] : memref<128x128xf32, #tpu.memory_space<vmem>>, vector<128x128xf32>
    tpu.vector_store %arg7[%c0_136, %c0_137], %142 {strides = array<i32>} : memref<128x128xf32, #tpu.memory_space<vmem>>, vector<128x128xf32>,
    %c1_138 = arith.constant 1 : index
    %c0_139 = arith.constant 0 : index
    %144 = arith.index_cast %4 : i32 to index
    %145 = vector.load %arg5[%c1_138, %c0_139, %144] : memref<2x128x1024xf32, #tpu.memory_space<vmem>>, vector<1x128x1024xf32>
    %146 = vector.shape_cast %145 : vector<1x128x1024xf32> to vector<128x1024xf32>
    %147 = vector.shape_cast %79 : vector<128x1024xf32> to vector<1x128x1024xf32>
    tpu.vector_store %arg5[%c1_138, %c0_139, %144], %147 {strides = array<i32>} : memref<2x128x1024xf32, #tpu.memory_space<vmem>>, vector<1x128x1024xf32>,
    %c0_i32_140 = arith.constant 0 : i32
    %148 = arith.cmpi eq, %arg0, %c0_i32_140 : i32
    %149 = arith.extui %148 : i1 to i32
    %c0_i32_141 = arith.constant 0 : i32
    %150 = arith.cmpi ne, %149, %c0_i32_141 : i32
    scf.if %150 {
      %c0_142 = arith.constant 0 : index
      %c0_143 = arith.constant 0 : index
      %151 = vector.load %arg6[%c0_142, %c0_143] : memref<128x128xf32, #tpu.memory_space<vmem>>, vector<128x128xf32>
      %cst_144 = arith.constant dense<0.000000e+00> : vector<128xf32>
      %152 = vector.multi_reduction <add>, %151, %cst_144 [1] : vector<128x128xf32> to vector<128xf32>
      %153 = vector.shape_cast %152 : vector<128xf32> to vector<128x1xf32>
      %c0_145 = arith.constant 0 : index
      %c0_146 = arith.constant 0 : index
      %154 = vector.load %arg7[%c0_145, %c0_146] : memref<128x128xf32, #tpu.memory_space<vmem>>, vector<128x128xf32>
      %cst_147 = arith.constant dense<0.000000e+00> : vector<128xf32>
      %155 = vector.multi_reduction <add>, %154, %cst_147 [1] : vector<128x128xf32> to vector<128xf32>
      %156 = vector.shape_cast %155 : vector<128xf32> to vector<128x1xf32>
      %cst_148 = arith.constant 4.8828125E-4 : f32
      %157 = vector.broadcast %cst_148 : f32 to vector<128x1xf32>
      %158 = arith.mulf %153, %157 : vector<128x1xf32>
      %cst_149 = arith.constant 4.8828125E-4 : f32
      %159 = vector.broadcast %cst_149 : f32 to vector<128x1xf32>
      %160 = arith.mulf %156, %159 : vector<128x1xf32>
      %161 = arith.mulf %158, %158 : vector<128x1xf32>
      %162 = arith.subf %160, %161 : vector<128x1xf32>
      %cst_150 = arith.constant 0.000000e+00 : f32
      %163 = vector.broadcast %cst_150 : f32 to vector<128x1xf32>
      %164 = arith.maximumf %162, %163 : vector<128x1xf32>
      %cst_151 = arith.constant 9.99999974E-6 : f32
      %165 = vector.broadcast %cst_151 : f32 to vector<128x1xf32>
      %166 = arith.addf %164, %165 : vector<128x1xf32>
      %167 = math.rsqrt %166 : vector<128x1xf32>
      %c0_152 = arith.constant 0 : index
      %c0_153 = arith.constant 0 : index
      %168 = vector.load %arg3[%c0_152, %c0_153] : memref<128x1xf32, #tpu.memory_space<vmem>>, vector<128x1xf32>
      %169 = arith.mulf %168, %167 : vector<128x1xf32>
      %c0_154 = arith.constant 0 : index
      %c0_155 = arith.constant 0 : index
      %170 = vector.load %arg4[%c0_154, %c0_155] : memref<128x1xf32, #tpu.memory_space<vmem>>, vector<128x1xf32>
      %171 = arith.mulf %158, %169 : vector<128x1xf32>
      %172 = arith.subf %170, %171 : vector<128x1xf32>
      %c0_156 = arith.constant 0 : index
      %c0_157 = arith.constant 0 : index
      %c0_158 = arith.constant 0 : index
      %173 = vector.load %arg5[%c0_156, %c0_157, %c0_158] : memref<2x128x1024xf32, #tpu.memory_space<vmem>>, vector<1x128x1024xf32>
      %174 = vector.shape_cast %173 : vector<1x128x1024xf32> to vector<128x1024xf32>
      %175 = vector.broadcast %169 : vector<128x1xf32> to vector<128x1024xf32>
      %176 = arith.mulf %174, %175 : vector<128x1024xf32>
      %177 = vector.broadcast %172 : vector<128x1xf32> to vector<128x1024xf32>
      %178 = arith.addf %176, %177 : vector<128x1024xf32>
      %cst_159 = arith.constant 0.000000e+00 : f32
      %179 = vector.broadcast %cst_159 : f32 to vector<128x1024xf32>
      %180 = arith.maximumf %178, %179 : vector<128x1024xf32>
      %c0_160 = arith.constant 0 : index
      %c0_161 = arith.constant 0 : index
      %c0_162 = arith.constant 0 : index
      %181 = vector.load %arg5[%c0_160, %c0_161, %c0_162] : memref<2x128x1024xf32, #tpu.memory_space<vmem>>, vector<1x128x1024xf32>
      %182 = vector.shape_cast %181 : vector<1x128x1024xf32> to vector<128x1024xf32>
      %183 = vector.shape_cast %180 : vector<128x1024xf32> to vector<1x128x1024xf32>
      tpu.vector_store %arg5[%c0_160, %c0_161, %c0_162], %183 {strides = array<i32>} : memref<2x128x1024xf32, #tpu.memory_space<vmem>>, vector<1x128x1024xf32>,
      %c1_163 = arith.constant 1 : index
      %c0_164 = arith.constant 0 : index
      %c0_165 = arith.constant 0 : index
      %184 = vector.load %arg5[%c1_163, %c0_164, %c0_165] : memref<2x128x1024xf32, #tpu.memory_space<vmem>>, vector<1x128x1024xf32>
      %185 = vector.shape_cast %184 : vector<1x128x1024xf32> to vector<128x1024xf32>
      %186 = vector.broadcast %169 : vector<128x1xf32> to vector<128x1024xf32>
      %187 = arith.mulf %185, %186 : vector<128x1024xf32>
      %188 = vector.broadcast %172 : vector<128x1xf32> to vector<128x1024xf32>
      %189 = arith.addf %187, %188 : vector<128x1024xf32>
      %cst_166 = arith.constant 0.000000e+00 : f32
      %190 = vector.broadcast %cst_166 : f32 to vector<128x1024xf32>
      %191 = arith.maximumf %189, %190 : vector<128x1024xf32>
      %c1_167 = arith.constant 1 : index
      %c0_168 = arith.constant 0 : index
      %c0_169 = arith.constant 0 : index
      %192 = vector.load %arg5[%c1_167, %c0_168, %c0_169] : memref<2x128x1024xf32, #tpu.memory_space<vmem>>, vector<1x128x1024xf32>
      %193 = vector.shape_cast %192 : vector<1x128x1024xf32> to vector<128x1024xf32>
      %194 = vector.shape_cast %191 : vector<128x1024xf32> to vector<1x128x1024xf32>
      tpu.vector_store %arg5[%c1_167, %c0_168, %c0_169], %194 {strides = array<i32>} : memref<2x128x1024xf32, #tpu.memory_space<vmem>>, vector<1x128x1024xf32>,
    } else {
    }
    return
  }
  func.func @transform_0(%arg0: i32) -> (i32, i32, i32) {
    %c0_i32 = arith.constant 0 : i32
    %c0_i32_0 = arith.constant 0 : i32
    %c0_i32_1 = arith.constant 0 : i32
    return %c0_i32, %c0_i32_0, %arg0 : i32, i32, i32
  }
  func.func @transform_1(%arg0: i32) -> (i32, i32) {
    %c0_i32 = arith.constant 0 : i32
    %c0_i32_0 = arith.constant 0 : i32
    %c0_i32_1 = arith.constant 0 : i32
    return %c0_i32, %c0_i32_0 : i32, i32
  }
  func.func @transform_2(%arg0: i32) -> (i32, i32) {
    %c0_i32 = arith.constant 0 : i32
    %c0_i32_0 = arith.constant 0 : i32
    %c0_i32_1 = arith.constant 0 : i32
    return %c0_i32, %c0_i32_0 : i32, i32
  }
  func.func @transform_3(%arg0: i32) -> (i32, i32) {
    %c0_i32 = arith.constant 0 : i32
    %c0_i32_0 = arith.constant 0 : i32
    %c0_i32_1 = arith.constant 0 : i32
    return %c0_i32, %c0_i32_0 : i32, i32
  }
  func.func @transform_4(%arg0: i32) -> (i32, i32, i32) {
    %c0_i32 = arith.constant 0 : i32
    %c0_i32_0 = arith.constant 0 : i32
    %c0_i32_1 = arith.constant 0 : i32
    %c0_i32_2 = arith.constant 0 : i32
    return %c0_i32, %c0_i32_0, %c0_i32_1 : i32, i32, i32
  }
}

</mosaic_0001>

<llo_original>
// kernel: tpu_custom_call.1
$region0: #{tpu_custom_call.1}
  #allocation0 [shape = 'u32[]', space=smem, size = 0x4, offset = 0x4, fixed_abs, tag = 'smem constant byte address 0x4 - core index']
  #allocation1 [shape = 'u32[144,128]{1,0:T(1,128)}', space=vmem, size = 0x12000, scoped, tag = 'internal scratch']
  #allocation2 [shape = 'f32[128,128]{1,0:T(8,128)}', space=vmem, size = 0x10000, scoped, tag = 'scratch operand']
  #allocation3 [shape = 'f32[128,128]{1,0:T(8,128)}', space=vmem, size = 0x10000, scoped, tag = 'scratch operand']
  %s0 = inlined_call_operand.hbm [shape: f32[2,32,1024], index: 0, kind: input, shape index: {}]
  %s1 = inlined_call_operand.vmem [shape: f32[128,32], index: 1, kind: input, shape index: {}]
  %s2 = inlined_call_operand.vmem [shape: f32[128,1], index: 2, kind: input, shape index: {}]
  %s3 = inlined_call_operand.vmem [shape: f32[128,1], index: 3, kind: input, shape index: {}]
  %s4 = inlined_call_operand.hbm [shape: f32[2,128,1024], index: 4, kind: output, shape index: {}]
  %s5 = sld [smem:[#allocation0]]
  $region38: #{tpu_custom_call.1} parent=0
    _
  %s7 = ssub.s32 1, %s5
  %s8 = scalar_select 0, %s7, %s5
  $region1: #{tpu_custom_call.1} parent=0
    #allocation4 [shape = 'u8[262144]{0}', space=vmem, size = 0x40000, scoped, tag = 'input window, operand 0, single buffered']
    #allocation5 [shape = 's32[1]{0}', space=sflag, size = 0x4, scoped, tag = 'scoped memory for tpu_custom_call.1']
    #allocation6 [shape = 's32[1]{0}', space=sflag, size = 0x4, scoped, tag = 'scoped memory for tpu_custom_call.1']
    #allocation7 [shape = 'u8[1048576]{0}', space=vmem, size = 0x100000, scoped, tag = 'output window, operand 0, single buffered']
    %9 = vsyncpa [#allocation5], 0
    %10 = vsyncpa [#allocation6], 0
    // Predicated region
    $region2: #{tpu_custom_call.1} parent=1 // pred_check
      _
    $region3: #{tpu_custom_call.1} parent=1 // pred_check_branch
      %12 = sbr.rel (0) target = $region5
    $region4: #{tpu_custom_call.1} parent=1 // pred_region
      %s14 = ssub.s32 8192, 8192
      %15 = vsyncadd [#allocation5], %s14
      %s16 = sshll.u32 [#allocation4], 4
      %s17 = int_to_ptr.vmem [resolvable:$true] %s16
      %22 = dma.hbm_to_vmem [thread:$0]  %s0, 8192, %s17, [#allocation5], 1024, 1024, 64
    $region5: #{tpu_custom_call.1} parent=1 // pred_fallthru
      _
    // Predicated region
    $region6: #{tpu_custom_call.1} parent=1 // pred_check
      _
    $region7: #{tpu_custom_call.1} parent=1 // pred_check_branch
      %24 = sbr.rel (0) target = $region9
    $region8: #{tpu_custom_call.1} parent=1 // pred_region
      _
    $region9: #{tpu_custom_call.1} parent=1 // pred_fallthru
      _
    // Predicated region
    $region10: #{tpu_custom_call.1} parent=1 // pred_check
      _
    $region11: #{tpu_custom_call.1} parent=1 // pred_check_branch
      %26 = sbr.rel (0) target = $region13
    $region12: #{tpu_custom_call.1} parent=1 // pred_region
      _
    $region13: #{tpu_custom_call.1} parent=1 // pred_fallthru
      _
    // Predicated region
    $region14: #{tpu_custom_call.1} parent=1 // pred_check
      _
    $region15: #{tpu_custom_call.1} parent=1 // pred_check_branch
      %28 = sbr.rel (0) target = $region17
    $region16: #{tpu_custom_call.1} parent=1 // pred_region
      _
    $region17: #{tpu_custom_call.1} parent=1 // pred_fallthru
      _
    // Predicated region
    $region18: #{tpu_custom_call.1} parent=1 // pred_check
      _
    $region19: #{tpu_custom_call.1} parent=1 // pred_check_branch
      %30 = sbr.rel (0) target = $region21
    $region20: #{tpu_custom_call.1} parent=1 // pred_region
      %31 = dma.done [#allocation5], 8192
    $region21: #{tpu_custom_call.1} parent=1 // pred_fallthru
      _
    %p32 = scmp.eq.s32.totalorder 0, 0
    // Predicated region
    $region22: #{tpu_custom_call.1} parent=1 // pred_check
      %p33 = pneg %p32
    $region23: #{tpu_custom_call.1} parent=1 // pred_check_branch
      %35 = sbr.rel (%p33) target = $region25
    $region24: #{tpu_custom_call.1} parent=1 // pred_region
      %36 = vst [vmem:[#allocation2] sm:$0xff] 0.0
      %37 = vst [vmem:[#allocation2 + $0x8] sm:$0xff] 0.0
      %38 = vst [vmem:[#allocation2 + $0x10] sm:$0xff] 0.0
      %39 = vst [vmem:[#allocation2 + $0x18] sm:$0xff] 0.0
      %40 = vst [vmem:[#allocation2 + $0x20] sm:$0xff] 0.0
      %41 = vst [vmem:[#allocation2 + $0x28] sm:$0xff] 0.0
      %42 = vst [vmem:[#allocation2 + $0x30] sm:$0xff] 0.0
      %43 = vst [vmem:[#allocation2 + $0x38] sm:$0xff] 0.0
      %44 = vst [vmem:[#allocation2 + $0x40] sm:$0xff] 0.0
      %45 = vst [vmem:[#allocation2 + $0x48] sm:$0xff] 0.0
      %46 = vst [vmem:[#allocation2 + $0x50] sm:$0xff] 0.0
      %47 = vst [vmem:[#allocation2 + $0x58] sm:$0xff] 0.0
      %48 = vst [vmem:[#allocation2 + $0x60] sm:$0xff] 0.0
      %49 = vst [vmem:[#allocation2 + $0x68] sm:$0xff] 0.0
      %50 = vst [vmem:[#allocation2 + $0x70] sm:$0xff] 0.0
      %51 = vst [vmem:[#allocation2 + $0x78] sm:$0xff] 0.0
      %52 = vst [vmem:[#allocation3] sm:$0xff] 0.0
      %53 = vst [vmem:[#allocation3 + $0x8] sm:$0xff] 0.0
      %54 = vst [vmem:[#allocation3 + $0x10] sm:$0xff] 0.0
      %55 = vst [vmem:[#allocation3 + $0x18] sm:$0xff] 0.0
      %56 = vst [vmem:[#allocation3 + $0x20] sm:$0xff] 0.0
      %57 = vst [vmem:[#allocation3 + $0x28] sm:$0xff] 0.0
      %58 = vst [vmem:[#allocation3 + $0x30] sm:$0xff] 0.0
      %59 = vst [vmem:[#allocation3 + $0x38] sm:$0xff] 0.0
      %60 = vst [vmem:[#allocation3 + $0x40] sm:$0xff] 0.0
      %61 = vst [vmem:[#allocation3 + $0x48] sm:$0xff] 0.0
      %62 = vst [vmem:[#allocation3 + $0x50] sm:$0xff] 0.0
      %63 = vst [vmem:[#allocation3 + $0x58] sm:$0xff] 0.0
      %64 = vst [vmem:[#allocation3 + $0x60] sm:$0xff] 0.0
      %65 = vst [vmem:[#allocation3 + $0x68] sm:$0xff] 0.0
      %66 = vst [vmem:[#allocation3 + $0x70] sm:$0xff] 0.0
      %67 = vst [vmem:[#allocation3 + $0x78] sm:$0xff] 0.0
    $region25: #{tpu_custom_call.1} parent=1 // pred_fallthru
      _
    %s68 = smul.u32 0, 1024
    %v69 = vld [vmem:[%s1] sm:$0xff]
    %v70 = vld [vmem:[%s1 + $0x8] sm:$0xff]
    %v71 = vld [vmem:[%s1 + $0x10] sm:$0xff]
    %v72 = vld [vmem:[%s1 + $0x18] sm:$0xff]
    %v73 = vld [vmem:[%s1 + $0x20] sm:$0xff]
    %v74 = vld [vmem:[%s1 + $0x28] sm:$0xff]
    %v75 = vld [vmem:[%s1 + $0x30] sm:$0xff]
    %v76 = vld [vmem:[%s1 + $0x38] sm:$0xff]
    %v77 = vld [vmem:[%s1 + $0x40] sm:$0xff]
    %v78 = vld [vmem:[%s1 + $0x48] sm:$0xff]
    %v79 = vld [vmem:[%s1 + $0x50] sm:$0xff]
    %v80 = vld [vmem:[%s1 + $0x58] sm:$0xff]
    %v81 = vld [vmem:[%s1 + $0x60] sm:$0xff]
    %v82 = vld [vmem:[%s1 + $0x68] sm:$0xff]
    %v83 = vld [vmem:[%s1 + $0x70] sm:$0xff]
    %v84 = vld [vmem:[%s1 + $0x78] sm:$0xff]
    %v85 = vld [vmem:[#allocation4] sm:$0xff]
    %v86 = vld [vmem:[#allocation4 + $0x8] sm:$0xff]
    %v87 = vld [vmem:[#allocation4 + $0x10] sm:$0xff]
    %v88 = vld [vmem:[#allocation4 + $0x18] sm:$0xff]
    %v89 = vld [vmem:[#allocation4 + $0x20] sm:$0xff]
    %v90 = vld [vmem:[#allocation4 + $0x28] sm:$0xff]
    %v91 = vld [vmem:[#allocation4 + $0x30] sm:$0xff]
    %v92 = vld [vmem:[#allocation4 + $0x38] sm:$0xff]
    %v93 = vld [vmem:[#allocation4 + $0x40] sm:$0xff]
    %v94 = vld [vmem:[#allocation4 + $0x48] sm:$0xff]
    %v95 = vld [vmem:[#allocation4 + $0x50] sm:$0xff]
    %v96 = vld [vmem:[#allocation4 + $0x58] sm:$0xff]
    %v97 = vld [vmem:[#allocation4 + $0x60] sm:$0xff]
    %v98 = vld [vmem:[#allocation4 + $0x68] sm:$0xff]
    %v99 = vld [vmem:[#allocation4 + $0x70] sm:$0xff]
    %v100 = vld [vmem:[#allocation4 + $0x78] sm:$0xff]
    %v101 = vld [vmem:[#allocation4 + $0x80] sm:$0xff]
    %v102 = vld [vmem:[#allocation4 + $0x88] sm:$0xff]
    %v103 = vld [vmem:[#allocation4 + $0x90] sm:$0xff]
    %v104 = vld [vmem:[#allocation4 + $0x98] sm:$0xff]
    %v105 = vld [vmem:[#allocation4 + $0xa0] sm:$0xff]
    %v106 = vld [vmem:[#allocation4 + $0xa8] sm:$0xff]
    %v107 = vld [vmem:[#allocation4 + $0xb0] sm:$0xff]
    %v108 = vld [vmem:[#allocation4 + $0xb8] sm:$0xff]
    %v109 = vld [vmem:[#allocation4 + $0xc0] sm:$0xff]
    %v110 = vld [vmem:[#allocation4 + $0xc8] sm:$0xff]
    %v111 = vld [vmem:[#allocation4 + $0xd0] sm:$0xff]
    %v112 = vld [vmem:[#allocation4 + $0xd8] sm:$0xff]
    %v113 = vld [vmem:[#allocation4 + $0xe0] sm:$0xff]
    %v114 = vld [vmem:[#allocation4 + $0xe8] sm:$0xff]
    %v115 = vld [vmem:[#allocation4 + $0xf0] sm:$0xff]
    %v116 = vld [vmem:[#allocation4 + $0xf8] sm:$0xff]
    %vm117 = vcmask 261120
    %v119 = vsel %vm117, %v69, 0
    %v122 = vsel %vm117, %v70, 0
    %v125 = vsel %vm117, %v71, 0
    %v128 = vsel %vm117, %v72, 0
    %v131 = vsel %vm117, %v73, 0
    %v134 = vsel %vm117, %v74, 0
    %v137 = vsel %vm117, %v75, 0
    %v140 = vsel %vm117, %v76, 0
    %v143 = vsel %vm117, %v77, 0
    %v146 = vsel %vm117, %v78, 0
    %v149 = vsel %vm117, %v79, 0
    %v152 = vsel %vm117, %v80, 0
    %v155 = vsel %vm117, %v81, 0
    %v158 = vsel %vm117, %v82, 0
    %v161 = vsel %vm117, %v83, 0
    %v164 = vsel %vm117, %v84, 0
    %166 = vmatprep.subr.mxu0 %v86
    %167 = vmatpush1.msra.mxu0 %v85
    %168 = vmatprep.subr.mxu0 %v94
    %169 = vmatpush1.msra.mxu0 %v93
    %170 = vmatprep.subr.mxu0 %v102
    %171 = vmatpush1.msra.mxu0 %v101
    %172 = vmatprep.subr.mxu0 %v110
    %173 = vmatpush1.msra.mxu0 %v109
    %174 = vmatprep.subr.mxu0 0.0
    %175 = vmatpush1.msra.mxu0 0.0
    %176 = vmatprep.subr.mxu0 0.0
    %177 = vmatpush1.msra.mxu0 0.0
    %178 = vmatprep.subr.mxu0 0.0
    %179 = vmatpush1.msra.mxu0 0.0
    %180 = vmatprep.subr.mxu0 0.0
    %181 = vmatpush1.msra.mxu0 0.0
    %182 = vmatprep.subr.mxu0 0.0
    %183 = vmatpush1.msra.mxu0 0.0
    %184 = vmatprep.subr.mxu0 0.0
    %185 = vmatpush1.msra.mxu0 0.0
    %186 = vmatprep.subr.mxu0 0.0
    %187 = vmatpush1.msra.mxu0 0.0
    %188 = vmatprep.subr.mxu0 0.0
    %189 = vmatpush1.msra.mxu0 0.0
    %190 = vmatprep.subr.mxu0 0.0
    %191 = vmatpush1.msra.mxu0 0.0
    %192 = vmatprep.subr.mxu0 0.0
    %193 = vmatpush1.msra.mxu0 0.0
    %194 = vmatprep.subr.mxu0 0.0
    %195 = vmatpush1.msra.mxu0 0.0
    %196 = vmatprep.subr.mxu0 0.0
    %197 = vmatpush1.msra.mxu0 0.0
    %198 = vmatprep.subr.mxu0 0.0
    %199 = vmatpush1.msra.mxu0 0.0
    %200 = vmatprep.subr.mxu0 0.0
    %201 = vmatpush1.msra.mxu0 0.0
    %202 = vmatprep.subr.mxu0 0.0
    %203 = vmatpush1.msra.mxu0 0.0
    %204 = vmatprep.subr.mxu0 0.0
    %205 = vmatpush1.msra.mxu0 0.0
    %206 = vmatprep.subr.mxu0 0.0
    %207 = vmatpush1.msra.mxu0 0.0
    %208 = vmatprep.subr.mxu0 0.0
    %209 = vmatpush1.msra.mxu0 0.0
    %210 = vmatprep.subr.mxu0 0.0
    %211 = vmatpush1.msra.mxu0 0.0
    %212 = vmatprep.subr.mxu0 0.0
    %213 = vmatpush1.msra.mxu0 0.0
    %214 = vmatprep.subr.mxu0 0.0
    %215 = vmatpush1.msra.mxu0 0.0
    %216 = vmatprep.subr.mxu0 0.0
    %217 = vmatpush1.msra.mxu0 0.0
    %218 = vmatprep.subr.mxu0 0.0
    %219 = vmatpush1.msra.mxu0 0.0
    %220 = vmatprep.subr.mxu0 0.0
    %221 = vmatpush1.msra.mxu0 0.0
    %222 = vmatprep.subr.mxu0 0.0
    %223 = vmatpush1.msra.mxu0 0.0
    %224 = vmatprep.subr.mxu0 0.0
    %225 = vmatpush1.msra.mxu0 0.0
    %226 = vmatprep.subr.mxu0 0.0
    %227 = vmatpush1.msra.mxu0 0.0
    %228 = vmatprep.subr.mxu0 0.0
    %229 = vmatpush1.msra.mxu0 0.0
    %230 = vmatprep.mubr.f32.mxu0 0.0
    %231 = vmatmul.mubr.f32.gmra.mrb[0].mxu0 %v119
    %v232 = vpop.f32.mrb[0].mxu0
    %v233 = vadd.f32 0.0, %v232
    %v234 = vpop.f32.mrb[0].mxu0
    %v235 = vadd.f32 0.0, %v234
    %236 = vmatprep.mubr.f32.mxu0 0.0
    %237 = vmatmul.mubr.f32.gmra.mrb[0].mxu0 %v122
    %v238 = vpop.f32.mrb[0].mxu0
    %v239 = vadd.f32 0.0, %v238
    %v240 = vpop.f32.mrb[0].mxu0
    %v241 = vadd.f32 0.0, %v240
    %242 = vmatprep.mubr.f32.mxu0 0.0
    %243 = vmatmul.mubr.f32.gmra.mrb[0].mxu0 %v125
    %v244 = vpop.f32.mrb[0].mxu0
    %v245 = vadd.f32 0.0, %v244
    %v246 = vpop.f32.mrb[0].mxu0
    %v247 = vadd.f32 0.0, %v246
    %248 = vmatprep.mubr.f32.mxu0 0.0
    %249 = vmatmul.mubr.f32.gmra.mrb[0].mxu0 %v128
    %v250 = vpop.f32.mrb[0].mxu0
    %v251 = vadd.f32 0.0, %v250
    %v252 = vpop.f32.mrb[0].mxu0
    %v253 = vadd.f32 0.0, %v252
    %254 = vmatprep.mubr.f32.mxu0 0.0
    %255 = vmatmul.mubr.f32.gmra.mrb[0].mxu0 %v131
    %v256 = vpop.f32.mrb[0].mxu0
    %v257 = vadd.f32 0.0, %v256
    %v258 = vpop.f32.mrb[0].mxu0
    %v259 = vadd.f32 0.0, %v258
    %260 = vmatprep.mubr.f32.mxu0 0.0
    %261 = vmatmul.mubr.f32.gmra.mrb[0].mxu0 %v134
    %v262 = vpop.f32.mrb[0].mxu0
    %v263 = vadd.f32 0.0, %v262
    %v264 = vpop.f32.mrb[0].mxu0
    %v265 = vadd.f32 0.0, %v264
    %266 = vmatprep.mubr.f32.mxu0 0.0
    %267 = vmatmul.mubr.f32.gmra.mrb[0].mxu0 %v137
    %v268 = vpop.f32.mrb[0].mxu0
    %v269 = vadd.f32 0.0, %v268
    %v270 = vpop.f32.mrb[0].mxu0
    %v271 = vadd.f32 0.0, %v270
    %272 = vmatprep.mubr.f32.mxu0 0.0
    %273 = vmatmul.mubr.f32.gmra.mrb[0].mxu0 %v140
    %v274 = vpop.f32.mrb[0].mxu0
    %v275 = vadd.f32 0.0, %v274
    %v276 = vpop.f32.mrb[0].mxu0
    %v277 = vadd.f32 0.0, %v276
    %278 = vmatprep.mubr.f32.mxu0 0.0
    %279 = vmatmul.mubr.f32.gmra.mrb[0].mxu0 %v143
    %v280 = vpop.f32.mrb[0].mxu0
    %v281 = vadd.f32 0.0, %v280
    %v282 = vpop.f32.mrb[0].mxu0
    %v283 = vadd.f32 0.0, %v282
    %284 = vmatprep.mubr.f32.mxu0 0.0
    %285 = vmatmul.mubr.f32.gmra.mrb[0].mxu0 %v146
    %v286 = vpop.f32.mrb[0].mxu0
    %v287 = vadd.f32 0.0, %v286
    %v288 = vpop.f32.mrb[0].mxu0
    %v289 = vadd.f32 0.0, %v288
    %290 = vmatprep.mubr.f32.mxu0 0.0
    %291 = vmatmul.mubr.f32.gmra.mrb[0].mxu0 %v149
    %v292 = vpop.f32.mrb[0].mxu0
    %v293 = vadd.f32 0.0, %v292
    %v294 = vpop.f32.mrb[0].mxu0
    %v295 = vadd.f32 0.0, %v294
    %296 = vmatprep.mubr.f32.mxu0 0.0
    %297 = vmatmul.mubr.f32.gmra.mrb[0].mxu0 %v152
    %v298 = vpop.f32.mrb[0].mxu0
    %v299 = vadd.f32 0.0, %v298
    %v300 = vpop.f32.mrb[0].mxu0
    %v301 = vadd.f32 0.0, %v300
    %302 = vmatprep.mubr.f32.mxu0 0.0
    %303 = vmatmul.mubr.f32.gmra.mrb[0].mxu0 %v155
    %v304 = vpop.f32.mrb[0].mxu0
    %v305 = vadd.f32 0.0, %v304
    %v306 = vpop.f32.mrb[0].mxu0
    %v307 = vadd.f32 0.0, %v306
    %308 = vmatprep.mubr.f32.mxu0 0.0
    %309 = vmatmul.mubr.f32.gmra.mrb[0].mxu0 %v158
    %v310 = vpop.f32.mrb[0].mxu0
    %v311 = vadd.f32 0.0, %v310
    %v312 = vpop.f32.mrb[0].mxu0
    %v313 = vadd.f32 0.0, %v312
    %314 = vmatprep.mubr.f32.mxu0 0.0
    %315 = vmatmul.mubr.f32.gmra.mrb[0].mxu0 %v161
    %v316 = vpop.f32.mrb[0].mxu0
    %v317 = vadd.f32 0.0, %v316
    %v318 = vpop.f32.mrb[0].mxu0
    %v319 = vadd.f32 0.0, %v318
    %320 = vmatprep.mubr.f32.mxu0 0.0
    %321 = vmatmul.mubr.f32.gmra.mrb[0].mxu0 %v164
    %v322 = vpop.f32.mrb[0].mxu0
    %v323 = vadd.f32 0.0, %v322
    %v324 = vpop.f32.mrb[0].mxu0
    %v325 = vadd.f32 0.0, %v324
    %326 = vdwg.mxu0
    %327 = vmatprep.subr.mxu0 %v88
    %328 = vmatpush1.msra.mxu0 %v87
    %329 = vmatprep.subr.mxu0 %v96
    %330 = vmatpush1.msra.mxu0 %v95
    %331 = vmatprep.subr.mxu0 %v104
    %332 = vmatpush1.msra.mxu0 %v103
    %333 = vmatprep.subr.mxu0 %v112
    %334 = vmatpush1.msra.mxu0 %v111
    %335 = vmatprep.subr.mxu0 0.0
    %336 = vmatpush1.msra.mxu0 0.0
    %337 = vmatprep.subr.mxu0 0.0
    %338 = vmatpush1.msra.mxu0 0.0
    %339 = vmatprep.subr.mxu0 0.0
    %340 = vmatpush1.msra.mxu0 0.0
    %341 = vmatprep.subr.mxu0 0.0
    %342 = vmatpush1.msra.mxu0 0.0
    %343 = vmatprep.subr.mxu0 0.0
    %344 = vmatpush1.msra.mxu0 0.0
    %345 = vmatprep.subr.mxu0 0.0
    %346 = vmatpush1.msra.mxu0 0.0
    %347 = vmatprep.subr.mxu0 0.0
    %348 = vmatpush1.msra.mxu0 0.0
    %349 = vmatprep.subr.mxu0 0.0
    %350 = vmatpush1.msra.mxu0 0.0
    %351 = vmatprep.subr.mxu0 0.0
    %352 = vmatpush1.msra.mxu0 0.0
    %353 = vmatprep.subr.mxu0 0.0
    %354 = vmatpush1.msra.mxu0 0.0
    %355 = vmatprep.subr.mxu0 0.0
    %356 = vmatpush1.msra.mxu0 0.0
    %357 = vmatprep.subr.mxu0 0.0
    %358 = vmatpush1.msra.mxu0 0.0
    %359 = vmatprep.subr.mxu0 0.0
    %360 = vmatpush1.msra.mxu0 0.0
    %361 = vmatprep.subr.mxu0 0.0
    %362 = vmatpush1.msra.mxu0 0.0
    %363 = vmatprep.subr.mxu0 0.0
    %364 = vmatpush1.msra.mxu0 0.0
    %365 = vmatprep.subr.mxu0 0.0
    %366 = vmatpush1.msra.mxu0 0.0
    %367 = vmatprep.subr.mxu0 0.0
    %368 = vmatpush1.msra.mxu0 0.0
    %369 = vmatprep.subr.mxu0 0.0
    %370 = vmatpush1.msra.mxu0 0.0
    %371 = vmatprep.subr.mxu0 0.0
    %372 = vmatpush1.msra.mxu0 0.0
    %373 = vmatprep.subr.mxu0 0.0
    %374 = vmatpush1.msra.mxu0 0.0
    %375 = vmatprep.subr.mxu0 0.0
    %376 = vmatpush1.msra.mxu0 0.0
    %377 = vmatprep.subr.mxu0 0.0
    %378 = vmatpush1.msra.mxu0 0.0
    %379 = vmatprep.subr.mxu0 0.0
    %380 = vmatpush1.msra.mxu0 0.0
    %381 = vmatprep.subr.mxu0 0.0
    %382 = vmatpush1.msra.mxu0 0.0
    %383 = vmatprep.subr.mxu0 0.0
    %384 = vmatpush1.msra.mxu0 0.0
    %385 = vmatprep.subr.mxu0 0.0
    %386 = vmatpush1.msra.mxu0 0.0
    %387 = vmatprep.subr.mxu0 0.0
    %388 = vmatpush1.msra.mxu0 0.0
    %389 = vmatprep.subr.mxu0 0.0
    %390 = vmatpush1.msra.mxu0 0.0
    %391 = vmatprep.mubr.f32.mxu0 0.0
    %392 = vmatmul.mubr.f32.gmra.mrb[0].mxu0 %v119
    %v393 = vpop.f32.mrb[0].mxu0
    %v394 = vadd.f32 0.0, %v393
    %v395 = vpop.f32.mrb[0].mxu0
    %v396 = vadd.f32 0.0, %v395
    %397 = vmatprep.mubr.f32.mxu0 0.0
    %398 = vmatmul.mubr.f32.gmra.mrb[0].mxu0 %v122
    %v399 = vpop.f32.mrb[0].mxu0
    %v400 = vadd.f32 0.0, %v399
    %v401 = vpop.f32.mrb[0].mxu0
    %v402 = vadd.f32 0.0, %v401
    %403 = vmatprep.mubr.f32.mxu0 0.0
    %404 = vmatmul.mubr.f32.gmra.mrb[0].mxu0 %v125
    %v405 = vpop.f32.mrb[0].mxu0
    %v406 = vadd.f32 0.0, %v405
    %v407 = vpop.f32.mrb[0].mxu0
    %v408 = vadd.f32 0.0, %v407
    %409 = vmatprep.mubr.f32.mxu0 0.0
    %410 = vmatmul.mubr.f32.gmra.mrb[0].mxu0 %v128
    %v411 = vpop.f32.mrb[0].mxu0
    %v412 = vadd.f32 0.0, %v411
    %v413 = vpop.f32.mrb[0].mxu0
    %v414 = vadd.f32 0.0, %v413
    %415 = vmatprep.mubr.f32.mxu0 0.0
    %416 = vmatmul.mubr.f32.gmra.mrb[0].mxu0 %v131
    %v417 = vpop.f32.mrb[0].mxu0
    %v418 = vadd.f32 0.0, %v417
    %v419 = vpop.f32.mrb[0].mxu0
    %v420 = vadd.f32 0.0, %v419
    %421 = vmatprep.mubr.f32.mxu0 0.0
    %422 = vmatmul.mubr.f32.gmra.mrb[0].mxu0 %v134
    %v423 = vpop.f32.mrb[0].mxu0
    %v424 = vadd.f32 0.0, %v423
    %v425 = vpop.f32.mrb[0].mxu0
    %v426 = vadd.f32 0.0, %v425
    %427 = vmatprep.mubr.f32.mxu0 0.0
    %428 = vmatmul.mubr.f32.gmra.mrb[0].mxu0 %v137
    %v429 = vpop.f32.mrb[0].mxu0
    %v430 = vadd.f32 0.0, %v429
    %v431 = vpop.f32.mrb[0].mxu0
    %v432 = vadd.f32 0.0, %v431
    %433 = vmatprep.mubr.f32.mxu0 0.0
    %434 = vmatmul.mubr.f32.gmra.mrb[0].mxu0 %v140
    %v435 = vpop.f32.mrb[0].mxu0
    %v436 = vadd.f32 0.0, %v435
    %v437 = vpop.f32.mrb[0].mxu0
    %v438 = vadd.f32 0.0, %v437
    %439 = vmatprep.mubr.f32.mxu0 0.0
    %440 = vmatmul.mubr.f32.gmra.mrb[0].mxu0 %v143
    %v441 = vpop.f32.mrb[0].mxu0
    %v442 = vadd.f32 0.0, %v441
    %v443 = vpop.f32.mrb[0].mxu0
    %v444 = vadd.f32 0.0, %v443
    %445 = vmatprep.mubr.f32.mxu0 0.0
    %446 = vmatmul.mubr.f32.gmra.mrb[0].mxu0 %v146
    %v447 = vpop.f32.mrb[0].mxu0
    %v448 = vadd.f32 0.0, %v447
    %v449 = vpop.f32.mrb[0].mxu0
    %v450 = vadd.f32 0.0, %v449
    %451 = vmatprep.mubr.f32.mxu0 0.0
    %452 = vmatmul.mubr.f32.gmra.mrb[0].mxu0 %v149
    %v453 = vpop.f32.mrb[0].mxu0
    %v454 = vadd.f32 0.0, %v453
    %v455 = vpop.f32.mrb[0].mxu0
    %v456 = vadd.f32 0.0, %v455
    %457 = vmatprep.mubr.f32.mxu0 0.0
    %458 = vmatmul.mubr.f32.gmra.mrb[0].mxu0 %v152
    %v459 = vpop.f32.mrb[0].mxu0
    %v460 = vadd.f32 0.0, %v459
    %v461 = vpop.f32.mrb[0].mxu0
    %v462 = vadd.f32 0.0, %v461
    %463 = vmatprep.mubr.f32.mxu0 0.0
    %464 = vmatmul.mubr.f32.gmra.mrb[0].mxu0 %v155
    %v465 = vpop.f32.mrb[0].mxu0
    %v466 = vadd.f32 0.0, %v465
    %v467 = vpop.f32.mrb[0].mxu0
    %v468 = vadd.f32 0.0, %v467
    %469 = vmatprep.mubr.f32.mxu0 0.0
    %470 = vmatmul.mubr.f32.gmra.mrb[0].mxu0 %v158
    %v471 = vpop.f32.mrb[0].mxu0
    %v472 = vadd.f32 0.0, %v471
    %v473 = vpop.f32.mrb[0].mxu0
    %v474 = vadd.f32 0.0, %v473
    %475 = vmatprep.mubr.f32.mxu0 0.0
    %476 = vmatmul.mubr.f32.gmra.mrb[0].mxu0 %v161
    %v477 = vpop.f32.mrb[0].mxu0
    %v478 = vadd.f32 0.0, %v477
    %v479 = vpop.f32.mrb[0].mxu0
    %v480 = vadd.f32 0.0, %v479
    %481 = vmatprep.mubr.f32.mxu0 0.0
    %482 = vmatmul.mubr.f32.gmra.mrb[0].mxu0 %v164
    %v483 = vpop.f32.mrb[0].mxu0
    %v484 = vadd.f32 0.0, %v483
    %v485 = vpop.f32.mrb[0].mxu0
    %v486 = vadd.f32 0.0, %v485
    %487 = vdwg.mxu0
    %488 = vmatprep.subr.mxu0 %v90
    %489 = vmatpush1.msra.mxu0 %v89
    %490 = vmatprep.subr.mxu0 %v98
    %491 = vmatpush1.msra.mxu0 %v97
    %492 = vmatprep.subr.mxu0 %v106
    %493 = vmatpush1.msra.mxu0 %v105
    %494 = vmatprep.subr.mxu0 %v114
    %495 = vmatpush1.msra.mxu0 %v113
    %496 = vmatprep.subr.mxu0 0.0
    %497 = vmatpush1.msra.mxu0 0.0
    %498 = vmatprep.subr.mxu0 0.0
    %499 = vmatpush1.msra.mxu0 0.0
    %500 = vmatprep.subr.mxu0 0.0
    %501 = vmatpush1.msra.mxu0 0.0
    %502 = vmatprep.subr.mxu0 0.0
    %503 = vmatpush1.msra.mxu0 0.0
    %504 = vmatprep.subr.mxu0 0.0
    %505 = vmatpush1.msra.mxu0 0.0
    %506 = vmatprep.subr.mxu0 0.0
    %507 = vmatpush1.msra.mxu0 0.0
    %508 = vmatprep.subr.mxu0 0.0
    %509 = vmatpush1.msra.mxu0 0.0
    %510 = vmatprep.subr.mxu0 0.0
    %511 = vmatpush1.msra.mxu0 0.0
    %512 = vmatprep.subr.mxu0 0.0
    %513 = vmatpush1.msra.mxu0 0.0
    %514 = vmatprep.subr.mxu0 0.0
    %515 = vmatpush1.msra.mxu0 0.0
    %516 = vmatprep.subr.mxu0 0.0
    %517 = vmatpush1.msra.mxu0 0.0
    %518 = vmatprep.subr.mxu0 0.0
    %519 = vmatpush1.msra.mxu0 0.0
    %520 = vmatprep.subr.mxu0 0.0
    %521 = vmatpush1.msra.mxu0 0.0
    %522 = vmatprep.subr.mxu0 0.0
    %523 = vmatpush1.msra.mxu0 0.0
    %524 = vmatprep.subr.mxu0 0.0
    %525 = vmatpush1.msra.mxu0 0.0
    %526 = vmatprep.subr.mxu0 0.0
    %527 = vmatpush1.msra.mxu0 0.0
    %528 = vmatprep.subr.mxu0 0.0
    %529 = vmatpush1.msra.mxu0 0.0
    %530 = vmatprep.subr.mxu0 0.0
    %531 = vmatpush1.msra.mxu0 0.0
    %532 = vmatprep.subr.mxu0 0.0
    %533 = vmatpush1.msra.mxu0 0.0
    %534 = vmatprep.subr.mxu0 0.0
    %535 = vmatpush1.msra.mxu0 0.0
    %536 = vmatprep.subr.mxu0 0.0
    %537 = vmatpush1.msra.mxu0 0.0
    %538 = vmatprep.subr.mxu0 0.0
    %539 = vmatpush1.msra.mxu0 0.0
    %540 = vmatprep.subr.mxu0 0.0
    %541 = vmatpush1.msra.mxu0 0.0
    %542 = vmatprep.subr.mxu0 0.0
    %543 = vmatpush1.msra.mxu0 0.0
    %544 = vmatprep.subr.mxu0 0.0
    %545 = vmatpush1.msra.mxu0 0.0
    %546 = vmatprep.subr.mxu0 0.0
    %547 = vmatpush1.msra.mxu0 0.0
    %548 = vmatprep.subr.mxu0 0.0
    %549 = vmatpush1.msra.mxu0 0.0
    %550 = vmatprep.subr.mxu0 0.0
    %551 = vmatpush1.msra.mxu0 0.0
    %552 = vmatprep.mubr.f32.mxu0 0.0
    %553 = vmatmul.mubr.f32.gmra.mrb[0].mxu0 %v119
    %v554 = vpop.f32.mrb[0].mxu0
    %v555 = vadd.f32 0.0, %v554
    %v556 = vpop.f32.mrb[0].mxu0
    %v557 = vadd.f32 0.0, %v556
    %558 = vmatprep.mubr.f32.mxu0 0.0
    %559 = vmatmul.mubr.f32.gmra.mrb[0].mxu0 %v122
    %v560 = vpop.f32.mrb[0].mxu0
    %v561 = vadd.f32 0.0, %v560
    %v562 = vpop.f32.mrb[0].mxu0
    %v563 = vadd.f32 0.0, %v562
    %564 = vmatprep.mubr.f32.mxu0 0.0
    %565 = vmatmul.mubr.f32.gmra.mrb[0].mxu0 %v125
    %v566 = vpop.f32.mrb[0].mxu0
    %v567 = vadd.f32 0.0, %v566
    %v568 = vpop.f32.mrb[0].mxu0
    %v569 = vadd.f32 0.0, %v568
    %570 = vmatprep.mubr.f32.mxu0 0.0
    %571 = vmatmul.mubr.f32.gmra.mrb[0].mxu0 %v128
    %v572 = vpop.f32.mrb[0].mxu0
    %v573 = vadd.f32 0.0, %v572
    %v574 = vpop.f32.mrb[0].mxu0
    %v575 = vadd.f32 0.0, %v574
    %576 = vmatprep.mubr.f32.mxu0 0.0
    %577 = vmatmul.mubr.f32.gmra.mrb[0].mxu0 %v131
    %v578 = vpop.f32.mrb[0].mxu0
    %v579 = vadd.f32 0.0, %v578
    %v580 = vpop.f32.mrb[0].mxu0
    %v581 = vadd.f32 0.0, %v580
    %582 = vmatprep.mubr.f32.mxu0 0.0
    %583 = vmatmul.mubr.f32.gmra.mrb[0].mxu0 %v134
    %v584 = vpop.f32.mrb[0].mxu0
    %v585 = vadd.f32 0.0, %v584
    %v586 = vpop.f32.mrb[0].mxu0
    %v587 = vadd.f32 0.0, %v586
    %588 = vmatprep.mubr.f32.mxu0 0.0
    %589 = vmatmul.mubr.f32.gmra.mrb[0].mxu0 %v137
    %v590 = vpop.f32.mrb[0].mxu0
    %v591 = vadd.f32 0.0, %v590
    %v592 = vpop.f32.mrb[0].mxu0
    %v593 = vadd.f32 0.0, %v592
    %594 = vmatprep.mubr.f32.mxu0 0.0
    %595 = vmatmul.mubr.f32.gmra.mrb[0].mxu0 %v140
    %v596 = vpop.f32.mrb[0].mxu0
    %v597 = vadd.f32 0.0, %v596
    %v598 = vpop.f32.mrb[0].mxu0
    %v599 = vadd.f32 0.0, %v598
    %600 = vmatprep.mubr.f32.mxu0 0.0
    %601 = vmatmul.mubr.f32.gmra.mrb[0].mxu0 %v143
    %v602 = vpop.f32.mrb[0].mxu0
    %v603 = vadd.f32 0.0, %v602
    %v604 = vpop.f32.mrb[0].mxu0
    %v605 = vadd.f32 0.0, %v604
    %606 = vmatprep.mubr.f32.mxu0 0.0
    %607 = vmatmul.mubr.f32.gmra.mrb[0].mxu0 %v146
    %v608 = vpop.f32.mrb[0].mxu0
    %v609 = vadd.f32 0.0, %v608
    %v610 = vpop.f32.mrb[0].mxu0
    %v611 = vadd.f32 0.0, %v610
    %612 = vmatprep.mubr.f32.mxu0 0.0
    %613 = vmatmul.mubr.f32.gmra.mrb[0].mxu0 %v149
    %v614 = vpop.f32.mrb[0].mxu0
    %v615 = vadd.f32 0.0, %v614
    %v616 = vpop.f32.mrb[0].mxu0
    %v617 = vadd.f32 0.0, %v616
    %618 = vmatprep.mubr.f32.mxu0 0.0
    %619 = vmatmul.mubr.f32.gmra.mrb[0].mxu0 %v152
    %v620 = vpop.f32.mrb[0].mxu0
    %v621 = vadd.f32 0.0, %v620
    %v622 = vpop.f32.mrb[0].mxu0
    %v623 = vadd.f32 0.0, %v622
    %624 = vmatprep.mubr.f32.mxu0 0.0
    %625 = vmatmul.mubr.f32.gmra.mrb[0].mxu0 %v155
    %v626 = vpop.f32.mrb[0].mxu0
    %v627 = vadd.f32 0.0, %v626
    %v628 = vpop.f32.mrb[0].mxu0
    %v629 = vadd.f32 0.0, %v628
    %630 = vmatprep.mubr.f32.mxu0 0.0
    %631 = vmatmul.mubr.f32.gmra.mrb[0].mxu0 %v158
    %v632 = vpop.f32.mrb[0].mxu0
    %v633 = vadd.f32 0.0, %v632
    %v634 = vpop.f32.mrb[0].mxu0
    %v635 = vadd.f32 0.0, %v634
    %636 = vmatprep.mubr.f32.mxu0 0.0
    %637 = vmatmul.mubr.f32.gmra.mrb[0].mxu0 %v161
    %v638 = vpop.f32.mrb[0].mxu0
    %v639 = vadd.f32 0.0, %v638
    %v640 = vpop.f32.mrb[0].mxu0
    %v641 = vadd.f32 0.0, %v640
    %642 = vmatprep.mubr.f32.mxu0 0.0
    %643 = vmatmul.mubr.f32.gmra.mrb[0].mxu0 %v164
    %v644 = vpop.f32.mrb[0].mxu0
    %v645 = vadd.f32 0.0, %v644
    %v646 = vpop.f32.mrb[0].mxu0
    %v647 = vadd.f32 0.0, %v646
    %648 = vdwg.mxu0
    %649 = vmatprep.subr.mxu0 %v92
    %650 = vmatpush1.msra.mxu0 %v91
    %651 = vmatprep.subr.mxu0 %v100
    %652 = vmatpush1.msra.mxu0 %v99
    %653 = vmatprep.subr.mxu0 %v108
    %654 = vmatpush1.msra.mxu0 %v107
    %655 = vmatprep.subr.mxu0 %v116
    %656 = vmatpush1.msra.mxu0 %v115
    %657 = vmatprep.subr.mxu0 0.0
    %658 = vmatpush1.msra.mxu0 0.0
    %659 = vmatprep.subr.mxu0 0.0
    %660 = vmatpush1.msra.mxu0 0.0
    %661 = vmatprep.subr.mxu0 0.0
    %662 = vmatpush1.msra.mxu0 0.0
    %663 = vmatprep.subr.mxu0 0.0
    %664 = vmatpush1.msra.mxu0 0.0
    %665 = vmatprep.subr.mxu0 0.0
    %666 = vmatpush1.msra.mxu0 0.0
    %667 = vmatprep.subr.mxu0 0.0
    %668 = vmatpush1.msra.mxu0 0.0
    %669 = vmatprep.subr.mxu0 0.0
    %670 = vmatpush1.msra.mxu0 0.0
    %671 = vmatprep.subr.mxu0 0.0
    %672 = vmatpush1.msra.mxu0 0.0
    %673 = vmatprep.subr.mxu0 0.0
    %674 = vmatpush1.msra.mxu0 0.0
    %675 = vmatprep.subr.mxu0 0.0
    %676 = vmatpush1.msra.mxu0 0.0
    %677 = vmatprep.subr.mxu0 0.0
    %678 = vmatpush1.msra.mxu0 0.0
    %679 = vmatprep.subr.mxu0 0.0
    %680 = vmatpush1.msra.mxu0 0.0
    %681 = vmatprep.subr.mxu0 0.0
    %682 = vmatpush1.msra.mxu0 0.0
    %683 = vmatprep.subr.mxu0 0.0
    %684 = vmatpush1.msra.mxu0 0.0
    %685 = vmatprep.subr.mxu0 0.0
    %686 = vmatpush1.msra.mxu0 0.0
    %687 = vmatprep.subr.mxu0 0.0
    %688 = vmatpush1.msra.mxu0 0.0
    %689 = vmatprep.subr.mxu0 0.0
    %690 = vmatpush1.msra.mxu0 0.0
    %691 = vmatprep.subr.mxu0 0.0
    %692 = vmatpush1.msra.mxu0 0.0
    %693 = vmatprep.subr.mxu0 0.0
    %694 = vmatpush1.msra.mxu0 0.0
    %695 = vmatprep.subr.mxu0 0.0
    %696 = vmatpush1.msra.mxu0 0.0
    %697 = vmatprep.subr.mxu0 0.0
    %698 = vmatpush1.msra.mxu0 0.0
    %699 = vmatprep.subr.mxu0 0.0
    %700 = vmatpush1.msra.mxu0 0.0
    %701 = vmatprep.subr.mxu0 0.0
    %702 = vmatpush1.msra.mxu0 0.0
    %703 = vmatprep.subr.mxu0 0.0
    %704 = vmatpush1.msra.mxu0 0.0
    %705 = vmatprep.subr.mxu0 0.0
    %706 = vmatpush1.msra.mxu0 0.0
    %707 = vmatprep.subr.mxu0 0.0
    %708 = vmatpush1.msra.mxu0 0.0
    %709 = vmatprep.subr.mxu0 0.0
    %710 = vmatpush1.msra.mxu0 0.0
    %711 = vmatprep.subr.mxu0 0.0
    %712 = vmatpush1.msra.mxu0 0.0
    %713 = vmatprep.mubr.f32.mxu0 0.0
    %714 = vmatmul.mubr.f32.gmra.mrb[0].mxu0 %v119
    %v715 = vpop.f32.mrb[0].mxu0
    %v716 = vadd.f32 0.0, %v715
    %v717 = vpop.f32.mrb[0].mxu0
    %v718 = vadd.f32 0.0, %v717
    %719 = vmatprep.mubr.f32.mxu0 0.0
    %720 = vmatmul.mubr.f32.gmra.mrb[0].mxu0 %v122
    %v721 = vpop.f32.mrb[0].mxu0
    %v722 = vadd.f32 0.0, %v721
    %v723 = vpop.f32.mrb[0].mxu0
    %v724 = vadd.f32 0.0, %v723
    %725 = vmatprep.mubr.f32.mxu0 0.0
    %726 = vmatmul.mubr.f32.gmra.mrb[0].mxu0 %v125
    %v727 = vpop.f32.mrb[0].mxu0
    %v728 = vadd.f32 0.0, %v727
    %v729 = vpop.f32.mrb[0].mxu0
    %v730 = vadd.f32 0.0, %v729
    %731 = vmatprep.mubr.f32.mxu0 0.0
    %732 = vmatmul.mubr.f32.gmra.mrb[0].mxu0 %v128
    %v733 = vpop.f32.mrb[0].mxu0
    %v734 = vadd.f32 0.0, %v733
    %v735 = vpop.f32.mrb[0].mxu0
    %v736 = vadd.f32 0.0, %v735
    %737 = vmatprep.mubr.f32.mxu0 0.0
    %738 = vmatmul.mubr.f32.gmra.mrb[0].mxu0 %v131
    %v739 = vpop.f32.mrb[0].mxu0
    %v740 = vadd.f32 0.0, %v739
    %v741 = vpop.f32.mrb[0].mxu0
    %v742 = vadd.f32 0.0, %v741
    %743 = vmatprep.mubr.f32.mxu0 0.0
    %744 = vmatmul.mubr.f32.gmra.mrb[0].mxu0 %v134
    %v745 = vpop.f32.mrb[0].mxu0
    %v746 = vadd.f32 0.0, %v745
    %v747 = vpop.f32.mrb[0].mxu0
    %v748 = vadd.f32 0.0, %v747
    %749 = vmatprep.mubr.f32.mxu0 0.0
    %750 = vmatmul.mubr.f32.gmra.mrb[0].mxu0 %v137
    %v751 = vpop.f32.mrb[0].mxu0
    %v752 = vadd.f32 0.0, %v751
    %v753 = vpop.f32.mrb[0].mxu0
    %v754 = vadd.f32 0.0, %v753
    %755 = vmatprep.mubr.f32.mxu0 0.0
    %756 = vmatmul.mubr.f32.gmra.mrb[0].mxu0 %v140
    %v757 = vpop.f32.mrb[0].mxu0
    %v758 = vadd.f32 0.0, %v757
    %v759 = vpop.f32.mrb[0].mxu0
    %v760 = vadd.f32 0.0, %v759
    %761 = vmatprep.mubr.f32.mxu0 0.0
    %762 = vmatmul.mubr.f32.gmra.mrb[0].mxu0 %v143
    %v763 = vpop.f32.mrb[0].mxu0
    %v764 = vadd.f32 0.0, %v763
    %v765 = vpop.f32.mrb[0].mxu0
    %v766 = vadd.f32 0.0, %v765
    %767 = vmatprep.mubr.f32.mxu0 0.0
    %768 = vmatmul.mubr.f32.gmra.mrb[0].mxu0 %v146
    %v769 = vpop.f32.mrb[0].mxu0
    %v770 = vadd.f32 0.0, %v769
    %v771 = vpop.f32.mrb[0].mxu0
    %v772 = vadd.f32 0.0, %v771
    %773 = vmatprep.mubr.f32.mxu0 0.0
    %774 = vmatmul.mubr.f32.gmra.mrb[0].mxu0 %v149
    %v775 = vpop.f32.mrb[0].mxu0
    %v776 = vadd.f32 0.0, %v775
    %v777 = vpop.f32.mrb[0].mxu0
    %v778 = vadd.f32 0.0, %v777
    %779 = vmatprep.mubr.f32.mxu0 0.0
    %780 = vmatmul.mubr.f32.gmra.mrb[0].mxu0 %v152
    %v781 = vpop.f32.mrb[0].mxu0
    %v782 = vadd.f32 0.0, %v781
    %v783 = vpop.f32.mrb[0].mxu0
    %v784 = vadd.f32 0.0, %v783
    %785 = vmatprep.mubr.f32.mxu0 0.0
    %786 = vmatmul.mubr.f32.gmra.mrb[0].mxu0 %v155
    %v787 = vpop.f32.mrb[0].mxu0
    %v788 = vadd.f32 0.0, %v787
    %v789 = vpop.f32.mrb[0].mxu0
    %v790 = vadd.f32 0.0, %v789
    %791 = vmatprep.mubr.f32.mxu0 0.0
    %792 = vmatmul.mubr.f32.gmra.mrb[0].mxu0 %v158
    %v793 = vpop.f32.mrb[0].mxu0
    %v794 = vadd.f32 0.0, %v793
    %v795 = vpop.f32.mrb[0].mxu0
    %v796 = vadd.f32 0.0, %v795
    %797 = vmatprep.mubr.f32.mxu0 0.0
    %798 = vmatmul.mubr.f32.gmra.mrb[0].mxu0 %v161
    %v799 = vpop.f32.mrb[0].mxu0
    %v800 = vadd.f32 0.0, %v799
    %v801 = vpop.f32.mrb[0].mxu0
    %v802 = vadd.f32 0.0, %v801
    %803 = vmatprep.mubr.f32.mxu0 0.0
    %804 = vmatmul.mubr.f32.gmra.mrb[0].mxu0 %v164
    %v805 = vpop.f32.mrb[0].mxu0
    %v806 = vadd.f32 0.0, %v805
    %v807 = vpop.f32.mrb[0].mxu0
    %v808 = vadd.f32 0.0, %v807
    %809 = vdwg.mxu0
    %v810 = vld [vmem:[#allocation2] sm:$0xff]
    %v811 = vld [vmem:[#allocation2 + $0x8] sm:$0xff]
    %v812 = vld [vmem:[#allocation2 + $0x10] sm:$0xff]
    %v813 = vld [vmem:[#allocation2 + $0x18] sm:$0xff]
    %v814 = vld [vmem:[#allocation2 + $0x20] sm:$0xff]
    %v815 = vld [vmem:[#allocation2 + $0x28] sm:$0xff]
    %v816 = vld [vmem:[#allocation2 + $0x30] sm:$0xff]
    %v817 = vld [vmem:[#allocation2 + $0x38] sm:$0xff]
    %v818 = vld [vmem:[#allocation2 + $0x40] sm:$0xff]
    %v819 = vld [vmem:[#allocation2 + $0x48] sm:$0xff]
    %v820 = vld [vmem:[#allocation2 + $0x50] sm:$0xff]
    %v821 = vld [vmem:[#allocation2 + $0x58] sm:$0xff]
    %v822 = vld [vmem:[#allocation2 + $0x60] sm:$0xff]
    %v823 = vld [vmem:[#allocation2 + $0x68] sm:$0xff]
    %v824 = vld [vmem:[#allocation2 + $0x70] sm:$0xff]
    %v825 = vld [vmem:[#allocation2 + $0x78] sm:$0xff]
    %v826 = vadd.f32 %v810, %v233
    %v827 = vadd.f32 %v811, %v239
    %v828 = vadd.f32 %v812, %v245
    %v829 = vadd.f32 %v813, %v251
    %v830 = vadd.f32 %v814, %v257
    %v831 = vadd.f32 %v815, %v263
    %v832 = vadd.f32 %v816, %v269
    %v833 = vadd.f32 %v817, %v275
    %v834 = vadd.f32 %v818, %v281
    %v835 = vadd.f32 %v819, %v287
    %v836 = vadd.f32 %v820, %v293
    %v837 = vadd.f32 %v821, %v299
    %v838 = vadd.f32 %v822, %v305
    %v839 = vadd.f32 %v823, %v311
    %v840 = vadd.f32 %v824, %v317
    %v841 = vadd.f32 %v825, %v323
    %842 = vst [vmem:[#allocation2] sm:$0xff] %v826
    %843 = vst [vmem:[#allocation2 + $0x8] sm:$0xff] %v827
    %844 = vst [vmem:[#allocation2 + $0x10] sm:$0xff] %v828
    %845 = vst [vmem:[#allocation2 + $0x18] sm:$0xff] %v829
    %846 = vst [vmem:[#allocation2 + $0x20] sm:$0xff] %v830
    %847 = vst [vmem:[#allocation2 + $0x28] sm:$0xff] %v831
    %848 = vst [vmem:[#allocation2 + $0x30] sm:$0xff] %v832
    %849 = vst [vmem:[#allocation2 + $0x38] sm:$0xff] %v833
    %850 = vst [vmem:[#allocation2 + $0x40] sm:$0xff] %v834
    %851 = vst [vmem:[#allocation2 + $0x48] sm:$0xff] %v835
    %852 = vst [vmem:[#allocation2 + $0x50] sm:$0xff] %v836
    %853 = vst [vmem:[#allocation2 + $0x58] sm:$0xff] %v837
    %854 = vst [vmem:[#allocation2 + $0x60] sm:$0xff] %v838
    %855 = vst [vmem:[#allocation2 + $0x68] sm:$0xff] %v839
    %856 = vst [vmem:[#allocation2 + $0x70] sm:$0xff] %v840
    %857 = vst [vmem:[#allocation2 + $0x78] sm:$0xff] %v841
    %v858 = vld [vmem:[#allocation3] sm:$0xff]
    %v859 = vld [vmem:[#allocation3 + $0x8] sm:$0xff]
    %v860 = vld [vmem:[#allocation3 + $0x10] sm:$0xff]
    %v861 = vld [vmem:[#allocation3 + $0x18] sm:$0xff]
    %v862 = vld [vmem:[#allocation3 + $0x20] sm:$0xff]
    %v863 = vld [vmem:[#allocation3 + $0x28] sm:$0xff]
    %v864 = vld [vmem:[#allocation3 + $0x30] sm:$0xff]
    %v865 = vld [vmem:[#allocation3 + $0x38] sm:$0xff]
    %v866 = vld [vmem:[#allocation3 + $0x40] sm:$0xff]
    %v867 = vld [vmem:[#allocation3 + $0x48] sm:$0xff]
    %v868 = vld [vmem:[#allocation3 + $0x50] sm:$0xff]
    %v869 = vld [vmem:[#allocation3 + $0x58] sm:$0xff]
    %v870 = vld [vmem:[#allocation3 + $0x60] sm:$0xff]
    %v871 = vld [vmem:[#allocation3 + $0x68] sm:$0xff]
    %v872 = vld [vmem:[#allocation3 + $0x70] sm:$0xff]
    %v873 = vld [vmem:[#allocation3 + $0x78] sm:$0xff]
    %v874 = vmul.f32 %v233, %v233
    %v875 = vmul.f32 %v239, %v239
    %v876 = vmul.f32 %v245, %v245
    %v877 = vmul.f32 %v251, %v251
    %v878 = vmul.f32 %v257, %v257
    %v879 = vmul.f32 %v263, %v263
    %v880 = vmul.f32 %v269, %v269
    %v881 = vmul.f32 %v275, %v275
    %v882 = vmul.f32 %v281, %v281
    %v883 = vmul.f32 %v287, %v287
    %v884 = vmul.f32 %v293, %v293
    %v885 = vmul.f32 %v299, %v299
    %v886 = vmul.f32 %v305, %v305
    %v887 = vmul.f32 %v311, %v311
    %v888 = vmul.f32 %v317, %v317
    %v889 = vmul.f32 %v323, %v323
    %v890 = vadd.f32 %v858, %v874
    %v891 = vadd.f32 %v859, %v875
    %v892 = vadd.f32 %v860, %v876
    %v893 = vadd.f32 %v861, %v877
    %v894 = vadd.f32 %v862, %v878
    %v895 = vadd.f32 %v863, %v879
    %v896 = vadd.f32 %v864, %v880
    %v897 = vadd.f32 %v865, %v881
    %v898 = vadd.f32 %v866, %v882
    %v899 = vadd.f32 %v867, %v883
    %v900 = vadd.f32 %v868, %v884
    %v901 = vadd.f32 %v869, %v885
    %v902 = vadd.f32 %v870, %v886
    %v903 = vadd.f32 %v871, %v887
    %v904 = vadd.f32 %v872, %v888
    %v905 = vadd.f32 %v873, %v889
    %906 = vst [vmem:[#allocation3] sm:$0xff] %v890
    %907 = vst [vmem:[#allocation3 + $0x8] sm:$0xff] %v891
    %908 = vst [vmem:[#allocation3 + $0x10] sm:$0xff] %v892
    %909 = vst [vmem:[#allocation3 + $0x18] sm:$0xff] %v893
    %910 = vst [vmem:[#allocation3 + $0x20] sm:$0xff] %v894
    %911 = vst [vmem:[#allocation3 + $0x28] sm:$0xff] %v895
    %912 = vst [vmem:[#allocation3 + $0x30] sm:$0xff] %v896
    %913 = vst [vmem:[#allocation3 + $0x38] sm:$0xff] %v897
    %914 = vst [vmem:[#allocation3 + $0x40] sm:$0xff] %v898
    %915 = vst [vmem:[#allocation3 + $0x48] sm:$0xff] %v899
    %916 = vst [vmem:[#allocation3 + $0x50] sm:$0xff] %v900
    %917 = vst [vmem:[#allocation3 + $0x58] sm:$0xff] %v901
    %918 = vst [vmem:[#allocation3 + $0x60] sm:$0xff] %v902
    %919 = vst [vmem:[#allocation3 + $0x68] sm:$0xff] %v903
    %920 = vst [vmem:[#allocation3 + $0x70] sm:$0xff] %v904
    %921 = vst [vmem:[#allocation3 + $0x78] sm:$0xff] %v905
    %v922 = vld [vmem:[#allocation2] sm:$0xff]
    %v923 = vld [vmem:[#allocation2 + $0x8] sm:$0xff]
    %v924 = vld [vmem:[#allocation2 + $0x10] sm:$0xff]
    %v925 = vld [vmem:[#allocation2 + $0x18] sm:$0xff]
    %v926 = vld [vmem:[#allocation2 + $0x20] sm:$0xff]
    %v927 = vld [vmem:[#allocation2 + $0x28] sm:$0xff]
    %v928 = vld [vmem:[#allocation2 + $0x30] sm:$0xff]
    %v929 = vld [vmem:[#allocation2 + $0x38] sm:$0xff]
    %v930 = vld [vmem:[#allocation2 + $0x40] sm:$0xff]
    %v931 = vld [vmem:[#allocation2 + $0x48] sm:$0xff]
    %v932 = vld [vmem:[#allocation2 + $0x50] sm:$0xff]
    %v933 = vld [vmem:[#allocation2 + $0x58] sm:$0xff]
    %v934 = vld [vmem:[#allocation2 + $0x60] sm:$0xff]
    %v935 = vld [vmem:[#allocation2 + $0x68] sm:$0xff]
    %v936 = vld [vmem:[#allocation2 + $0x70] sm:$0xff]
    %v937 = vld [vmem:[#allocation2 + $0x78] sm:$0xff]
    %v938 = vadd.f32 %v922, %v235
    %v939 = vadd.f32 %v923, %v241
    %v940 = vadd.f32 %v924, %v247
    %v941 = vadd.f32 %v925, %v253
    %v942 = vadd.f32 %v926, %v259
    %v943 = vadd.f32 %v927, %v265
    %v944 = vadd.f32 %v928, %v271
    %v945 = vadd.f32 %v929, %v277
    %v946 = vadd.f32 %v930, %v283
    %v947 = vadd.f32 %v931, %v289
    %v948 = vadd.f32 %v932, %v295
    %v949 = vadd.f32 %v933, %v301
    %v950 = vadd.f32 %v934, %v307
    %v951 = vadd.f32 %v935, %v313
    %v952 = vadd.f32 %v936, %v319
    %v953 = vadd.f32 %v937, %v325
    %954 = vst [vmem:[#allocation2] sm:$0xff] %v938
    %955 = vst [vmem:[#allocation2 + $0x8] sm:$0xff] %v939
    %956 = vst [vmem:[#allocation2 + $0x10] sm:$0xff] %v940
    %957 = vst [vmem:[#allocation2 + $0x18] sm:$0xff] %v941
    %958 = vst [vmem:[#allocation2 + $0x20] sm:$0xff] %v942
    %959 = vst [vmem:[#allocation2 + $0x28] sm:$0xff] %v943
    %960 = vst [vmem:[#allocation2 + $0x30] sm:$0xff] %v944
    %961 = vst [vmem:[#allocation2 + $0x38] sm:$0xff] %v945
    %962 = vst [vmem:[#allocation2 + $0x40] sm:$0xff] %v946
    %963 = vst [vmem:[#allocation2 + $0x48] sm:$0xff] %v947
    %964 = vst [vmem:[#allocation2 + $0x50] sm:$0xff] %v948
    %965 = vst [vmem:[#allocation2 + $0x58] sm:$0xff] %v949
    %966 = vst [vmem:[#allocation2 + $0x60] sm:$0xff] %v950
    %967 = vst [vmem:[#allocation2 + $0x68] sm:$0xff] %v951
    %968 = vst [vmem:[#allocation2 + $0x70] sm:$0xff] %v952
    %969 = vst [vmem:[#allocation2 + $0x78] sm:$0xff] %v953
    %v970 = vld [vmem:[#allocation3] sm:$0xff]
    %v971 = vld [vmem:[#allocation3 + $0x8] sm:$0xff]
    %v972 = vld [vmem:[#allocation3 + $0x10] sm:$0xff]
    %v973 = vld [vmem:[#allocation3 + $0x18] sm:$0xff]
    %v974 = vld [vmem:[#allocation3 + $0x20] sm:$0xff]
    %v975 = vld [vmem:[#allocation3 + $0x28] sm:$0xff]
    %v976 = vld [vmem:[#allocation3 + $0x30] sm:$0xff]
    %v977 = vld [vmem:[#allocation3 + $0x38] sm:$0xff]
    %v978 = vld [vmem:[#allocation3 + $0x40] sm:$0xff]
    %v979 = vld [vmem:[#allocation3 + $0x48] sm:$0xff]
    %v980 = vld [vmem:[#allocation3 + $0x50] sm:$0xff]
    %v981 = vld [vmem:[#allocation3 + $0x58] sm:$0xff]
    %v982 = vld [vmem:[#allocation3 + $0x60] sm:$0xff]
    %v983 = vld [vmem:[#allocation3 + $0x68] sm:$0xff]
    %v984 = vld [vmem:[#allocation3 + $0x70] sm:$0xff]
    %v985 = vld [vmem:[#allocation3 + $0x78] sm:$0xff]
    %v986 = vmul.f32 %v235, %v235
    %v987 = vmul.f32 %v241, %v241
    %v988 = vmul.f32 %v247, %v247
    %v989 = vmul.f32 %v253, %v253
    %v990 = vmul.f32 %v259, %v259
    %v991 = vmul.f32 %v265, %v265
    %v992 = vmul.f32 %v271, %v271
    %v993 = vmul.f32 %v277, %v277
    %v994 = vmul.f32 %v283, %v283
    %v995 = vmul.f32 %v289, %v289
    %v996 = vmul.f32 %v295, %v295
    %v997 = vmul.f32 %v301, %v301
    %v998 = vmul.f32 %v307, %v307
    %v999 = vmul.f32 %v313, %v313
    %v1000 = vmul.f32 %v319, %v319
    %v1001 = vmul.f32 %v325, %v325
    %v1002 = vadd.f32 %v970, %v986
    %v1003 = vadd.f32 %v971, %v987
    %v1004 = vadd.f32 %v972, %v988
    %v1005 = vadd.f32 %v973, %v989
    %v1006 = vadd.f32 %v974, %v990
    %v1007 = vadd.f32 %v975, %v991
    %v1008 = vadd.f32 %v976, %v992
    %v1009 = vadd.f32 %v977, %v993
    %v1010 = vadd.f32 %v978, %v994
    %v1011 = vadd.f32 %v979, %v995
    %v1012 = vadd.f32 %v980, %v996
    %v1013 = vadd.f32 %v981, %v997
    %v1014 = vadd.f32 %v982, %v998
    %v1015 = vadd.f32 %v983, %v999
    %v1016 = vadd.f32 %v984, %v1000
    %v1017 = vadd.f32 %v985, %v1001
    %1018 = vst [vmem:[#allocation3] sm:$0xff] %v1002
    %1019 = vst [vmem:[#allocation3 + $0x8] sm:$0xff] %v1003
    %1020 = vst [vmem:[#allocation3 + $0x10] sm:$0xff] %v1004
    %1021 = vst [vmem:[#allocation3 + $0x18] sm:$0xff] %v1005
    %1022 = vst [vmem:[#allocation3 + $0x20] sm:$0xff] %v1006
    %1023 = vst [vmem:[#allocation3 + $0x28] sm:$0xff] %v1007
    %1024 = vst [vmem:[#allocation3 + $0x30] sm:$0xff] %v1008
    %1025 = vst [vmem:[#allocation3 + $0x38] sm:$0xff] %v1009
    %1026 = vst [vmem:[#allocation3 + $0x40] sm:$0xff] %v1010
    %1027 = vst [vmem:[#allocation3 + $0x48] sm:$0xff] %v1011
    %1028 = vst [vmem:[#allocation3 + $0x50] sm:$0xff] %v1012
    %1029 = vst [vmem:[#allocation3 + $0x58] sm:$0xff] %v1013
    %1030 = vst [vmem:[#allocation3 + $0x60] sm:$0xff] %v1014
    %1031 = vst [vmem:[#allocation3 + $0x68] sm:$0xff] %v1015
    %1032 = vst [vmem:[#allocation3 + $0x70] sm:$0xff] %v1016
    %1033 = vst [vmem:[#allocation3 + $0x78] sm:$0xff] %v1017
    %v1034 = vld [vmem:[#allocation2] sm:$0xff]
    %v1035 = vld [vmem:[#allocation2 + $0x8] sm:$0xff]
    %v1036 = vld [vmem:[#allocation2 + $0x10] sm:$0xff]
    %v1037 = vld [vmem:[#allocation2 + $0x18] sm:$0xff]
    %v1038 = vld [vmem:[#allocation2 + $0x20] sm:$0xff]
    %v1039 = vld [vmem:[#allocation2 + $0x28] sm:$0xff]
    %v1040 = vld [vmem:[#allocation2 + $0x30] sm:$0xff]
    %v1041 = vld [vmem:[#allocation2 + $0x38] sm:$0xff]
    %v1042 = vld [vmem:[#allocation2 + $0x40] sm:$0xff]
    %v1043 = vld [vmem:[#allocation2 + $0x48] sm:$0xff]
    %v1044 = vld [vmem:[#allocation2 + $0x50] sm:$0xff]
    %v1045 = vld [vmem:[#allocation2 + $0x58] sm:$0xff]
    %v1046 = vld [vmem:[#allocation2 + $0x60] sm:$0xff]
    %v1047 = vld [vmem:[#allocation2 + $0x68] sm:$0xff]
    %v1048 = vld [vmem:[#allocation2 + $0x70] sm:$0xff]
    %v1049 = vld [vmem:[#allocation2 + $0x78] sm:$0xff]
    %v1050 = vadd.f32 %v1034, %v394
    %v1051 = vadd.f32 %v1035, %v400
    %v1052 = vadd.f32 %v1036, %v406
    %v1053 = vadd.f32 %v1037, %v412
    %v1054 = vadd.f32 %v1038, %v418
    %v1055 = vadd.f32 %v1039, %v424
    %v1056 = vadd.f32 %v1040, %v430
    %v1057 = vadd.f32 %v1041, %v436
    %v1058 = vadd.f32 %v1042, %v442
    %v1059 = vadd.f32 %v1043, %v448
    %v1060 = vadd.f32 %v1044, %v454
    %v1061 = vadd.f32 %v1045, %v460
    %v1062 = vadd.f32 %v1046, %v466
    %v1063 = vadd.f32 %v1047, %v472
    %v1064 = vadd.f32 %v1048, %v478
    %v1065 = vadd.f32 %v1049, %v484
    %1066 = vst [vmem:[#allocation2] sm:$0xff] %v1050
    %1067 = vst [vmem:[#allocation2 + $0x8] sm:$0xff] %v1051
    %1068 = vst [vmem:[#allocation2 + $0x10] sm:$0xff] %v1052
    %1069 = vst [vmem:[#allocation2 + $0x18] sm:$0xff] %v1053
    %1070 = vst [vmem:[#allocation2 + $0x20] sm:$0xff] %v1054
    %1071 = vst [vmem:[#allocation2 + $0x28] sm:$0xff] %v1055
    %1072 = vst [vmem:[#allocation2 + $0x30] sm:$0xff] %v1056
    %1073 = vst [vmem:[#allocation2 + $0x38] sm:$0xff] %v1057
    %1074 = vst [vmem:[#allocation2 + $0x40] sm:$0xff] %v1058
    %1075 = vst [vmem:[#allocation2 + $0x48] sm:$0xff] %v1059
    %1076 = vst [vmem:[#allocation2 + $0x50] sm:$0xff] %v1060
    %1077 = vst [vmem:[#allocation2 + $0x58] sm:$0xff] %v1061
    %1078 = vst [vmem:[#allocation2 + $0x60] sm:$0xff] %v1062
    %1079 = vst [vmem:[#allocation2 + $0x68] sm:$0xff] %v1063
    %1080 = vst [vmem:[#allocation2 + $0x70] sm:$0xff] %v1064
    %1081 = vst [vmem:[#allocation2 + $0x78] sm:$0xff] %v1065
    %v1082 = vld [vmem:[#allocation3] sm:$0xff]
    %v1083 = vld [vmem:[#allocation3 + $0x8] sm:$0xff]
    %v1084 = vld [vmem:[#allocation3 + $0x10] sm:$0xff]
    %v1085 = vld [vmem:[#allocation3 + $0x18] sm:$0xff]
    %v1086 = vld [vmem:[#allocation3 + $0x20] sm:$0xff]
    %v1087 = vld [vmem:[#allocation3 + $0x28] sm:$0xff]
    %v1088 = vld [vmem:[#allocation3 + $0x30] sm:$0xff]
    %v1089 = vld [vmem:[#allocation3 + $0x38] sm:$0xff]
    %v1090 = vld [vmem:[#allocation3 + $0x40] sm:$0xff]
    %v1091 = vld [vmem:[#allocation3 + $0x48] sm:$0xff]
    %v1092 = vld [vmem:[#allocation3 + $0x50] sm:$0xff]
    %v1093 = vld [vmem:[#allocation3 + $0x58] sm:$0xff]
    %v1094 = vld [vmem:[#allocation3 + $0x60] sm:$0xff]
    %v1095 = vld [vmem:[#allocation3 + $0x68] sm:$0xff]
    %v1096 = vld [vmem:[#allocation3 + $0x70] sm:$0xff]
    %v1097 = vld [vmem:[#allocation3 + $0x78] sm:$0xff]
    %v1098 = vmul.f32 %v394, %v394
    %v1099 = vmul.f32 %v400, %v400
    %v1100 = vmul.f32 %v406, %v406
    %v1101 = vmul.f32 %v412, %v412
    %v1102 = vmul.f32 %v418, %v418
    %v1103 = vmul.f32 %v424, %v424
    %v1104 = vmul.f32 %v430, %v430
    %v1105 = vmul.f32 %v436, %v436
    %v1106 = vmul.f32 %v442, %v442
    %v1107 = vmul.f32 %v448, %v448
    %v1108 = vmul.f32 %v454, %v454
    %v1109 = vmul.f32 %v460, %v460
    %v1110 = vmul.f32 %v466, %v466
    %v1111 = vmul.f32 %v472, %v472
    %v1112 = vmul.f32 %v478, %v478
    %v1113 = vmul.f32 %v484, %v484
    %v1114 = vadd.f32 %v1082, %v1098
    %v1115 = vadd.f32 %v1083, %v1099
    %v1116 = vadd.f32 %v1084, %v1100
    %v1117 = vadd.f32 %v1085, %v1101
    %v1118 = vadd.f32 %v1086, %v1102
    %v1119 = vadd.f32 %v1087, %v1103
    %v1120 = vadd.f32 %v1088, %v1104
    %v1121 = vadd.f32 %v1089, %v1105
    %v1122 = vadd.f32 %v1090, %v1106
    %v1123 = vadd.f32 %v1091, %v1107
    %v1124 = vadd.f32 %v1092, %v1108
    %v1125 = vadd.f32 %v1093, %v1109
    %v1126 = vadd.f32 %v1094, %v1110
    %v1127 = vadd.f32 %v1095, %v1111
    %v1128 = vadd.f32 %v1096, %v1112
    %v1129 = vadd.f32 %v1097, %v1113
    %1130 = vst [vmem:[#allocation3] sm:$0xff] %v1114
    %1131 = vst [vmem:[#allocation3 + $0x8] sm:$0xff] %v1115
    %1132 = vst [vmem:[#allocation3 + $0x10] sm:$0xff] %v1116
    %1133 = vst [vmem:[#allocation3 + $0x18] sm:$0xff] %v1117
    %1134 = vst [vmem:[#allocation3 + $0x20] sm:$0xff] %v1118
    %1135 = vst [vmem:[#allocation3 + $0x28] sm:$0xff] %v1119
    %1136 = vst [vmem:[#allocation3 + $0x30] sm:$0xff] %v1120
    %1137 = vst [vmem:[#allocation3 + $0x38] sm:$0xff] %v1121
    %1138 = vst [vmem:[#allocation3 + $0x40] sm:$0xff] %v1122
    %1139 = vst [vmem:[#allocation3 + $0x48] sm:$0xff] %v1123
    %1140 = vst [vmem:[#allocation3 + $0x50] sm:$0xff] %v1124
    %1141 = vst [vmem:[#allocation3 + $0x58] sm:$0xff] %v1125
    %1142 = vst [vmem:[#allocation3 + $0x60] sm:$0xff] %v1126
    %1143 = vst [vmem:[#allocation3 + $0x68] sm:$0xff] %v1127
    %1144 = vst [vmem:[#allocation3 + $0x70] sm:$0xff] %v1128
    %1145 = vst [vmem:[#allocation3 + $0x78] sm:$0xff] %v1129
    %v1146 = vld [vmem:[#allocation2] sm:$0xff]
    %v1147 = vld [vmem:[#allocation2 + $0x8] sm:$0xff]
    %v1148 = vld [vmem:[#allocation2 + $0x10] sm:$0xff]
    %v1149 = vld [vmem:[#allocation2 + $0x18] sm:$0xff]
    %v1150 = vld [vmem:[#allocation2 + $0x20] sm:$0xff]
    %v1151 = vld [vmem:[#allocation2 + $0x28] sm:$0xff]
    %v1152 = vld [vmem:[#allocation2 + $0x30] sm:$0xff]
    %v1153 = vld [vmem:[#allocation2 + $0x38] sm:$0xff]
    %v1154 = vld [vmem:[#allocation2 + $0x40] sm:$0xff]
    %v1155 = vld [vmem:[#allocation2 + $0x48] sm:$0xff]
    %v1156 = vld [vmem:[#allocation2 + $0x50] sm:$0xff]
    %v1157 = vld [vmem:[#allocation2 + $0x58] sm:$0xff]
    %v1158 = vld [vmem:[#allocation2 + $0x60] sm:$0xff]
    %v1159 = vld [vmem:[#allocation2 + $0x68] sm:$0xff]
    %v1160 = vld [vmem:[#allocation2 + $0x70] sm:$0xff]
    %v1161 = vld [vmem:[#allocation2 + $0x78] sm:$0xff]
    %v1162 = vadd.f32 %v1146, %v396
    %v1163 = vadd.f32 %v1147, %v402
    %v1164 = vadd.f32 %v1148, %v408
    %v1165 = vadd.f32 %v1149, %v414
    %v1166 = vadd.f32 %v1150, %v420
    %v1167 = vadd.f32 %v1151, %v426
    %v1168 = vadd.f32 %v1152, %v432
    %v1169 = vadd.f32 %v1153, %v438
    %v1170 = vadd.f32 %v1154, %v444
    %v1171 = vadd.f32 %v1155, %v450
    %v1172 = vadd.f32 %v1156, %v456
    %v1173 = vadd.f32 %v1157, %v462
    %v1174 = vadd.f32 %v1158, %v468
    %v1175 = vadd.f32 %v1159, %v474
    %v1176 = vadd.f32 %v1160, %v480
    %v1177 = vadd.f32 %v1161, %v486
    %1178 = vst [vmem:[#allocation2] sm:$0xff] %v1162
    %1179 = vst [vmem:[#allocation2 + $0x8] sm:$0xff] %v1163
    %1180 = vst [vmem:[#allocation2 + $0x10] sm:$0xff] %v1164
    %1181 = vst [vmem:[#allocation2 + $0x18] sm:$0xff] %v1165
    %1182 = vst [vmem:[#allocation2 + $0x20] sm:$0xff] %v1166
    %1183 = vst [vmem:[#allocation2 + $0x28] sm:$0xff] %v1167
    %1184 = vst [vmem:[#allocation2 + $0x30] sm:$0xff] %v1168
    %1185 = vst [vmem:[#allocation2 + $0x38] sm:$0xff] %v1169
    %1186 = vst [vmem:[#allocation2 + $0x40] sm:$0xff] %v1170
    %1187 = vst [vmem:[#allocation2 + $0x48] sm:$0xff] %v1171
    %1188 = vst [vmem:[#allocation2 + $0x50] sm:$0xff] %v1172
    %1189 = vst [vmem:[#allocation2 + $0x58] sm:$0xff] %v1173
    %1190 = vst [vmem:[#allocation2 + $0x60] sm:$0xff] %v1174
    %1191 = vst [vmem:[#allocation2 + $0x68] sm:$0xff] %v1175
    %1192 = vst [vmem:[#allocation2 + $0x70] sm:$0xff] %v1176
    %1193 = vst [vmem:[#allocation2 + $0x78] sm:$0xff] %v1177
    %v1194 = vld [vmem:[#allocation3] sm:$0xff]
    %v1195 = vld [vmem:[#allocation3 + $0x8] sm:$0xff]
    %v1196 = vld [vmem:[#allocation3 + $0x10] sm:$0xff]
    %v1197 = vld [vmem:[#allocation3 + $0x18] sm:$0xff]
    %v1198 = vld [vmem:[#allocation3 + $0x20] sm:$0xff]
    %v1199 = vld [vmem:[#allocation3 + $0x28] sm:$0xff]
    %v1200 = vld [vmem:[#allocation3 + $0x30] sm:$0xff]
    %v1201 = vld [vmem:[#allocation3 + $0x38] sm:$0xff]
    %v1202 = vld [vmem:[#allocation3 + $0x40] sm:$0xff]
    %v1203 = vld [vmem:[#allocation3 + $0x48] sm:$0xff]
    %v1204 = vld [vmem:[#allocation3 + $0x50] sm:$0xff]
    %v1205 = vld [vmem:[#allocation3 + $0x58] sm:$0xff]
    %v1206 = vld [vmem:[#allocation3 + $0x60] sm:$0xff]
    %v1207 = vld [vmem:[#allocation3 + $0x68] sm:$0xff]
    %v1208 = vld [vmem:[#allocation3 + $0x70] sm:$0xff]
    %v1209 = vld [vmem:[#allocation3 + $0x78] sm:$0xff]
    %v1210 = vmul.f32 %v396, %v396
    %v1211 = vmul.f32 %v402, %v402
    %v1212 = vmul.f32 %v408, %v408
    %v1213 = vmul.f32 %v414, %v414
    %v1214 = vmul.f32 %v420, %v420
    %v1215 = vmul.f32 %v426, %v426
    %v1216 = vmul.f32 %v432, %v432
    %v1217 = vmul.f32 %v438, %v438
    %v1218 = vmul.f32 %v444, %v444
    %v1219 = vmul.f32 %v450, %v450
    %v1220 = vmul.f32 %v456, %v456
    %v1221 = vmul.f32 %v462, %v462
    %v1222 = vmul.f32 %v468, %v468
    %v1223 = vmul.f32 %v474, %v474
    %v1224 = vmul.f32 %v480, %v480
    %v1225 = vmul.f32 %v486, %v486
    %v1226 = vadd.f32 %v1194, %v1210
    %v1227 = vadd.f32 %v1195, %v1211
    %v1228 = vadd.f32 %v1196, %v1212
    %v1229 = vadd.f32 %v1197, %v1213
    %v1230 = vadd.f32 %v1198, %v1214
    %v1231 = vadd.f32 %v1199, %v1215
    %v1232 = vadd.f32 %v1200, %v1216
    %v1233 = vadd.f32 %v1201, %v1217
    %v1234 = vadd.f32 %v1202, %v1218
    %v1235 = vadd.f32 %v1203, %v1219
    %v1236 = vadd.f32 %v1204, %v1220
    %v1237 = vadd.f32 %v1205, %v1221
    %v1238 = vadd.f32 %v1206, %v1222
    %v1239 = vadd.f32 %v1207, %v1223
    %v1240 = vadd.f32 %v1208, %v1224
    %v1241 = vadd.f32 %v1209, %v1225
    %1242 = vst [vmem:[#allocation3] sm:$0xff] %v1226
    %1243 = vst [vmem:[#allocation3 + $0x8] sm:$0xff] %v1227
    %1244 = vst [vmem:[#allocation3 + $0x10] sm:$0xff] %v1228
    %1245 = vst [vmem:[#allocation3 + $0x18] sm:$0xff] %v1229
    %1246 = vst [vmem:[#allocation3 + $0x20] sm:$0xff] %v1230
    %1247 = vst [vmem:[#allocation3 + $0x28] sm:$0xff] %v1231
    %1248 = vst [vmem:[#allocation3 + $0x30] sm:$0xff] %v1232
    %1249 = vst [vmem:[#allocation3 + $0x38] sm:$0xff] %v1233
    %1250 = vst [vmem:[#allocation3 + $0x40] sm:$0xff] %v1234
    %1251 = vst [vmem:[#allocation3 + $0x48] sm:$0xff] %v1235
    %1252 = vst [vmem:[#allocation3 + $0x50] sm:$0xff] %v1236
    %1253 = vst [vmem:[#allocation3 + $0x58] sm:$0xff] %v1237
    %1254 = vst [vmem:[#allocation3 + $0x60] sm:$0xff] %v1238
    %1255 = vst [vmem:[#allocation3 + $0x68] sm:$0xff] %v1239
    %1256 = vst [vmem:[#allocation3 + $0x70] sm:$0xff] %v1240
    %1257 = vst [vmem:[#allocation3 + $0x78] sm:$0xff] %v1241
    %v1258 = vld [vmem:[#allocation2] sm:$0xff]
    %v1259 = vld [vmem:[#allocation2 + $0x8] sm:$0xff]
    %v1260 = vld [vmem:[#allocation2 + $0x10] sm:$0xff]
    %v1261 = vld [vmem:[#allocation2 + $0x18] sm:$0xff]
    %v1262 = vld [vmem:[#allocation2 + $0x20] sm:$0xff]
    %v1263 = vld [vmem:[#allocation2 + $0x28] sm:$0xff]
    %v1264 = vld [vmem:[#allocation2 + $0x30] sm:$0xff]
    %v1265 = vld [vmem:[#allocation2 + $0x38] sm:$0xff]
    %v1266 = vld [vmem:[#allocation2 + $0x40] sm:$0xff]
    %v1267 = vld [vmem:[#allocation2 + $0x48] sm:$0xff]
    %v1268 = vld [vmem:[#allocation2 + $0x50] sm:$0xff]
    %v1269 = vld [vmem:[#allocation2 + $0x58] sm:$0xff]
    %v1270 = vld [vmem:[#allocation2 + $0x60] sm:$0xff]
    %v1271 = vld [vmem:[#allocation2 + $0x68] sm:$0xff]
    %v1272 = vld [vmem:[#allocation2 + $0x70] sm:$0xff]
    %v1273 = vld [vmem:[#allocation2 + $0x78] sm:$0xff]
    %v1274 = vadd.f32 %v1258, %v555
    %v1275 = vadd.f32 %v1259, %v561
    %v1276 = vadd.f32 %v1260, %v567
    %v1277 = vadd.f32 %v1261, %v573
    %v1278 = vadd.f32 %v1262, %v579
    %v1279 = vadd.f32 %v1263, %v585
    %v1280 = vadd.f32 %v1264, %v591
    %v1281 = vadd.f32 %v1265, %v597
    %v1282 = vadd.f32 %v1266, %v603
    %v1283 = vadd.f32 %v1267, %v609
    %v1284 = vadd.f32 %v1268, %v615
    %v1285 = vadd.f32 %v1269, %v621
    %v1286 = vadd.f32 %v1270, %v627
    %v1287 = vadd.f32 %v1271, %v633
    %v1288 = vadd.f32 %v1272, %v639
    %v1289 = vadd.f32 %v1273, %v645
    %1290 = vst [vmem:[#allocation2] sm:$0xff] %v1274
    %1291 = vst [vmem:[#allocation2 + $0x8] sm:$0xff] %v1275
    %1292 = vst [vmem:[#allocation2 + $0x10] sm:$0xff] %v1276
    %1293 = vst [vmem:[#allocation2 + $0x18] sm:$0xff] %v1277
    %1294 = vst [vmem:[#allocation2 + $0x20] sm:$0xff] %v1278
    %1295 = vst [vmem:[#allocation2 + $0x28] sm:$0xff] %v1279
    %1296 = vst [vmem:[#allocation2 + $0x30] sm:$0xff] %v1280
    %1297 = vst [vmem:[#allocation2 + $0x38] sm:$0xff] %v1281
    %1298 = vst [vmem:[#allocation2 + $0x40] sm:$0xff] %v1282
    %1299 = vst [vmem:[#allocation2 + $0x48] sm:$0xff] %v1283
    %1300 = vst [vmem:[#allocation2 + $0x50] sm:$0xff] %v1284
    %1301 = vst [vmem:[#allocation2 + $0x58] sm:$0xff] %v1285
    %1302 = vst [vmem:[#allocation2 + $0x60] sm:$0xff] %v1286
    %1303 = vst [vmem:[#allocation2 + $0x68] sm:$0xff] %v1287
    %1304 = vst [vmem:[#allocation2 + $0x70] sm:$0xff] %v1288
    %1305 = vst [vmem:[#allocation2 + $0x78] sm:$0xff] %v1289
    %v1306 = vld [vmem:[#allocation3] sm:$0xff]
    %v1307 = vld [vmem:[#allocation3 + $0x8] sm:$0xff]
    %v1308 = vld [vmem:[#allocation3 + $0x10] sm:$0xff]
    %v1309 = vld [vmem:[#allocation3 + $0x18] sm:$0xff]
    %v1310 = vld [vmem:[#allocation3 + $0x20] sm:$0xff]
    %v1311 = vld [vmem:[#allocation3 + $0x28] sm:$0xff]
    %v1312 = vld [vmem:[#allocation3 + $0x30] sm:$0xff]
    %v1313 = vld [vmem:[#allocation3 + $0x38] sm:$0xff]
    %v1314 = vld [vmem:[#allocation3 + $0x40] sm:$0xff]
    %v1315 = vld [vmem:[#allocation3 + $0x48] sm:$0xff]
    %v1316 = vld [vmem:[#allocation3 + $0x50] sm:$0xff]
    %v1317 = vld [vmem:[#allocation3 + $0x58] sm:$0xff]
    %v1318 = vld [vmem:[#allocation3 + $0x60] sm:$0xff]
    %v1319 = vld [vmem:[#allocation3 + $0x68] sm:$0xff]
    %v1320 = vld [vmem:[#allocation3 + $0x70] sm:$0xff]
    %v1321 = vld [vmem:[#allocation3 + $0x78] sm:$0xff]
    %v1322 = vmul.f32 %v555, %v555
    %v1323 = vmul.f32 %v561, %v561
    %v1324 = vmul.f32 %v567, %v567
    %v1325 = vmul.f32 %v573, %v573
    %v1326 = vmul.f32 %v579, %v579
    %v1327 = vmul.f32 %v585, %v585
    %v1328 = vmul.f32 %v591, %v591
    %v1329 = vmul.f32 %v597, %v597
    %v1330 = vmul.f32 %v603, %v603
    %v1331 = vmul.f32 %v609, %v609
    %v1332 = vmul.f32 %v615, %v615
    %v1333 = vmul.f32 %v621, %v621
    %v1334 = vmul.f32 %v627, %v627
    %v1335 = vmul.f32 %v633, %v633
    %v1336 = vmul.f32 %v639, %v639
    %v1337 = vmul.f32 %v645, %v645
    %v1338 = vadd.f32 %v1306, %v1322
    %v1339 = vadd.f32 %v1307, %v1323
    %v1340 = vadd.f32 %v1308, %v1324
    %v1341 = vadd.f32 %v1309, %v1325
    %v1342 = vadd.f32 %v1310, %v1326
    %v1343 = vadd.f32 %v1311, %v1327
    %v1344 = vadd.f32 %v1312, %v1328
    %v1345 = vadd.f32 %v1313, %v1329
    %v1346 = vadd.f32 %v1314, %v1330
    %v1347 = vadd.f32 %v1315, %v1331
    %v1348 = vadd.f32 %v1316, %v1332
    %v1349 = vadd.f32 %v1317, %v1333
    %v1350 = vadd.f32 %v1318, %v1334
    %v1351 = vadd.f32 %v1319, %v1335
    %v1352 = vadd.f32 %v1320, %v1336
    %v1353 = vadd.f32 %v1321, %v1337
    %1354 = vst [vmem:[#allocation3] sm:$0xff] %v1338
    %1355 = vst [vmem:[#allocation3 + $0x8] sm:$0xff] %v1339
    %1356 = vst [vmem:[#allocation3 + $0x10] sm:$0xff] %v1340
    %1357 = vst [vmem:[#allocation3 + $0x18] sm:$0xff] %v1341
    %1358 = vst [vmem:[#allocation3 + $0x20] sm:$0xff] %v1342
    %1359 = vst [vmem:[#allocation3 + $0x28] sm:$0xff] %v1343
    %1360 = vst [vmem:[#allocation3 + $0x30] sm:$0xff] %v1344
    %1361 = vst [vmem:[#allocation3 + $0x38] sm:$0xff] %v1345
    %1362 = vst [vmem:[#allocation3 + $0x40] sm:$0xff] %v1346
    %1363 = vst [vmem:[#allocation3 + $0x48] sm:$0xff] %v1347
    %1364 = vst [vmem:[#allocation3 + $0x50] sm:$0xff] %v1348
    %1365 = vst [vmem:[#allocation3 + $0x58] sm:$0xff] %v1349
    %1366 = vst [vmem:[#allocation3 + $0x60] sm:$0xff] %v1350
    %1367 = vst [vmem:[#allocation3 + $0x68] sm:$0xff] %v1351
    %1368 = vst [vmem:[#allocation3 + $0x70] sm:$0xff] %v1352
    %1369 = vst [vmem:[#allocation3 + $0x78] sm:$0xff] %v1353
    %v1370 = vld [vmem:[#allocation2] sm:$0xff]
    %v1371 = vld [vmem:[#allocation2 + $0x8] sm:$0xff]
    %v1372 = vld [vmem:[#allocation2 + $0x10] sm:$0xff]
    %v1373 = vld [vmem:[#allocation2 + $0x18] sm:$0xff]
    %v1374 = vld [vmem:[#allocation2 + $0x20] sm:$0xff]
    %v1375 = vld [vmem:[#allocation2 + $0x28] sm:$0xff]
    %v1376 = vld [vmem:[#allocation2 + $0x30] sm:$0xff]
    %v1377 = vld [vmem:[#allocation2 + $0x38] sm:$0xff]
    %v1378 = vld [vmem:[#allocation2 + $0x40] sm:$0xff]
    %v1379 = vld [vmem:[#allocation2 + $0x48] sm:$0xff]
    %v1380 = vld [vmem:[#allocation2 + $0x50] sm:$0xff]
    %v1381 = vld [vmem:[#allocation2 + $0x58] sm:$0xff]
    %v1382 = vld [vmem:[#allocation2 + $0x60] sm:$0xff]
    %v1383 = vld [vmem:[#allocation2 + $0x68] sm:$0xff]
    %v1384 = vld [vmem:[#allocation2 + $0x70] sm:$0xff]
    %v1385 = vld [vmem:[#allocation2 + $0x78] sm:$0xff]
    %v1386 = vadd.f32 %v1370, %v557
    %v1387 = vadd.f32 %v1371, %v563
    %v1388 = vadd.f32 %v1372, %v569
    %v1389 = vadd.f32 %v1373, %v575
    %v1390 = vadd.f32 %v1374, %v581
    %v1391 = vadd.f32 %v1375, %v587
    %v1392 = vadd.f32 %v1376, %v593
    %v1393 = vadd.f32 %v1377, %v599
    %v1394 = vadd.f32 %v1378, %v605
    %v1395 = vadd.f32 %v1379, %v611
    %v1396 = vadd.f32 %v1380, %v617
    %v1397 = vadd.f32 %v1381, %v623
    %v1398 = vadd.f32 %v1382, %v629
    %v1399 = vadd.f32 %v1383, %v635
    %v1400 = vadd.f32 %v1384, %v641
    %v1401 = vadd.f32 %v1385, %v647
    %1402 = vst [vmem:[#allocation2] sm:$0xff] %v1386
    %1403 = vst [vmem:[#allocation2 + $0x8] sm:$0xff] %v1387
    %1404 = vst [vmem:[#allocation2 + $0x10] sm:$0xff] %v1388
    %1405 = vst [vmem:[#allocation2 + $0x18] sm:$0xff] %v1389
    %1406 = vst [vmem:[#allocation2 + $0x20] sm:$0xff] %v1390
    %1407 = vst [vmem:[#allocation2 + $0x28] sm:$0xff] %v1391
    %1408 = vst [vmem:[#allocation2 + $0x30] sm:$0xff] %v1392
    %1409 = vst [vmem:[#allocation2 + $0x38] sm:$0xff] %v1393
    %1410 = vst [vmem:[#allocation2 + $0x40] sm:$0xff] %v1394
    %1411 = vst [vmem:[#allocation2 + $0x48] sm:$0xff] %v1395
    %1412 = vst [vmem:[#allocation2 + $0x50] sm:$0xff] %v1396
    %1413 = vst [vmem:[#allocation2 + $0x58] sm:$0xff] %v1397
    %1414 = vst [vmem:[#allocation2 + $0x60] sm:$0xff] %v1398
    %1415 = vst [vmem:[#allocation2 + $0x68] sm:$0xff] %v1399
    %1416 = vst [vmem:[#allocation2 + $0x70] sm:$0xff] %v1400
    %1417 = vst [vmem:[#allocation2 + $0x78] sm:$0xff] %v1401
    %v1418 = vld [vmem:[#allocation3] sm:$0xff]
    %v1419 = vld [vmem:[#allocation3 + $0x8] sm:$0xff]
    %v1420 = vld [vmem:[#allocation3 + $0x10] sm:$0xff]
    %v1421 = vld [vmem:[#allocation3 + $0x18] sm:$0xff]
    %v1422 = vld [vmem:[#allocation3 + $0x20] sm:$0xff]
    %v1423 = vld [vmem:[#allocation3 + $0x28] sm:$0xff]
    %v1424 = vld [vmem:[#allocation3 + $0x30] sm:$0xff]
    %v1425 = vld [vmem:[#allocation3 + $0x38] sm:$0xff]
    %v1426 = vld [vmem:[#allocation3 + $0x40] sm:$0xff]
    %v1427 = vld [vmem:[#allocation3 + $0x48] sm:$0xff]
    %v1428 = vld [vmem:[#allocation3 + $0x50] sm:$0xff]
    %v1429 = vld [vmem:[#allocation3 + $0x58] sm:$0xff]
    %v1430 = vld [vmem:[#allocation3 + $0x60] sm:$0xff]
    %v1431 = vld [vmem:[#allocation3 + $0x68] sm:$0xff]
    %v1432 = vld [vmem:[#allocation3 + $0x70] sm:$0xff]
    %v1433 = vld [vmem:[#allocation3 + $0x78] sm:$0xff]
    %v1434 = vmul.f32 %v557, %v557
    %v1435 = vmul.f32 %v563, %v563
    %v1436 = vmul.f32 %v569, %v569
    %v1437 = vmul.f32 %v575, %v575
    %v1438 = vmul.f32 %v581, %v581
    %v1439 = vmul.f32 %v587, %v587
    %v1440 = vmul.f32 %v593, %v593
    %v1441 = vmul.f32 %v599, %v599
    %v1442 = vmul.f32 %v605, %v605
    %v1443 = vmul.f32 %v611, %v611
    %v1444 = vmul.f32 %v617, %v617
    %v1445 = vmul.f32 %v623, %v623
    %v1446 = vmul.f32 %v629, %v629
    %v1447 = vmul.f32 %v635, %v635
    %v1448 = vmul.f32 %v641, %v641
    %v1449 = vmul.f32 %v647, %v647
    %v1450 = vadd.f32 %v1418, %v1434
    %v1451 = vadd.f32 %v1419, %v1435
    %v1452 = vadd.f32 %v1420, %v1436
    %v1453 = vadd.f32 %v1421, %v1437
    %v1454 = vadd.f32 %v1422, %v1438
    %v1455 = vadd.f32 %v1423, %v1439
    %v1456 = vadd.f32 %v1424, %v1440
    %v1457 = vadd.f32 %v1425, %v1441
    %v1458 = vadd.f32 %v1426, %v1442
    %v1459 = vadd.f32 %v1427, %v1443
    %v1460 = vadd.f32 %v1428, %v1444
    %v1461 = vadd.f32 %v1429, %v1445
    %v1462 = vadd.f32 %v1430, %v1446
    %v1463 = vadd.f32 %v1431, %v1447
    %v1464 = vadd.f32 %v1432, %v1448
    %v1465 = vadd.f32 %v1433, %v1449
    %1466 = vst [vmem:[#allocation3] sm:$0xff] %v1450
    %1467 = vst [vmem:[#allocation3 + $0x8] sm:$0xff] %v1451
    %1468 = vst [vmem:[#allocation3 + $0x10] sm:$0xff] %v1452
    %1469 = vst [vmem:[#allocation3 + $0x18] sm:$0xff] %v1453
    %1470 = vst [vmem:[#allocation3 + $0x20] sm:$0xff] %v1454
    %1471 = vst [vmem:[#allocation3 + $0x28] sm:$0xff] %v1455
    %1472 = vst [vmem:[#allocation3 + $0x30] sm:$0xff] %v1456
    %1473 = vst [vmem:[#allocation3 + $0x38] sm:$0xff] %v1457
    %1474 = vst [vmem:[#allocation3 + $0x40] sm:$0xff] %v1458
    %1475 = vst [vmem:[#allocation3 + $0x48] sm:$0xff] %v1459
    %1476 = vst [vmem:[#allocation3 + $0x50] sm:$0xff] %v1460
    %1477 = vst [vmem:[#allocation3 + $0x58] sm:$0xff] %v1461
    %1478 = vst [vmem:[#allocation3 + $0x60] sm:$0xff] %v1462
    %1479 = vst [vmem:[#allocation3 + $0x68] sm:$0xff] %v1463
    %1480 = vst [vmem:[#allocation3 + $0x70] sm:$0xff] %v1464
    %1481 = vst [vmem:[#allocation3 + $0x78] sm:$0xff] %v1465
    %v1482 = vld [vmem:[#allocation2] sm:$0xff]
    %v1483 = vld [vmem:[#allocation2 + $0x8] sm:$0xff]
    %v1484 = vld [vmem:[#allocation2 + $0x10] sm:$0xff]
    %v1485 = vld [vmem:[#allocation2 + $0x18] sm:$0xff]
    %v1486 = vld [vmem:[#allocation2 + $0x20] sm:$0xff]
    %v1487 = vld [vmem:[#allocation2 + $0x28] sm:$0xff]
    %v1488 = vld [vmem:[#allocation2 + $0x30] sm:$0xff]
    %v1489 = vld [vmem:[#allocation2 + $0x38] sm:$0xff]
    %v1490 = vld [vmem:[#allocation2 + $0x40] sm:$0xff]
    %v1491 = vld [vmem:[#allocation2 + $0x48] sm:$0xff]
    %v1492 = vld [vmem:[#allocation2 + $0x50] sm:$0xff]
    %v1493 = vld [vmem:[#allocation2 + $0x58] sm:$0xff]
    %v1494 = vld [vmem:[#allocation2 + $0x60] sm:$0xff]
    %v1495 = vld [vmem:[#allocation2 + $0x68] sm:$0xff]
    %v1496 = vld [vmem:[#allocation2 + $0x70] sm:$0xff]
    %v1497 = vld [vmem:[#allocation2 + $0x78] sm:$0xff]
    %v1498 = vadd.f32 %v1482, %v716
    %v1499 = vadd.f32 %v1483, %v722
    %v1500 = vadd.f32 %v1484, %v728
    %v1501 = vadd.f32 %v1485, %v734
    %v1502 = vadd.f32 %v1486, %v740
    %v1503 = vadd.f32 %v1487, %v746
    %v1504 = vadd.f32 %v1488, %v752
    %v1505 = vadd.f32 %v1489, %v758
    %v1506 = vadd.f32 %v1490, %v764
    %v1507 = vadd.f32 %v1491, %v770
    %v1508 = vadd.f32 %v1492, %v776
    %v1509 = vadd.f32 %v1493, %v782
    %v1510 = vadd.f32 %v1494, %v788
    %v1511 = vadd.f32 %v1495, %v794
    %v1512 = vadd.f32 %v1496, %v800
    %v1513 = vadd.f32 %v1497, %v806
    %1514 = vst [vmem:[#allocation2] sm:$0xff] %v1498
    %1515 = vst [vmem:[#allocation2 + $0x8] sm:$0xff] %v1499
    %1516 = vst [vmem:[#allocation2 + $0x10] sm:$0xff] %v1500
    %1517 = vst [vmem:[#allocation2 + $0x18] sm:$0xff] %v1501
    %1518 = vst [vmem:[#allocation2 + $0x20] sm:$0xff] %v1502
    %1519 = vst [vmem:[#allocation2 + $0x28] sm:$0xff] %v1503
    %1520 = vst [vmem:[#allocation2 + $0x30] sm:$0xff] %v1504
    %1521 = vst [vmem:[#allocation2 + $0x38] sm:$0xff] %v1505
    %1522 = vst [vmem:[#allocation2 + $0x40] sm:$0xff] %v1506
    %1523 = vst [vmem:[#allocation2 + $0x48] sm:$0xff] %v1507
    %1524 = vst [vmem:[#allocation2 + $0x50] sm:$0xff] %v1508
    %1525 = vst [vmem:[#allocation2 + $0x58] sm:$0xff] %v1509
    %1526 = vst [vmem:[#allocation2 + $0x60] sm:$0xff] %v1510
    %1527 = vst [vmem:[#allocation2 + $0x68] sm:$0xff] %v1511
    %1528 = vst [vmem:[#allocation2 + $0x70] sm:$0xff] %v1512
    %1529 = vst [vmem:[#allocation2 + $0x78] sm:$0xff] %v1513
    %v1530 = vld [vmem:[#allocation3] sm:$0xff]
    %v1531 = vld [vmem:[#allocation3 + $0x8] sm:$0xff]
    %v1532 = vld [vmem:[#allocation3 + $0x10] sm:$0xff]
    %v1533 = vld [vmem:[#allocation3 + $0x18] sm:$0xff]
    %v1534 = vld [vmem:[#allocation3 + $0x20] sm:$0xff]
    %v1535 = vld [vmem:[#allocation3 + $0x28] sm:$0xff]
    %v1536 = vld [vmem:[#allocation3 + $0x30] sm:$0xff]
    %v1537 = vld [vmem:[#allocation3 + $0x38] sm:$0xff]
    %v1538 = vld [vmem:[#allocation3 + $0x40] sm:$0xff]
    %v1539 = vld [vmem:[#allocation3 + $0x48] sm:$0xff]
    %v1540 = vld [vmem:[#allocation3 + $0x50] sm:$0xff]
    %v1541 = vld [vmem:[#allocation3 + $0x58] sm:$0xff]
    %v1542 = vld [vmem:[#allocation3 + $0x60] sm:$0xff]
    %v1543 = vld [vmem:[#allocation3 + $0x68] sm:$0xff]
    %v1544 = vld [vmem:[#allocation3 + $0x70] sm:$0xff]
    %v1545 = vld [vmem:[#allocation3 + $0x78] sm:$0xff]
    %v1546 = vmul.f32 %v716, %v716
    %v1547 = vmul.f32 %v722, %v722
    %v1548 = vmul.f32 %v728, %v728
    %v1549 = vmul.f32 %v734, %v734
    %v1550 = vmul.f32 %v740, %v740
    %v1551 = vmul.f32 %v746, %v746
    %v1552 = vmul.f32 %v752, %v752
    %v1553 = vmul.f32 %v758, %v758
    %v1554 = vmul.f32 %v764, %v764
    %v1555 = vmul.f32 %v770, %v770
    %v1556 = vmul.f32 %v776, %v776
    %v1557 = vmul.f32 %v782, %v782
    %v1558 = vmul.f32 %v788, %v788
    %v1559 = vmul.f32 %v794, %v794
    %v1560 = vmul.f32 %v800, %v800
    %v1561 = vmul.f32 %v806, %v806
    %v1562 = vadd.f32 %v1530, %v1546
    %v1563 = vadd.f32 %v1531, %v1547
    %v1564 = vadd.f32 %v1532, %v1548
    %v1565 = vadd.f32 %v1533, %v1549
    %v1566 = vadd.f32 %v1534, %v1550
    %v1567 = vadd.f32 %v1535, %v1551
    %v1568 = vadd.f32 %v1536, %v1552
    %v1569 = vadd.f32 %v1537, %v1553
    %v1570 = vadd.f32 %v1538, %v1554
    %v1571 = vadd.f32 %v1539, %v1555
    %v1572 = vadd.f32 %v1540, %v1556
    %v1573 = vadd.f32 %v1541, %v1557
    %v1574 = vadd.f32 %v1542, %v1558
    %v1575 = vadd.f32 %v1543, %v1559
    %v1576 = vadd.f32 %v1544, %v1560
    %v1577 = vadd.f32 %v1545, %v1561
    %1578 = vst [vmem:[#allocation3] sm:$0xff] %v1562
    %1579 = vst [vmem:[#allocation3 + $0x8] sm:$0xff] %v1563
    %1580 = vst [vmem:[#allocation3 + $0x10] sm:$0xff] %v1564
    %1581 = vst [vmem:[#allocation3 + $0x18] sm:$0xff] %v1565
    %1582 = vst [vmem:[#allocation3 + $0x20] sm:$0xff] %v1566
    %1583 = vst [vmem:[#allocation3 + $0x28] sm:$0xff] %v1567
    %1584 = vst [vmem:[#allocation3 + $0x30] sm:$0xff] %v1568
    %1585 = vst [vmem:[#allocation3 + $0x38] sm:$0xff] %v1569
    %1586 = vst [vmem:[#allocation3 + $0x40] sm:$0xff] %v1570
    %1587 = vst [vmem:[#allocation3 + $0x48] sm:$0xff] %v1571
    %1588 = vst [vmem:[#allocation3 + $0x50] sm:$0xff] %v1572
    %1589 = vst [vmem:[#allocation3 + $0x58] sm:$0xff] %v1573
    %1590 = vst [vmem:[#allocation3 + $0x60] sm:$0xff] %v1574
    %1591 = vst [vmem:[#allocation3 + $0x68] sm:$0xff] %v1575
    %1592 = vst [vmem:[#allocation3 + $0x70] sm:$0xff] %v1576
    %1593 = vst [vmem:[#allocation3 + $0x78] sm:$0xff] %v1577
    %v1594 = vld [vmem:[#allocation2] sm:$0xff]
    %v1595 = vld [vmem:[#allocation2 + $0x8] sm:$0xff]
    %v1596 = vld [vmem:[#allocation2 + $0x10] sm:$0xff]
    %v1597 = vld [vmem:[#allocation2 + $0x18] sm:$0xff]
    %v1598 = vld [vmem:[#allocation2 + $0x20] sm:$0xff]
    %v1599 = vld [vmem:[#allocation2 + $0x28] sm:$0xff]
    %v1600 = vld [vmem:[#allocation2 + $0x30] sm:$0xff]
    %v1601 = vld [vmem:[#allocation2 + $0x38] sm:$0xff]
    %v1602 = vld [vmem:[#allocation2 + $0x40] sm:$0xff]
    %v1603 = vld [vmem:[#allocation2 + $0x48] sm:$0xff]
    %v1604 = vld [vmem:[#allocation2 + $0x50] sm:$0xff]
    %v1605 = vld [vmem:[#allocation2 + $0x58] sm:$0xff]
    %v1606 = vld [vmem:[#allocation2 + $0x60] sm:$0xff]
    %v1607 = vld [vmem:[#allocation2 + $0x68] sm:$0xff]
    %v1608 = vld [vmem:[#allocation2 + $0x70] sm:$0xff]
    %v1609 = vld [vmem:[#allocation2 + $0x78] sm:$0xff]
    %v1610 = vadd.f32 %v1594, %v718
    %v1611 = vadd.f32 %v1595, %v724
    %v1612 = vadd.f32 %v1596, %v730
    %v1613 = vadd.f32 %v1597, %v736
    %v1614 = vadd.f32 %v1598, %v742
    %v1615 = vadd.f32 %v1599, %v748
    %v1616 = vadd.f32 %v1600, %v754
    %v1617 = vadd.f32 %v1601, %v760
    %v1618 = vadd.f32 %v1602, %v766
    %v1619 = vadd.f32 %v1603, %v772
    %v1620 = vadd.f32 %v1604, %v778
    %v1621 = vadd.f32 %v1605, %v784
    %v1622 = vadd.f32 %v1606, %v790
    %v1623 = vadd.f32 %v1607, %v796
    %v1624 = vadd.f32 %v1608, %v802
    %v1625 = vadd.f32 %v1609, %v808
    %1626 = vst [vmem:[#allocation2] sm:$0xff] %v1610
    %1627 = vst [vmem:[#allocation2 + $0x8] sm:$0xff] %v1611
    %1628 = vst [vmem:[#allocation2 + $0x10] sm:$0xff] %v1612
    %1629 = vst [vmem:[#allocation2 + $0x18] sm:$0xff] %v1613
    %1630 = vst [vmem:[#allocation2 + $0x20] sm:$0xff] %v1614
    %1631 = vst [vmem:[#allocation2 + $0x28] sm:$0xff] %v1615
    %1632 = vst [vmem:[#allocation2 + $0x30] sm:$0xff] %v1616
    %1633 = vst [vmem:[#allocation2 + $0x38] sm:$0xff] %v1617
    %1634 = vst [vmem:[#allocation2 + $0x40] sm:$0xff] %v1618
    %1635 = vst [vmem:[#allocation2 + $0x48] sm:$0xff] %v1619
    %1636 = vst [vmem:[#allocation2 + $0x50] sm:$0xff] %v1620
    %1637 = vst [vmem:[#allocation2 + $0x58] sm:$0xff] %v1621
    %1638 = vst [vmem:[#allocation2 + $0x60] sm:$0xff] %v1622
    %1639 = vst [vmem:[#allocation2 + $0x68] sm:$0xff] %v1623
    %1640 = vst [vmem:[#allocation2 + $0x70] sm:$0xff] %v1624
    %1641 = vst [vmem:[#allocation2 + $0x78] sm:$0xff] %v1625
    %v1642 = vld [vmem:[#allocation3] sm:$0xff]
    %v1643 = vld [vmem:[#allocation3 + $0x8] sm:$0xff]
    %v1644 = vld [vmem:[#allocation3 + $0x10] sm:$0xff]
    %v1645 = vld [vmem:[#allocation3 + $0x18] sm:$0xff]
    %v1646 = vld [vmem:[#allocation3 + $0x20] sm:$0xff]
    %v1647 = vld [vmem:[#allocation3 + $0x28] sm:$0xff]
    %v1648 = vld [vmem:[#allocation3 + $0x30] sm:$0xff]
    %v1649 = vld [vmem:[#allocation3 + $0x38] sm:$0xff]
    %v1650 = vld [vmem:[#allocation3 + $0x40] sm:$0xff]
    %v1651 = vld [vmem:[#allocation3 + $0x48] sm:$0xff]
    %v1652 = vld [vmem:[#allocation3 + $0x50] sm:$0xff]
    %v1653 = vld [vmem:[#allocation3 + $0x58] sm:$0xff]
    %v1654 = vld [vmem:[#allocation3 + $0x60] sm:$0xff]
    %v1655 = vld [vmem:[#allocation3 + $0x68] sm:$0xff]
    %v1656 = vld [vmem:[#allocation3 + $0x70] sm:$0xff]
    %v1657 = vld [vmem:[#allocation3 + $0x78] sm:$0xff]
    %v1658 = vmul.f32 %v718, %v718
    %v1659 = vmul.f32 %v724, %v724
    %v1660 = vmul.f32 %v730, %v730
    %v1661 = vmul.f32 %v736, %v736
    %v1662 = vmul.f32 %v742, %v742
    %v1663 = vmul.f32 %v748, %v748
    %v1664 = vmul.f32 %v754, %v754
    %v1665 = vmul.f32 %v760, %v760
    %v1666 = vmul.f32 %v766, %v766
    %v1667 = vmul.f32 %v772, %v772
    %v1668 = vmul.f32 %v778, %v778
    %v1669 = vmul.f32 %v784, %v784
    %v1670 = vmul.f32 %v790, %v790
    %v1671 = vmul.f32 %v796, %v796
    %v1672 = vmul.f32 %v802, %v802
    %v1673 = vmul.f32 %v808, %v808
    %v1674 = vadd.f32 %v1642, %v1658
    %v1675 = vadd.f32 %v1643, %v1659
    %v1676 = vadd.f32 %v1644, %v1660
    %v1677 = vadd.f32 %v1645, %v1661
    %v1678 = vadd.f32 %v1646, %v1662
    %v1679 = vadd.f32 %v1647, %v1663
    %v1680 = vadd.f32 %v1648, %v1664
    %v1681 = vadd.f32 %v1649, %v1665
    %v1682 = vadd.f32 %v1650, %v1666
    %v1683 = vadd.f32 %v1651, %v1667
    %v1684 = vadd.f32 %v1652, %v1668
    %v1685 = vadd.f32 %v1653, %v1669
    %v1686 = vadd.f32 %v1654, %v1670
    %v1687 = vadd.f32 %v1655, %v1671
    %v1688 = vadd.f32 %v1656, %v1672
    %v1689 = vadd.f32 %v1657, %v1673
    %1690 = vst [vmem:[#allocation3] sm:$0xff] %v1674
    %1691 = vst [vmem:[#allocation3 + $0x8] sm:$0xff] %v1675
    %1692 = vst [vmem:[#allocation3 + $0x10] sm:$0xff] %v1676
    %1693 = vst [vmem:[#allocation3 + $0x18] sm:$0xff] %v1677
    %1694 = vst [vmem:[#allocation3 + $0x20] sm:$0xff] %v1678
    %1695 = vst [vmem:[#allocation3 + $0x28] sm:$0xff] %v1679
    %1696 = vst [vmem:[#allocation3 + $0x30] sm:$0xff] %v1680
    %1697 = vst [vmem:[#allocation3 + $0x38] sm:$0xff] %v1681
    %1698 = vst [vmem:[#allocation3 + $0x40] sm:$0xff] %v1682
    %1699 = vst [vmem:[#allocation3 + $0x48] sm:$0xff] %v1683
    %1700 = vst [vmem:[#allocation3 + $0x50] sm:$0xff] %v1684
    %1701 = vst [vmem:[#allocation3 + $0x58] sm:$0xff] %v1685
    %1702 = vst [vmem:[#allocation3 + $0x60] sm:$0xff] %v1686
    %1703 = vst [vmem:[#allocation3 + $0x68] sm:$0xff] %v1687
    %1704 = vst [vmem:[#allocation3 + $0x70] sm:$0xff] %v1688
    %1705 = vst [vmem:[#allocation3 + $0x78] sm:$0xff] %v1689
    %s1706 = sshra.s32 %s68, 7
    %s1707 = sand.u32 %s68, 127
    %s1708 = smul.addr %s1706, 8
    %s1709 = scalar_lea.vmem [#allocation7], %s1708
    %1710 = vst [vmem:[%s1709] sm:$0xff] %v233
    %1711 = vst [vmem:[%s1709 + $0x8] sm:$0xff] %v235
    %1712 = vst [vmem:[%s1709 + $0x10] sm:$0xff] %v394
    %1713 = vst [vmem:[%s1709 + $0x18] sm:$0xff] %v396
    %1714 = vst [vmem:[%s1709 + $0x20] sm:$0xff] %v555
    %1715 = vst [vmem:[%s1709 + $0x28] sm:$0xff] %v557
    %1716 = vst [vmem:[%s1709 + $0x30] sm:$0xff] %v716
    %1717 = vst [vmem:[%s1709 + $0x38] sm:$0xff] %v718
    %1718 = vst [vmem:[%s1709 + $0x40] sm:$0xff] %v239
    %1719 = vst [vmem:[%s1709 + $0x48] sm:$0xff] %v241
    %1720 = vst [vmem:[%s1709 + $0x50] sm:$0xff] %v400
    %1721 = vst [vmem:[%s1709 + $0x58] sm:$0xff] %v402
    %1722 = vst [vmem:[%s1709 + $0x60] sm:$0xff] %v561
    %1723 = vst [vmem:[%s1709 + $0x68] sm:$0xff] %v563
    %1724 = vst [vmem:[%s1709 + $0x70] sm:$0xff] %v722
    %1725 = vst [vmem:[%s1709 + $0x78] sm:$0xff] %v724
    %1726 = vst [vmem:[%s1709 + $0x80] sm:$0xff] %v245
    %1727 = vst [vmem:[%s1709 + $0x88] sm:$0xff] %v247
    %1728 = vst [vmem:[%s1709 + $0x90] sm:$0xff] %v406
    %1729 = vst [vmem:[%s1709 + $0x98] sm:$0xff] %v408
    %1730 = vst [vmem:[%s1709 + $0xa0] sm:$0xff] %v567
    %1731 = vst [vmem:[%s1709 + $0xa8] sm:$0xff] %v569
    %1732 = vst [vmem:[%s1709 + $0xb0] sm:$0xff] %v728
    %1733 = vst [vmem:[%s1709 + $0xb8] sm:$0xff] %v730
    %1734 = vst [vmem:[%s1709 + $0xc0] sm:$0xff] %v251
    %1735 = vst [vmem:[%s1709 + $0xc8] sm:$0xff] %v253
    %1736 = vst [vmem:[%s1709 + $0xd0] sm:$0xff] %v412
    %1737 = vst [vmem:[%s1709 + $0xd8] sm:$0xff] %v414
    %1738 = vst [vmem:[%s1709 + $0xe0] sm:$0xff] %v573
    %1739 = vst [vmem:[%s1709 + $0xe8] sm:$0xff] %v575
    %1740 = vst [vmem:[%s1709 + $0xf0] sm:$0xff] %v734
    %1741 = vst [vmem:[%s1709 + $0xf8] sm:$0xff] %v736
    %1742 = vst [vmem:[%s1709 + $0x100] sm:$0xff] %v257
    %1743 = vst [vmem:[%s1709 + $0x108] sm:$0xff] %v259
    %1744 = vst [vmem:[%s1709 + $0x110] sm:$0xff] %v418
    %1745 = vst [vmem:[%s1709 + $0x118] sm:$0xff] %v420
    %1746 = vst [vmem:[%s1709 + $0x120] sm:$0xff] %v579
    %1747 = vst [vmem:[%s1709 + $0x128] sm:$0xff] %v581
    %1748 = vst [vmem:[%s1709 + $0x130] sm:$0xff] %v740
    %1749 = vst [vmem:[%s1709 + $0x138] sm:$0xff] %v742
    %1750 = vst [vmem:[%s1709 + $0x140] sm:$0xff] %v263
    %1751 = vst [vmem:[%s1709 + $0x148] sm:$0xff] %v265
    %1752 = vst [vmem:[%s1709 + $0x150] sm:$0xff] %v424
    %1753 = vst [vmem:[%s1709 + $0x158] sm:$0xff] %v426
    %1754 = vst [vmem:[%s1709 + $0x160] sm:$0xff] %v585
    %1755 = vst [vmem:[%s1709 + $0x168] sm:$0xff] %v587
    %1756 = vst [vmem:[%s1709 + $0x170] sm:$0xff] %v746
    %1757 = vst [vmem:[%s1709 + $0x178] sm:$0xff] %v748
    %1758 = vst [vmem:[%s1709 + $0x180] sm:$0xff] %v269
    %1759 = vst [vmem:[%s1709 + $0x188] sm:$0xff] %v271
    %1760 = vst [vmem:[%s1709 + $0x190] sm:$0xff] %v430
    %1761 = vst [vmem:[%s1709 + $0x198] sm:$0xff] %v432
    %1762 = vst [vmem:[%s1709 + $0x1a0] sm:$0xff] %v591
    %1763 = vst [vmem:[%s1709 + $0x1a8] sm:$0xff] %v593
    %1764 = vst [vmem:[%s1709 + $0x1b0] sm:$0xff] %v752
    %1765 = vst [vmem:[%s1709 + $0x1b8] sm:$0xff] %v754
    %1766 = vst [vmem:[%s1709 + $0x1c0] sm:$0xff] %v275
    %1767 = vst [vmem:[%s1709 + $0x1c8] sm:$0xff] %v277
    %1768 = vst [vmem:[%s1709 + $0x1d0] sm:$0xff] %v436
    %1769 = vst [vmem:[%s1709 + $0x1d8] sm:$0xff] %v438
    %1770 = vst [vmem:[%s1709 + $0x1e0] sm:$0xff] %v597
    %1771 = vst [vmem:[%s1709 + $0x1e8] sm:$0xff] %v599
    %1772 = vst [vmem:[%s1709 + $0x1f0] sm:$0xff] %v758
    %1773 = vst [vmem:[%s1709 + $0x1f8] sm:$0xff] %v760
    %1774 = vst [vmem:[%s1709 + $0x200] sm:$0xff] %v281
    %1775 = vst [vmem:[%s1709 + $0x208] sm:$0xff] %v283
    %1776 = vst [vmem:[%s1709 + $0x210] sm:$0xff] %v442
    %1777 = vst [vmem:[%s1709 + $0x218] sm:$0xff] %v444
    %1778 = vst [vmem:[%s1709 + $0x220] sm:$0xff] %v603
    %1779 = vst [vmem:[%s1709 + $0x228] sm:$0xff] %v605
    %1780 = vst [vmem:[%s1709 + $0x230] sm:$0xff] %v764
    %1781 = vst [vmem:[%s1709 + $0x238] sm:$0xff] %v766
    %1782 = vst [vmem:[%s1709 + $0x240] sm:$0xff] %v287
    %1783 = vst [vmem:[%s1709 + $0x248] sm:$0xff] %v289
    %1784 = vst [vmem:[%s1709 + $0x250] sm:$0xff] %v448
    %1785 = vst [vmem:[%s1709 + $0x258] sm:$0xff] %v450
    %1786 = vst [vmem:[%s1709 + $0x260] sm:$0xff] %v609
    %1787 = vst [vmem:[%s1709 + $0x268] sm:$0xff] %v611
    %1788 = vst [vmem:[%s1709 + $0x270] sm:$0xff] %v770
    %1789 = vst [vmem:[%s1709 + $0x278] sm:$0xff] %v772
    %1790 = vst [vmem:[%s1709 + $0x280] sm:$0xff] %v293
    %1791 = vst [vmem:[%s1709 + $0x288] sm:$0xff] %v295
    %1792 = vst [vmem:[%s1709 + $0x290] sm:$0xff] %v454
    %1793 = vst [vmem:[%s1709 + $0x298] sm:$0xff] %v456
    %1794 = vst [vmem:[%s1709 + $0x2a0] sm:$0xff] %v615
    %1795 = vst [vmem:[%s1709 + $0x2a8] sm:$0xff] %v617
    %1796 = vst [vmem:[%s1709 + $0x2b0] sm:$0xff] %v776
    %1797 = vst [vmem:[%s1709 + $0x2b8] sm:$0xff] %v778
    %1798 = vst [vmem:[%s1709 + $0x2c0] sm:$0xff] %v299
    %1799 = vst [vmem:[%s1709 + $0x2c8] sm:$0xff] %v301
    %1800 = vst [vmem:[%s1709 + $0x2d0] sm:$0xff] %v460
    %1801 = vst [vmem:[%s1709 + $0x2d8] sm:$0xff] %v462
    %1802 = vst [vmem:[%s1709 + $0x2e0] sm:$0xff] %v621
    %1803 = vst [vmem:[%s1709 + $0x2e8] sm:$0xff] %v623
    %1804 = vst [vmem:[%s1709 + $0x2f0] sm:$0xff] %v782
    %1805 = vst [vmem:[%s1709 + $0x2f8] sm:$0xff] %v784
    %1806 = vst [vmem:[%s1709 + $0x300] sm:$0xff] %v305
    %1807 = vst [vmem:[%s1709 + $0x308] sm:$0xff] %v307
    %1808 = vst [vmem:[%s1709 + $0x310] sm:$0xff] %v466
    %1809 = vst [vmem:[%s1709 + $0x318] sm:$0xff] %v468
    %1810 = vst [vmem:[%s1709 + $0x320] sm:$0xff] %v627
    %1811 = vst [vmem:[%s1709 + $0x328] sm:$0xff] %v629
    %1812 = vst [vmem:[%s1709 + $0x330] sm:$0xff] %v788
    %1813 = vst [vmem:[%s1709 + $0x338] sm:$0xff] %v790
    %1814 = vst [vmem:[%s1709 + $0x340] sm:$0xff] %v311
    %1815 = vst [vmem:[%s1709 + $0x348] sm:$0xff] %v313
    %1816 = vst [vmem:[%s1709 + $0x350] sm:$0xff] %v472
    %1817 = vst [vmem:[%s1709 + $0x358] sm:$0xff] %v474
    %1818 = vst [vmem:[%s1709 + $0x360] sm:$0xff] %v633
    %1819 = vst [vmem:[%s1709 + $0x368] sm:$0xff] %v635
    %1820 = vst [vmem:[%s1709 + $0x370] sm:$0xff] %v794
    %1821 = vst [vmem:[%s1709 + $0x378] sm:$0xff] %v796
    %1822 = vst [vmem:[%s1709 + $0x380] sm:$0xff] %v317
    %1823 = vst [vmem:[%s1709 + $0x388] sm:$0xff] %v319
    %1824 = vst [vmem:[%s1709 + $0x390] sm:$0xff] %v478
    %1825 = vst [vmem:[%s1709 + $0x398] sm:$0xff] %v480
    %1826 = vst [vmem:[%s1709 + $0x3a0] sm:$0xff] %v639
    %1827 = vst [vmem:[%s1709 + $0x3a8] sm:$0xff] %v641
    %1828 = vst [vmem:[%s1709 + $0x3b0] sm:$0xff] %v800
    %1829 = vst [vmem:[%s1709 + $0x3b8] sm:$0xff] %v802
    %1830 = vst [vmem:[%s1709 + $0x3c0] sm:$0xff] %v323
    %1831 = vst [vmem:[%s1709 + $0x3c8] sm:$0xff] %v325
    %1832 = vst [vmem:[%s1709 + $0x3d0] sm:$0xff] %v484
    %1833 = vst [vmem:[%s1709 + $0x3d8] sm:$0xff] %v486
    %1834 = vst [vmem:[%s1709 + $0x3e0] sm:$0xff] %v645
    %1835 = vst [vmem:[%s1709 + $0x3e8] sm:$0xff] %v647
    %1836 = vst [vmem:[%s1709 + $0x3f0] sm:$0xff] %v806
    %1837 = vst [vmem:[%s1709 + $0x3f8] sm:$0xff] %v808
    %s1838 = scalar_lea.vmem [#allocation4], 256
    %v1839 = vld [vmem:[%s1838] sm:$0xff]
    %v1840 = vld [vmem:[%s1838 + $0x8] sm:$0xff]
    %v1841 = vld [vmem:[%s1838 + $0x10] sm:$0xff]
    %v1842 = vld [vmem:[%s1838 + $0x18] sm:$0xff]
    %v1843 = vld [vmem:[%s1838 + $0x20] sm:$0xff]
    %v1844 = vld [vmem:[%s1838 + $0x28] sm:$0xff]
    %v1845 = vld [vmem:[%s1838 + $0x30] sm:$0xff]
    %v1846 = vld [vmem:[%s1838 + $0x38] sm:$0xff]
    %v1847 = vld [vmem:[%s1838 + $0x40] sm:$0xff]
    %v1848 = vld [vmem:[%s1838 + $0x48] sm:$0xff]
    %v1849 = vld [vmem:[%s1838 + $0x50] sm:$0xff]
    %v1850 = vld [vmem:[%s1838 + $0x58] sm:$0xff]
    %v1851 = vld [vmem:[%s1838 + $0x60] sm:$0xff]
    %v1852 = vld [vmem:[%s1838 + $0x68] sm:$0xff]
    %v1853 = vld [vmem:[%s1838 + $0x70] sm:$0xff]
    %v1854 = vld [vmem:[%s1838 + $0x78] sm:$0xff]
    %v1855 = vld [vmem:[%s1838 + $0x80] sm:$0xff]
    %v1856 = vld [vmem:[%s1838 + $0x88] sm:$0xff]
    %v1857 = vld [vmem:[%s1838 + $0x90] sm:$0xff]
    %v1858 = vld [vmem:[%s1838 + $0x98] sm:$0xff]
    %v1859 = vld [vmem:[%s1838 + $0xa0] sm:$0xff]
    %v1860 = vld [vmem:[%s1838 + $0xa8] sm:$0xff]
    %v1861 = vld [vmem:[%s1838 + $0xb0] sm:$0xff]
    %v1862 = vld [vmem:[%s1838 + $0xb8] sm:$0xff]
    %v1863 = vld [vmem:[%s1838 + $0xc0] sm:$0xff]
    %v1864 = vld [vmem:[%s1838 + $0xc8] sm:$0xff]
    %v1865 = vld [vmem:[%s1838 + $0xd0] sm:$0xff]
    %v1866 = vld [vmem:[%s1838 + $0xd8] sm:$0xff]
    %v1867 = vld [vmem:[%s1838 + $0xe0] sm:$0xff]
    %v1868 = vld [vmem:[%s1838 + $0xe8] sm:$0xff]
    %v1869 = vld [vmem:[%s1838 + $0xf0] sm:$0xff]
    %v1870 = vld [vmem:[%s1838 + $0xf8] sm:$0xff]
    %1871 = vmatprep.subr.mxu0 %v1840
    %1872 = vmatpush1.msra.mxu0 %v1839
    %1873 = vmatprep.subr.mxu0 %v1848
    %1874 = vmatpush1.msra.mxu0 %v1847
    %1875 = vmatprep.subr.mxu0 %v1856
    %1876 = vmatpush1.msra.mxu0 %v1855
    %1877 = vmatprep.subr.mxu0 %v1864
    %1878 = vmatpush1.msra.mxu0 %v1863
    %1879 = vmatprep.subr.mxu0 0.0
    %1880 = vmatpush1.msra.mxu0 0.0
    %1881 = vmatprep.subr.mxu0 0.0
    %1882 = vmatpush1.msra.mxu0 0.0
    %1883 = vmatprep.subr.mxu0 0.0
    %1884 = vmatpush1.msra.mxu0 0.0
    %1885 = vmatprep.subr.mxu0 0.0
    %1886 = vmatpush1.msra.mxu0 0.0
    %1887 = vmatprep.subr.mxu0 0.0
    %1888 = vmatpush1.msra.mxu0 0.0
    %1889 = vmatprep.subr.mxu0 0.0
    %1890 = vmatpush1.msra.mxu0 0.0
    %1891 = vmatprep.subr.mxu0 0.0
    %1892 = vmatpush1.msra.mxu0 0.0
    %1893 = vmatprep.subr.mxu0 0.0
    %1894 = vmatpush1.msra.mxu0 0.0
    %1895 = vmatprep.subr.mxu0 0.0
    %1896 = vmatpush1.msra.mxu0 0.0
    %1897 = vmatprep.subr.mxu0 0.0
    %1898 = vmatpush1.msra.mxu0 0.0
    %1899 = vmatprep.subr.mxu0 0.0
    %1900 = vmatpush1.msra.mxu0 0.0
    %1901 = vmatprep.subr.mxu0 0.0
    %1902 = vmatpush1.msra.mxu0 0.0
    %1903 = vmatprep.subr.mxu0 0.0
    %1904 = vmatpush1.msra.mxu0 0.0
    %1905 = vmatprep.subr.mxu0 0.0
    %1906 = vmatpush1.msra.mxu0 0.0
    %1907 = vmatprep.subr.mxu0 0.0
    %1908 = vmatpush1.msra.mxu0 0.0
    %1909 = vmatprep.subr.mxu0 0.0
    %1910 = vmatpush1.msra.mxu0 0.0
    %1911 = vmatprep.subr.mxu0 0.0
    %1912 = vmatpush1.msra.mxu0 0.0
    %1913 = vmatprep.subr.mxu0 0.0
    %1914 = vmatpush1.msra.mxu0 0.0
    %1915 = vmatprep.subr.mxu0 0.0
    %1916 = vmatpush1.msra.mxu0 0.0
    %1917 = vmatprep.subr.mxu0 0.0
    %1918 = vmatpush1.msra.mxu0 0.0
    %1919 = vmatprep.subr.mxu0 0.0
    %1920 = vmatpush1.msra.mxu0 0.0
    %1921 = vmatprep.subr.mxu0 0.0
    %1922 = vmatpush1.msra.mxu0 0.0
    %1923 = vmatprep.subr.mxu0 0.0
    %1924 = vmatpush1.msra.mxu0 0.0
    %1925 = vmatprep.subr.mxu0 0.0
    %1926 = vmatpush1.msra.mxu0 0.0
    %1927 = vmatprep.subr.mxu0 0.0
    %1928 = vmatpush1.msra.mxu0 0.0
    %1929 = vmatprep.subr.mxu0 0.0
    %1930 = vmatpush1.msra.mxu0 0.0
    %1931 = vmatprep.subr.mxu0 0.0
    %1932 = vmatpush1.msra.mxu0 0.0
    %1933 = vmatprep.subr.mxu0 0.0
    %1934 = vmatpush1.msra.mxu0 0.0
    %1935 = vmatprep.mubr.f32.mxu0 0.0
    %1936 = vmatmul.mubr.f32.gmra.mrb[0].mxu0 %v119
    %v1937 = vpop.f32.mrb[0].mxu0
    %v1938 = vadd.f32 0.0, %v1937
    %v1939 = vpop.f32.mrb[0].mxu0
    %v1940 = vadd.f32 0.0, %v1939
    %1941 = vmatprep.mubr.f32.mxu0 0.0
    %1942 = vmatmul.mubr.f32.gmra.mrb[0].mxu0 %v122
    %v1943 = vpop.f32.mrb[0].mxu0
    %v1944 = vadd.f32 0.0, %v1943
    %v1945 = vpop.f32.mrb[0].mxu0
    %v1946 = vadd.f32 0.0, %v1945
    %1947 = vmatprep.mubr.f32.mxu0 0.0
    %1948 = vmatmul.mubr.f32.gmra.mrb[0].mxu0 %v125
    %v1949 = vpop.f32.mrb[0].mxu0
    %v1950 = vadd.f32 0.0, %v1949
    %v1951 = vpop.f32.mrb[0].mxu0
    %v1952 = vadd.f32 0.0, %v1951
    %1953 = vmatprep.mubr.f32.mxu0 0.0
    %1954 = vmatmul.mubr.f32.gmra.mrb[0].mxu0 %v128
    %v1955 = vpop.f32.mrb[0].mxu0
    %v1956 = vadd.f32 0.0, %v1955
    %v1957 = vpop.f32.mrb[0].mxu0
    %v1958 = vadd.f32 0.0, %v1957
    %1959 = vmatprep.mubr.f32.mxu0 0.0
    %1960 = vmatmul.mubr.f32.gmra.mrb[0].mxu0 %v131
    %v1961 = vpop.f32.mrb[0].mxu0
    %v1962 = vadd.f32 0.0, %v1961
    %v1963 = vpop.f32.mrb[0].mxu0
    %v1964 = vadd.f32 0.0, %v1963
    %1965 = vmatprep.mubr.f32.mxu0 0.0
    %1966 = vmatmul.mubr.f32.gmra.mrb[0].mxu0 %v134
    %v1967 = vpop.f32.mrb[0].mxu0
    %v1968 = vadd.f32 0.0, %v1967
    %v1969 = vpop.f32.mrb[0].mxu0
    %v1970 = vadd.f32 0.0, %v1969
    %1971 = vmatprep.mubr.f32.mxu0 0.0
    %1972 = vmatmul.mubr.f32.gmra.mrb[0].mxu0 %v137
    %v1973 = vpop.f32.mrb[0].mxu0
    %v1974 = vadd.f32 0.0, %v1973
    %v1975 = vpop.f32.mrb[0].mxu0
    %v1976 = vadd.f32 0.0, %v1975
    %1977 = vmatprep.mubr.f32.mxu0 0.0
    %1978 = vmatmul.mubr.f32.gmra.mrb[0].mxu0 %v140
    %v1979 = vpop.f32.mrb[0].mxu0
    %v1980 = vadd.f32 0.0, %v1979
    %v1981 = vpop.f32.mrb[0].mxu0
    %v1982 = vadd.f32 0.0, %v1981
    %1983 = vmatprep.mubr.f32.mxu0 0.0
    %1984 = vmatmul.mubr.f32.gmra.mrb[0].mxu0 %v143
    %v1985 = vpop.f32.mrb[0].mxu0
    %v1986 = vadd.f32 0.0, %v1985
    %v1987 = vpop.f32.mrb[0].mxu0
    %v1988 = vadd.f32 0.0, %v1987
    %1989 = vmatprep.mubr.f32.mxu0 0.0
    %1990 = vmatmul.mubr.f32.gmra.mrb[0].mxu0 %v146
    %v1991 = vpop.f32.mrb[0].mxu0
    %v1992 = vadd.f32 0.0, %v1991
    %v1993 = vpop.f32.mrb[0].mxu0
    %v1994 = vadd.f32 0.0, %v1993
    %1995 = vmatprep.mubr.f32.mxu0 0.0
    %1996 = vmatmul.mubr.f32.gmra.mrb[0].mxu0 %v149
    %v1997 = vpop.f32.mrb[0].mxu0
    %v1998 = vadd.f32 0.0, %v1997
    %v1999 = vpop.f32.mrb[0].mxu0
    %v2000 = vadd.f32 0.0, %v1999
    %2001 = vmatprep.mubr.f32.mxu0 0.0
    %2002 = vmatmul.mubr.f32.gmra.mrb[0].mxu0 %v152
    %v2003 = vpop.f32.mrb[0].mxu0
    %v2004 = vadd.f32 0.0, %v2003
    %v2005 = vpop.f32.mrb[0].mxu0
    %v2006 = vadd.f32 0.0, %v2005
    %2007 = vmatprep.mubr.f32.mxu0 0.0
    %2008 = vmatmul.mubr.f32.gmra.mrb[0].mxu0 %v155
    %v2009 = vpop.f32.mrb[0].mxu0
    %v2010 = vadd.f32 0.0, %v2009
    %v2011 = vpop.f32.mrb[0].mxu0
    %v2012 = vadd.f32 0.0, %v2011
    %2013 = vmatprep.mubr.f32.mxu0 0.0
    %2014 = vmatmul.mubr.f32.gmra.mrb[0].mxu0 %v158
    %v2015 = vpop.f32.mrb[0].mxu0
    %v2016 = vadd.f32 0.0, %v2015
    %v2017 = vpop.f32.mrb[0].mxu0
    %v2018 = vadd.f32 0.0, %v2017
    %2019 = vmatprep.mubr.f32.mxu0 0.0
    %2020 = vmatmul.mubr.f32.gmra.mrb[0].mxu0 %v161
    %v2021 = vpop.f32.mrb[0].mxu0
    %v2022 = vadd.f32 0.0, %v2021
    %v2023 = vpop.f32.mrb[0].mxu0
    %v2024 = vadd.f32 0.0, %v2023
    %2025 = vmatprep.mubr.f32.mxu0 0.0
    %2026 = vmatmul.mubr.f32.gmra.mrb[0].mxu0 %v164
    %v2027 = vpop.f32.mrb[0].mxu0
    %v2028 = vadd.f32 0.0, %v2027
    %v2029 = vpop.f32.mrb[0].mxu0
    %v2030 = vadd.f32 0.0, %v2029
    %2031 = vdwg.mxu0
    %2032 = vmatprep.subr.mxu0 %v1842
    %2033 = vmatpush1.msra.mxu0 %v1841
    %2034 = vmatprep.subr.mxu0 %v1850
    %2035 = vmatpush1.msra.mxu0 %v1849
    %2036 = vmatprep.subr.mxu0 %v1858
    %2037 = vmatpush1.msra.mxu0 %v1857
    %2038 = vmatprep.subr.mxu0 %v1866
    %2039 = vmatpush1.msra.mxu0 %v1865
    %2040 = vmatprep.subr.mxu0 0.0
    %2041 = vmatpush1.msra.mxu0 0.0
    %2042 = vmatprep.subr.mxu0 0.0
    %2043 = vmatpush1.msra.mxu0 0.0
    %2044 = vmatprep.subr.mxu0 0.0
    %2045 = vmatpush1.msra.mxu0 0.0
    %2046 = vmatprep.subr.mxu0 0.0
    %2047 = vmatpush1.msra.mxu0 0.0
    %2048 = vmatprep.subr.mxu0 0.0
    %2049 = vmatpush1.msra.mxu0 0.0
    %2050 = vmatprep.subr.mxu0 0.0
    %2051 = vmatpush1.msra.mxu0 0.0
    %2052 = vmatprep.subr.mxu0 0.0
    %2053 = vmatpush1.msra.mxu0 0.0
    %2054 = vmatprep.subr.mxu0 0.0
    %2055 = vmatpush1.msra.mxu0 0.0
    %2056 = vmatprep.subr.mxu0 0.0
    %2057 = vmatpush1.msra.mxu0 0.0
    %2058 = vmatprep.subr.mxu0 0.0
    %2059 = vmatpush1.msra.mxu0 0.0
    %2060 = vmatprep.subr.mxu0 0.0
    %2061 = vmatpush1.msra.mxu0 0.0
    %2062 = vmatprep.subr.mxu0 0.0
    %2063 = vmatpush1.msra.mxu0 0.0
    %2064 = vmatprep.subr.mxu0 0.0
    %2065 = vmatpush1.msra.mxu0 0.0
    %2066 = vmatprep.subr.mxu0 0.0
    %2067 = vmatpush1.msra.mxu0 0.0
    %2068 = vmatprep.subr.mxu0 0.0
    %2069 = vmatpush1.msra.mxu0 0.0
    %2070 = vmatprep.subr.mxu0 0.0
    %2071 = vmatpush1.msra.mxu0 0.0
    %2072 = vmatprep.subr.mxu0 0.0
    %2073 = vmatpush1.msra.mxu0 0.0
    %2074 = vmatprep.subr.mxu0 0.0
    %2075 = vmatpush1.msra.mxu0 0.0
    %2076 = vmatprep.subr.mxu0 0.0
    %2077 = vmatpush1.msra.mxu0 0.0
    %2078 = vmatprep.subr.mxu0 0.0
    %2079 = vmatpush1.msra.mxu0 0.0
    %2080 = vmatprep.subr.mxu0 0.0
    %2081 = vmatpush1.msra.mxu0 0.0
    %2082 = vmatprep.subr.mxu0 0.0
    %2083 = vmatpush1.msra.mxu0 0.0
    %2084 = vmatprep.subr.mxu0 0.0
    %2085 = vmatpush1.msra.mxu0 0.0
    %2086 = vmatprep.subr.mxu0 0.0
    %2087 = vmatpush1.msra.mxu0 0.0
    %2088 = vmatprep.subr.mxu0 0.0
    %2089 = vmatpush1.msra.mxu0 0.0
    %2090 = vmatprep.subr.mxu0 0.0
    %2091 = vmatpush1.msra.mxu0 0.0
    %2092 = vmatprep.subr.mxu0 0.0
    %2093 = vmatpush1.msra.mxu0 0.0
    %2094 = vmatprep.subr.mxu0 0.0
    %2095 = vmatpush1.msra.mxu0 0.0
    %2096 = vmatprep.mubr.f32.mxu0 0.0
    %2097 = vmatmul.mubr.f32.gmra.mrb[0].mxu0 %v119
    %v2098 = vpop.f32.mrb[0].mxu0
    %v2099 = vadd.f32 0.0, %v2098
    %v2100 = vpop.f32.mrb[0].mxu0
    %v2101 = vadd.f32 0.0, %v2100
    %2102 = vmatprep.mubr.f32.mxu0 0.0
    %2103 = vmatmul.mubr.f32.gmra.mrb[0].mxu0 %v122
    %v2104 = vpop.f32.mrb[0].mxu0
    %v2105 = vadd.f32 0.0, %v2104
    %v2106 = vpop.f32.mrb[0].mxu0
    %v2107 = vadd.f32 0.0, %v2106
    %2108 = vmatprep.mubr.f32.mxu0 0.0
    %2109 = vmatmul.mubr.f32.gmra.mrb[0].mxu0 %v125
    %v2110 = vpop.f32.mrb[0].mxu0
    %v2111 = vadd.f32 0.0, %v2110
    %v2112 = vpop.f32.mrb[0].mxu0
    %v2113 = vadd.f32 0.0, %v2112
    %2114 = vmatprep.mubr.f32.mxu0 0.0
    %2115 = vmatmul.mubr.f32.gmra.mrb[0].mxu0 %v128
    %v2116 = vpop.f32.mrb[0].mxu0
    %v2117 = vadd.f32 0.0, %v2116
    %v2118 = vpop.f32.mrb[0].mxu0
    %v2119 = vadd.f32 0.0, %v2118
    %2120 = vmatprep.mubr.f32.mxu0 0.0
    %2121 = vmatmul.mubr.f32.gmra.mrb[0].mxu0 %v131
    %v2122 = vpop.f32.mrb[0].mxu0
    %v2123 = vadd.f32 0.0, %v2122
    %v2124 = vpop.f32.mrb[0].mxu0
    %v2125 = vadd.f32 0.0, %v2124
    %2126 = vmatprep.mubr.f32.mxu0 0.0
    %2127 = vmatmul.mubr.f32.gmra.mrb[0].mxu0 %v134
    %v2128 = vpop.f32.mrb[0].mxu0
    %v2129 = vadd.f32 0.0, %v2128
    %v2130 = vpop.f32.mrb[0].mxu0
    %v2131 = vadd.f32 0.0, %v2130
    %2132 = vmatprep.mubr.f32.mxu0 0.0
    %2133 = vmatmul.mubr.f32.gmra.mrb[0].mxu0 %v137
    %v2134 = vpop.f32.mrb[0].mxu0
    %v2135 = vadd.f32 0.0, %v2134
    %v2136 = vpop.f32.mrb[0].mxu0
    %v2137 = vadd.f32 0.0, %v2136
    %2138 = vmatprep.mubr.f32.mxu0 0.0
    %2139 = vmatmul.mubr.f32.gmra.mrb[0].mxu0 %v140
    %v2140 = vpop.f32.mrb[0].mxu0
    %v2141 = vadd.f32 0.0, %v2140
    %v2142 = vpop.f32.mrb[0].mxu0
    %v2143 = vadd.f32 0.0, %v2142
    %2144 = vmatprep.mubr.f32.mxu0 0.0
    %2145 = vmatmul.mubr.f32.gmra.mrb[0].mxu0 %v143
    %v2146 = vpop.f32.mrb[0].mxu0
    %v2147 = vadd.f32 0.0, %v2146
    %v2148 = vpop.f32.mrb[0].mxu0
    %v2149 = vadd.f32 0.0, %v2148
    %2150 = vmatprep.mubr.f32.mxu0 0.0
    %2151 = vmatmul.mubr.f32.gmra.mrb[0].mxu0 %v146
    %v2152 = vpop.f32.mrb[0].mxu0
    %v2153 = vadd.f32 0.0, %v2152
    %v2154 = vpop.f32.mrb[0].mxu0
    %v2155 = vadd.f32 0.0, %v2154
    %2156 = vmatprep.mubr.f32.mxu0 0.0
    %2157 = vmatmul.mubr.f32.gmra.mrb[0].mxu0 %v149
    %v2158 = vpop.f32.mrb[0].mxu0
    %v2159 = vadd.f32 0.0, %v2158
    %v2160 = vpop.f32.mrb[0].mxu0
    %v2161 = vadd.f32 0.0, %v2160
    %2162 = vmatprep.mubr.f32.mxu0 0.0
    %2163 = vmatmul.mubr.f32.gmra.mrb[0].mxu0 %v152
    %v2164 = vpop.f32.mrb[0].mxu0
    %v2165 = vadd.f32 0.0, %v2164
    %v2166 = vpop.f32.mrb[0].mxu0
    %v2167 = vadd.f32 0.0, %v2166
    %2168 = vmatprep.mubr.f32.mxu0 0.0
    %2169 = vmatmul.mubr.f32.gmra.mrb[0].mxu0 %v155
    %v2170 = vpop.f32.mrb[0].mxu0
    %v2171 = vadd.f32 0.0, %v2170
    %v2172 = vpop.f32.mrb[0].mxu0
    %v2173 = vadd.f32 0.0, %v2172
    %2174 = vmatprep.mubr.f32.mxu0 0.0
    %2175 = vmatmul.mubr.f32.gmra.mrb[0].mxu0 %v158
    %v2176 = vpop.f32.mrb[0].mxu0
    %v2177 = vadd.f32 0.0, %v2176
    %v2178 = vpop.f32.mrb[0].mxu0
    %v2179 = vadd.f32 0.0, %v2178
    %2180 = vmatprep.mubr.f32.mxu0 0.0
    %2181 = vmatmul.mubr.f32.gmra.mrb[0].mxu0 %v161
    %v2182 = vpop.f32.mrb[0].mxu0
    %v2183 = vadd.f32 0.0, %v2182
    %v2184 = vpop.f32.mrb[0].mxu0
    %v2185 = vadd.f32 0.0, %v2184
    %2186 = vmatprep.mubr.f32.mxu0 0.0
    %2187 = vmatmul.mubr.f32.gmra.mrb[0].mxu0 %v164
    %v2188 = vpop.f32.mrb[0].mxu0
    %v2189 = vadd.f32 0.0, %v2188
    %v2190 = vpop.f32.mrb[0].mxu0
    %v2191 = vadd.f32 0.0, %v2190
    %2192 = vdwg.mxu0
    %2193 = vmatprep.subr.mxu0 %v1844
    %2194 = vmatpush1.msra.mxu0 %v1843
    %2195 = vmatprep.subr.mxu0 %v1852
    %2196 = vmatpush1.msra.mxu0 %v1851
    %2197 = vmatprep.subr.mxu0 %v1860
    %2198 = vmatpush1.msra.mxu0 %v1859
    %2199 = vmatprep.subr.mxu0 %v1868
    %2200 = vmatpush1.msra.mxu0 %v1867
    %2201 = vmatprep.subr.mxu0 0.0
    %2202 = vmatpush1.msra.mxu0 0.0
    %2203 = vmatprep.subr.mxu0 0.0
    %2204 = vmatpush1.msra.mxu0 0.0
    %2205 = vmatprep.subr.mxu0 0.0
    %2206 = vmatpush1.msra.mxu0 0.0
    %2207 = vmatprep.subr.mxu0 0.0
    %2208 = vmatpush1.msra.mxu0 0.0
    %2209 = vmatprep.subr.mxu0 0.0
    %2210 = vmatpush1.msra.mxu0 0.0
    %2211 = vmatprep.subr.mxu0 0.0
    %2212 = vmatpush1.msra.mxu0 0.0
    %2213 = vmatprep.subr.mxu0 0.0
    %2214 = vmatpush1.msra.mxu0 0.0
    %2215 = vmatprep.subr.mxu0 0.0
    %2216 = vmatpush1.msra.mxu0 0.0
    %2217 = vmatprep.subr.mxu0 0.0
    %2218 = vmatpush1.msra.mxu0 0.0
    %2219 = vmatprep.subr.mxu0 0.0
    %2220 = vmatpush1.msra.mxu0 0.0
    %2221 = vmatprep.subr.mxu0 0.0
    %2222 = vmatpush1.msra.mxu0 0.0
    %2223 = vmatprep.subr.mxu0 0.0
    %2224 = vmatpush1.msra.mxu0 0.0
    %2225 = vmatprep.subr.mxu0 0.0
    %2226 = vmatpush1.msra.mxu0 0.0
    %2227 = vmatprep.subr.mxu0 0.0
    %2228 = vmatpush1.msra.mxu0 0.0
    %2229 = vmatprep.subr.mxu0 0.0
    %2230 = vmatpush1.msra.mxu0 0.0
    %2231 = vmatprep.subr.mxu0 0.0
    %2232 = vmatpush1.msra.mxu0 0.0
    %2233 = vmatprep.subr.mxu0 0.0
    %2234 = vmatpush1.msra.mxu0 0.0
    %2235 = vmatprep.subr.mxu0 0.0
    %2236 = vmatpush1.msra.mxu0 0.0
    %2237 = vmatprep.subr.mxu0 0.0
    %2238 = vmatpush1.msra.mxu0 0.0
    %2239 = vmatprep.subr.mxu0 0.0
    %2240 = vmatpush1.msra.mxu0 0.0
    %2241 = vmatprep.subr.mxu0 0.0
    %2242 = vmatpush1.msra.mxu0 0.0
    %2243 = vmatprep.subr.mxu0 0.0
    %2244 = vmatpush1.msra.mxu0 0.0
    %2245 = vmatprep.subr.mxu0 0.0
    %2246 = vmatpush1.msra.mxu0 0.0
    %2247 = vmatprep.subr.mxu0 0.0
    %2248 = vmatpush1.msra.mxu0 0.0
    %2249 = vmatprep.subr.mxu0 0.0
    %2250 = vmatpush1.msra.mxu0 0.0
    %2251 = vmatprep.subr.mxu0 0.0
    %2252 = vmatpush1.msra.mxu0 0.0
    %2253 = vmatprep.subr.mxu0 0.0
    %2254 = vmatpush1.msra.mxu0 0.0
    %2255 = vmatprep.subr.mxu0 0.0
    %2256 = vmatpush1.msra.mxu0 0.0
    %2257 = vmatprep.mubr.f32.mxu0 0.0
    %2258 = vmatmul.mubr.f32.gmra.mrb[0].mxu0 %v119
    %v2259 = vpop.f32.mrb[0].mxu0
    %v2260 = vadd.f32 0.0, %v2259
    %v2261 = vpop.f32.mrb[0].mxu0
    %v2262 = vadd.f32 0.0, %v2261
    %2263 = vmatprep.mubr.f32.mxu0 0.0
    %2264 = vmatmul.mubr.f32.gmra.mrb[0].mxu0 %v122
    %v2265 = vpop.f32.mrb[0].mxu0
    %v2266 = vadd.f32 0.0, %v2265
    %v2267 = vpop.f32.mrb[0].mxu0
    %v2268 = vadd.f32 0.0, %v2267
    %2269 = vmatprep.mubr.f32.mxu0 0.0
    %2270 = vmatmul.mubr.f32.gmra.mrb[0].mxu0 %v125
    %v2271 = vpop.f32.mrb[0].mxu0
    %v2272 = vadd.f32 0.0, %v2271
    %v2273 = vpop.f32.mrb[0].mxu0
    %v2274 = vadd.f32 0.0, %v2273
    %2275 = vmatprep.mubr.f32.mxu0 0.0
    %2276 = vmatmul.mubr.f32.gmra.mrb[0].mxu0 %v128
    %v2277 = vpop.f32.mrb[0].mxu0
    %v2278 = vadd.f32 0.0, %v2277
    %v2279 = vpop.f32.mrb[0].mxu0
    %v2280 = vadd.f32 0.0, %v2279
    %2281 = vmatprep.mubr.f32.mxu0 0.0
    %2282 = vmatmul.mubr.f32.gmra.mrb[0].mxu0 %v131
    %v2283 = vpop.f32.mrb[0].mxu0
    %v2284 = vadd.f32 0.0, %v2283
    %v2285 = vpop.f32.mrb[0].mxu0
    %v2286 = vadd.f32 0.0, %v2285
    %2287 = vmatprep.mubr.f32.mxu0 0.0
    %2288 = vmatmul.mubr.f32.gmra.mrb[0].mxu0 %v134
    %v2289 = vpop.f32.mrb[0].mxu0
    %v2290 = vadd.f32 0.0, %v2289
    %v2291 = vpop.f32.mrb[0].mxu0
    %v2292 = vadd.f32 0.0, %v2291
    %2293 = vmatprep.mubr.f32.mxu0 0.0
    %2294 = vmatmul.mubr.f32.gmra.mrb[0].mxu0 %v137
    %v2295 = vpop.f32.mrb[0].mxu0
    %v2296 = vadd.f32 0.0, %v2295
    %v2297 = vpop.f32.mrb[0].mxu0
    %v2298 = vadd.f32 0.0, %v2297
    %2299 = vmatprep.mubr.f32.mxu0 0.0
    %2300 = vmatmul.mubr.f32.gmra.mrb[0].mxu0 %v140
    %v2301 = vpop.f32.mrb[0].mxu0
    %v2302 = vadd.f32 0.0, %v2301
    %v2303 = vpop.f32.mrb[0].mxu0
    %v2304 = vadd.f32 0.0, %v2303
    %2305 = vmatprep.mubr.f32.mxu0 0.0
    %2306 = vmatmul.mubr.f32.gmra.mrb[0].mxu0 %v143
    %v2307 = vpop.f32.mrb[0].mxu0
    %v2308 = vadd.f32 0.0, %v2307
    %v2309 = vpop.f32.mrb[0].mxu0
    %v2310 = vadd.f32 0.0, %v2309
    %2311 = vmatprep.mubr.f32.mxu0 0.0
    %2312 = vmatmul.mubr.f32.gmra.mrb[0].mxu0 %v146
    %v2313 = vpop.f32.mrb[0].mxu0
    %v2314 = vadd.f32 0.0, %v2313
    %v2315 = vpop.f32.mrb[0].mxu0
    %v2316 = vadd.f32 0.0, %v2315
    %2317 = vmatprep.mubr.f32.mxu0 0.0
    %2318 = vmatmul.mubr.f32.gmra.mrb[0].mxu0 %v149
    %v2319 = vpop.f32.mrb[0].mxu0
    %v2320 = vadd.f32 0.0, %v2319
    %v2321 = vpop.f32.mrb[0].mxu0
    %v2322 = vadd.f32 0.0, %v2321
    %2323 = vmatprep.mubr.f32.mxu0 0.0
    %2324 = vmatmul.mubr.f32.gmra.mrb[0].mxu0 %v152
    %v2325 = vpop.f32.mrb[0].mxu0
    %v2326 = vadd.f32 0.0, %v2325
    %v2327 = vpop.f32.mrb[0].mxu0
    %v2328 = vadd.f32 0.0, %v2327
    %2329 = vmatprep.mubr.f32.mxu0 0.0
    %2330 = vmatmul.mubr.f32.gmra.mrb[0].mxu0 %v155
    %v2331 = vpop.f32.mrb[0].mxu0
    %v2332 = vadd.f32 0.0, %v2331
    %v2333 = vpop.f32.mrb[0].mxu0
    %v2334 = vadd.f32 0.0, %v2333
    %2335 = vmatprep.mubr.f32.mxu0 0.0
    %2336 = vmatmul.mubr.f32.gmra.mrb[0].mxu0 %v158
    %v2337 = vpop.f32.mrb[0].mxu0
    %v2338 = vadd.f32 0.0, %v2337
    %v2339 = vpop.f32.mrb[0].mxu0
    %v2340 = vadd.f32 0.0, %v2339
    %2341 = vmatprep.mubr.f32.mxu0 0.0
    %2342 = vmatmul.mubr.f32.gmra.mrb[0].mxu0 %v161
    %v2343 = vpop.f32.mrb[0].mxu0
    %v2344 = vadd.f32 0.0, %v2343
    %v2345 = vpop.f32.mrb[0].mxu0
    %v2346 = vadd.f32 0.0, %v2345
    %2347 = vmatprep.mubr.f32.mxu0 0.0
    %2348 = vmatmul.mubr.f32.gmra.mrb[0].mxu0 %v164
    %v2349 = vpop.f32.mrb[0].mxu0
    %v2350 = vadd.f32 0.0, %v2349
    %v2351 = vpop.f32.mrb[0].mxu0
    %v2352 = vadd.f32 0.0, %v2351
    %2353 = vdwg.mxu0
    %2354 = vmatprep.subr.mxu0 %v1846
    %2355 = vmatpush1.msra.mxu0 %v1845
    %2356 = vmatprep.subr.mxu0 %v1854
    %2357 = vmatpush1.msra.mxu0 %v1853
    %2358 = vmatprep.subr.mxu0 %v1862
    %2359 = vmatpush1.msra.mxu0 %v1861
    %2360 = vmatprep.subr.mxu0 %v1870
    %2361 = vmatpush1.msra.mxu0 %v1869
    %2362 = vmatprep.subr.mxu0 0.0
    %2363 = vmatpush1.msra.mxu0 0.0
    %2364 = vmatprep.subr.mxu0 0.0
    %2365 = vmatpush1.msra.mxu0 0.0
    %2366 = vmatprep.subr.mxu0 0.0
    %2367 = vmatpush1.msra.mxu0 0.0
    %2368 = vmatprep.subr.mxu0 0.0
    %2369 = vmatpush1.msra.mxu0 0.0
    %2370 = vmatprep.subr.mxu0 0.0
    %2371 = vmatpush1.msra.mxu0 0.0
    %2372 = vmatprep.subr.mxu0 0.0
    %2373 = vmatpush1.msra.mxu0 0.0
    %2374 = vmatprep.subr.mxu0 0.0
    %2375 = vmatpush1.msra.mxu0 0.0
    %2376 = vmatprep.subr.mxu0 0.0
    %2377 = vmatpush1.msra.mxu0 0.0
    %2378 = vmatprep.subr.mxu0 0.0
    %2379 = vmatpush1.msra.mxu0 0.0
    %2380 = vmatprep.subr.mxu0 0.0
    %2381 = vmatpush1.msra.mxu0 0.0
    %2382 = vmatprep.subr.mxu0 0.0
    %2383 = vmatpush1.msra.mxu0 0.0
    %2384 = vmatprep.subr.mxu0 0.0
    %2385 = vmatpush1.msra.mxu0 0.0
    %2386 = vmatprep.subr.mxu0 0.0
    %2387 = vmatpush1.msra.mxu0 0.0
    %2388 = vmatprep.subr.mxu0 0.0
    %2389 = vmatpush1.msra.mxu0 0.0
    %2390 = vmatprep.subr.mxu0 0.0
    %2391 = vmatpush1.msra.mxu0 0.0
    %2392 = vmatprep.subr.mxu0 0.0
    %2393 = vmatpush1.msra.mxu0 0.0
    %2394 = vmatprep.subr.mxu0 0.0
    %2395 = vmatpush1.msra.mxu0 0.0
    %2396 = vmatprep.subr.mxu0 0.0
    %2397 = vmatpush1.msra.mxu0 0.0
    %2398 = vmatprep.subr.mxu0 0.0
    %2399 = vmatpush1.msra.mxu0 0.0
    %2400 = vmatprep.subr.mxu0 0.0
    %2401 = vmatpush1.msra.mxu0 0.0
    %2402 = vmatprep.subr.mxu0 0.0
    %2403 = vmatpush1.msra.mxu0 0.0
    %2404 = vmatprep.subr.mxu0 0.0
    %2405 = vmatpush1.msra.mxu0 0.0
    %2406 = vmatprep.subr.mxu0 0.0
    %2407 = vmatpush1.msra.mxu0 0.0
    %2408 = vmatprep.subr.mxu0 0.0
    %2409 = vmatpush1.msra.mxu0 0.0
    %2410 = vmatprep.subr.mxu0 0.0
    %2411 = vmatpush1.msra.mxu0 0.0
    %2412 = vmatprep.subr.mxu0 0.0
    %2413 = vmatpush1.msra.mxu0 0.0
    %2414 = vmatprep.subr.mxu0 0.0
    %2415 = vmatpush1.msra.mxu0 0.0
    %2416 = vmatprep.subr.mxu0 0.0
    %2417 = vmatpush1.msra.mxu0 0.0
    %2418 = vmatprep.mubr.f32.mxu0 0.0
    %2419 = vmatmul.mubr.f32.gmra.mrb[0].mxu0 %v119
    %v2420 = vpop.f32.mrb[0].mxu0
    %v2421 = vadd.f32 0.0, %v2420
    %v2422 = vpop.f32.mrb[0].mxu0
    %v2423 = vadd.f32 0.0, %v2422
    %2424 = vmatprep.mubr.f32.mxu0 0.0
    %2425 = vmatmul.mubr.f32.gmra.mrb[0].mxu0 %v122
    %v2426 = vpop.f32.mrb[0].mxu0
    %v2427 = vadd.f32 0.0, %v2426
    %v2428 = vpop.f32.mrb[0].mxu0
    %v2429 = vadd.f32 0.0, %v2428
    %2430 = vmatprep.mubr.f32.mxu0 0.0
    %2431 = vmatmul.mubr.f32.gmra.mrb[0].mxu0 %v125
    %v2432 = vpop.f32.mrb[0].mxu0
    %v2433 = vadd.f32 0.0, %v2432
    %v2434 = vpop.f32.mrb[0].mxu0
    %v2435 = vadd.f32 0.0, %v2434
    %2436 = vmatprep.mubr.f32.mxu0 0.0
    %2437 = vmatmul.mubr.f32.gmra.mrb[0].mxu0 %v128
    %v2438 = vpop.f32.mrb[0].mxu0
    %v2439 = vadd.f32 0.0, %v2438
    %v2440 = vpop.f32.mrb[0].mxu0
    %v2441 = vadd.f32 0.0, %v2440
    %2442 = vmatprep.mubr.f32.mxu0 0.0
    %2443 = vmatmul.mubr.f32.gmra.mrb[0].mxu0 %v131
    %v2444 = vpop.f32.mrb[0].mxu0
    %v2445 = vadd.f32 0.0, %v2444
    %v2446 = vpop.f32.mrb[0].mxu0
    %v2447 = vadd.f32 0.0, %v2446
    %2448 = vmatprep.mubr.f32.mxu0 0.0
    %2449 = vmatmul.mubr.f32.gmra.mrb[0].mxu0 %v134
    %v2450 = vpop.f32.mrb[0].mxu0
    %v2451 = vadd.f32 0.0, %v2450
    %v2452 = vpop.f32.mrb[0].mxu0
    %v2453 = vadd.f32 0.0, %v2452
    %2454 = vmatprep.mubr.f32.mxu0 0.0
    %2455 = vmatmul.mubr.f32.gmra.mrb[0].mxu0 %v137
    %v2456 = vpop.f32.mrb[0].mxu0
    %v2457 = vadd.f32 0.0, %v2456
    %v2458 = vpop.f32.mrb[0].mxu0
    %v2459 = vadd.f32 0.0, %v2458
    %2460 = vmatprep.mubr.f32.mxu0 0.0
    %2461 = vmatmul.mubr.f32.gmra.mrb[0].mxu0 %v140
    %v2462 = vpop.f32.mrb[0].mxu0
    %v2463 = vadd.f32 0.0, %v2462
    %v2464 = vpop.f32.mrb[0].mxu0
    %v2465 = vadd.f32 0.0, %v2464
    %2466 = vmatprep.mubr.f32.mxu0 0.0
    %2467 = vmatmul.mubr.f32.gmra.mrb[0].mxu0 %v143
    %v2468 = vpop.f32.mrb[0].mxu0
    %v2469 = vadd.f32 0.0, %v2468
    %v2470 = vpop.f32.mrb[0].mxu0
    %v2471 = vadd.f32 0.0, %v2470
    %2472 = vmatprep.mubr.f32.mxu0 0.0
    %2473 = vmatmul.mubr.f32.gmra.mrb[0].mxu0 %v146
    %v2474 = vpop.f32.mrb[0].mxu0
    %v2475 = vadd.f32 0.0, %v2474
    %v2476 = vpop.f32.mrb[0].mxu0
    %v2477 = vadd.f32 0.0, %v2476
    %2478 = vmatprep.mubr.f32.mxu0 0.0
    %2479 = vmatmul.mubr.f32.gmra.mrb[0].mxu0 %v149
    %v2480 = vpop.f32.mrb[0].mxu0
    %v2481 = vadd.f32 0.0, %v2480
    %v2482 = vpop.f32.mrb[0].mxu0
    %v2483 = vadd.f32 0.0, %v2482
    %2484 = vmatprep.mubr.f32.mxu0 0.0
    %2485 = vmatmul.mubr.f32.gmra.mrb[0].mxu0 %v152
    %v2486 = vpop.f32.mrb[0].mxu0
    %v2487 = vadd.f32 0.0, %v2486
    %v2488 = vpop.f32.mrb[0].mxu0
    %v2489 = vadd.f32 0.0, %v2488
    %2490 = vmatprep.mubr.f32.mxu0 0.0
    %2491 = vmatmul.mubr.f32.gmra.mrb[0].mxu0 %v155
    %v2492 = vpop.f32.mrb[0].mxu0
    %v2493 = vadd.f32 0.0, %v2492
    %v2494 = vpop.f32.mrb[0].mxu0
    %v2495 = vadd.f32 0.0, %v2494
    %2496 = vmatprep.mubr.f32.mxu0 0.0
    %2497 = vmatmul.mubr.f32.gmra.mrb[0].mxu0 %v158
    %v2498 = vpop.f32.mrb[0].mxu0
    %v2499 = vadd.f32 0.0, %v2498
    %v2500 = vpop.f32.mrb[0].mxu0
    %v2501 = vadd.f32 0.0, %v2500
    %2502 = vmatprep.mubr.f32.mxu0 0.0
    %2503 = vmatmul.mubr.f32.gmra.mrb[0].mxu0 %v161
    %v2504 = vpop.f32.mrb[0].mxu0
    %v2505 = vadd.f32 0.0, %v2504
    %v2506 = vpop.f32.mrb[0].mxu0
    %v2507 = vadd.f32 0.0, %v2506
    %2508 = vmatprep.mubr.f32.mxu0 0.0
    %2509 = vmatmul.mubr.f32.gmra.mrb[0].mxu0 %v164
    %v2510 = vpop.f32.mrb[0].mxu0
    %v2511 = vadd.f32 0.0, %v2510
    %v2512 = vpop.f32.mrb[0].mxu0
    %v2513 = vadd.f32 0.0, %v2512
    %2514 = vdwg.mxu0
    %v2515 = vld [vmem:[#allocation2] sm:$0xff]
    %v2516 = vld [vmem:[#allocation2 + $0x8] sm:$0xff]
    %v2517 = vld [vmem:[#allocation2 + $0x10] sm:$0xff]
    %v2518 = vld [vmem:[#allocation2 + $0x18] sm:$0xff]
    %v2519 = vld [vmem:[#allocation2 + $0x20] sm:$0xff]
    %v2520 = vld [vmem:[#allocation2 + $0x28] sm:$0xff]
    %v2521 = vld [vmem:[#allocation2 + $0x30] sm:$0xff]
    %v2522 = vld [vmem:[#allocation2 + $0x38] sm:$0xff]
    %v2523 = vld [vmem:[#allocation2 + $0x40] sm:$0xff]
    %v2524 = vld [vmem:[#allocation2 + $0x48] sm:$0xff]
    %v2525 = vld [vmem:[#allocation2 + $0x50] sm:$0xff]
    %v2526 = vld [vmem:[#allocation2 + $0x58] sm:$0xff]
    %v2527 = vld [vmem:[#allocation2 + $0x60] sm:$0xff]
    %v2528 = vld [vmem:[#allocation2 + $0x68] sm:$0xff]
    %v2529 = vld [vmem:[#allocation2 + $0x70] sm:$0xff]
    %v2530 = vld [vmem:[#allocation2 + $0x78] sm:$0xff]
    %v2531 = vadd.f32 %v2515, %v1938
    %v2532 = vadd.f32 %v2516, %v1944
    %v2533 = vadd.f32 %v2517, %v1950
    %v2534 = vadd.f32 %v2518, %v1956
    %v2535 = vadd.f32 %v2519, %v1962
    %v2536 = vadd.f32 %v2520, %v1968
    %v2537 = vadd.f32 %v2521, %v1974
    %v2538 = vadd.f32 %v2522, %v1980
    %v2539 = vadd.f32 %v2523, %v1986
    %v2540 = vadd.f32 %v2524, %v1992
    %v2541 = vadd.f32 %v2525, %v1998
    %v2542 = vadd.f32 %v2526, %v2004
    %v2543 = vadd.f32 %v2527, %v2010
    %v2544 = vadd.f32 %v2528, %v2016
    %v2545 = vadd.f32 %v2529, %v2022
    %v2546 = vadd.f32 %v2530, %v2028
    %2547 = vst [vmem:[#allocation2] sm:$0xff] %v2531
    %2548 = vst [vmem:[#allocation2 + $0x8] sm:$0xff] %v2532
    %2549 = vst [vmem:[#allocation2 + $0x10] sm:$0xff] %v2533
    %2550 = vst [vmem:[#allocation2 + $0x18] sm:$0xff] %v2534
    %2551 = vst [vmem:[#allocation2 + $0x20] sm:$0xff] %v2535
    %2552 = vst [vmem:[#allocation2 + $0x28] sm:$0xff] %v2536
    %2553 = vst [vmem:[#allocation2 + $0x30] sm:$0xff] %v2537
    %2554 = vst [vmem:[#allocation2 + $0x38] sm:$0xff] %v2538
    %2555 = vst [vmem:[#allocation2 + $0x40] sm:$0xff] %v2539
    %2556 = vst [vmem:[#allocation2 + $0x48] sm:$0xff] %v2540
    %2557 = vst [vmem:[#allocation2 + $0x50] sm:$0xff] %v2541
    %2558 = vst [vmem:[#allocation2 + $0x58] sm:$0xff] %v2542
    %2559 = vst [vmem:[#allocation2 + $0x60] sm:$0xff] %v2543
    %2560 = vst [vmem:[#allocation2 + $0x68] sm:$0xff] %v2544
    %2561 = vst [vmem:[#allocation2 + $0x70] sm:$0xff] %v2545
    %2562 = vst [vmem:[#allocation2 + $0x78] sm:$0xff] %v2546
    %v2563 = vld [vmem:[#allocation3] sm:$0xff]
    %v2564 = vld [vmem:[#allocation3 + $0x8] sm:$0xff]
    %v2565 = vld [vmem:[#allocation3 + $0x10] sm:$0xff]
    %v2566 = vld [vmem:[#allocation3 + $0x18] sm:$0xff]
    %v2567 = vld [vmem:[#allocation3 + $0x20] sm:$0xff]
    %v2568 = vld [vmem:[#allocation3 + $0x28] sm:$0xff]
    %v2569 = vld [vmem:[#allocation3 + $0x30] sm:$0xff]
    %v2570 = vld [vmem:[#allocation3 + $0x38] sm:$0xff]
    %v2571 = vld [vmem:[#allocation3 + $0x40] sm:$0xff]
    %v2572 = vld [vmem:[#allocation3 + $0x48] sm:$0xff]
    %v2573 = vld [vmem:[#allocation3 + $0x50] sm:$0xff]
    %v2574 = vld [vmem:[#allocation3 + $0x58] sm:$0xff]
    %v2575 = vld [vmem:[#allocation3 + $0x60] sm:$0xff]
    %v2576 = vld [vmem:[#allocation3 + $0x68] sm:$0xff]
    %v2577 = vld [vmem:[#allocation3 + $0x70] sm:$0xff]
    %v2578 = vld [vmem:[#allocation3 + $0x78] sm:$0xff]
    %v2579 = vmul.f32 %v1938, %v1938
    %v2580 = vmul.f32 %v1944, %v1944
    %v2581 = vmul.f32 %v1950, %v1950
    %v2582 = vmul.f32 %v1956, %v1956
    %v2583 = vmul.f32 %v1962, %v1962
    %v2584 = vmul.f32 %v1968, %v1968
    %v2585 = vmul.f32 %v1974, %v1974
    %v2586 = vmul.f32 %v1980, %v1980
    %v2587 = vmul.f32 %v1986, %v1986
    %v2588 = vmul.f32 %v1992, %v1992
    %v2589 = vmul.f32 %v1998, %v1998
    %v2590 = vmul.f32 %v2004, %v2004
    %v2591 = vmul.f32 %v2010, %v2010
    %v2592 = vmul.f32 %v2016, %v2016
    %v2593 = vmul.f32 %v2022, %v2022
    %v2594 = vmul.f32 %v2028, %v2028
    %v2595 = vadd.f32 %v2563, %v2579
    %v2596 = vadd.f32 %v2564, %v2580
    %v2597 = vadd.f32 %v2565, %v2581
    %v2598 = vadd.f32 %v2566, %v2582
    %v2599 = vadd.f32 %v2567, %v2583
    %v2600 = vadd.f32 %v2568, %v2584
    %v2601 = vadd.f32 %v2569, %v2585
    %v2602 = vadd.f32 %v2570, %v2586
    %v2603 = vadd.f32 %v2571, %v2587
    %v2604 = vadd.f32 %v2572, %v2588
    %v2605 = vadd.f32 %v2573, %v2589
    %v2606 = vadd.f32 %v2574, %v2590
    %v2607 = vadd.f32 %v2575, %v2591
    %v2608 = vadd.f32 %v2576, %v2592
    %v2609 = vadd.f32 %v2577, %v2593
    %v2610 = vadd.f32 %v2578, %v2594
    %2611 = vst [vmem:[#allocation3] sm:$0xff] %v2595
    %2612 = vst [vmem:[#allocation3 + $0x8] sm:$0xff] %v2596
    %2613 = vst [vmem:[#allocation3 + $0x10] sm:$0xff] %v2597
    %2614 = vst [vmem:[#allocation3 + $0x18] sm:$0xff] %v2598
    %2615 = vst [vmem:[#allocation3 + $0x20] sm:$0xff] %v2599
    %2616 = vst [vmem:[#allocation3 + $0x28] sm:$0xff] %v2600
    %2617 = vst [vmem:[#allocation3 + $0x30] sm:$0xff] %v2601
    %2618 = vst [vmem:[#allocation3 + $0x38] sm:$0xff] %v2602
    %2619 = vst [vmem:[#allocation3 + $0x40] sm:$0xff] %v2603
    %2620 = vst [vmem:[#allocation3 + $0x48] sm:$0xff] %v2604
    %2621 = vst [vmem:[#allocation3 + $0x50] sm:$0xff] %v2605
    %2622 = vst [vmem:[#allocation3 + $0x58] sm:$0xff] %v2606
    %2623 = vst [vmem:[#allocation3 + $0x60] sm:$0xff] %v2607
    %2624 = vst [vmem:[#allocation3 + $0x68] sm:$0xff] %v2608
    %2625 = vst [vmem:[#allocation3 + $0x70] sm:$0xff] %v2609
    %2626 = vst [vmem:[#allocation3 + $0x78] sm:$0xff] %v2610
    %v2627 = vld [vmem:[#allocation2] sm:$0xff]
    %v2628 = vld [vmem:[#allocation2 + $0x8] sm:$0xff]
    %v2629 = vld [vmem:[#allocation2 + $0x10] sm:$0xff]
    %v2630 = vld [vmem:[#allocation2 + $0x18] sm:$0xff]
    %v2631 = vld [vmem:[#allocation2 + $0x20] sm:$0xff]
    %v2632 = vld [vmem:[#allocation2 + $0x28] sm:$0xff]
    %v2633 = vld [vmem:[#allocation2 + $0x30] sm:$0xff]
    %v2634 = vld [vmem:[#allocation2 + $0x38] sm:$0xff]
    %v2635 = vld [vmem:[#allocation2 + $0x40] sm:$0xff]
    %v2636 = vld [vmem:[#allocation2 + $0x48] sm:$0xff]
    %v2637 = vld [vmem:[#allocation2 + $0x50] sm:$0xff]
    %v2638 = vld [vmem:[#allocation2 + $0x58] sm:$0xff]
    %v2639 = vld [vmem:[#allocation2 + $0x60] sm:$0xff]
    %v2640 = vld [vmem:[#allocation2 + $0x68] sm:$0xff]
    %v2641 = vld [vmem:[#allocation2 + $0x70] sm:$0xff]
    %v2642 = vld [vmem:[#allocation2 + $0x78] sm:$0xff]
    %v2643 = vadd.f32 %v2627, %v1940
    %v2644 = vadd.f32 %v2628, %v1946
    %v2645 = vadd.f32 %v2629, %v1952
    %v2646 = vadd.f32 %v2630, %v1958
    %v2647 = vadd.f32 %v2631, %v1964
    %v2648 = vadd.f32 %v2632, %v1970
    %v2649 = vadd.f32 %v2633, %v1976
    %v2650 = vadd.f32 %v2634, %v1982
    %v2651 = vadd.f32 %v2635, %v1988
    %v2652 = vadd.f32 %v2636, %v1994
    %v2653 = vadd.f32 %v2637, %v2000
    %v2654 = vadd.f32 %v2638, %v2006
    %v2655 = vadd.f32 %v2639, %v2012
    %v2656 = vadd.f32 %v2640, %v2018
    %v2657 = vadd.f32 %v2641, %v2024
    %v2658 = vadd.f32 %v2642, %v2030
    %2659 = vst [vmem:[#allocation2] sm:$0xff] %v2643
    %2660 = vst [vmem:[#allocation2 + $0x8] sm:$0xff] %v2644
    %2661 = vst [vmem:[#allocation2 + $0x10] sm:$0xff] %v2645
    %2662 = vst [vmem:[#allocation2 + $0x18] sm:$0xff] %v2646
    %2663 = vst [vmem:[#allocation2 + $0x20] sm:$0xff] %v2647
    %2664 = vst [vmem:[#allocation2 + $0x28] sm:$0xff] %v2648
    %2665 = vst [vmem:[#allocation2 + $0x30] sm:$0xff] %v2649
    %2666 = vst [vmem:[#allocation2 + $0x38] sm:$0xff] %v2650
    %2667 = vst [vmem:[#allocation2 + $0x40] sm:$0xff] %v2651
    %2668 = vst [vmem:[#allocation2 + $0x48] sm:$0xff] %v2652
    %2669 = vst [vmem:[#allocation2 + $0x50] sm:$0xff] %v2653
    %2670 = vst [vmem:[#allocation2 + $0x58] sm:$0xff] %v2654
    %2671 = vst [vmem:[#allocation2 + $0x60] sm:$0xff] %v2655
    %2672 = vst [vmem:[#allocation2 + $0x68] sm:$0xff] %v2656
    %2673 = vst [vmem:[#allocation2 + $0x70] sm:$0xff] %v2657
    %2674 = vst [vmem:[#allocation2 + $0x78] sm:$0xff] %v2658
    %v2675 = vld [vmem:[#allocation3] sm:$0xff]
    %v2676 = vld [vmem:[#allocation3 + $0x8] sm:$0xff]
    %v2677 = vld [vmem:[#allocation3 + $0x10] sm:$0xff]
    %v2678 = vld [vmem:[#allocation3 + $0x18] sm:$0xff]
    %v2679 = vld [vmem:[#allocation3 + $0x20] sm:$0xff]
    %v2680 = vld [vmem:[#allocation3 + $0x28] sm:$0xff]
    %v2681 = vld [vmem:[#allocation3 + $0x30] sm:$0xff]
    %v2682 = vld [vmem:[#allocation3 + $0x38] sm:$0xff]
    %v2683 = vld [vmem:[#allocation3 + $0x40] sm:$0xff]
    %v2684 = vld [vmem:[#allocation3 + $0x48] sm:$0xff]
    %v2685 = vld [vmem:[#allocation3 + $0x50] sm:$0xff]
    %v2686 = vld [vmem:[#allocation3 + $0x58] sm:$0xff]
    %v2687 = vld [vmem:[#allocation3 + $0x60] sm:$0xff]
    %v2688 = vld [vmem:[#allocation3 + $0x68] sm:$0xff]
    %v2689 = vld [vmem:[#allocation3 + $0x70] sm:$0xff]
    %v2690 = vld [vmem:[#allocation3 + $0x78] sm:$0xff]
    %v2691 = vmul.f32 %v1940, %v1940
    %v2692 = vmul.f32 %v1946, %v1946
    %v2693 = vmul.f32 %v1952, %v1952
    %v2694 = vmul.f32 %v1958, %v1958
    %v2695 = vmul.f32 %v1964, %v1964
    %v2696 = vmul.f32 %v1970, %v1970
    %v2697 = vmul.f32 %v1976, %v1976
    %v2698 = vmul.f32 %v1982, %v1982
    %v2699 = vmul.f32 %v1988, %v1988
    %v2700 = vmul.f32 %v1994, %v1994
    %v2701 = vmul.f32 %v2000, %v2000
    %v2702 = vmul.f32 %v2006, %v2006
    %v2703 = vmul.f32 %v2012, %v2012
    %v2704 = vmul.f32 %v2018, %v2018
    %v2705 = vmul.f32 %v2024, %v2024
    %v2706 = vmul.f32 %v2030, %v2030
    %v2707 = vadd.f32 %v2675, %v2691
    %v2708 = vadd.f32 %v2676, %v2692
    %v2709 = vadd.f32 %v2677, %v2693
    %v2710 = vadd.f32 %v2678, %v2694
    %v2711 = vadd.f32 %v2679, %v2695
    %v2712 = vadd.f32 %v2680, %v2696
    %v2713 = vadd.f32 %v2681, %v2697
    %v2714 = vadd.f32 %v2682, %v2698
    %v2715 = vadd.f32 %v2683, %v2699
    %v2716 = vadd.f32 %v2684, %v2700
    %v2717 = vadd.f32 %v2685, %v2701
    %v2718 = vadd.f32 %v2686, %v2702
    %v2719 = vadd.f32 %v2687, %v2703
    %v2720 = vadd.f32 %v2688, %v2704
    %v2721 = vadd.f32 %v2689, %v2705
    %v2722 = vadd.f32 %v2690, %v2706
    %2723 = vst [vmem:[#allocation3] sm:$0xff] %v2707
    %2724 = vst [vmem:[#allocation3 + $0x8] sm:$0xff] %v2708
    %2725 = vst [vmem:[#allocation3 + $0x10] sm:$0xff] %v2709
    %2726 = vst [vmem:[#allocation3 + $0x18] sm:$0xff] %v2710
    %2727 = vst [vmem:[#allocation3 + $0x20] sm:$0xff] %v2711
    %2728 = vst [vmem:[#allocation3 + $0x28] sm:$0xff] %v2712
    %2729 = vst [vmem:[#allocation3 + $0x30] sm:$0xff] %v2713
    %2730 = vst [vmem:[#allocation3 + $0x38] sm:$0xff] %v2714
    %2731 = vst [vmem:[#allocation3 + $0x40] sm:$0xff] %v2715
    %2732 = vst [vmem:[#allocation3 + $0x48] sm:$0xff] %v2716
    %2733 = vst [vmem:[#allocation3 + $0x50] sm:$0xff] %v2717
    %2734 = vst [vmem:[#allocation3 + $0x58] sm:$0xff] %v2718
    %2735 = vst [vmem:[#allocation3 + $0x60] sm:$0xff] %v2719
    %2736 = vst [vmem:[#allocation3 + $0x68] sm:$0xff] %v2720
    %2737 = vst [vmem:[#allocation3 + $0x70] sm:$0xff] %v2721
    %2738 = vst [vmem:[#allocation3 + $0x78] sm:$0xff] %v2722
    %v2739 = vld [vmem:[#allocation2] sm:$0xff]
    %v2740 = vld [vmem:[#allocation2 + $0x8] sm:$0xff]
    %v2741 = vld [vmem:[#allocation2 + $0x10] sm:$0xff]
    %v2742 = vld [vmem:[#allocation2 + $0x18] sm:$0xff]
    %v2743 = vld [vmem:[#allocation2 + $0x20] sm:$0xff]
    %v2744 = vld [vmem:[#allocation2 + $0x28] sm:$0xff]
    %v2745 = vld [vmem:[#allocation2 + $0x30] sm:$0xff]
    %v2746 = vld [vmem:[#allocation2 + $0x38] sm:$0xff]
    %v2747 = vld [vmem:[#allocation2 + $0x40] sm:$0xff]
    %v2748 = vld [vmem:[#allocation2 + $0x48] sm:$0xff]
    %v2749 = vld [vmem:[#allocation2 + $0x50] sm:$0xff]
    %v2750 = vld [vmem:[#allocation2 + $0x58] sm:$0xff]
    %v2751 = vld [vmem:[#allocation2 + $0x60] sm:$0xff]
    %v2752 = vld [vmem:[#allocation2 + $0x68] sm:$0xff]
    %v2753 = vld [vmem:[#allocation2 + $0x70] sm:$0xff]
    %v2754 = vld [vmem:[#allocation2 + $0x78] sm:$0xff]
    %v2755 = vadd.f32 %v2739, %v2099
    %v2756 = vadd.f32 %v2740, %v2105
    %v2757 = vadd.f32 %v2741, %v2111
    %v2758 = vadd.f32 %v2742, %v2117
    %v2759 = vadd.f32 %v2743, %v2123
    %v2760 = vadd.f32 %v2744, %v2129
    %v2761 = vadd.f32 %v2745, %v2135
    %v2762 = vadd.f32 %v2746, %v2141
    %v2763 = vadd.f32 %v2747, %v2147
    %v2764 = vadd.f32 %v2748, %v2153
    %v2765 = vadd.f32 %v2749, %v2159
    %v2766 = vadd.f32 %v2750, %v2165
    %v2767 = vadd.f32 %v2751, %v2171
    %v2768 = vadd.f32 %v2752, %v2177
    %v2769 = vadd.f32 %v2753, %v2183
    %v2770 = vadd.f32 %v2754, %v2189
    %2771 = vst [vmem:[#allocation2] sm:$0xff] %v2755
    %2772 = vst [vmem:[#allocation2 + $0x8] sm:$0xff] %v2756
    %2773 = vst [vmem:[#allocation2 + $0x10] sm:$0xff] %v2757
    %2774 = vst [vmem:[#allocation2 + $0x18] sm:$0xff] %v2758
    %2775 = vst [vmem:[#allocation2 + $0x20] sm:$0xff] %v2759
    %2776 = vst [vmem:[#allocation2 + $0x28] sm:$0xff] %v2760
    %2777 = vst [vmem:[#allocation2 + $0x30] sm:$0xff] %v2761
    %2778 = vst [vmem:[#allocation2 + $0x38] sm:$0xff] %v2762
    %2779 = vst [vmem:[#allocation2 + $0x40] sm:$0xff] %v2763
    %2780 = vst [vmem:[#allocation2 + $0x48] sm:$0xff] %v2764
    %2781 = vst [vmem:[#allocation2 + $0x50] sm:$0xff] %v2765
    %2782 = vst [vmem:[#allocation2 + $0x58] sm:$0xff] %v2766
    %2783 = vst [vmem:[#allocation2 + $0x60] sm:$0xff] %v2767
    %2784 = vst [vmem:[#allocation2 + $0x68] sm:$0xff] %v2768
    %2785 = vst [vmem:[#allocation2 + $0x70] sm:$0xff] %v2769
    %2786 = vst [vmem:[#allocation2 + $0x78] sm:$0xff] %v2770
    %v2787 = vld [vmem:[#allocation3] sm:$0xff]
    %v2788 = vld [vmem:[#allocation3 + $0x8] sm:$0xff]
    %v2789 = vld [vmem:[#allocation3 + $0x10] sm:$0xff]
    %v2790 = vld [vmem:[#allocation3 + $0x18] sm:$0xff]
    %v2791 = vld [vmem:[#allocation3 + $0x20] sm:$0xff]
    %v2792 = vld [vmem:[#allocation3 + $0x28] sm:$0xff]
    %v2793 = vld [vmem:[#allocation3 + $0x30] sm:$0xff]
    %v2794 = vld [vmem:[#allocation3 + $0x38] sm:$0xff]
    %v2795 = vld [vmem:[#allocation3 + $0x40] sm:$0xff]
    %v2796 = vld [vmem:[#allocation3 + $0x48] sm:$0xff]
    %v2797 = vld [vmem:[#allocation3 + $0x50] sm:$0xff]
    %v2798 = vld [vmem:[#allocation3 + $0x58] sm:$0xff]
    %v2799 = vld [vmem:[#allocation3 + $0x60] sm:$0xff]
    %v2800 = vld [vmem:[#allocation3 + $0x68] sm:$0xff]
    %v2801 = vld [vmem:[#allocation3 + $0x70] sm:$0xff]
    %v2802 = vld [vmem:[#allocation3 + $0x78] sm:$0xff]
    %v2803 = vmul.f32 %v2099, %v2099
    %v2804 = vmul.f32 %v2105, %v2105
    %v2805 = vmul.f32 %v2111, %v2111
    %v2806 = vmul.f32 %v2117, %v2117
    %v2807 = vmul.f32 %v2123, %v2123
    %v2808 = vmul.f32 %v2129, %v2129
    %v2809 = vmul.f32 %v2135, %v2135
    %v2810 = vmul.f32 %v2141, %v2141
    %v2811 = vmul.f32 %v2147, %v2147
    %v2812 = vmul.f32 %v2153, %v2153
    %v2813 = vmul.f32 %v2159, %v2159
    %v2814 = vmul.f32 %v2165, %v2165
    %v2815 = vmul.f32 %v2171, %v2171
    %v2816 = vmul.f32 %v2177, %v2177
    %v2817 = vmul.f32 %v2183, %v2183
    %v2818 = vmul.f32 %v2189, %v2189
    %v2819 = vadd.f32 %v2787, %v2803
    %v2820 = vadd.f32 %v2788, %v2804
    %v2821 = vadd.f32 %v2789, %v2805
    %v2822 = vadd.f32 %v2790, %v2806
    %v2823 = vadd.f32 %v2791, %v2807
    %v2824 = vadd.f32 %v2792, %v2808
    %v2825 = vadd.f32 %v2793, %v2809
    %v2826 = vadd.f32 %v2794, %v2810
    %v2827 = vadd.f32 %v2795, %v2811
    %v2828 = vadd.f32 %v2796, %v2812
    %v2829 = vadd.f32 %v2797, %v2813
    %v2830 = vadd.f32 %v2798, %v2814
    %v2831 = vadd.f32 %v2799, %v2815
    %v2832 = vadd.f32 %v2800, %v2816
    %v2833 = vadd.f32 %v2801, %v2817
    %v2834 = vadd.f32 %v2802, %v2818
    %2835 = vst [vmem:[#allocation3] sm:$0xff] %v2819
    %2836 = vst [vmem:[#allocation3 + $0x8] sm:$0xff] %v2820
    %2837 = vst [vmem:[#allocation3 + $0x10] sm:$0xff] %v2821
    %2838 = vst [vmem:[#allocation3 + $0x18] sm:$0xff] %v2822
    %2839 = vst [vmem:[#allocation3 + $0x20] sm:$0xff] %v2823
    %2840 = vst [vmem:[#allocation3 + $0x28] sm:$0xff] %v2824
    %2841 = vst [vmem:[#allocation3 + $0x30] sm:$0xff] %v2825
    %2842 = vst [vmem:[#allocation3 + $0x38] sm:$0xff] %v2826
    %2843 = vst [vmem:[#allocation3 + $0x40] sm:$0xff] %v2827
    %2844 = vst [vmem:[#allocation3 + $0x48] sm:$0xff] %v2828
    %2845 = vst [vmem:[#allocation3 + $0x50] sm:$0xff] %v2829
    %2846 = vst [vmem:[#allocation3 + $0x58] sm:$0xff] %v2830
    %2847 = vst [vmem:[#allocation3 + $0x60] sm:$0xff] %v2831
    %2848 = vst [vmem:[#allocation3 + $0x68] sm:$0xff] %v2832
    %2849 = vst [vmem:[#allocation3 + $0x70] sm:$0xff] %v2833
    %2850 = vst [vmem:[#allocation3 + $0x78] sm:$0xff] %v2834
    %v2851 = vld [vmem:[#allocation2] sm:$0xff]
    %v2852 = vld [vmem:[#allocation2 + $0x8] sm:$0xff]
    %v2853 = vld [vmem:[#allocation2 + $0x10] sm:$0xff]
    %v2854 = vld [vmem:[#allocation2 + $0x18] sm:$0xff]
    %v2855 = vld [vmem:[#allocation2 + $0x20] sm:$0xff]
    %v2856 = vld [vmem:[#allocation2 + $0x28] sm:$0xff]
    %v2857 = vld [vmem:[#allocation2 + $0x30] sm:$0xff]
    %v2858 = vld [vmem:[#allocation2 + $0x38] sm:$0xff]
    %v2859 = vld [vmem:[#allocation2 + $0x40] sm:$0xff]
    %v2860 = vld [vmem:[#allocation2 + $0x48] sm:$0xff]
    %v2861 = vld [vmem:[#allocation2 + $0x50] sm:$0xff]
    %v2862 = vld [vmem:[#allocation2 + $0x58] sm:$0xff]
    %v2863 = vld [vmem:[#allocation2 + $0x60] sm:$0xff]
    %v2864 = vld [vmem:[#allocation2 + $0x68] sm:$0xff]
    %v2865 = vld [vmem:[#allocation2 + $0x70] sm:$0xff]
    %v2866 = vld [vmem:[#allocation2 + $0x78] sm:$0xff]
    %v2867 = vadd.f32 %v2851, %v2101
    %v2868 = vadd.f32 %v2852, %v2107
    %v2869 = vadd.f32 %v2853, %v2113
    %v2870 = vadd.f32 %v2854, %v2119
    %v2871 = vadd.f32 %v2855, %v2125
    %v2872 = vadd.f32 %v2856, %v2131
    %v2873 = vadd.f32 %v2857, %v2137
    %v2874 = vadd.f32 %v2858, %v2143
    %v2875 = vadd.f32 %v2859, %v2149
    %v2876 = vadd.f32 %v2860, %v2155
    %v2877 = vadd.f32 %v2861, %v2161
    %v2878 = vadd.f32 %v2862, %v2167
    %v2879 = vadd.f32 %v2863, %v2173
    %v2880 = vadd.f32 %v2864, %v2179
    %v2881 = vadd.f32 %v2865, %v2185
    %v2882 = vadd.f32 %v2866, %v2191
    %2883 = vst [vmem:[#allocation2] sm:$0xff] %v2867
    %2884 = vst [vmem:[#allocation2 + $0x8] sm:$0xff] %v2868
    %2885 = vst [vmem:[#allocation2 + $0x10] sm:$0xff] %v2869
    %2886 = vst [vmem:[#allocation2 + $0x18] sm:$0xff] %v2870
    %2887 = vst [vmem:[#allocation2 + $0x20] sm:$0xff] %v2871
    %2888 = vst [vmem:[#allocation2 + $0x28] sm:$0xff] %v2872
    %2889 = vst [vmem:[#allocation2 + $0x30] sm:$0xff] %v2873
    %2890 = vst [vmem:[#allocation2 + $0x38] sm:$0xff] %v2874
    %2891 = vst [vmem:[#allocation2 + $0x40] sm:$0xff] %v2875
    %2892 = vst [vmem:[#allocation2 + $0x48] sm:$0xff] %v2876
    %2893 = vst [vmem:[#allocation2 + $0x50] sm:$0xff] %v2877
    %2894 = vst [vmem:[#allocation2 + $0x58] sm:$0xff] %v2878
    %2895 = vst [vmem:[#allocation2 + $0x60] sm:$0xff] %v2879
    %2896 = vst [vmem:[#allocation2 + $0x68] sm:$0xff] %v2880
    %2897 = vst [vmem:[#allocation2 + $0x70] sm:$0xff] %v2881
    %2898 = vst [vmem:[#allocation2 + $0x78] sm:$0xff] %v2882
    %v2899 = vld [vmem:[#allocation3] sm:$0xff]
    %v2900 = vld [vmem:[#allocation3 + $0x8] sm:$0xff]
    %v2901 = vld [vmem:[#allocation3 + $0x10] sm:$0xff]
    %v2902 = vld [vmem:[#allocation3 + $0x18] sm:$0xff]
    %v2903 = vld [vmem:[#allocation3 + $0x20] sm:$0xff]
    %v2904 = vld [vmem:[#allocation3 + $0x28] sm:$0xff]
    %v2905 = vld [vmem:[#allocation3 + $0x30] sm:$0xff]
    %v2906 = vld [vmem:[#allocation3 + $0x38] sm:$0xff]
    %v2907 = vld [vmem:[#allocation3 + $0x40] sm:$0xff]
    %v2908 = vld [vmem:[#allocation3 + $0x48] sm:$0xff]
    %v2909 = vld [vmem:[#allocation3 + $0x50] sm:$0xff]
    %v2910 = vld [vmem:[#allocation3 + $0x58] sm:$0xff]
    %v2911 = vld [vmem:[#allocation3 + $0x60] sm:$0xff]
    %v2912 = vld [vmem:[#allocation3 + $0x68] sm:$0xff]
    %v2913 = vld [vmem:[#allocation3 + $0x70] sm:$0xff]
    %v2914 = vld [vmem:[#allocation3 + $0x78] sm:$0xff]
    %v2915 = vmul.f32 %v2101, %v2101
    %v2916 = vmul.f32 %v2107, %v2107
    %v2917 = vmul.f32 %v2113, %v2113
    %v2918 = vmul.f32 %v2119, %v2119
    %v2919 = vmul.f32 %v2125, %v2125
    %v2920 = vmul.f32 %v2131, %v2131
    %v2921 = vmul.f32 %v2137, %v2137
    %v2922 = vmul.f32 %v2143, %v2143
    %v2923 = vmul.f32 %v2149, %v2149
    %v2924 = vmul.f32 %v2155, %v2155
    %v2925 = vmul.f32 %v2161, %v2161
    %v2926 = vmul.f32 %v2167, %v2167
    %v2927 = vmul.f32 %v2173, %v2173
    %v2928 = vmul.f32 %v2179, %v2179
    %v2929 = vmul.f32 %v2185, %v2185
    %v2930 = vmul.f32 %v2191, %v2191
    %v2931 = vadd.f32 %v2899, %v2915
    %v2932 = vadd.f32 %v2900, %v2916
    %v2933 = vadd.f32 %v2901, %v2917
    %v2934 = vadd.f32 %v2902, %v2918
    %v2935 = vadd.f32 %v2903, %v2919
    %v2936 = vadd.f32 %v2904, %v2920
    %v2937 = vadd.f32 %v2905, %v2921
    %v2938 = vadd.f32 %v2906, %v2922
    %v2939 = vadd.f32 %v2907, %v2923
    %v2940 = vadd.f32 %v2908, %v2924
    %v2941 = vadd.f32 %v2909, %v2925
    %v2942 = vadd.f32 %v2910, %v2926
    %v2943 = vadd.f32 %v2911, %v2927
    %v2944 = vadd.f32 %v2912, %v2928
    %v2945 = vadd.f32 %v2913, %v2929
    %v2946 = vadd.f32 %v2914, %v2930
    %2947 = vst [vmem:[#allocation3] sm:$0xff] %v2931
    %2948 = vst [vmem:[#allocation3 + $0x8] sm:$0xff] %v2932
    %2949 = vst [vmem:[#allocation3 + $0x10] sm:$0xff] %v2933
    %2950 = vst [vmem:[#allocation3 + $0x18] sm:$0xff] %v2934
    %2951 = vst [vmem:[#allocation3 + $0x20] sm:$0xff] %v2935
    %2952 = vst [vmem:[#allocation3 + $0x28] sm:$0xff] %v2936
    %2953 = vst [vmem:[#allocation3 + $0x30] sm:$0xff] %v2937
    %2954 = vst [vmem:[#allocation3 + $0x38] sm:$0xff] %v2938
    %2955 = vst [vmem:[#allocation3 + $0x40] sm:$0xff] %v2939
    %2956 = vst [vmem:[#allocation3 + $0x48] sm:$0xff] %v2940
    %2957 = vst [vmem:[#allocation3 + $0x50] sm:$0xff] %v2941
    %2958 = vst [vmem:[#allocation3 + $0x58] sm:$0xff] %v2942
    %2959 = vst [vmem:[#allocation3 + $0x60] sm:$0xff] %v2943
    %2960 = vst [vmem:[#allocation3 + $0x68] sm:$0xff] %v2944
    %2961 = vst [vmem:[#allocation3 + $0x70] sm:$0xff] %v2945
    %2962 = vst [vmem:[#allocation3 + $0x78] sm:$0xff] %v2946
    %v2963 = vld [vmem:[#allocation2] sm:$0xff]
    %v2964 = vld [vmem:[#allocation2 + $0x8] sm:$0xff]
    %v2965 = vld [vmem:[#allocation2 + $0x10] sm:$0xff]
    %v2966 = vld [vmem:[#allocation2 + $0x18] sm:$0xff]
    %v2967 = vld [vmem:[#allocation2 + $0x20] sm:$0xff]
    %v2968 = vld [vmem:[#allocation2 + $0x28] sm:$0xff]
    %v2969 = vld [vmem:[#allocation2 + $0x30] sm:$0xff]
    %v2970 = vld [vmem:[#allocation2 + $0x38] sm:$0xff]
    %v2971 = vld [vmem:[#allocation2 + $0x40] sm:$0xff]
    %v2972 = vld [vmem:[#allocation2 + $0x48] sm:$0xff]
    %v2973 = vld [vmem:[#allocation2 + $0x50] sm:$0xff]
    %v2974 = vld [vmem:[#allocation2 + $0x58] sm:$0xff]
    %v2975 = vld [vmem:[#allocation2 + $0x60] sm:$0xff]
    %v2976 = vld [vmem:[#allocation2 + $0x68] sm:$0xff]
    %v2977 = vld [vmem:[#allocation2 + $0x70] sm:$0xff]
    %v2978 = vld [vmem:[#allocation2 + $0x78] sm:$0xff]
    %v2979 = vadd.f32 %v2963, %v2260
    %v2980 = vadd.f32 %v2964, %v2266
    %v2981 = vadd.f32 %v2965, %v2272
    %v2982 = vadd.f32 %v2966, %v2278
    %v2983 = vadd.f32 %v2967, %v2284
    %v2984 = vadd.f32 %v2968, %v2290
    %v2985 = vadd.f32 %v2969, %v2296
    %v2986 = vadd.f32 %v2970, %v2302
    %v2987 = vadd.f32 %v2971, %v2308
    %v2988 = vadd.f32 %v2972, %v2314
    %v2989 = vadd.f32 %v2973, %v2320
    %v2990 = vadd.f32 %v2974, %v2326
    %v2991 = vadd.f32 %v2975, %v2332
    %v2992 = vadd.f32 %v2976, %v2338
    %v2993 = vadd.f32 %v2977, %v2344
    %v2994 = vadd.f32 %v2978, %v2350
    %2995 = vst [vmem:[#allocation2] sm:$0xff] %v2979
    %2996 = vst [vmem:[#allocation2 + $0x8] sm:$0xff] %v2980
    %2997 = vst [vmem:[#allocation2 + $0x10] sm:$0xff] %v2981
    %2998 = vst [vmem:[#allocation2 + $0x18] sm:$0xff] %v2982
    %2999 = vst [vmem:[#allocation2 + $0x20] sm:$0xff] %v2983
    %3000 = vst [vmem:[#allocation2 + $0x28] sm:$0xff] %v2984
    %3001 = vst [vmem:[#allocation2 + $0x30] sm:$0xff] %v2985
    %3002 = vst [vmem:[#allocation2 + $0x38] sm:$0xff] %v2986
    %3003 = vst [vmem:[#allocation2 + $0x40] sm:$0xff] %v2987
    %3004 = vst [vmem:[#allocation2 + $0x48] sm:$0xff] %v2988
    %3005 = vst [vmem:[#allocation2 + $0x50] sm:$0xff] %v2989
    %3006 = vst [vmem:[#allocation2 + $0x58] sm:$0xff] %v2990
    %3007 = vst [vmem:[#allocation2 + $0x60] sm:$0xff] %v2991
    %3008 = vst [vmem:[#allocation2 + $0x68] sm:$0xff] %v2992
    %3009 = vst [vmem:[#allocation2 + $0x70] sm:$0xff] %v2993
    %3010 = vst [vmem:[#allocation2 + $0x78] sm:$0xff] %v2994
    %v3011 = vld [vmem:[#allocation3] sm:$0xff]
    %v3012 = vld [vmem:[#allocation3 + $0x8] sm:$0xff]
    %v3013 = vld [vmem:[#allocation3 + $0x10] sm:$0xff]
    %v3014 = vld [vmem:[#allocation3 + $0x18] sm:$0xff]
    %v3015 = vld [vmem:[#allocation3 + $0x20] sm:$0xff]
    %v3016 = vld [vmem:[#allocation3 + $0x28] sm:$0xff]
    %v3017 = vld [vmem:[#allocation3 + $0x30] sm:$0xff]
    %v3018 = vld [vmem:[#allocation3 + $0x38] sm:$0xff]
    %v3019 = vld [vmem:[#allocation3 + $0x40] sm:$0xff]
    %v3020 = vld [vmem:[#allocation3 + $0x48] sm:$0xff]
    %v3021 = vld [vmem:[#allocation3 + $0x50] sm:$0xff]
    %v3022 = vld [vmem:[#allocation3 + $0x58] sm:$0xff]
    %v3023 = vld [vmem:[#allocation3 + $0x60] sm:$0xff]
    %v3024 = vld [vmem:[#allocation3 + $0x68] sm:$0xff]
    %v3025 = vld [vmem:[#allocation3 + $0x70] sm:$0xff]
    %v3026 = vld [vmem:[#allocation3 + $0x78] sm:$0xff]
    %v3027 = vmul.f32 %v2260, %v2260
    %v3028 = vmul.f32 %v2266, %v2266
    %v3029 = vmul.f32 %v2272, %v2272
    %v3030 = vmul.f32 %v2278, %v2278
    %v3031 = vmul.f32 %v2284, %v2284
    %v3032 = vmul.f32 %v2290, %v2290
    %v3033 = vmul.f32 %v2296, %v2296
    %v3034 = vmul.f32 %v2302, %v2302
    %v3035 = vmul.f32 %v2308, %v2308
    %v3036 = vmul.f32 %v2314, %v2314
    %v3037 = vmul.f32 %v2320, %v2320
    %v3038 = vmul.f32 %v2326, %v2326
    %v3039 = vmul.f32 %v2332, %v2332
    %v3040 = vmul.f32 %v2338, %v2338
    %v3041 = vmul.f32 %v2344, %v2344
    %v3042 = vmul.f32 %v2350, %v2350
    %v3043 = vadd.f32 %v3011, %v3027
    %v3044 = vadd.f32 %v3012, %v3028
    %v3045 = vadd.f32 %v3013, %v3029
    %v3046 = vadd.f32 %v3014, %v3030
    %v3047 = vadd.f32 %v3015, %v3031
    %v3048 = vadd.f32 %v3016, %v3032
    %v3049 = vadd.f32 %v3017, %v3033
    %v3050 = vadd.f32 %v3018, %v3034
    %v3051 = vadd.f32 %v3019, %v3035
    %v3052 = vadd.f32 %v3020, %v3036
    %v3053 = vadd.f32 %v3021, %v3037
    %v3054 = vadd.f32 %v3022, %v3038
    %v3055 = vadd.f32 %v3023, %v3039
    %v3056 = vadd.f32 %v3024, %v3040
    %v3057 = vadd.f32 %v3025, %v3041
    %v3058 = vadd.f32 %v3026, %v3042
    %3059 = vst [vmem:[#allocation3] sm:$0xff] %v3043
    %3060 = vst [vmem:[#allocation3 + $0x8] sm:$0xff] %v3044
    %3061 = vst [vmem:[#allocation3 + $0x10] sm:$0xff] %v3045
    %3062 = vst [vmem:[#allocation3 + $0x18] sm:$0xff] %v3046
    %3063 = vst [vmem:[#allocation3 + $0x20] sm:$0xff] %v3047
    %3064 = vst [vmem:[#allocation3 + $0x28] sm:$0xff] %v3048
    %3065 = vst [vmem:[#allocation3 + $0x30] sm:$0xff] %v3049
    %3066 = vst [vmem:[#allocation3 + $0x38] sm:$0xff] %v3050
    %3067 = vst [vmem:[#allocation3 + $0x40] sm:$0xff] %v3051
    %3068 = vst [vmem:[#allocation3 + $0x48] sm:$0xff] %v3052
    %3069 = vst [vmem:[#allocation3 + $0x50] sm:$0xff] %v3053
    %3070 = vst [vmem:[#allocation3 + $0x58] sm:$0xff] %v3054
    %3071 = vst [vmem:[#allocation3 + $0x60] sm:$0xff] %v3055
    %3072 = vst [vmem:[#allocation3 + $0x68] sm:$0xff] %v3056
    %3073 = vst [vmem:[#allocation3 + $0x70] sm:$0xff] %v3057
    %3074 = vst [vmem:[#allocation3 + $0x78] sm:$0xff] %v3058
    %v3075 = vld [vmem:[#allocation2] sm:$0xff]
    %v3076 = vld [vmem:[#allocation2 + $0x8] sm:$0xff]
    %v3077 = vld [vmem:[#allocation2 + $0x10] sm:$0xff]
    %v3078 = vld [vmem:[#allocation2 + $0x18] sm:$0xff]
    %v3079 = vld [vmem:[#allocation2 + $0x20] sm:$0xff]
    %v3080 = vld [vmem:[#allocation2 + $0x28] sm:$0xff]
    %v3081 = vld [vmem:[#allocation2 + $0x30] sm:$0xff]
    %v3082 = vld [vmem:[#allocation2 + $0x38] sm:$0xff]
    %v3083 = vld [vmem:[#allocation2 + $0x40] sm:$0xff]
    %v3084 = vld [vmem:[#allocation2 + $0x48] sm:$0xff]
    %v3085 = vld [vmem:[#allocation2 + $0x50] sm:$0xff]
    %v3086 = vld [vmem:[#allocation2 + $0x58] sm:$0xff]
    %v3087 = vld [vmem:[#allocation2 + $0x60] sm:$0xff]
    %v3088 = vld [vmem:[#allocation2 + $0x68] sm:$0xff]
    %v3089 = vld [vmem:[#allocation2 + $0x70] sm:$0xff]
    %v3090 = vld [vmem:[#allocation2 + $0x78] sm:$0xff]
    %v3091 = vadd.f32 %v3075, %v2262
    %v3092 = vadd.f32 %v3076, %v2268
    %v3093 = vadd.f32 %v3077, %v2274
    %v3094 = vadd.f32 %v3078, %v2280
    %v3095 = vadd.f32 %v3079, %v2286
    %v3096 = vadd.f32 %v3080, %v2292
    %v3097 = vadd.f32 %v3081, %v2298
    %v3098 = vadd.f32 %v3082, %v2304
    %v3099 = vadd.f32 %v3083, %v2310
    %v3100 = vadd.f32 %v3084, %v2316
    %v3101 = vadd.f32 %v3085, %v2322
    %v3102 = vadd.f32 %v3086, %v2328
    %v3103 = vadd.f32 %v3087, %v2334
    %v3104 = vadd.f32 %v3088, %v2340
    %v3105 = vadd.f32 %v3089, %v2346
    %v3106 = vadd.f32 %v3090, %v2352
    %3107 = vst [vmem:[#allocation2] sm:$0xff] %v3091
    %3108 = vst [vmem:[#allocation2 + $0x8] sm:$0xff] %v3092
    %3109 = vst [vmem:[#allocation2 + $0x10] sm:$0xff] %v3093
    %3110 = vst [vmem:[#allocation2 + $0x18] sm:$0xff] %v3094
    %3111 = vst [vmem:[#allocation2 + $0x20] sm:$0xff] %v3095
    %3112 = vst [vmem:[#allocation2 + $0x28] sm:$0xff] %v3096
    %3113 = vst [vmem:[#allocation2 + $0x30] sm:$0xff] %v3097
    %3114 = vst [vmem:[#allocation2 + $0x38] sm:$0xff] %v3098
    %3115 = vst [vmem:[#allocation2 + $0x40] sm:$0xff] %v3099
    %3116 = vst [vmem:[#allocation2 + $0x48] sm:$0xff] %v3100
    %3117 = vst [vmem:[#allocation2 + $0x50] sm:$0xff] %v3101
    %3118 = vst [vmem:[#allocation2 + $0x58] sm:$0xff] %v3102
    %3119 = vst [vmem:[#allocation2 + $0x60] sm:$0xff] %v3103
    %3120 = vst [vmem:[#allocation2 + $0x68] sm:$0xff] %v3104
    %3121 = vst [vmem:[#allocation2 + $0x70] sm:$0xff] %v3105
    %3122 = vst [vmem:[#allocation2 + $0x78] sm:$0xff] %v3106
    %v3123 = vld [vmem:[#allocation3] sm:$0xff]
    %v3124 = vld [vmem:[#allocation3 + $0x8] sm:$0xff]
    %v3125 = vld [vmem:[#allocation3 + $0x10] sm:$0xff]
    %v3126 = vld [vmem:[#allocation3 + $0x18] sm:$0xff]
    %v3127 = vld [vmem:[#allocation3 + $0x20] sm:$0xff]
    %v3128 = vld [vmem:[#allocation3 + $0x28] sm:$0xff]
    %v3129 = vld [vmem:[#allocation3 + $0x30] sm:$0xff]
    %v3130 = vld [vmem:[#allocation3 + $0x38] sm:$0xff]
    %v3131 = vld [vmem:[#allocation3 + $0x40] sm:$0xff]
    %v3132 = vld [vmem:[#allocation3 + $0x48] sm:$0xff]
    %v3133 = vld [vmem:[#allocation3 + $0x50] sm:$0xff]
    %v3134 = vld [vmem:[#allocation3 + $0x58] sm:$0xff]
    %v3135 = vld [vmem:[#allocation3 + $0x60] sm:$0xff]
    %v3136 = vld [vmem:[#allocation3 + $0x68] sm:$0xff]
    %v3137 = vld [vmem:[#allocation3 + $0x70] sm:$0xff]
    %v3138 = vld [vmem:[#allocation3 + $0x78] sm:$0xff]
    %v3139 = vmul.f32 %v2262, %v2262
    %v3140 = vmul.f32 %v2268, %v2268
    %v3141 = vmul.f32 %v2274, %v2274
    %v3142 = vmul.f32 %v2280, %v2280
    %v3143 = vmul.f32 %v2286, %v2286
    %v3144 = vmul.f32 %v2292, %v2292
    %v3145 = vmul.f32 %v2298, %v2298
    %v3146 = vmul.f32 %v2304, %v2304
    %v3147 = vmul.f32 %v2310, %v2310
    %v3148 = vmul.f32 %v2316, %v2316
    %v3149 = vmul.f32 %v2322, %v2322
    %v3150 = vmul.f32 %v2328, %v2328
    %v3151 = vmul.f32 %v2334, %v2334
    %v3152 = vmul.f32 %v2340, %v2340
    %v3153 = vmul.f32 %v2346, %v2346
    %v3154 = vmul.f32 %v2352, %v2352
    %v3155 = vadd.f32 %v3123, %v3139
    %v3156 = vadd.f32 %v3124, %v3140
    %v3157 = vadd.f32 %v3125, %v3141
    %v3158 = vadd.f32 %v3126, %v3142
    %v3159 = vadd.f32 %v3127, %v3143
    %v3160 = vadd.f32 %v3128, %v3144
    %v3161 = vadd.f32 %v3129, %v3145
    %v3162 = vadd.f32 %v3130, %v3146
    %v3163 = vadd.f32 %v3131, %v3147
    %v3164 = vadd.f32 %v3132, %v3148
    %v3165 = vadd.f32 %v3133, %v3149
    %v3166 = vadd.f32 %v3134, %v3150
    %v3167 = vadd.f32 %v3135, %v3151
    %v3168 = vadd.f32 %v3136, %v3152
    %v3169 = vadd.f32 %v3137, %v3153
    %v3170 = vadd.f32 %v3138, %v3154
    %3171 = vst [vmem:[#allocation3] sm:$0xff] %v3155
    %3172 = vst [vmem:[#allocation3 + $0x8] sm:$0xff] %v3156
    %3173 = vst [vmem:[#allocation3 + $0x10] sm:$0xff] %v3157
    %3174 = vst [vmem:[#allocation3 + $0x18] sm:$0xff] %v3158
    %3175 = vst [vmem:[#allocation3 + $0x20] sm:$0xff] %v3159
    %3176 = vst [vmem:[#allocation3 + $0x28] sm:$0xff] %v3160
    %3177 = vst [vmem:[#allocation3 + $0x30] sm:$0xff] %v3161
    %3178 = vst [vmem:[#allocation3 + $0x38] sm:$0xff] %v3162
    %3179 = vst [vmem:[#allocation3 + $0x40] sm:$0xff] %v3163
    %3180 = vst [vmem:[#allocation3 + $0x48] sm:$0xff] %v3164
    %3181 = vst [vmem:[#allocation3 + $0x50] sm:$0xff] %v3165
    %3182 = vst [vmem:[#allocation3 + $0x58] sm:$0xff] %v3166
    %3183 = vst [vmem:[#allocation3 + $0x60] sm:$0xff] %v3167
    %3184 = vst [vmem:[#allocation3 + $0x68] sm:$0xff] %v3168
    %3185 = vst [vmem:[#allocation3 + $0x70] sm:$0xff] %v3169
    %3186 = vst [vmem:[#allocation3 + $0x78] sm:$0xff] %v3170
    %v3187 = vld [vmem:[#allocation2] sm:$0xff]
    %v3188 = vld [vmem:[#allocation2 + $0x8] sm:$0xff]
    %v3189 = vld [vmem:[#allocation2 + $0x10] sm:$0xff]
    %v3190 = vld [vmem:[#allocation2 + $0x18] sm:$0xff]
    %v3191 = vld [vmem:[#allocation2 + $0x20] sm:$0xff]
    %v3192 = vld [vmem:[#allocation2 + $0x28] sm:$0xff]
    %v3193 = vld [vmem:[#allocation2 + $0x30] sm:$0xff]
    %v3194 = vld [vmem:[#allocation2 + $0x38] sm:$0xff]
    %v3195 = vld [vmem:[#allocation2 + $0x40] sm:$0xff]
    %v3196 = vld [vmem:[#allocation2 + $0x48] sm:$0xff]
    %v3197 = vld [vmem:[#allocation2 + $0x50] sm:$0xff]
    %v3198 = vld [vmem:[#allocation2 + $0x58] sm:$0xff]
    %v3199 = vld [vmem:[#allocation2 + $0x60] sm:$0xff]
    %v3200 = vld [vmem:[#allocation2 + $0x68] sm:$0xff]
    %v3201 = vld [vmem:[#allocation2 + $0x70] sm:$0xff]
    %v3202 = vld [vmem:[#allocation2 + $0x78] sm:$0xff]
    %v3203 = vadd.f32 %v3187, %v2421
    %v3204 = vadd.f32 %v3188, %v2427
    %v3205 = vadd.f32 %v3189, %v2433
    %v3206 = vadd.f32 %v3190, %v2439
    %v3207 = vadd.f32 %v3191, %v2445
    %v3208 = vadd.f32 %v3192, %v2451
    %v3209 = vadd.f32 %v3193, %v2457
    %v3210 = vadd.f32 %v3194, %v2463
    %v3211 = vadd.f32 %v3195, %v2469
    %v3212 = vadd.f32 %v3196, %v2475
    %v3213 = vadd.f32 %v3197, %v2481
    %v3214 = vadd.f32 %v3198, %v2487
    %v3215 = vadd.f32 %v3199, %v2493
    %v3216 = vadd.f32 %v3200, %v2499
    %v3217 = vadd.f32 %v3201, %v2505
    %v3218 = vadd.f32 %v3202, %v2511
    %3219 = vst [vmem:[#allocation2] sm:$0xff] %v3203
    %3220 = vst [vmem:[#allocation2 + $0x8] sm:$0xff] %v3204
    %3221 = vst [vmem:[#allocation2 + $0x10] sm:$0xff] %v3205
    %3222 = vst [vmem:[#allocation2 + $0x18] sm:$0xff] %v3206
    %3223 = vst [vmem:[#allocation2 + $0x20] sm:$0xff] %v3207
    %3224 = vst [vmem:[#allocation2 + $0x28] sm:$0xff] %v3208
    %3225 = vst [vmem:[#allocation2 + $0x30] sm:$0xff] %v3209
    %3226 = vst [vmem:[#allocation2 + $0x38] sm:$0xff] %v3210
    %3227 = vst [vmem:[#allocation2 + $0x40] sm:$0xff] %v3211
    %3228 = vst [vmem:[#allocation2 + $0x48] sm:$0xff] %v3212
    %3229 = vst [vmem:[#allocation2 + $0x50] sm:$0xff] %v3213
    %3230 = vst [vmem:[#allocation2 + $0x58] sm:$0xff] %v3214
    %3231 = vst [vmem:[#allocation2 + $0x60] sm:$0xff] %v3215
    %3232 = vst [vmem:[#allocation2 + $0x68] sm:$0xff] %v3216
    %3233 = vst [vmem:[#allocation2 + $0x70] sm:$0xff] %v3217
    %3234 = vst [vmem:[#allocation2 + $0x78] sm:$0xff] %v3218
    %v3235 = vld [vmem:[#allocation3] sm:$0xff]
    %v3236 = vld [vmem:[#allocation3 + $0x8] sm:$0xff]
    %v3237 = vld [vmem:[#allocation3 + $0x10] sm:$0xff]
    %v3238 = vld [vmem:[#allocation3 + $0x18] sm:$0xff]
    %v3239 = vld [vmem:[#allocation3 + $0x20] sm:$0xff]
    %v3240 = vld [vmem:[#allocation3 + $0x28] sm:$0xff]
    %v3241 = vld [vmem:[#allocation3 + $0x30] sm:$0xff]
    %v3242 = vld [vmem:[#allocation3 + $0x38] sm:$0xff]
    %v3243 = vld [vmem:[#allocation3 + $0x40] sm:$0xff]
    %v3244 = vld [vmem:[#allocation3 + $0x48] sm:$0xff]
    %v3245 = vld [vmem:[#allocation3 + $0x50] sm:$0xff]
    %v3246 = vld [vmem:[#allocation3 + $0x58] sm:$0xff]
    %v3247 = vld [vmem:[#allocation3 + $0x60] sm:$0xff]
    %v3248 = vld [vmem:[#allocation3 + $0x68] sm:$0xff]
    %v3249 = vld [vmem:[#allocation3 + $0x70] sm:$0xff]
    %v3250 = vld [vmem:[#allocation3 + $0x78] sm:$0xff]
    %v3251 = vmul.f32 %v2421, %v2421
    %v3252 = vmul.f32 %v2427, %v2427
    %v3253 = vmul.f32 %v2433, %v2433
    %v3254 = vmul.f32 %v2439, %v2439
    %v3255 = vmul.f32 %v2445, %v2445
    %v3256 = vmul.f32 %v2451, %v2451
    %v3257 = vmul.f32 %v2457, %v2457
    %v3258 = vmul.f32 %v2463, %v2463
    %v3259 = vmul.f32 %v2469, %v2469
    %v3260 = vmul.f32 %v2475, %v2475
    %v3261 = vmul.f32 %v2481, %v2481
    %v3262 = vmul.f32 %v2487, %v2487
    %v3263 = vmul.f32 %v2493, %v2493
    %v3264 = vmul.f32 %v2499, %v2499
    %v3265 = vmul.f32 %v2505, %v2505
    %v3266 = vmul.f32 %v2511, %v2511
    %v3267 = vadd.f32 %v3235, %v3251
    %v3268 = vadd.f32 %v3236, %v3252
    %v3269 = vadd.f32 %v3237, %v3253
    %v3270 = vadd.f32 %v3238, %v3254
    %v3271 = vadd.f32 %v3239, %v3255
    %v3272 = vadd.f32 %v3240, %v3256
    %v3273 = vadd.f32 %v3241, %v3257
    %v3274 = vadd.f32 %v3242, %v3258
    %v3275 = vadd.f32 %v3243, %v3259
    %v3276 = vadd.f32 %v3244, %v3260
    %v3277 = vadd.f32 %v3245, %v3261
    %v3278 = vadd.f32 %v3246, %v3262
    %v3279 = vadd.f32 %v3247, %v3263
    %v3280 = vadd.f32 %v3248, %v3264
    %v3281 = vadd.f32 %v3249, %v3265
    %v3282 = vadd.f32 %v3250, %v3266
    %3283 = vst [vmem:[#allocation3] sm:$0xff] %v3267
    %3284 = vst [vmem:[#allocation3 + $0x8] sm:$0xff] %v3268
    %3285 = vst [vmem:[#allocation3 + $0x10] sm:$0xff] %v3269
    %3286 = vst [vmem:[#allocation3 + $0x18] sm:$0xff] %v3270
    %3287 = vst [vmem:[#allocation3 + $0x20] sm:$0xff] %v3271
    %3288 = vst [vmem:[#allocation3 + $0x28] sm:$0xff] %v3272
    %3289 = vst [vmem:[#allocation3 + $0x30] sm:$0xff] %v3273
    %3290 = vst [vmem:[#allocation3 + $0x38] sm:$0xff] %v3274
    %3291 = vst [vmem:[#allocation3 + $0x40] sm:$0xff] %v3275
    %3292 = vst [vmem:[#allocation3 + $0x48] sm:$0xff] %v3276
    %3293 = vst [vmem:[#allocation3 + $0x50] sm:$0xff] %v3277
    %3294 = vst [vmem:[#allocation3 + $0x58] sm:$0xff] %v3278
    %3295 = vst [vmem:[#allocation3 + $0x60] sm:$0xff] %v3279
    %3296 = vst [vmem:[#allocation3 + $0x68] sm:$0xff] %v3280
    %3297 = vst [vmem:[#allocation3 + $0x70] sm:$0xff] %v3281
    %3298 = vst [vmem:[#allocation3 + $0x78] sm:$0xff] %v3282
    %v3299 = vld [vmem:[#allocation2] sm:$0xff]
    %v3300 = vld [vmem:[#allocation2 + $0x8] sm:$0xff]
    %v3301 = vld [vmem:[#allocation2 + $0x10] sm:$0xff]
    %v3302 = vld [vmem:[#allocation2 + $0x18] sm:$0xff]
    %v3303 = vld [vmem:[#allocation2 + $0x20] sm:$0xff]
    %v3304 = vld [vmem:[#allocation2 + $0x28] sm:$0xff]
    %v3305 = vld [vmem:[#allocation2 + $0x30] sm:$0xff]
    %v3306 = vld [vmem:[#allocation2 + $0x38] sm:$0xff]
    %v3307 = vld [vmem:[#allocation2 + $0x40] sm:$0xff]
    %v3308 = vld [vmem:[#allocation2 + $0x48] sm:$0xff]
    %v3309 = vld [vmem:[#allocation2 + $0x50] sm:$0xff]
    %v3310 = vld [vmem:[#allocation2 + $0x58] sm:$0xff]
    %v3311 = vld [vmem:[#allocation2 + $0x60] sm:$0xff]
    %v3312 = vld [vmem:[#allocation2 + $0x68] sm:$0xff]
    %v3313 = vld [vmem:[#allocation2 + $0x70] sm:$0xff]
    %v3314 = vld [vmem:[#allocation2 + $0x78] sm:$0xff]
    %v3315 = vadd.f32 %v3299, %v2423
    %v3316 = vadd.f32 %v3300, %v2429
    %v3317 = vadd.f32 %v3301, %v2435
    %v3318 = vadd.f32 %v3302, %v2441
    %v3319 = vadd.f32 %v3303, %v2447
    %v3320 = vadd.f32 %v3304, %v2453
    %v3321 = vadd.f32 %v3305, %v2459
    %v3322 = vadd.f32 %v3306, %v2465
    %v3323 = vadd.f32 %v3307, %v2471
    %v3324 = vadd.f32 %v3308, %v2477
    %v3325 = vadd.f32 %v3309, %v2483
    %v3326 = vadd.f32 %v3310, %v2489
    %v3327 = vadd.f32 %v3311, %v2495
    %v3328 = vadd.f32 %v3312, %v2501
    %v3329 = vadd.f32 %v3313, %v2507
    %v3330 = vadd.f32 %v3314, %v2513
    %3331 = vst [vmem:[#allocation2] sm:$0xff] %v3315
    %3332 = vst [vmem:[#allocation2 + $0x8] sm:$0xff] %v3316
    %3333 = vst [vmem:[#allocation2 + $0x10] sm:$0xff] %v3317
    %3334 = vst [vmem:[#allocation2 + $0x18] sm:$0xff] %v3318
    %3335 = vst [vmem:[#allocation2 + $0x20] sm:$0xff] %v3319
    %3336 = vst [vmem:[#allocation2 + $0x28] sm:$0xff] %v3320
    %3337 = vst [vmem:[#allocation2 + $0x30] sm:$0xff] %v3321
    %3338 = vst [vmem:[#allocation2 + $0x38] sm:$0xff] %v3322
    %3339 = vst [vmem:[#allocation2 + $0x40] sm:$0xff] %v3323
    %3340 = vst [vmem:[#allocation2 + $0x48] sm:$0xff] %v3324
    %3341 = vst [vmem:[#allocation2 + $0x50] sm:$0xff] %v3325
    %3342 = vst [vmem:[#allocation2 + $0x58] sm:$0xff] %v3326
    %3343 = vst [vmem:[#allocation2 + $0x60] sm:$0xff] %v3327
    %3344 = vst [vmem:[#allocation2 + $0x68] sm:$0xff] %v3328
    %3345 = vst [vmem:[#allocation2 + $0x70] sm:$0xff] %v3329
    %3346 = vst [vmem:[#allocation2 + $0x78] sm:$0xff] %v3330
    %v3347 = vld [vmem:[#allocation3] sm:$0xff]
    %v3348 = vld [vmem:[#allocation3 + $0x8] sm:$0xff]
    %v3349 = vld [vmem:[#allocation3 + $0x10] sm:$0xff]
    %v3350 = vld [vmem:[#allocation3 + $0x18] sm:$0xff]
    %v3351 = vld [vmem:[#allocation3 + $0x20] sm:$0xff]
    %v3352 = vld [vmem:[#allocation3 + $0x28] sm:$0xff]
    %v3353 = vld [vmem:[#allocation3 + $0x30] sm:$0xff]
    %v3354 = vld [vmem:[#allocation3 + $0x38] sm:$0xff]
    %v3355 = vld [vmem:[#allocation3 + $0x40] sm:$0xff]
    %v3356 = vld [vmem:[#allocation3 + $0x48] sm:$0xff]
    %v3357 = vld [vmem:[#allocation3 + $0x50] sm:$0xff]
    %v3358 = vld [vmem:[#allocation3 + $0x58] sm:$0xff]
    %v3359 = vld [vmem:[#allocation3 + $0x60] sm:$0xff]
    %v3360 = vld [vmem:[#allocation3 + $0x68] sm:$0xff]
    %v3361 = vld [vmem:[#allocation3 + $0x70] sm:$0xff]
    %v3362 = vld [vmem:[#allocation3 + $0x78] sm:$0xff]
    %v3363 = vmul.f32 %v2423, %v2423
    %v3364 = vmul.f32 %v2429, %v2429
    %v3365 = vmul.f32 %v2435, %v2435
    %v3366 = vmul.f32 %v2441, %v2441
    %v3367 = vmul.f32 %v2447, %v2447
    %v3368 = vmul.f32 %v2453, %v2453
    %v3369 = vmul.f32 %v2459, %v2459
    %v3370 = vmul.f32 %v2465, %v2465
    %v3371 = vmul.f32 %v2471, %v2471
    %v3372 = vmul.f32 %v2477, %v2477
    %v3373 = vmul.f32 %v2483, %v2483
    %v3374 = vmul.f32 %v2489, %v2489
    %v3375 = vmul.f32 %v2495, %v2495
    %v3376 = vmul.f32 %v2501, %v2501
    %v3377 = vmul.f32 %v2507, %v2507
    %v3378 = vmul.f32 %v2513, %v2513
    %v3379 = vadd.f32 %v3347, %v3363
    %v3380 = vadd.f32 %v3348, %v3364
    %v3381 = vadd.f32 %v3349, %v3365
    %v3382 = vadd.f32 %v3350, %v3366
    %v3383 = vadd.f32 %v3351, %v3367
    %v3384 = vadd.f32 %v3352, %v3368
    %v3385 = vadd.f32 %v3353, %v3369
    %v3386 = vadd.f32 %v3354, %v3370
    %v3387 = vadd.f32 %v3355, %v3371
    %v3388 = vadd.f32 %v3356, %v3372
    %v3389 = vadd.f32 %v3357, %v3373
    %v3390 = vadd.f32 %v3358, %v3374
    %v3391 = vadd.f32 %v3359, %v3375
    %v3392 = vadd.f32 %v3360, %v3376
    %v3393 = vadd.f32 %v3361, %v3377
    %v3394 = vadd.f32 %v3362, %v3378
    %3395 = vst [vmem:[#allocation3] sm:$0xff] %v3379
    %3396 = vst [vmem:[#allocation3 + $0x8] sm:$0xff] %v3380
    %3397 = vst [vmem:[#allocation3 + $0x10] sm:$0xff] %v3381
    %3398 = vst [vmem:[#allocation3 + $0x18] sm:$0xff] %v3382
    %3399 = vst [vmem:[#allocation3 + $0x20] sm:$0xff] %v3383
    %3400 = vst [vmem:[#allocation3 + $0x28] sm:$0xff] %v3384
    %3401 = vst [vmem:[#allocation3 + $0x30] sm:$0xff] %v3385
    %3402 = vst [vmem:[#allocation3 + $0x38] sm:$0xff] %v3386
    %3403 = vst [vmem:[#allocation3 + $0x40] sm:$0xff] %v3387
    %3404 = vst [vmem:[#allocation3 + $0x48] sm:$0xff] %v3388
    %3405 = vst [vmem:[#allocation3 + $0x50] sm:$0xff] %v3389
    %3406 = vst [vmem:[#allocation3 + $0x58] sm:$0xff] %v3390
    %3407 = vst [vmem:[#allocation3 + $0x60] sm:$0xff] %v3391
    %3408 = vst [vmem:[#allocation3 + $0x68] sm:$0xff] %v3392
    %3409 = vst [vmem:[#allocation3 + $0x70] sm:$0xff] %v3393
    %3410 = vst [vmem:[#allocation3 + $0x78] sm:$0xff] %v3394
    %s3411 = sadd.s32 %s1706, 128
    %s3412 = smul.addr %s3411, 8
    %s3413 = scalar_lea.vmem [#allocation7], %s3412
    %3414 = vst [vmem:[%s3413] sm:$0xff] %v1938
    %3415 = vst [vmem:[%s3413 + $0x8] sm:$0xff] %v1940
    %3416 = vst [vmem:[%s3413 + $0x10] sm:$0xff] %v2099
    %3417 = vst [vmem:[%s3413 + $0x18] sm:$0xff] %v2101
    %3418 = vst [vmem:[%s3413 + $0x20] sm:$0xff] %v2260
    %3419 = vst [vmem:[%s3413 + $0x28] sm:$0xff] %v2262
    %3420 = vst [vmem:[%s3413 + $0x30] sm:$0xff] %v2421
    %3421 = vst [vmem:[%s3413 + $0x38] sm:$0xff] %v2423
    %3422 = vst [vmem:[%s3413 + $0x40] sm:$0xff] %v1944
    %3423 = vst [vmem:[%s3413 + $0x48] sm:$0xff] %v1946
    %3424 = vst [vmem:[%s3413 + $0x50] sm:$0xff] %v2105
    %3425 = vst [vmem:[%s3413 + $0x58] sm:$0xff] %v2107
    %3426 = vst [vmem:[%s3413 + $0x60] sm:$0xff] %v2266
    %3427 = vst [vmem:[%s3413 + $0x68] sm:$0xff] %v2268
    %3428 = vst [vmem:[%s3413 + $0x70] sm:$0xff] %v2427
    %3429 = vst [vmem:[%s3413 + $0x78] sm:$0xff] %v2429
    %3430 = vst [vmem:[%s3413 + $0x80] sm:$0xff] %v1950
    %3431 = vst [vmem:[%s3413 + $0x88] sm:$0xff] %v1952
    %3432 = vst [vmem:[%s3413 + $0x90] sm:$0xff] %v2111
    %3433 = vst [vmem:[%s3413 + $0x98] sm:$0xff] %v2113
    %3434 = vst [vmem:[%s3413 + $0xa0] sm:$0xff] %v2272
    %3435 = vst [vmem:[%s3413 + $0xa8] sm:$0xff] %v2274
    %3436 = vst [vmem:[%s3413 + $0xb0] sm:$0xff] %v2433
    %3437 = vst [vmem:[%s3413 + $0xb8] sm:$0xff] %v2435
    %3438 = vst [vmem:[%s3413 + $0xc0] sm:$0xff] %v1956
    %3439 = vst [vmem:[%s3413 + $0xc8] sm:$0xff] %v1958
    %3440 = vst [vmem:[%s3413 + $0xd0] sm:$0xff] %v2117
    %3441 = vst [vmem:[%s3413 + $0xd8] sm:$0xff] %v2119
    %3442 = vst [vmem:[%s3413 + $0xe0] sm:$0xff] %v2278
    %3443 = vst [vmem:[%s3413 + $0xe8] sm:$0xff] %v2280
    %3444 = vst [vmem:[%s3413 + $0xf0] sm:$0xff] %v2439
    %3445 = vst [vmem:[%s3413 + $0xf8] sm:$0xff] %v2441
    %3446 = vst [vmem:[%s3413 + $0x100] sm:$0xff] %v1962
    %3447 = vst [vmem:[%s3413 + $0x108] sm:$0xff] %v1964
    %3448 = vst [vmem:[%s3413 + $0x110] sm:$0xff] %v2123
    %3449 = vst [vmem:[%s3413 + $0x118] sm:$0xff] %v2125
    %3450 = vst [vmem:[%s3413 + $0x120] sm:$0xff] %v2284
    %3451 = vst [vmem:[%s3413 + $0x128] sm:$0xff] %v2286
    %3452 = vst [vmem:[%s3413 + $0x130] sm:$0xff] %v2445
    %3453 = vst [vmem:[%s3413 + $0x138] sm:$0xff] %v2447
    %3454 = vst [vmem:[%s3413 + $0x140] sm:$0xff] %v1968
    %3455 = vst [vmem:[%s3413 + $0x148] sm:$0xff] %v1970
    %3456 = vst [vmem:[%s3413 + $0x150] sm:$0xff] %v2129
    %3457 = vst [vmem:[%s3413 + $0x158] sm:$0xff] %v2131
    %3458 = vst [vmem:[%s3413 + $0x160] sm:$0xff] %v2290
    %3459 = vst [vmem:[%s3413 + $0x168] sm:$0xff] %v2292
    %3460 = vst [vmem:[%s3413 + $0x170] sm:$0xff] %v2451
    %3461 = vst [vmem:[%s3413 + $0x178] sm:$0xff] %v2453
    %3462 = vst [vmem:[%s3413 + $0x180] sm:$0xff] %v1974
    %3463 = vst [vmem:[%s3413 + $0x188] sm:$0xff] %v1976
    %3464 = vst [vmem:[%s3413 + $0x190] sm:$0xff] %v2135
    %3465 = vst [vmem:[%s3413 + $0x198] sm:$0xff] %v2137
    %3466 = vst [vmem:[%s3413 + $0x1a0] sm:$0xff] %v2296
    %3467 = vst [vmem:[%s3413 + $0x1a8] sm:$0xff] %v2298
    %3468 = vst [vmem:[%s3413 + $0x1b0] sm:$0xff] %v2457
    %3469 = vst [vmem:[%s3413 + $0x1b8] sm:$0xff] %v2459
    %3470 = vst [vmem:[%s3413 + $0x1c0] sm:$0xff] %v1980
    %3471 = vst [vmem:[%s3413 + $0x1c8] sm:$0xff] %v1982
    %3472 = vst [vmem:[%s3413 + $0x1d0] sm:$0xff] %v2141
    %3473 = vst [vmem:[%s3413 + $0x1d8] sm:$0xff] %v2143
    %3474 = vst [vmem:[%s3413 + $0x1e0] sm:$0xff] %v2302
    %3475 = vst [vmem:[%s3413 + $0x1e8] sm:$0xff] %v2304
    %3476 = vst [vmem:[%s3413 + $0x1f0] sm:$0xff] %v2463
    %3477 = vst [vmem:[%s3413 + $0x1f8] sm:$0xff] %v2465
    %3478 = vst [vmem:[%s3413 + $0x200] sm:$0xff] %v1986
    %3479 = vst [vmem:[%s3413 + $0x208] sm:$0xff] %v1988
    %3480 = vst [vmem:[%s3413 + $0x210] sm:$0xff] %v2147
    %3481 = vst [vmem:[%s3413 + $0x218] sm:$0xff] %v2149
    %3482 = vst [vmem:[%s3413 + $0x220] sm:$0xff] %v2308
    %3483 = vst [vmem:[%s3413 + $0x228] sm:$0xff] %v2310
    %3484 = vst [vmem:[%s3413 + $0x230] sm:$0xff] %v2469
    %3485 = vst [vmem:[%s3413 + $0x238] sm:$0xff] %v2471
    %3486 = vst [vmem:[%s3413 + $0x240] sm:$0xff] %v1992
    %3487 = vst [vmem:[%s3413 + $0x248] sm:$0xff] %v1994
    %3488 = vst [vmem:[%s3413 + $0x250] sm:$0xff] %v2153
    %3489 = vst [vmem:[%s3413 + $0x258] sm:$0xff] %v2155
    %3490 = vst [vmem:[%s3413 + $0x260] sm:$0xff] %v2314
    %3491 = vst [vmem:[%s3413 + $0x268] sm:$0xff] %v2316
    %3492 = vst [vmem:[%s3413 + $0x270] sm:$0xff] %v2475
    %3493 = vst [vmem:[%s3413 + $0x278] sm:$0xff] %v2477
    %3494 = vst [vmem:[%s3413 + $0x280] sm:$0xff] %v1998
    %3495 = vst [vmem:[%s3413 + $0x288] sm:$0xff] %v2000
    %3496 = vst [vmem:[%s3413 + $0x290] sm:$0xff] %v2159
    %3497 = vst [vmem:[%s3413 + $0x298] sm:$0xff] %v2161
    %3498 = vst [vmem:[%s3413 + $0x2a0] sm:$0xff] %v2320
    %3499 = vst [vmem:[%s3413 + $0x2a8] sm:$0xff] %v2322
    %3500 = vst [vmem:[%s3413 + $0x2b0] sm:$0xff] %v2481
    %3501 = vst [vmem:[%s3413 + $0x2b8] sm:$0xff] %v2483
    %3502 = vst [vmem:[%s3413 + $0x2c0] sm:$0xff] %v2004
    %3503 = vst [vmem:[%s3413 + $0x2c8] sm:$0xff] %v2006
    %3504 = vst [vmem:[%s3413 + $0x2d0] sm:$0xff] %v2165
    %3505 = vst [vmem:[%s3413 + $0x2d8] sm:$0xff] %v2167
    %3506 = vst [vmem:[%s3413 + $0x2e0] sm:$0xff] %v2326
    %3507 = vst [vmem:[%s3413 + $0x2e8] sm:$0xff] %v2328
    %3508 = vst [vmem:[%s3413 + $0x2f0] sm:$0xff] %v2487
    %3509 = vst [vmem:[%s3413 + $0x2f8] sm:$0xff] %v2489
    %3510 = vst [vmem:[%s3413 + $0x300] sm:$0xff] %v2010
    %3511 = vst [vmem:[%s3413 + $0x308] sm:$0xff] %v2012
    %3512 = vst [vmem:[%s3413 + $0x310] sm:$0xff] %v2171
    %3513 = vst [vmem:[%s3413 + $0x318] sm:$0xff] %v2173
    %3514 = vst [vmem:[%s3413 + $0x320] sm:$0xff] %v2332
    %3515 = vst [vmem:[%s3413 + $0x328] sm:$0xff] %v2334
    %3516 = vst [vmem:[%s3413 + $0x330] sm:$0xff] %v2493
    %3517 = vst [vmem:[%s3413 + $0x338] sm:$0xff] %v2495
    %3518 = vst [vmem:[%s3413 + $0x340] sm:$0xff] %v2016
    %3519 = vst [vmem:[%s3413 + $0x348] sm:$0xff] %v2018
    %3520 = vst [vmem:[%s3413 + $0x350] sm:$0xff] %v2177
    %3521 = vst [vmem:[%s3413 + $0x358] sm:$0xff] %v2179
    %3522 = vst [vmem:[%s3413 + $0x360] sm:$0xff] %v2338
    %3523 = vst [vmem:[%s3413 + $0x368] sm:$0xff] %v2340
    %3524 = vst [vmem:[%s3413 + $0x370] sm:$0xff] %v2499
    %3525 = vst [vmem:[%s3413 + $0x378] sm:$0xff] %v2501
    %3526 = vst [vmem:[%s3413 + $0x380] sm:$0xff] %v2022
    %3527 = vst [vmem:[%s3413 + $0x388] sm:$0xff] %v2024
    %3528 = vst [vmem:[%s3413 + $0x390] sm:$0xff] %v2183
    %3529 = vst [vmem:[%s3413 + $0x398] sm:$0xff] %v2185
    %3530 = vst [vmem:[%s3413 + $0x3a0] sm:$0xff] %v2344
    %3531 = vst [vmem:[%s3413 + $0x3a8] sm:$0xff] %v2346
    %3532 = vst [vmem:[%s3413 + $0x3b0] sm:$0xff] %v2505
    %3533 = vst [vmem:[%s3413 + $0x3b8] sm:$0xff] %v2507
    %3534 = vst [vmem:[%s3413 + $0x3c0] sm:$0xff] %v2028
    %3535 = vst [vmem:[%s3413 + $0x3c8] sm:$0xff] %v2030
    %3536 = vst [vmem:[%s3413 + $0x3d0] sm:$0xff] %v2189
    %3537 = vst [vmem:[%s3413 + $0x3d8] sm:$0xff] %v2191
    %3538 = vst [vmem:[%s3413 + $0x3e0] sm:$0xff] %v2350
    %3539 = vst [vmem:[%s3413 + $0x3e8] sm:$0xff] %v2352
    %3540 = vst [vmem:[%s3413 + $0x3f0] sm:$0xff] %v2511
    %3541 = vst [vmem:[%s3413 + $0x3f8] sm:$0xff] %v2513
    // Predicated region
    $region26: #{tpu_custom_call.1} parent=1 // pred_check
      %p3542 = pneg %p32
    $region27: #{tpu_custom_call.1} parent=1 // pred_check_branch
      %3544 = sbr.rel (%p3542) target = $region29
    $region28: #{tpu_custom_call.1} parent=1 // pred_region
      %v3545 = vld [vmem:[#allocation2] sm:$0xff]
      %v3546 = vld [vmem:[#allocation2 + $0x8] sm:$0xff]
      %v3547 = vld [vmem:[#allocation2 + $0x10] sm:$0xff]
      %v3548 = vld [vmem:[#allocation2 + $0x18] sm:$0xff]
      %v3549 = vld [vmem:[#allocation2 + $0x20] sm:$0xff]
      %v3550 = vld [vmem:[#allocation2 + $0x28] sm:$0xff]
      %v3551 = vld [vmem:[#allocation2 + $0x30] sm:$0xff]
      %v3552 = vld [vmem:[#allocation2 + $0x38] sm:$0xff]
      %v3553 = vld [vmem:[#allocation2 + $0x40] sm:$0xff]
      %v3554 = vld [vmem:[#allocation2 + $0x48] sm:$0xff]
      %v3555 = vld [vmem:[#allocation2 + $0x50] sm:$0xff]
      %v3556 = vld [vmem:[#allocation2 + $0x58] sm:$0xff]
      %v3557 = vld [vmem:[#allocation2 + $0x60] sm:$0xff]
      %v3558 = vld [vmem:[#allocation2 + $0x68] sm:$0xff]
      %v3559 = vld [vmem:[#allocation2 + $0x70] sm:$0xff]
      %v3560 = vld [vmem:[#allocation2 + $0x78] sm:$0xff]
      %3561 = vadd.xlane.f32.xlu0 %v3545
      %v3562 = vpop.xlane.xlu0 %3561
      %3563 = vadd.xlane.f32.xlu0 %v3546
      %v3564 = vpop.xlane.xlu0 %3563
      %3565 = vadd.xlane.f32.xlu0 %v3547
      %v3566 = vpop.xlane.xlu0 %3565
      %3567 = vadd.xlane.f32.xlu0 %v3548
      %v3568 = vpop.xlane.xlu0 %3567
      %3569 = vadd.xlane.f32.xlu0 %v3549
      %v3570 = vpop.xlane.xlu0 %3569
      %3571 = vadd.xlane.f32.xlu0 %v3550
      %v3572 = vpop.xlane.xlu0 %3571
      %3573 = vadd.xlane.f32.xlu0 %v3551
      %v3574 = vpop.xlane.xlu0 %3573
      %3575 = vadd.xlane.f32.xlu0 %v3552
      %v3576 = vpop.xlane.xlu0 %3575
      %3577 = vadd.xlane.f32.xlu0 %v3553
      %v3578 = vpop.xlane.xlu0 %3577
      %3579 = vadd.xlane.f32.xlu0 %v3554
      %v3580 = vpop.xlane.xlu0 %3579
      %3581 = vadd.xlane.f32.xlu0 %v3555
      %v3582 = vpop.xlane.xlu0 %3581
      %3583 = vadd.xlane.f32.xlu0 %v3556
      %v3584 = vpop.xlane.xlu0 %3583
      %3585 = vadd.xlane.f32.xlu0 %v3557
      %v3586 = vpop.xlane.xlu0 %3585
      %3587 = vadd.xlane.f32.xlu0 %v3558
      %v3588 = vpop.xlane.xlu0 %3587
      %3589 = vadd.xlane.f32.xlu0 %v3559
      %v3590 = vpop.xlane.xlu0 %3589
      %3591 = vadd.xlane.f32.xlu0 %v3560
      %v3592 = vpop.xlane.xlu0 %3591
      %v3593 = vld [vmem:[#allocation3] sm:$0xff]
      %v3594 = vld [vmem:[#allocation3 + $0x8] sm:$0xff]
      %v3595 = vld [vmem:[#allocation3 + $0x10] sm:$0xff]
      %v3596 = vld [vmem:[#allocation3 + $0x18] sm:$0xff]
      %v3597 = vld [vmem:[#allocation3 + $0x20] sm:$0xff]
      %v3598 = vld [vmem:[#allocation3 + $0x28] sm:$0xff]
      %v3599 = vld [vmem:[#allocation3 + $0x30] sm:$0xff]
      %v3600 = vld [vmem:[#allocation3 + $0x38] sm:$0xff]
      %v3601 = vld [vmem:[#allocation3 + $0x40] sm:$0xff]
      %v3602 = vld [vmem:[#allocation3 + $0x48] sm:$0xff]
      %v3603 = vld [vmem:[#allocation3 + $0x50] sm:$0xff]
      %v3604 = vld [vmem:[#allocation3 + $0x58] sm:$0xff]
      %v3605 = vld [vmem:[#allocation3 + $0x60] sm:$0xff]
      %v3606 = vld [vmem:[#allocation3 + $0x68] sm:$0xff]
      %v3607 = vld [vmem:[#allocation3 + $0x70] sm:$0xff]
      %v3608 = vld [vmem:[#allocation3 + $0x78] sm:$0xff]
      %3609 = vadd.xlane.f32.xlu0 %v3593
      %v3610 = vpop.xlane.xlu0 %3609
      %3611 = vadd.xlane.f32.xlu0 %v3594
      %v3612 = vpop.xlane.xlu0 %3611
      %3613 = vadd.xlane.f32.xlu0 %v3595
      %v3614 = vpop.xlane.xlu0 %3613
      %3615 = vadd.xlane.f32.xlu0 %v3596
      %v3616 = vpop.xlane.xlu0 %3615
      %3617 = vadd.xlane.f32.xlu0 %v3597
      %v3618 = vpop.xlane.xlu0 %3617
      %3619 = vadd.xlane.f32.xlu0 %v3598
      %v3620 = vpop.xlane.xlu0 %3619
      %3621 = vadd.xlane.f32.xlu0 %v3599
      %v3622 = vpop.xlane.xlu0 %3621
      %3623 = vadd.xlane.f32.xlu0 %v3600
      %v3624 = vpop.xlane.xlu0 %3623
      %3625 = vadd.xlane.f32.xlu0 %v3601
      %v3626 = vpop.xlane.xlu0 %3625
      %3627 = vadd.xlane.f32.xlu0 %v3602
      %v3628 = vpop.xlane.xlu0 %3627
      %3629 = vadd.xlane.f32.xlu0 %v3603
      %v3630 = vpop.xlane.xlu0 %3629
      %3631 = vadd.xlane.f32.xlu0 %v3604
      %v3632 = vpop.xlane.xlu0 %3631
      %3633 = vadd.xlane.f32.xlu0 %v3605
      %v3634 = vpop.xlane.xlu0 %3633
      %3635 = vadd.xlane.f32.xlu0 %v3606
      %v3636 = vpop.xlane.xlu0 %3635
      %3637 = vadd.xlane.f32.xlu0 %v3607
      %v3638 = vpop.xlane.xlu0 %3637
      %3639 = vadd.xlane.f32.xlu0 %v3608
      %v3640 = vpop.xlane.xlu0 %3639
      %v3641 = vmul.f32 %v3562, 0.00048828125
      %v3642 = vmul.f32 %v3564, 0.00048828125
      %v3643 = vmul.f32 %v3566, 0.00048828125
      %v3644 = vmul.f32 %v3568, 0.00048828125
      %v3645 = vmul.f32 %v3570, 0.00048828125
      %v3646 = vmul.f32 %v3572, 0.00048828125
      %v3647 = vmul.f32 %v3574, 0.00048828125
      %v3648 = vmul.f32 %v3576, 0.00048828125
      %v3649 = vmul.f32 %v3578, 0.00048828125
      %v3650 = vmul.f32 %v3580, 0.00048828125
      %v3651 = vmul.f32 %v3582, 0.00048828125
      %v3652 = vmul.f32 %v3584, 0.00048828125
      %v3653 = vmul.f32 %v3586, 0.00048828125
      %v3654 = vmul.f32 %v3588, 0.00048828125
      %v3655 = vmul.f32 %v3590, 0.00048828125
      %v3656 = vmul.f32 %v3592, 0.00048828125
      %v3657 = vmul.f32 %v3610, 0.00048828125
      %v3658 = vmul.f32 %v3612, 0.00048828125
      %v3659 = vmul.f32 %v3614, 0.00048828125
      %v3660 = vmul.f32 %v3616, 0.00048828125
      %v3661 = vmul.f32 %v3618, 0.00048828125
      %v3662 = vmul.f32 %v3620, 0.00048828125
      %v3663 = vmul.f32 %v3622, 0.00048828125
      %v3664 = vmul.f32 %v3624, 0.00048828125
      %v3665 = vmul.f32 %v3626, 0.00048828125
      %v3666 = vmul.f32 %v3628, 0.00048828125
      %v3667 = vmul.f32 %v3630, 0.00048828125
      %v3668 = vmul.f32 %v3632, 0.00048828125
      %v3669 = vmul.f32 %v3634, 0.00048828125
      %v3670 = vmul.f32 %v3636, 0.00048828125
      %v3671 = vmul.f32 %v3638, 0.00048828125
      %v3672 = vmul.f32 %v3640, 0.00048828125
      %v3673 = vmul.f32 %v3641, %v3641
      %v3674 = vmul.f32 %v3642, %v3642
      %v3675 = vmul.f32 %v3643, %v3643
      %v3676 = vmul.f32 %v3644, %v3644
      %v3677 = vmul.f32 %v3645, %v3645
      %v3678 = vmul.f32 %v3646, %v3646
      %v3679 = vmul.f32 %v3647, %v3647
      %v3680 = vmul.f32 %v3648, %v3648
      %v3681 = vmul.f32 %v3649, %v3649
      %v3682 = vmul.f32 %v3650, %v3650
      %v3683 = vmul.f32 %v3651, %v3651
      %v3684 = vmul.f32 %v3652, %v3652
      %v3685 = vmul.f32 %v3653, %v3653
      %v3686 = vmul.f32 %v3654, %v3654
      %v3687 = vmul.f32 %v3655, %v3655
      %v3688 = vmul.f32 %v3656, %v3656
      %v3689 = vsub.f32 %v3657, %v3673
      %v3690 = vsub.f32 %v3658, %v3674
      %v3691 = vsub.f32 %v3659, %v3675
      %v3692 = vsub.f32 %v3660, %v3676
      %v3693 = vsub.f32 %v3661, %v3677
      %v3694 = vsub.f32 %v3662, %v3678
      %v3695 = vsub.f32 %v3663, %v3679
      %v3696 = vsub.f32 %v3664, %v3680
      %v3697 = vsub.f32 %v3665, %v3681
      %v3698 = vsub.f32 %v3666, %v3682
      %v3699 = vsub.f32 %v3667, %v3683
      %v3700 = vsub.f32 %v3668, %v3684
      %v3701 = vsub.f32 %v3669, %v3685
      %v3702 = vsub.f32 %v3670, %v3686
      %v3703 = vsub.f32 %v3671, %v3687
      %v3704 = vsub.f32 %v3672, %v3688
      %v3705 = vmax.f32 %v3689, 0.0
      %v3706 = vmax.f32 %v3690, 0.0
      %v3707 = vmax.f32 %v3691, 0.0
      %v3708 = vmax.f32 %v3692, 0.0
      %v3709 = vmax.f32 %v3693, 0.0
      %v3710 = vmax.f32 %v3694, 0.0
      %v3711 = vmax.f32 %v3695, 0.0
      %v3712 = vmax.f32 %v3696, 0.0
      %v3713 = vmax.f32 %v3697, 0.0
      %v3714 = vmax.f32 %v3698, 0.0
      %v3715 = vmax.f32 %v3699, 0.0
      %v3716 = vmax.f32 %v3700, 0.0
      %v3717 = vmax.f32 %v3701, 0.0
      %v3718 = vmax.f32 %v3702, 0.0
      %v3719 = vmax.f32 %v3703, 0.0
      %v3720 = vmax.f32 %v3704, 0.0
      %v3721 = vadd.f32 %v3705, 1e-05
      %v3722 = vadd.f32 %v3706, 1e-05
      %v3723 = vadd.f32 %v3707, 1e-05
      %v3724 = vadd.f32 %v3708, 1e-05
      %v3725 = vadd.f32 %v3709, 1e-05
      %v3726 = vadd.f32 %v3710, 1e-05
      %v3727 = vadd.f32 %v3711, 1e-05
      %v3728 = vadd.f32 %v3712, 1e-05
      %v3729 = vadd.f32 %v3713, 1e-05
      %v3730 = vadd.f32 %v3714, 1e-05
      %v3731 = vadd.f32 %v3715, 1e-05
      %v3732 = vadd.f32 %v3716, 1e-05
      %v3733 = vadd.f32 %v3717, 1e-05
      %v3734 = vadd.f32 %v3718, 1e-05
      %v3735 = vadd.f32 %v3719, 1e-05
      %v3736 = vadd.f32 %v3720, 1e-05
      %v3737 = vrsqrt.pop %v3721
      %v3738 = vrsqrt.pop %v3722
      %v3739 = vrsqrt.pop %v3723
      %v3740 = vrsqrt.pop %v3724
      %v3741 = vrsqrt.pop %v3725
      %v3742 = vrsqrt.pop %v3726
      %v3743 = vrsqrt.pop %v3727
      %v3744 = vrsqrt.pop %v3728
      %v3745 = vrsqrt.pop %v3729
      %v3746 = vrsqrt.pop %v3730
      %v3747 = vrsqrt.pop %v3731
      %v3748 = vrsqrt.pop %v3732
      %v3749 = vrsqrt.pop %v3733
      %v3750 = vrsqrt.pop %v3734
      %v3751 = vrsqrt.pop %v3735
      %v3752 = vrsqrt.pop %v3736
      %v3753 = vld [vmem:[%s2] sm:$0xff]
      %v3754 = vld [vmem:[%s2 + $0x8] sm:$0xff]
      %v3755 = vld [vmem:[%s2 + $0x10] sm:$0xff]
      %v3756 = vld [vmem:[%s2 + $0x18] sm:$0xff]
      %v3757 = vld [vmem:[%s2 + $0x20] sm:$0xff]
      %v3758 = vld [vmem:[%s2 + $0x28] sm:$0xff]
      %v3759 = vld [vmem:[%s2 + $0x30] sm:$0xff]
      %v3760 = vld [vmem:[%s2 + $0x38] sm:$0xff]
      %v3761 = vld [vmem:[%s2 + $0x40] sm:$0xff]
      %v3762 = vld [vmem:[%s2 + $0x48] sm:$0xff]
      %v3763 = vld [vmem:[%s2 + $0x50] sm:$0xff]
      %v3764 = vld [vmem:[%s2 + $0x58] sm:$0xff]
      %v3765 = vld [vmem:[%s2 + $0x60] sm:$0xff]
      %v3766 = vld [vmem:[%s2 + $0x68] sm:$0xff]
      %v3767 = vld [vmem:[%s2 + $0x70] sm:$0xff]
      %v3768 = vld [vmem:[%s2 + $0x78] sm:$0xff]
      %v3769 = vmul.f32 %v3753, %v3737
      %v3770 = vmul.f32 %v3754, %v3738
      %v3771 = vmul.f32 %v3755, %v3739
      %v3772 = vmul.f32 %v3756, %v3740
      %v3773 = vmul.f32 %v3757, %v3741
      %v3774 = vmul.f32 %v3758, %v3742
      %v3775 = vmul.f32 %v3759, %v3743
      %v3776 = vmul.f32 %v3760, %v3744
      %v3777 = vmul.f32 %v3761, %v3745
      %v3778 = vmul.f32 %v3762, %v3746
      %v3779 = vmul.f32 %v3763, %v3747
      %v3780 = vmul.f32 %v3764, %v3748
      %v3781 = vmul.f32 %v3765, %v3749
      %v3782 = vmul.f32 %v3766, %v3750
      %v3783 = vmul.f32 %v3767, %v3751
      %v3784 = vmul.f32 %v3768, %v3752
      %v3785 = vld [vmem:[%s3] sm:$0xff]
      %v3786 = vld [vmem:[%s3 + $0x8] sm:$0xff]
      %v3787 = vld [vmem:[%s3 + $0x10] sm:$0xff]
      %v3788 = vld [vmem:[%s3 + $0x18] sm:$0xff]
      %v3789 = vld [vmem:[%s3 + $0x20] sm:$0xff]
      %v3790 = vld [vmem:[%s3 + $0x28] sm:$0xff]
      %v3791 = vld [vmem:[%s3 + $0x30] sm:$0xff]
      %v3792 = vld [vmem:[%s3 + $0x38] sm:$0xff]
      %v3793 = vld [vmem:[%s3 + $0x40] sm:$0xff]
      %v3794 = vld [vmem:[%s3 + $0x48] sm:$0xff]
      %v3795 = vld [vmem:[%s3 + $0x50] sm:$0xff]
      %v3796 = vld [vmem:[%s3 + $0x58] sm:$0xff]
      %v3797 = vld [vmem:[%s3 + $0x60] sm:$0xff]
      %v3798 = vld [vmem:[%s3 + $0x68] sm:$0xff]
      %v3799 = vld [vmem:[%s3 + $0x70] sm:$0xff]
      %v3800 = vld [vmem:[%s3 + $0x78] sm:$0xff]
      %v3801 = vmul.f32 %v3641, %v3769
      %v3802 = vmul.f32 %v3642, %v3770
      %v3803 = vmul.f32 %v3643, %v3771
      %v3804 = vmul.f32 %v3644, %v3772
      %v3805 = vmul.f32 %v3645, %v3773
      %v3806 = vmul.f32 %v3646, %v3774
      %v3807 = vmul.f32 %v3647, %v3775
      %v3808 = vmul.f32 %v3648, %v3776
      %v3809 = vmul.f32 %v3649, %v3777
      %v3810 = vmul.f32 %v3650, %v3778
      %v3811 = vmul.f32 %v3651, %v3779
      %v3812 = vmul.f32 %v3652, %v3780
      %v3813 = vmul.f32 %v3653, %v3781
      %v3814 = vmul.f32 %v3654, %v3782
      %v3815 = vmul.f32 %v3655, %v3783
      %v3816 = vmul.f32 %v3656, %v3784
      %v3817 = vsub.f32 %v3785, %v3801
      %v3818 = vsub.f32 %v3786, %v3802
      %v3819 = vsub.f32 %v3787, %v3803
      %v3820 = vsub.f32 %v3788, %v3804
      %v3821 = vsub.f32 %v3789, %v3805
      %v3822 = vsub.f32 %v3790, %v3806
      %v3823 = vsub.f32 %v3791, %v3807
      %v3824 = vsub.f32 %v3792, %v3808
      %v3825 = vsub.f32 %v3793, %v3809
      %v3826 = vsub.f32 %v3794, %v3810
      %v3827 = vsub.f32 %v3795, %v3811
      %v3828 = vsub.f32 %v3796, %v3812
      %v3829 = vsub.f32 %v3797, %v3813
      %v3830 = vsub.f32 %v3798, %v3814
      %v3831 = vsub.f32 %v3799, %v3815
      %v3832 = vsub.f32 %v3800, %v3816
      %v3833 = vld [vmem:[#allocation7] sm:$0xff]
      %v3834 = vld [vmem:[#allocation7 + $0x8] sm:$0xff]
      %v3835 = vld [vmem:[#allocation7 + $0x10] sm:$0xff]
      %v3836 = vld [vmem:[#allocation7 + $0x18] sm:$0xff]
      %v3837 = vld [vmem:[#allocation7 + $0x20] sm:$0xff]
      %v3838 = vld [vmem:[#allocation7 + $0x28] sm:$0xff]
      %v3839 = vld [vmem:[#allocation7 + $0x30] sm:$0xff]
      %v3840 = vld [vmem:[#allocation7 + $0x38] sm:$0xff]
      %v3841 = vld [vmem:[#allocation7 + $0x40] sm:$0xff]
      %v3842 = vld [vmem:[#allocation7 + $0x48] sm:$0xff]
      %v3843 = vld [vmem:[#allocation7 + $0x50] sm:$0xff]
      %v3844 = vld [vmem:[#allocation7 + $0x58] sm:$0xff]
      %v3845 = vld [vmem:[#allocation7 + $0x60] sm:$0xff]
      %v3846 = vld [vmem:[#allocation7 + $0x68] sm:$0xff]
      %v3847 = vld [vmem:[#allocation7 + $0x70] sm:$0xff]
      %v3848 = vld [vmem:[#allocation7 + $0x78] sm:$0xff]
      %v3849 = vld [vmem:[#allocation7 + $0x80] sm:$0xff]
      %v3850 = vld [vmem:[#allocation7 + $0x88] sm:$0xff]
      %v3851 = vld [vmem:[#allocation7 + $0x90] sm:$0xff]
      %v3852 = vld [vmem:[#allocation7 + $0x98] sm:$0xff]
      %v3853 = vld [vmem:[#allocation7 + $0xa0] sm:$0xff]
      %v3854 = vld [vmem:[#allocation7 + $0xa8] sm:$0xff]
      %v3855 = vld [vmem:[#allocation7 + $0xb0] sm:$0xff]
      %v3856 = vld [vmem:[#allocation7 + $0xb8] sm:$0xff]
      %v3857 = vld [vmem:[#allocation7 + $0xc0] sm:$0xff]
      %v3858 = vld [vmem:[#allocation7 + $0xc8] sm:$0xff]
      %v3859 = vld [vmem:[#allocation7 + $0xd0] sm:$0xff]
      %v3860 = vld [vmem:[#allocation7 + $0xd8] sm:$0xff]
      %v3861 = vld [vmem:[#allocation7 + $0xe0] sm:$0xff]
      %v3862 = vld [vmem:[#allocation7 + $0xe8] sm:$0xff]
      %v3863 = vld [vmem:[#allocation7 + $0xf0] sm:$0xff]
      %v3864 = vld [vmem:[#allocation7 + $0xf8] sm:$0xff]
      %v3865 = vld [vmem:[#allocation7 + $0x100] sm:$0xff]
      %v3866 = vld [vmem:[#allocation7 + $0x108] sm:$0xff]
      %v3867 = vld [vmem:[#allocation7 + $0x110] sm:$0xff]
      %v3868 = vld [vmem:[#allocation7 + $0x118] sm:$0xff]
      %v3869 = vld [vmem:[#allocation7 + $0x120] sm:$0xff]
      %v3870 = vld [vmem:[#allocation7 + $0x128] sm:$0xff]
      %v3871 = vld [vmem:[#allocation7 + $0x130] sm:$0xff]
      %v3872 = vld [vmem:[#allocation7 + $0x138] sm:$0xff]
      %v3873 = vld [vmem:[#allocation7 + $0x140] sm:$0xff]
      %v3874 = vld [vmem:[#allocation7 + $0x148] sm:$0xff]
      %v3875 = vld [vmem:[#allocation7 + $0x150] sm:$0xff]
      %v3876 = vld [vmem:[#allocation7 + $0x158] sm:$0xff]
      %v3877 = vld [vmem:[#allocation7 + $0x160] sm:$0xff]
      %v3878 = vld [vmem:[#allocation7 + $0x168] sm:$0xff]
      %v3879 = vld [vmem:[#allocation7 + $0x170] sm:$0xff]
      %v3880 = vld [vmem:[#allocation7 + $0x178] sm:$0xff]
      %v3881 = vld [vmem:[#allocation7 + $0x180] sm:$0xff]
      %v3882 = vld [vmem:[#allocation7 + $0x188] sm:$0xff]
      %v3883 = vld [vmem:[#allocation7 + $0x190] sm:$0xff]
      %v3884 = vld [vmem:[#allocation7 + $0x198] sm:$0xff]
      %v3885 = vld [vmem:[#allocation7 + $0x1a0] sm:$0xff]
      %v3886 = vld [vmem:[#allocation7 + $0x1a8] sm:$0xff]
      %v3887 = vld [vmem:[#allocation7 + $0x1b0] sm:$0xff]
      %v3888 = vld [vmem:[#allocation7 + $0x1b8] sm:$0xff]
      %v3889 = vld [vmem:[#allocation7 + $0x1c0] sm:$0xff]
      %v3890 = vld [vmem:[#allocation7 + $0x1c8] sm:$0xff]
      %v3891 = vld [vmem:[#allocation7 + $0x1d0] sm:$0xff]
      %v3892 = vld [vmem:[#allocation7 + $0x1d8] sm:$0xff]
      %v3893 = vld [vmem:[#allocation7 + $0x1e0] sm:$0xff]
      %v3894 = vld [vmem:[#allocation7 + $0x1e8] sm:$0xff]
      %v3895 = vld [vmem:[#allocation7 + $0x1f0] sm:$0xff]
      %v3896 = vld [vmem:[#allocation7 + $0x1f8] sm:$0xff]
      %v3897 = vld [vmem:[#allocation7 + $0x200] sm:$0xff]
      %v3898 = vld [vmem:[#allocation7 + $0x208] sm:$0xff]
      %v3899 = vld [vmem:[#allocation7 + $0x210] sm:$0xff]
      %v3900 = vld [vmem:[#allocation7 + $0x218] sm:$0xff]
      %v3901 = vld [vmem:[#allocation7 + $0x220] sm:$0xff]
      %v3902 = vld [vmem:[#allocation7 + $0x228] sm:$0xff]
      %v3903 = vld [vmem:[#allocation7 + $0x230] sm:$0xff]
      %v3904 = vld [vmem:[#allocation7 + $0x238] sm:$0xff]
      %v3905 = vld [vmem:[#allocation7 + $0x240] sm:$0xff]
      %v3906 = vld [vmem:[#allocation7 + $0x248] sm:$0xff]
      %v3907 = vld [vmem:[#allocation7 + $0x250] sm:$0xff]
      %v3908 = vld [vmem:[#allocation7 + $0x258] sm:$0xff]
      %v3909 = vld [vmem:[#allocation7 + $0x260] sm:$0xff]
      %v3910 = vld [vmem:[#allocation7 + $0x268] sm:$0xff]
      %v3911 = vld [vmem:[#allocation7 + $0x270] sm:$0xff]
      %v3912 = vld [vmem:[#allocation7 + $0x278] sm:$0xff]
      %v3913 = vld [vmem:[#allocation7 + $0x280] sm:$0xff]
      %v3914 = vld [vmem:[#allocation7 + $0x288] sm:$0xff]
      %v3915 = vld [vmem:[#allocation7 + $0x290] sm:$0xff]
      %v3916 = vld [vmem:[#allocation7 + $0x298] sm:$0xff]
      %v3917 = vld [vmem:[#allocation7 + $0x2a0] sm:$0xff]
      %v3918 = vld [vmem:[#allocation7 + $0x2a8] sm:$0xff]
      %v3919 = vld [vmem:[#allocation7 + $0x2b0] sm:$0xff]
      %v3920 = vld [vmem:[#allocation7 + $0x2b8] sm:$0xff]
      %v3921 = vld [vmem:[#allocation7 + $0x2c0] sm:$0xff]
      %v3922 = vld [vmem:[#allocation7 + $0x2c8] sm:$0xff]
      %v3923 = vld [vmem:[#allocation7 + $0x2d0] sm:$0xff]
      %v3924 = vld [vmem:[#allocation7 + $0x2d8] sm:$0xff]
      %v3925 = vld [vmem:[#allocation7 + $0x2e0] sm:$0xff]
      %v3926 = vld [vmem:[#allocation7 + $0x2e8] sm:$0xff]
      %v3927 = vld [vmem:[#allocation7 + $0x2f0] sm:$0xff]
      %v3928 = vld [vmem:[#allocation7 + $0x2f8] sm:$0xff]
      %v3929 = vld [vmem:[#allocation7 + $0x300] sm:$0xff]
      %v3930 = vld [vmem:[#allocation7 + $0x308] sm:$0xff]
      %v3931 = vld [vmem:[#allocation7 + $0x310] sm:$0xff]
      %v3932 = vld [vmem:[#allocation7 + $0x318] sm:$0xff]
      %v3933 = vld [vmem:[#allocation7 + $0x320] sm:$0xff]
      %v3934 = vld [vmem:[#allocation7 + $0x328] sm:$0xff]
      %v3935 = vld [vmem:[#allocation7 + $0x330] sm:$0xff]
      %v3936 = vld [vmem:[#allocation7 + $0x338] sm:$0xff]
      %v3937 = vld [vmem:[#allocation7 + $0x340] sm:$0xff]
      %v3938 = vld [vmem:[#allocation7 + $0x348] sm:$0xff]
      %v3939 = vld [vmem:[#allocation7 + $0x350] sm:$0xff]
      %v3940 = vld [vmem:[#allocation7 + $0x358] sm:$0xff]
      %v3941 = vld [vmem:[#allocation7 + $0x360] sm:$0xff]
      %v3942 = vld [vmem:[#allocation7 + $0x368] sm:$0xff]
      %v3943 = vld [vmem:[#allocation7 + $0x370] sm:$0xff]
      %v3944 = vld [vmem:[#allocation7 + $0x378] sm:$0xff]
      %v3945 = vld [vmem:[#allocation7 + $0x380] sm:$0xff]
      %v3946 = vld [vmem:[#allocation7 + $0x388] sm:$0xff]
      %v3947 = vld [vmem:[#allocation7 + $0x390] sm:$0xff]
      %v3948 = vld [vmem:[#allocation7 + $0x398] sm:$0xff]
      %v3949 = vld [vmem:[#allocation7 + $0x3a0] sm:$0xff]
      %v3950 = vld [vmem:[#allocation7 + $0x3a8] sm:$0xff]
      %v3951 = vld [vmem:[#allocation7 + $0x3b0] sm:$0xff]
      %v3952 = vld [vmem:[#allocation7 + $0x3b8] sm:$0xff]
      %v3953 = vld [vmem:[#allocation7 + $0x3c0] sm:$0xff]
      %v3954 = vld [vmem:[#allocation7 + $0x3c8] sm:$0xff]
      %v3955 = vld [vmem:[#allocation7 + $0x3d0] sm:$0xff]
      %v3956 = vld [vmem:[#allocation7 + $0x3d8] sm:$0xff]
      %v3957 = vld [vmem:[#allocation7 + $0x3e0] sm:$0xff]
      %v3958 = vld [vmem:[#allocation7 + $0x3e8] sm:$0xff]
      %v3959 = vld [vmem:[#allocation7 + $0x3f0] sm:$0xff]
      %v3960 = vld [vmem:[#allocation7 + $0x3f8] sm:$0xff]
      %3962 = vset.pattern.permute.xlu0 0
      %3963 = vperm.xlu0 %3962, %v3769
      %v3964 = vpop.permute.xlu0 %3963
      %3967 = vset.pattern.permute.xlu0 0
      %3968 = vperm.xlu0 %3967, %v3770
      %v3969 = vpop.permute.xlu0 %3968
      %3972 = vset.pattern.permute.xlu0 0
      %3973 = vperm.xlu0 %3972, %v3771
      %v3974 = vpop.permute.xlu0 %3973
      %3977 = vset.pattern.permute.xlu0 0
      %3978 = vperm.xlu0 %3977, %v3772
      %v3979 = vpop.permute.xlu0 %3978
      %3982 = vset.pattern.permute.xlu0 0
      %3983 = vperm.xlu0 %3982, %v3773
      %v3984 = vpop.permute.xlu0 %3983
      %3987 = vset.pattern.permute.xlu0 0
      %3988 = vperm.xlu0 %3987, %v3774
      %v3989 = vpop.permute.xlu0 %3988
      %3992 = vset.pattern.permute.xlu0 0
      %3993 = vperm.xlu0 %3992, %v3775
      %v3994 = vpop.permute.xlu0 %3993
      %3997 = vset.pattern.permute.xlu0 0
      %3998 = vperm.xlu0 %3997, %v3776
      %v3999 = vpop.permute.xlu0 %3998
      %4002 = vset.pattern.permute.xlu0 0
      %4003 = vperm.xlu0 %4002, %v3777
      %v4004 = vpop.permute.xlu0 %4003
      %4007 = vset.pattern.permute.xlu0 0
      %4008 = vperm.xlu0 %4007, %v3778
      %v4009 = vpop.permute.xlu0 %4008
      %4012 = vset.pattern.permute.xlu0 0
      %4013 = vperm.xlu0 %4012, %v3779
      %v4014 = vpop.permute.xlu0 %4013
      %4017 = vset.pattern.permute.xlu0 0
      %4018 = vperm.xlu0 %4017, %v3780
      %v4019 = vpop.permute.xlu0 %4018
      %4022 = vset.pattern.permute.xlu0 0
      %4023 = vperm.xlu0 %4022, %v3781
      %v4024 = vpop.permute.xlu0 %4023
      %4027 = vset.pattern.permute.xlu0 0
      %4028 = vperm.xlu0 %4027, %v3782
      %v4029 = vpop.permute.xlu0 %4028
      %4032 = vset.pattern.permute.xlu0 0
      %4033 = vperm.xlu0 %4032, %v3783
      %v4034 = vpop.permute.xlu0 %4033
      %4037 = vset.pattern.permute.xlu0 0
      %4038 = vperm.xlu0 %4037, %v3784
      %v4039 = vpop.permute.xlu0 %4038
      %v4041 = vmul.f32 %v3833, %v3964
      %v4042 = vmul.f32 %v3834, %v3964
      %v4043 = vmul.f32 %v3835, %v3964
      %v4044 = vmul.f32 %v3836, %v3964
      %v4045 = vmul.f32 %v3837, %v3964
      %v4046 = vmul.f32 %v3838, %v3964
      %v4047 = vmul.f32 %v3839, %v3964
      %v4048 = vmul.f32 %v3840, %v3964
      %v4049 = vmul.f32 %v3841, %v3969
      %v4050 = vmul.f32 %v3842, %v3969
      %v4051 = vmul.f32 %v3843, %v3969
      %v4052 = vmul.f32 %v3844, %v3969
      %v4053 = vmul.f32 %v3845, %v3969
      %v4054 = vmul.f32 %v3846, %v3969
      %v4055 = vmul.f32 %v3847, %v3969
      %v4056 = vmul.f32 %v3848, %v3969
      %v4057 = vmul.f32 %v3849, %v3974
      %v4058 = vmul.f32 %v3850, %v3974
      %v4059 = vmul.f32 %v3851, %v3974
      %v4060 = vmul.f32 %v3852, %v3974
      %v4061 = vmul.f32 %v3853, %v3974
      %v4062 = vmul.f32 %v3854, %v3974
      %v4063 = vmul.f32 %v3855, %v3974
      %v4064 = vmul.f32 %v3856, %v3974
      %v4065 = vmul.f32 %v3857, %v3979
      %v4066 = vmul.f32 %v3858, %v3979
      %v4067 = vmul.f32 %v3859, %v3979
      %v4068 = vmul.f32 %v3860, %v3979
      %v4069 = vmul.f32 %v3861, %v3979
      %v4070 = vmul.f32 %v3862, %v3979
      %v4071 = vmul.f32 %v3863, %v3979
      %v4072 = vmul.f32 %v3864, %v3979
      %v4073 = vmul.f32 %v3865, %v3984
      %v4074 = vmul.f32 %v3866, %v3984
      %v4075 = vmul.f32 %v3867, %v3984
      %v4076 = vmul.f32 %v3868, %v3984
      %v4077 = vmul.f32 %v3869, %v3984
      %v4078 = vmul.f32 %v3870, %v3984
      %v4079 = vmul.f32 %v3871, %v3984
      %v4080 = vmul.f32 %v3872, %v3984
      %v4081 = vmul.f32 %v3873, %v3989
      %v4082 = vmul.f32 %v3874, %v3989
      %v4083 = vmul.f32 %v3875, %v3989
      %v4084 = vmul.f32 %v3876, %v3989
      %v4085 = vmul.f32 %v3877, %v3989
      %v4086 = vmul.f32 %v3878, %v3989
      %v4087 = vmul.f32 %v3879, %v3989
      %v4088 = vmul.f32 %v3880, %v3989
      %v4089 = vmul.f32 %v3881, %v3994
      %v4090 = vmul.f32 %v3882, %v3994
      %v4091 = vmul.f32 %v3883, %v3994
      %v4092 = vmul.f32 %v3884, %v3994
      %v4093 = vmul.f32 %v3885, %v3994
      %v4094 = vmul.f32 %v3886, %v3994
      %v4095 = vmul.f32 %v3887, %v3994
      %v4096 = vmul.f32 %v3888, %v3994
      %v4097 = vmul.f32 %v3889, %v3999
      %v4098 = vmul.f32 %v3890, %v3999
      %v4099 = vmul.f32 %v3891, %v3999
      %v4100 = vmul.f32 %v3892, %v3999
      %v4101 = vmul.f32 %v3893, %v3999
      %v4102 = vmul.f32 %v3894, %v3999
      %v4103 = vmul.f32 %v3895, %v3999
      %v4104 = vmul.f32 %v3896, %v3999
      %v4105 = vmul.f32 %v3897, %v4004
      %v4106 = vmul.f32 %v3898, %v4004
      %v4107 = vmul.f32 %v3899, %v4004
      %v4108 = vmul.f32 %v3900, %v4004
      %v4109 = vmul.f32 %v3901, %v4004
      %v4110 = vmul.f32 %v3902, %v4004
      %v4111 = vmul.f32 %v3903, %v4004
      %v4112 = vmul.f32 %v3904, %v4004
      %v4113 = vmul.f32 %v3905, %v4009
      %v4114 = vmul.f32 %v3906, %v4009
      %v4115 = vmul.f32 %v3907, %v4009
      %v4116 = vmul.f32 %v3908, %v4009
      %v4117 = vmul.f32 %v3909, %v4009
      %v4118 = vmul.f32 %v3910, %v4009
      %v4119 = vmul.f32 %v3911, %v4009
      %v4120 = vmul.f32 %v3912, %v4009
      %v4121 = vmul.f32 %v3913, %v4014
      %v4122 = vmul.f32 %v3914, %v4014
      %v4123 = vmul.f32 %v3915, %v4014
      %v4124 = vmul.f32 %v3916, %v4014
      %v4125 = vmul.f32 %v3917, %v4014
      %v4126 = vmul.f32 %v3918, %v4014
      %v4127 = vmul.f32 %v3919, %v4014
      %v4128 = vmul.f32 %v3920, %v4014
      %v4129 = vmul.f32 %v3921, %v4019
      %v4130 = vmul.f32 %v3922, %v4019
      %v4131 = vmul.f32 %v3923, %v4019
      %v4132 = vmul.f32 %v3924, %v4019
      %v4133 = vmul.f32 %v3925, %v4019
      %v4134 = vmul.f32 %v3926, %v4019
      %v4135 = vmul.f32 %v3927, %v4019
      %v4136 = vmul.f32 %v3928, %v4019
      %v4137 = vmul.f32 %v3929, %v4024
      %v4138 = vmul.f32 %v3930, %v4024
      %v4139 = vmul.f32 %v3931, %v4024
      %v4140 = vmul.f32 %v3932, %v4024
      %v4141 = vmul.f32 %v3933, %v4024
      %v4142 = vmul.f32 %v3934, %v4024
      %v4143 = vmul.f32 %v3935, %v4024
      %v4144 = vmul.f32 %v3936, %v4024
      %v4145 = vmul.f32 %v3937, %v4029
      %v4146 = vmul.f32 %v3938, %v4029
      %v4147 = vmul.f32 %v3939, %v4029
      %v4148 = vmul.f32 %v3940, %v4029
      %v4149 = vmul.f32 %v3941, %v4029
      %v4150 = vmul.f32 %v3942, %v4029
      %v4151 = vmul.f32 %v3943, %v4029
      %v4152 = vmul.f32 %v3944, %v4029
      %v4153 = vmul.f32 %v3945, %v4034
      %v4154 = vmul.f32 %v3946, %v4034
      %v4155 = vmul.f32 %v3947, %v4034
      %v4156 = vmul.f32 %v3948, %v4034
      %v4157 = vmul.f32 %v3949, %v4034
      %v4158 = vmul.f32 %v3950, %v4034
      %v4159 = vmul.f32 %v3951, %v4034
      %v4160 = vmul.f32 %v3952, %v4034
      %v4161 = vmul.f32 %v3953, %v4039
      %v4162 = vmul.f32 %v3954, %v4039
      %v4163 = vmul.f32 %v3955, %v4039
      %v4164 = vmul.f32 %v3956, %v4039
      %v4165 = vmul.f32 %v3957, %v4039
      %v4166 = vmul.f32 %v3958, %v4039
      %v4167 = vmul.f32 %v3959, %v4039
      %v4168 = vmul.f32 %v3960, %v4039
      %4170 = vset.pattern.permute.xlu0 0
      %4171 = vperm.xlu0 %4170, %v3817
      %v4172 = vpop.permute.xlu0 %4171
      %4175 = vset.pattern.permute.xlu0 0
      %4176 = vperm.xlu0 %4175, %v3818
      %v4177 = vpop.permute.xlu0 %4176
      %4180 = vset.pattern.permute.xlu0 0
      %4181 = vperm.xlu0 %4180, %v3819
      %v4182 = vpop.permute.xlu0 %4181
      %4185 = vset.pattern.permute.xlu0 0
      %4186 = vperm.xlu0 %4185, %v3820
      %v4187 = vpop.permute.xlu0 %4186
      %4190 = vset.pattern.permute.xlu0 0
      %4191 = vperm.xlu0 %4190, %v3821
      %v4192 = vpop.permute.xlu0 %4191
      %4195 = vset.pattern.permute.xlu0 0
      %4196 = vperm.xlu0 %4195, %v3822
      %v4197 = vpop.permute.xlu0 %4196
      %4200 = vset.pattern.permute.xlu0 0
      %4201 = vperm.xlu0 %4200, %v3823
      %v4202 = vpop.permute.xlu0 %4201
      %4205 = vset.pattern.permute.xlu0 0
      %4206 = vperm.xlu0 %4205, %v3824
      %v4207 = vpop.permute.xlu0 %4206
      %4210 = vset.pattern.permute.xlu0 0
      %4211 = vperm.xlu0 %4210, %v3825
      %v4212 = vpop.permute.xlu0 %4211
      %4215 = vset.pattern.permute.xlu0 0
      %4216 = vperm.xlu0 %4215, %v3826
      %v4217 = vpop.permute.xlu0 %4216
      %4220 = vset.pattern.permute.xlu0 0
      %4221 = vperm.xlu0 %4220, %v3827
      %v4222 = vpop.permute.xlu0 %4221
      %4225 = vset.pattern.permute.xlu0 0
      %4226 = vperm.xlu0 %4225, %v3828
      %v4227 = vpop.permute.xlu0 %4226
      %4230 = vset.pattern.permute.xlu0 0
      %4231 = vperm.xlu0 %4230, %v3829
      %v4232 = vpop.permute.xlu0 %4231
      %4235 = vset.pattern.permute.xlu0 0
      %4236 = vperm.xlu0 %4235, %v3830
      %v4237 = vpop.permute.xlu0 %4236
      %4240 = vset.pattern.permute.xlu0 0
      %4241 = vperm.xlu0 %4240, %v3831
      %v4242 = vpop.permute.xlu0 %4241
      %4245 = vset.pattern.permute.xlu0 0
      %4246 = vperm.xlu0 %4245, %v3832
      %v4247 = vpop.permute.xlu0 %4246
      %v4249 = vadd.f32 %v4041, %v4172
      %v4250 = vadd.f32 %v4042, %v4172
      %v4251 = vadd.f32 %v4043, %v4172
      %v4252 = vadd.f32 %v4044, %v4172
      %v4253 = vadd.f32 %v4045, %v4172
      %v4254 = vadd.f32 %v4046, %v4172
      %v4255 = vadd.f32 %v4047, %v4172
      %v4256 = vadd.f32 %v4048, %v4172
      %v4257 = vadd.f32 %v4049, %v4177
      %v4258 = vadd.f32 %v4050, %v4177
      %v4259 = vadd.f32 %v4051, %v4177
      %v4260 = vadd.f32 %v4052, %v4177
      %v4261 = vadd.f32 %v4053, %v4177
      %v4262 = vadd.f32 %v4054, %v4177
      %v4263 = vadd.f32 %v4055, %v4177
      %v4264 = vadd.f32 %v4056, %v4177
      %v4265 = vadd.f32 %v4057, %v4182
      %v4266 = vadd.f32 %v4058, %v4182
      %v4267 = vadd.f32 %v4059, %v4182
      %v4268 = vadd.f32 %v4060, %v4182
      %v4269 = vadd.f32 %v4061, %v4182
      %v4270 = vadd.f32 %v4062, %v4182
      %v4271 = vadd.f32 %v4063, %v4182
      %v4272 = vadd.f32 %v4064, %v4182
      %v4273 = vadd.f32 %v4065, %v4187
      %v4274 = vadd.f32 %v4066, %v4187
      %v4275 = vadd.f32 %v4067, %v4187
      %v4276 = vadd.f32 %v4068, %v4187
      %v4277 = vadd.f32 %v4069, %v4187
      %v4278 = vadd.f32 %v4070, %v4187
      %v4279 = vadd.f32 %v4071, %v4187
      %v4280 = vadd.f32 %v4072, %v4187
      %v4281 = vadd.f32 %v4073, %v4192
      %v4282 = vadd.f32 %v4074, %v4192
      %v4283 = vadd.f32 %v4075, %v4192
      %v4284 = vadd.f32 %v4076, %v4192
      %v4285 = vadd.f32 %v4077, %v4192
      %v4286 = vadd.f32 %v4078, %v4192
      %v4287 = vadd.f32 %v4079, %v4192
      %v4288 = vadd.f32 %v4080, %v4192
      %v4289 = vadd.f32 %v4081, %v4197
      %v4290 = vadd.f32 %v4082, %v4197
      %v4291 = vadd.f32 %v4083, %v4197
      %v4292 = vadd.f32 %v4084, %v4197
      %v4293 = vadd.f32 %v4085, %v4197
      %v4294 = vadd.f32 %v4086, %v4197
      %v4295 = vadd.f32 %v4087, %v4197
      %v4296 = vadd.f32 %v4088, %v4197
      %v4297 = vadd.f32 %v4089, %v4202
      %v4298 = vadd.f32 %v4090, %v4202
      %v4299 = vadd.f32 %v4091, %v4202
      %v4300 = vadd.f32 %v4092, %v4202
      %v4301 = vadd.f32 %v4093, %v4202
      %v4302 = vadd.f32 %v4094, %v4202
      %v4303 = vadd.f32 %v4095, %v4202
      %v4304 = vadd.f32 %v4096, %v4202
      %v4305 = vadd.f32 %v4097, %v4207
      %v4306 = vadd.f32 %v4098, %v4207
      %v4307 = vadd.f32 %v4099, %v4207
      %v4308 = vadd.f32 %v4100, %v4207
      %v4309 = vadd.f32 %v4101, %v4207
      %v4310 = vadd.f32 %v4102, %v4207
      %v4311 = vadd.f32 %v4103, %v4207
      %v4312 = vadd.f32 %v4104, %v4207
      %v4313 = vadd.f32 %v4105, %v4212
      %v4314 = vadd.f32 %v4106, %v4212
      %v4315 = vadd.f32 %v4107, %v4212
      %v4316 = vadd.f32 %v4108, %v4212
      %v4317 = vadd.f32 %v4109, %v4212
      %v4318 = vadd.f32 %v4110, %v4212
      %v4319 = vadd.f32 %v4111, %v4212
      %v4320 = vadd.f32 %v4112, %v4212
      %v4321 = vadd.f32 %v4113, %v4217
      %v4322 = vadd.f32 %v4114, %v4217
      %v4323 = vadd.f32 %v4115, %v4217
      %v4324 = vadd.f32 %v4116, %v4217
      %v4325 = vadd.f32 %v4117, %v4217
      %v4326 = vadd.f32 %v4118, %v4217
      %v4327 = vadd.f32 %v4119, %v4217
      %v4328 = vadd.f32 %v4120, %v4217
      %v4329 = vadd.f32 %v4121, %v4222
      %v4330 = vadd.f32 %v4122, %v4222
      %v4331 = vadd.f32 %v4123, %v4222
      %v4332 = vadd.f32 %v4124, %v4222
      %v4333 = vadd.f32 %v4125, %v4222
      %v4334 = vadd.f32 %v4126, %v4222
      %v4335 = vadd.f32 %v4127, %v4222
      %v4336 = vadd.f32 %v4128, %v4222
      %v4337 = vadd.f32 %v4129, %v4227
      %v4338 = vadd.f32 %v4130, %v4227
      %v4339 = vadd.f32 %v4131, %v4227
      %v4340 = vadd.f32 %v4132, %v4227
      %v4341 = vadd.f32 %v4133, %v4227
      %v4342 = vadd.f32 %v4134, %v4227
      %v4343 = vadd.f32 %v4135, %v4227
      %v4344 = vadd.f32 %v4136, %v4227
      %v4345 = vadd.f32 %v4137, %v4232
      %v4346 = vadd.f32 %v4138, %v4232
      %v4347 = vadd.f32 %v4139, %v4232
      %v4348 = vadd.f32 %v4140, %v4232
      %v4349 = vadd.f32 %v4141, %v4232
      %v4350 = vadd.f32 %v4142, %v4232
      %v4351 = vadd.f32 %v4143, %v4232
      %v4352 = vadd.f32 %v4144, %v4232
      %v4353 = vadd.f32 %v4145, %v4237
      %v4354 = vadd.f32 %v4146, %v4237
      %v4355 = vadd.f32 %v4147, %v4237
      %v4356 = vadd.f32 %v4148, %v4237
      %v4357 = vadd.f32 %v4149, %v4237
      %v4358 = vadd.f32 %v4150, %v4237
      %v4359 = vadd.f32 %v4151, %v4237
      %v4360 = vadd.f32 %v4152, %v4237
      %v4361 = vadd.f32 %v4153, %v4242
      %v4362 = vadd.f32 %v4154, %v4242
      %v4363 = vadd.f32 %v4155, %v4242
      %v4364 = vadd.f32 %v4156, %v4242
      %v4365 = vadd.f32 %v4157, %v4242
      %v4366 = vadd.f32 %v4158, %v4242
      %v4367 = vadd.f32 %v4159, %v4242
      %v4368 = vadd.f32 %v4160, %v4242
      %v4369 = vadd.f32 %v4161, %v4247
      %v4370 = vadd.f32 %v4162, %v4247
      %v4371 = vadd.f32 %v4163, %v4247
      %v4372 = vadd.f32 %v4164, %v4247
      %v4373 = vadd.f32 %v4165, %v4247
      %v4374 = vadd.f32 %v4166, %v4247
      %v4375 = vadd.f32 %v4167, %v4247
      %v4376 = vadd.f32 %v4168, %v4247
      %v4377 = vmax.f32 %v4249, 0.0
      %v4378 = vmax.f32 %v4250, 0.0
      %v4379 = vmax.f32 %v4251, 0.0
      %v4380 = vmax.f32 %v4252, 0.0
      %v4381 = vmax.f32 %v4253, 0.0
      %v4382 = vmax.f32 %v4254, 0.0
      %v4383 = vmax.f32 %v4255, 0.0
      %v4384 = vmax.f32 %v4256, 0.0
      %v4385 = vmax.f32 %v4257, 0.0
      %v4386 = vmax.f32 %v4258, 0.0
      %v4387 = vmax.f32 %v4259, 0.0
      %v4388 = vmax.f32 %v4260, 0.0
      %v4389 = vmax.f32 %v4261, 0.0
      %v4390 = vmax.f32 %v4262, 0.0
      %v4391 = vmax.f32 %v4263, 0.0
      %v4392 = vmax.f32 %v4264, 0.0
      %v4393 = vmax.f32 %v4265, 0.0
      %v4394 = vmax.f32 %v4266, 0.0
      %v4395 = vmax.f32 %v4267, 0.0
      %v4396 = vmax.f32 %v4268, 0.0
      %v4397 = vmax.f32 %v4269, 0.0
      %v4398 = vmax.f32 %v4270, 0.0
      %v4399 = vmax.f32 %v4271, 0.0
      %v4400 = vmax.f32 %v4272, 0.0
      %v4401 = vmax.f32 %v4273, 0.0
      %v4402 = vmax.f32 %v4274, 0.0
      %v4403 = vmax.f32 %v4275, 0.0
      %v4404 = vmax.f32 %v4276, 0.0
      %v4405 = vmax.f32 %v4277, 0.0
      %v4406 = vmax.f32 %v4278, 0.0
      %v4407 = vmax.f32 %v4279, 0.0
      %v4408 = vmax.f32 %v4280, 0.0
      %v4409 = vmax.f32 %v4281, 0.0
      %v4410 = vmax.f32 %v4282, 0.0
      %v4411 = vmax.f32 %v4283, 0.0
      %v4412 = vmax.f32 %v4284, 0.0
      %v4413 = vmax.f32 %v4285, 0.0
      %v4414 = vmax.f32 %v4286, 0.0
      %v4415 = vmax.f32 %v4287, 0.0
      %v4416 = vmax.f32 %v4288, 0.0
      %v4417 = vmax.f32 %v4289, 0.0
      %v4418 = vmax.f32 %v4290, 0.0
      %v4419 = vmax.f32 %v4291, 0.0
      %v4420 = vmax.f32 %v4292, 0.0
      %v4421 = vmax.f32 %v4293, 0.0
      %v4422 = vmax.f32 %v4294, 0.0
      %v4423 = vmax.f32 %v4295, 0.0
      %v4424 = vmax.f32 %v4296, 0.0
      %v4425 = vmax.f32 %v4297, 0.0
      %v4426 = vmax.f32 %v4298, 0.0
      %v4427 = vmax.f32 %v4299, 0.0
      %v4428 = vmax.f32 %v4300, 0.0
      %v4429 = vmax.f32 %v4301, 0.0
      %v4430 = vmax.f32 %v4302, 0.0
      %v4431 = vmax.f32 %v4303, 0.0
      %v4432 = vmax.f32 %v4304, 0.0
      %v4433 = vmax.f32 %v4305, 0.0
      %v4434 = vmax.f32 %v4306, 0.0
      %v4435 = vmax.f32 %v4307, 0.0
      %v4436 = vmax.f32 %v4308, 0.0
      %v4437 = vmax.f32 %v4309, 0.0
      %v4438 = vmax.f32 %v4310, 0.0
      %v4439 = vmax.f32 %v4311, 0.0
      %v4440 = vmax.f32 %v4312, 0.0
      %v4441 = vmax.f32 %v4313, 0.0
      %v4442 = vmax.f32 %v4314, 0.0
      %v4443 = vmax.f32 %v4315, 0.0
      %v4444 = vmax.f32 %v4316, 0.0
      %v4445 = vmax.f32 %v4317, 0.0
      %v4446 = vmax.f32 %v4318, 0.0
      %v4447 = vmax.f32 %v4319, 0.0
      %v4448 = vmax.f32 %v4320, 0.0
      %v4449 = vmax.f32 %v4321, 0.0
      %v4450 = vmax.f32 %v4322, 0.0
      %v4451 = vmax.f32 %v4323, 0.0
      %v4452 = vmax.f32 %v4324, 0.0
      %v4453 = vmax.f32 %v4325, 0.0
      %v4454 = vmax.f32 %v4326, 0.0
      %v4455 = vmax.f32 %v4327, 0.0
      %v4456 = vmax.f32 %v4328, 0.0
      %v4457 = vmax.f32 %v4329, 0.0
      %v4458 = vmax.f32 %v4330, 0.0
      %v4459 = vmax.f32 %v4331, 0.0
      %v4460 = vmax.f32 %v4332, 0.0
      %v4461 = vmax.f32 %v4333, 0.0
      %v4462 = vmax.f32 %v4334, 0.0
      %v4463 = vmax.f32 %v4335, 0.0
      %v4464 = vmax.f32 %v4336, 0.0
      %v4465 = vmax.f32 %v4337, 0.0
      %v4466 = vmax.f32 %v4338, 0.0
      %v4467 = vmax.f32 %v4339, 0.0
      %v4468 = vmax.f32 %v4340, 0.0
      %v4469 = vmax.f32 %v4341, 0.0
      %v4470 = vmax.f32 %v4342, 0.0
      %v4471 = vmax.f32 %v4343, 0.0
      %v4472 = vmax.f32 %v4344, 0.0
      %v4473 = vmax.f32 %v4345, 0.0
      %v4474 = vmax.f32 %v4346, 0.0
      %v4475 = vmax.f32 %v4347, 0.0
      %v4476 = vmax.f32 %v4348, 0.0
      %v4477 = vmax.f32 %v4349, 0.0
      %v4478 = vmax.f32 %v4350, 0.0
      %v4479 = vmax.f32 %v4351, 0.0
      %v4480 = vmax.f32 %v4352, 0.0
      %v4481 = vmax.f32 %v4353, 0.0
      %v4482 = vmax.f32 %v4354, 0.0
      %v4483 = vmax.f32 %v4355, 0.0
      %v4484 = vmax.f32 %v4356, 0.0
      %v4485 = vmax.f32 %v4357, 0.0
      %v4486 = vmax.f32 %v4358, 0.0
      %v4487 = vmax.f32 %v4359, 0.0
      %v4488 = vmax.f32 %v4360, 0.0
      %v4489 = vmax.f32 %v4361, 0.0
      %v4490 = vmax.f32 %v4362, 0.0
      %v4491 = vmax.f32 %v4363, 0.0
      %v4492 = vmax.f32 %v4364, 0.0
      %v4493 = vmax.f32 %v4365, 0.0
      %v4494 = vmax.f32 %v4366, 0.0
      %v4495 = vmax.f32 %v4367, 0.0
      %v4496 = vmax.f32 %v4368, 0.0
      %v4497 = vmax.f32 %v4369, 0.0
      %v4498 = vmax.f32 %v4370, 0.0
      %v4499 = vmax.f32 %v4371, 0.0
      %v4500 = vmax.f32 %v4372, 0.0
      %v4501 = vmax.f32 %v4373, 0.0
      %v4502 = vmax.f32 %v4374, 0.0
      %v4503 = vmax.f32 %v4375, 0.0
      %v4504 = vmax.f32 %v4376, 0.0
      %4505 = vst [vmem:[#allocation7] sm:$0xff] %v4377
      %4506 = vst [vmem:[#allocation7 + $0x8] sm:$0xff] %v4378
      %4507 = vst [vmem:[#allocation7 + $0x10] sm:$0xff] %v4379
      %4508 = vst [vmem:[#allocation7 + $0x18] sm:$0xff] %v4380
      %4509 = vst [vmem:[#allocation7 + $0x20] sm:$0xff] %v4381
      %4510 = vst [vmem:[#allocation7 + $0x28] sm:$0xff] %v4382
      %4511 = vst [vmem:[#allocation7 + $0x30] sm:$0xff] %v4383
      %4512 = vst [vmem:[#allocation7 + $0x38] sm:$0xff] %v4384
      %4513 = vst [vmem:[#allocation7 + $0x40] sm:$0xff] %v4385
      %4514 = vst [vmem:[#allocation7 + $0x48] sm:$0xff] %v4386
      %4515 = vst [vmem:[#allocation7 + $0x50] sm:$0xff] %v4387
      %4516 = vst [vmem:[#allocation7 + $0x58] sm:$0xff] %v4388
      %4517 = vst [vmem:[#allocation7 + $0x60] sm:$0xff] %v4389
      %4518 = vst [vmem:[#allocation7 + $0x68] sm:$0xff] %v4390
      %4519 = vst [vmem:[#allocation7 + $0x70] sm:$0xff] %v4391
      %4520 = vst [vmem:[#allocation7 + $0x78] sm:$0xff] %v4392
      %4521 = vst [vmem:[#allocation7 + $0x80] sm:$0xff] %v4393
      %4522 = vst [vmem:[#allocation7 + $0x88] sm:$0xff] %v4394
      %4523 = vst [vmem:[#allocation7 + $0x90] sm:$0xff] %v4395
      %4524 = vst [vmem:[#allocation7 + $0x98] sm:$0xff] %v4396
      %4525 = vst [vmem:[#allocation7 + $0xa0] sm:$0xff] %v4397
      %4526 = vst [vmem:[#allocation7 + $0xa8] sm:$0xff] %v4398
      %4527 = vst [vmem:[#allocation7 + $0xb0] sm:$0xff] %v4399
      %4528 = vst [vmem:[#allocation7 + $0xb8] sm:$0xff] %v4400
      %4529 = vst [vmem:[#allocation7 + $0xc0] sm:$0xff] %v4401
      %4530 = vst [vmem:[#allocation7 + $0xc8] sm:$0xff] %v4402
      %4531 = vst [vmem:[#allocation7 + $0xd0] sm:$0xff] %v4403
      %4532 = vst [vmem:[#allocation7 + $0xd8] sm:$0xff] %v4404
      %4533 = vst [vmem:[#allocation7 + $0xe0] sm:$0xff] %v4405
      %4534 = vst [vmem:[#allocation7 + $0xe8] sm:$0xff] %v4406
      %4535 = vst [vmem:[#allocation7 + $0xf0] sm:$0xff] %v4407
      %4536 = vst [vmem:[#allocation7 + $0xf8] sm:$0xff] %v4408
      %4537 = vst [vmem:[#allocation7 + $0x100] sm:$0xff] %v4409
      %4538 = vst [vmem:[#allocation7 + $0x108] sm:$0xff] %v4410
      %4539 = vst [vmem:[#allocation7 + $0x110] sm:$0xff] %v4411
      %4540 = vst [vmem:[#allocation7 + $0x118] sm:$0xff] %v4412
      %4541 = vst [vmem:[#allocation7 + $0x120] sm:$0xff] %v4413
      %4542 = vst [vmem:[#allocation7 + $0x128] sm:$0xff] %v4414
      %4543 = vst [vmem:[#allocation7 + $0x130] sm:$0xff] %v4415
      %4544 = vst [vmem:[#allocation7 + $0x138] sm:$0xff] %v4416
      %4545 = vst [vmem:[#allocation7 + $0x140] sm:$0xff] %v4417
      %4546 = vst [vmem:[#allocation7 + $0x148] sm:$0xff] %v4418
      %4547 = vst [vmem:[#allocation7 + $0x150] sm:$0xff] %v4419
      %4548 = vst [vmem:[#allocation7 + $0x158] sm:$0xff] %v4420
      %4549 = vst [vmem:[#allocation7 + $0x160] sm:$0xff] %v4421
      %4550 = vst [vmem:[#allocation7 + $0x168] sm:$0xff] %v4422
      %4551 = vst [vmem:[#allocation7 + $0x170] sm:$0xff] %v4423
      %4552 = vst [vmem:[#allocation7 + $0x178] sm:$0xff] %v4424
      %4553 = vst [vmem:[#allocation7 + $0x180] sm:$0xff] %v4425
      %4554 = vst [vmem:[#allocation7 + $0x188] sm:$0xff] %v4426
      %4555 = vst [vmem:[#allocation7 + $0x190] sm:$0xff] %v4427
      %4556 = vst [vmem:[#allocation7 + $0x198] sm:$0xff] %v4428
      %4557 = vst [vmem:[#allocation7 + $0x1a0] sm:$0xff] %v4429
      %4558 = vst [vmem:[#allocation7 + $0x1a8] sm:$0xff] %v4430
      %4559 = vst [vmem:[#allocation7 + $0x1b0] sm:$0xff] %v4431
      %4560 = vst [vmem:[#allocation7 + $0x1b8] sm:$0xff] %v4432
      %4561 = vst [vmem:[#allocation7 + $0x1c0] sm:$0xff] %v4433
      %4562 = vst [vmem:[#allocation7 + $0x1c8] sm:$0xff] %v4434
      %4563 = vst [vmem:[#allocation7 + $0x1d0] sm:$0xff] %v4435
      %4564 = vst [vmem:[#allocation7 + $0x1d8] sm:$0xff] %v4436
      %4565 = vst [vmem:[#allocation7 + $0x1e0] sm:$0xff] %v4437
      %4566 = vst [vmem:[#allocation7 + $0x1e8] sm:$0xff] %v4438
      %4567 = vst [vmem:[#allocation7 + $0x1f0] sm:$0xff] %v4439
      %4568 = vst [vmem:[#allocation7 + $0x1f8] sm:$0xff] %v4440
      %4569 = vst [vmem:[#allocation7 + $0x200] sm:$0xff] %v4441
      %4570 = vst [vmem:[#allocation7 + $0x208] sm:$0xff] %v4442
      %4571 = vst [vmem:[#allocation7 + $0x210] sm:$0xff] %v4443
      %4572 = vst [vmem:[#allocation7 + $0x218] sm:$0xff] %v4444
      %4573 = vst [vmem:[#allocation7 + $0x220] sm:$0xff] %v4445
      %4574 = vst [vmem:[#allocation7 + $0x228] sm:$0xff] %v4446
      %4575 = vst [vmem:[#allocation7 + $0x230] sm:$0xff] %v4447
      %4576 = vst [vmem:[#allocation7 + $0x238] sm:$0xff] %v4448
      %4577 = vst [vmem:[#allocation7 + $0x240] sm:$0xff] %v4449
      %4578 = vst [vmem:[#allocation7 + $0x248] sm:$0xff] %v4450
      %4579 = vst [vmem:[#allocation7 + $0x250] sm:$0xff] %v4451
      %4580 = vst [vmem:[#allocation7 + $0x258] sm:$0xff] %v4452
      %4581 = vst [vmem:[#allocation7 + $0x260] sm:$0xff] %v4453
      %4582 = vst [vmem:[#allocation7 + $0x268] sm:$0xff] %v4454
      %4583 = vst [vmem:[#allocation7 + $0x270] sm:$0xff] %v4455
      %4584 = vst [vmem:[#allocation7 + $0x278] sm:$0xff] %v4456
      %4585 = vst [vmem:[#allocation7 + $0x280] sm:$0xff] %v4457
      %4586 = vst [vmem:[#allocation7 + $0x288] sm:$0xff] %v4458
      %4587 = vst [vmem:[#allocation7 + $0x290] sm:$0xff] %v4459
      %4588 = vst [vmem:[#allocation7 + $0x298] sm:$0xff] %v4460
      %4589 = vst [vmem:[#allocation7 + $0x2a0] sm:$0xff] %v4461
      %4590 = vst [vmem:[#allocation7 + $0x2a8] sm:$0xff] %v4462
      %4591 = vst [vmem:[#allocation7 + $0x2b0] sm:$0xff] %v4463
      %4592 = vst [vmem:[#allocation7 + $0x2b8] sm:$0xff] %v4464
      %4593 = vst [vmem:[#allocation7 + $0x2c0] sm:$0xff] %v4465
      %4594 = vst [vmem:[#allocation7 + $0x2c8] sm:$0xff] %v4466
      %4595 = vst [vmem:[#allocation7 + $0x2d0] sm:$0xff] %v4467
      %4596 = vst [vmem:[#allocation7 + $0x2d8] sm:$0xff] %v4468
      %4597 = vst [vmem:[#allocation7 + $0x2e0] sm:$0xff] %v4469
      %4598 = vst [vmem:[#allocation7 + $0x2e8] sm:$0xff] %v4470
      %4599 = vst [vmem:[#allocation7 + $0x2f0] sm:$0xff] %v4471
      %4600 = vst [vmem:[#allocation7 + $0x2f8] sm:$0xff] %v4472
      %4601 = vst [vmem:[#allocation7 + $0x300] sm:$0xff] %v4473
      %4602 = vst [vmem:[#allocation7 + $0x308] sm:$0xff] %v4474
      %4603 = vst [vmem:[#allocation7 + $0x310] sm:$0xff] %v4475
      %4604 = vst [vmem:[#allocation7 + $0x318] sm:$0xff] %v4476
      %4605 = vst [vmem:[#allocation7 + $0x320] sm:$0xff] %v4477
      %4606 = vst [vmem:[#allocation7 + $0x328] sm:$0xff] %v4478
      %4607 = vst [vmem:[#allocation7 + $0x330] sm:$0xff] %v4479
      %4608 = vst [vmem:[#allocation7 + $0x338] sm:$0xff] %v4480
      %4609 = vst [vmem:[#allocation7 + $0x340] sm:$0xff] %v4481
      %4610 = vst [vmem:[#allocation7 + $0x348] sm:$0xff] %v4482
      %4611 = vst [vmem:[#allocation7 + $0x350] sm:$0xff] %v4483
      %4612 = vst [vmem:[#allocation7 + $0x358] sm:$0xff] %v4484
      %4613 = vst [vmem:[#allocation7 + $0x360] sm:$0xff] %v4485
      %4614 = vst [vmem:[#allocation7 + $0x368] sm:$0xff] %v4486
      %4615 = vst [vmem:[#allocation7 + $0x370] sm:$0xff] %v4487
      %4616 = vst [vmem:[#allocation7 + $0x378] sm:$0xff] %v4488
      %4617 = vst [vmem:[#allocation7 + $0x380] sm:$0xff] %v4489
      %4618 = vst [vmem:[#allocation7 + $0x388] sm:$0xff] %v4490
      %4619 = vst [vmem:[#allocation7 + $0x390] sm:$0xff] %v4491
      %4620 = vst [vmem:[#allocation7 + $0x398] sm:$0xff] %v4492
      %4621 = vst [vmem:[#allocation7 + $0x3a0] sm:$0xff] %v4493
      %4622 = vst [vmem:[#allocation7 + $0x3a8] sm:$0xff] %v4494
      %4623 = vst [vmem:[#allocation7 + $0x3b0] sm:$0xff] %v4495
      %4624 = vst [vmem:[#allocation7 + $0x3b8] sm:$0xff] %v4496
      %4625 = vst [vmem:[#allocation7 + $0x3c0] sm:$0xff] %v4497
      %4626 = vst [vmem:[#allocation7 + $0x3c8] sm:$0xff] %v4498
      %4627 = vst [vmem:[#allocation7 + $0x3d0] sm:$0xff] %v4499
      %4628 = vst [vmem:[#allocation7 + $0x3d8] sm:$0xff] %v4500
      %4629 = vst [vmem:[#allocation7 + $0x3e0] sm:$0xff] %v4501
      %4630 = vst [vmem:[#allocation7 + $0x3e8] sm:$0xff] %v4502
      %4631 = vst [vmem:[#allocation7 + $0x3f0] sm:$0xff] %v4503
      %4632 = vst [vmem:[#allocation7 + $0x3f8] sm:$0xff] %v4504
      %s4633 = scalar_lea.vmem [#allocation7], 1024
      %v4634 = vld [vmem:[%s4633] sm:$0xff]
      %v4635 = vld [vmem:[%s4633 + $0x8] sm:$0xff]
      %v4636 = vld [vmem:[%s4633 + $0x10] sm:$0xff]
      %v4637 = vld [vmem:[%s4633 + $0x18] sm:$0xff]
      %v4638 = vld [vmem:[%s4633 + $0x20] sm:$0xff]
      %v4639 = vld [vmem:[%s4633 + $0x28] sm:$0xff]
      %v4640 = vld [vmem:[%s4633 + $0x30] sm:$0xff]
      %v4641 = vld [vmem:[%s4633 + $0x38] sm:$0xff]
      %v4642 = vld [vmem:[%s4633 + $0x40] sm:$0xff]
      %v4643 = vld [vmem:[%s4633 + $0x48] sm:$0xff]
      %v4644 = vld [vmem:[%s4633 + $0x50] sm:$0xff]
      %v4645 = vld [vmem:[%s4633 + $0x58] sm:$0xff]
      %v4646 = vld [vmem:[%s4633 + $0x60] sm:$0xff]
      %v4647 = vld [vmem:[%s4633 + $0x68] sm:$0xff]
      %v4648 = vld [vmem:[%s4633 + $0x70] sm:$0xff]
      %v4649 = vld [vmem:[%s4633 + $0x78] sm:$0xff]
      %v4650 = vld [vmem:[%s4633 + $0x80] sm:$0xff]
      %v4651 = vld [vmem:[%s4633 + $0x88] sm:$0xff]
      %v4652 = vld [vmem:[%s4633 + $0x90] sm:$0xff]
      %v4653 = vld [vmem:[%s4633 + $0x98] sm:$0xff]
      %v4654 = vld [vmem:[%s4633 + $0xa0] sm:$0xff]
      %v4655 = vld [vmem:[%s4633 + $0xa8] sm:$0xff]
      %v4656 = vld [vmem:[%s4633 + $0xb0] sm:$0xff]
      %v4657 = vld [vmem:[%s4633 + $0xb8] sm:$0xff]
      %v4658 = vld [vmem:[%s4633 + $0xc0] sm:$0xff]
      %v4659 = vld [vmem:[%s4633 + $0xc8] sm:$0xff]
      %v4660 = vld [vmem:[%s4633 + $0xd0] sm:$0xff]
      %v4661 = vld [vmem:[%s4633 + $0xd8] sm:$0xff]
      %v4662 = vld [vmem:[%s4633 + $0xe0] sm:$0xff]
      %v4663 = vld [vmem:[%s4633 + $0xe8] sm:$0xff]
      %v4664 = vld [vmem:[%s4633 + $0xf0] sm:$0xff]
      %v4665 = vld [vmem:[%s4633 + $0xf8] sm:$0xff]
      %v4666 = vld [vmem:[%s4633 + $0x100] sm:$0xff]
      %v4667 = vld [vmem:[%s4633 + $0x108] sm:$0xff]
      %v4668 = vld [vmem:[%s4633 + $0x110] sm:$0xff]
      %v4669 = vld [vmem:[%s4633 + $0x118] sm:$0xff]
      %v4670 = vld [vmem:[%s4633 + $0x120] sm:$0xff]
      %v4671 = vld [vmem:[%s4633 + $0x128] sm:$0xff]
      %v4672 = vld [vmem:[%s4633 + $0x130] sm:$0xff]
      %v4673 = vld [vmem:[%s4633 + $0x138] sm:$0xff]
      %v4674 = vld [vmem:[%s4633 + $0x140] sm:$0xff]
      %v4675 = vld [vmem:[%s4633 + $0x148] sm:$0xff]
      %v4676 = vld [vmem:[%s4633 + $0x150] sm:$0xff]
      %v4677 = vld [vmem:[%s4633 + $0x158] sm:$0xff]
      %v4678 = vld [vmem:[%s4633 + $0x160] sm:$0xff]
      %v4679 = vld [vmem:[%s4633 + $0x168] sm:$0xff]
      %v4680 = vld [vmem:[%s4633 + $0x170] sm:$0xff]
      %v4681 = vld [vmem:[%s4633 + $0x178] sm:$0xff]
      %v4682 = vld [vmem:[%s4633 + $0x180] sm:$0xff]
      %v4683 = vld [vmem:[%s4633 + $0x188] sm:$0xff]
      %v4684 = vld [vmem:[%s4633 + $0x190] sm:$0xff]
      %v4685 = vld [vmem:[%s4633 + $0x198] sm:$0xff]
      %v4686 = vld [vmem:[%s4633 + $0x1a0] sm:$0xff]
      %v4687 = vld [vmem:[%s4633 + $0x1a8] sm:$0xff]
      %v4688 = vld [vmem:[%s4633 + $0x1b0] sm:$0xff]
      %v4689 = vld [vmem:[%s4633 + $0x1b8] sm:$0xff]
      %v4690 = vld [vmem:[%s4633 + $0x1c0] sm:$0xff]
      %v4691 = vld [vmem:[%s4633 + $0x1c8] sm:$0xff]
      %v4692 = vld [vmem:[%s4633 + $0x1d0] sm:$0xff]
      %v4693 = vld [vmem:[%s4633 + $0x1d8] sm:$0xff]
      %v4694 = vld [vmem:[%s4633 + $0x1e0] sm:$0xff]
      %v4695 = vld [vmem:[%s4633 + $0x1e8] sm:$0xff]
      %v4696 = vld [vmem:[%s4633 + $0x1f0] sm:$0xff]
      %v4697 = vld [vmem:[%s4633 + $0x1f8] sm:$0xff]
      %v4698 = vld [vmem:[%s4633 + $0x200] sm:$0xff]
      %v4699 = vld [vmem:[%s4633 + $0x208] sm:$0xff]
      %v4700 = vld [vmem:[%s4633 + $0x210] sm:$0xff]
      %v4701 = vld [vmem:[%s4633 + $0x218] sm:$0xff]
      %v4702 = vld [vmem:[%s4633 + $0x220] sm:$0xff]
      %v4703 = vld [vmem:[%s4633 + $0x228] sm:$0xff]
      %v4704 = vld [vmem:[%s4633 + $0x230] sm:$0xff]
      %v4705 = vld [vmem:[%s4633 + $0x238] sm:$0xff]
      %v4706 = vld [vmem:[%s4633 + $0x240] sm:$0xff]
      %v4707 = vld [vmem:[%s4633 + $0x248] sm:$0xff]
      %v4708 = vld [vmem:[%s4633 + $0x250] sm:$0xff]
      %v4709 = vld [vmem:[%s4633 + $0x258] sm:$0xff]
      %v4710 = vld [vmem:[%s4633 + $0x260] sm:$0xff]
      %v4711 = vld [vmem:[%s4633 + $0x268] sm:$0xff]
      %v4712 = vld [vmem:[%s4633 + $0x270] sm:$0xff]
      %v4713 = vld [vmem:[%s4633 + $0x278] sm:$0xff]
      %v4714 = vld [vmem:[%s4633 + $0x280] sm:$0xff]
      %v4715 = vld [vmem:[%s4633 + $0x288] sm:$0xff]
      %v4716 = vld [vmem:[%s4633 + $0x290] sm:$0xff]
      %v4717 = vld [vmem:[%s4633 + $0x298] sm:$0xff]
      %v4718 = vld [vmem:[%s4633 + $0x2a0] sm:$0xff]
      %v4719 = vld [vmem:[%s4633 + $0x2a8] sm:$0xff]
      %v4720 = vld [vmem:[%s4633 + $0x2b0] sm:$0xff]
      %v4721 = vld [vmem:[%s4633 + $0x2b8] sm:$0xff]
      %v4722 = vld [vmem:[%s4633 + $0x2c0] sm:$0xff]
      %v4723 = vld [vmem:[%s4633 + $0x2c8] sm:$0xff]
      %v4724 = vld [vmem:[%s4633 + $0x2d0] sm:$0xff]
      %v4725 = vld [vmem:[%s4633 + $0x2d8] sm:$0xff]
      %v4726 = vld [vmem:[%s4633 + $0x2e0] sm:$0xff]
      %v4727 = vld [vmem:[%s4633 + $0x2e8] sm:$0xff]
      %v4728 = vld [vmem:[%s4633 + $0x2f0] sm:$0xff]
      %v4729 = vld [vmem:[%s4633 + $0x2f8] sm:$0xff]
      %v4730 = vld [vmem:[%s4633 + $0x300] sm:$0xff]
      %v4731 = vld [vmem:[%s4633 + $0x308] sm:$0xff]
      %v4732 = vld [vmem:[%s4633 + $0x310] sm:$0xff]
      %v4733 = vld [vmem:[%s4633 + $0x318] sm:$0xff]
      %v4734 = vld [vmem:[%s4633 + $0x320] sm:$0xff]
      %v4735 = vld [vmem:[%s4633 + $0x328] sm:$0xff]
      %v4736 = vld [vmem:[%s4633 + $0x330] sm:$0xff]
      %v4737 = vld [vmem:[%s4633 + $0x338] sm:$0xff]
      %v4738 = vld [vmem:[%s4633 + $0x340] sm:$0xff]
      %v4739 = vld [vmem:[%s4633 + $0x348] sm:$0xff]
      %v4740 = vld [vmem:[%s4633 + $0x350] sm:$0xff]
      %v4741 = vld [vmem:[%s4633 + $0x358] sm:$0xff]
      %v4742 = vld [vmem:[%s4633 + $0x360] sm:$0xff]
      %v4743 = vld [vmem:[%s4633 + $0x368] sm:$0xff]
      %v4744 = vld [vmem:[%s4633 + $0x370] sm:$0xff]
      %v4745 = vld [vmem:[%s4633 + $0x378] sm:$0xff]
      %v4746 = vld [vmem:[%s4633 + $0x380] sm:$0xff]
      %v4747 = vld [vmem:[%s4633 + $0x388] sm:$0xff]
      %v4748 = vld [vmem:[%s4633 + $0x390] sm:$0xff]
      %v4749 = vld [vmem:[%s4633 + $0x398] sm:$0xff]
      %v4750 = vld [vmem:[%s4633 + $0x3a0] sm:$0xff]
      %v4751 = vld [vmem:[%s4633 + $0x3a8] sm:$0xff]
      %v4752 = vld [vmem:[%s4633 + $0x3b0] sm:$0xff]
      %v4753 = vld [vmem:[%s4633 + $0x3b8] sm:$0xff]
      %v4754 = vld [vmem:[%s4633 + $0x3c0] sm:$0xff]
      %v4755 = vld [vmem:[%s4633 + $0x3c8] sm:$0xff]
      %v4756 = vld [vmem:[%s4633 + $0x3d0] sm:$0xff]
      %v4757 = vld [vmem:[%s4633 + $0x3d8] sm:$0xff]
      %v4758 = vld [vmem:[%s4633 + $0x3e0] sm:$0xff]
      %v4759 = vld [vmem:[%s4633 + $0x3e8] sm:$0xff]
      %v4760 = vld [vmem:[%s4633 + $0x3f0] sm:$0xff]
      %v4761 = vld [vmem:[%s4633 + $0x3f8] sm:$0xff]
      %v4762 = vmul.f32 %v4634, %v3964
      %v4763 = vmul.f32 %v4635, %v3964
      %v4764 = vmul.f32 %v4636, %v3964
      %v4765 = vmul.f32 %v4637, %v3964
      %v4766 = vmul.f32 %v4638, %v3964
      %v4767 = vmul.f32 %v4639, %v3964
      %v4768 = vmul.f32 %v4640, %v3964
      %v4769 = vmul.f32 %v4641, %v3964
      %v4770 = vmul.f32 %v4642, %v3969
      %v4771 = vmul.f32 %v4643, %v3969
      %v4772 = vmul.f32 %v4644, %v3969
      %v4773 = vmul.f32 %v4645, %v3969
      %v4774 = vmul.f32 %v4646, %v3969
      %v4775 = vmul.f32 %v4647, %v3969
      %v4776 = vmul.f32 %v4648, %v3969
      %v4777 = vmul.f32 %v4649, %v3969
      %v4778 = vmul.f32 %v4650, %v3974
      %v4779 = vmul.f32 %v4651, %v3974
      %v4780 = vmul.f32 %v4652, %v3974
      %v4781 = vmul.f32 %v4653, %v3974
      %v4782 = vmul.f32 %v4654, %v3974
      %v4783 = vmul.f32 %v4655, %v3974
      %v4784 = vmul.f32 %v4656, %v3974
      %v4785 = vmul.f32 %v4657, %v3974
      %v4786 = vmul.f32 %v4658, %v3979
      %v4787 = vmul.f32 %v4659, %v3979
      %v4788 = vmul.f32 %v4660, %v3979
      %v4789 = vmul.f32 %v4661, %v3979
      %v4790 = vmul.f32 %v4662, %v3979
      %v4791 = vmul.f32 %v4663, %v3979
      %v4792 = vmul.f32 %v4664, %v3979
      %v4793 = vmul.f32 %v4665, %v3979
      %v4794 = vmul.f32 %v4666, %v3984
      %v4795 = vmul.f32 %v4667, %v3984
      %v4796 = vmul.f32 %v4668, %v3984
      %v4797 = vmul.f32 %v4669, %v3984
      %v4798 = vmul.f32 %v4670, %v3984
      %v4799 = vmul.f32 %v4671, %v3984
      %v4800 = vmul.f32 %v4672, %v3984
      %v4801 = vmul.f32 %v4673, %v3984
      %v4802 = vmul.f32 %v4674, %v3989
      %v4803 = vmul.f32 %v4675, %v3989
      %v4804 = vmul.f32 %v4676, %v3989
      %v4805 = vmul.f32 %v4677, %v3989
      %v4806 = vmul.f32 %v4678, %v3989
      %v4807 = vmul.f32 %v4679, %v3989
      %v4808 = vmul.f32 %v4680, %v3989
      %v4809 = vmul.f32 %v4681, %v3989
      %v4810 = vmul.f32 %v4682, %v3994
      %v4811 = vmul.f32 %v4683, %v3994
      %v4812 = vmul.f32 %v4684, %v3994
      %v4813 = vmul.f32 %v4685, %v3994
      %v4814 = vmul.f32 %v4686, %v3994
      %v4815 = vmul.f32 %v4687, %v3994
      %v4816 = vmul.f32 %v4688, %v3994
      %v4817 = vmul.f32 %v4689, %v3994
      %v4818 = vmul.f32 %v4690, %v3999
      %v4819 = vmul.f32 %v4691, %v3999
      %v4820 = vmul.f32 %v4692, %v3999
      %v4821 = vmul.f32 %v4693, %v3999
      %v4822 = vmul.f32 %v4694, %v3999
      %v4823 = vmul.f32 %v4695, %v3999
      %v4824 = vmul.f32 %v4696, %v3999
      %v4825 = vmul.f32 %v4697, %v3999
      %v4826 = vmul.f32 %v4698, %v4004
      %v4827 = vmul.f32 %v4699, %v4004
      %v4828 = vmul.f32 %v4700, %v4004
      %v4829 = vmul.f32 %v4701, %v4004
      %v4830 = vmul.f32 %v4702, %v4004
      %v4831 = vmul.f32 %v4703, %v4004
      %v4832 = vmul.f32 %v4704, %v4004
      %v4833 = vmul.f32 %v4705, %v4004
      %v4834 = vmul.f32 %v4706, %v4009
      %v4835 = vmul.f32 %v4707, %v4009
      %v4836 = vmul.f32 %v4708, %v4009
      %v4837 = vmul.f32 %v4709, %v4009
      %v4838 = vmul.f32 %v4710, %v4009
      %v4839 = vmul.f32 %v4711, %v4009
      %v4840 = vmul.f32 %v4712, %v4009
      %v4841 = vmul.f32 %v4713, %v4009
      %v4842 = vmul.f32 %v4714, %v4014
      %v4843 = vmul.f32 %v4715, %v4014
      %v4844 = vmul.f32 %v4716, %v4014
      %v4845 = vmul.f32 %v4717, %v4014
      %v4846 = vmul.f32 %v4718, %v4014
      %v4847 = vmul.f32 %v4719, %v4014
      %v4848 = vmul.f32 %v4720, %v4014
      %v4849 = vmul.f32 %v4721, %v4014
      %v4850 = vmul.f32 %v4722, %v4019
      %v4851 = vmul.f32 %v4723, %v4019
      %v4852 = vmul.f32 %v4724, %v4019
      %v4853 = vmul.f32 %v4725, %v4019
      %v4854 = vmul.f32 %v4726, %v4019
      %v4855 = vmul.f32 %v4727, %v4019
      %v4856 = vmul.f32 %v4728, %v4019
      %v4857 = vmul.f32 %v4729, %v4019
      %v4858 = vmul.f32 %v4730, %v4024
      %v4859 = vmul.f32 %v4731, %v4024
      %v4860 = vmul.f32 %v4732, %v4024
      %v4861 = vmul.f32 %v4733, %v4024
      %v4862 = vmul.f32 %v4734, %v4024
      %v4863 = vmul.f32 %v4735, %v4024
      %v4864 = vmul.f32 %v4736, %v4024
      %v4865 = vmul.f32 %v4737, %v4024
      %v4866 = vmul.f32 %v4738, %v4029
      %v4867 = vmul.f32 %v4739, %v4029
      %v4868 = vmul.f32 %v4740, %v4029
      %v4869 = vmul.f32 %v4741, %v4029
      %v4870 = vmul.f32 %v4742, %v4029
      %v4871 = vmul.f32 %v4743, %v4029
      %v4872 = vmul.f32 %v4744, %v4029
      %v4873 = vmul.f32 %v4745, %v4029
      %v4874 = vmul.f32 %v4746, %v4034
      %v4875 = vmul.f32 %v4747, %v4034
      %v4876 = vmul.f32 %v4748, %v4034
      %v4877 = vmul.f32 %v4749, %v4034
      %v4878 = vmul.f32 %v4750, %v4034
      %v4879 = vmul.f32 %v4751, %v4034
      %v4880 = vmul.f32 %v4752, %v4034
      %v4881 = vmul.f32 %v4753, %v4034
      %v4882 = vmul.f32 %v4754, %v4039
      %v4883 = vmul.f32 %v4755, %v4039
      %v4884 = vmul.f32 %v4756, %v4039
      %v4885 = vmul.f32 %v4757, %v4039
      %v4886 = vmul.f32 %v4758, %v4039
      %v4887 = vmul.f32 %v4759, %v4039
      %v4888 = vmul.f32 %v4760, %v4039
      %v4889 = vmul.f32 %v4761, %v4039
      %v4890 = vadd.f32 %v4762, %v4172
      %v4891 = vadd.f32 %v4763, %v4172
      %v4892 = vadd.f32 %v4764, %v4172
      %v4893 = vadd.f32 %v4765, %v4172
      %v4894 = vadd.f32 %v4766, %v4172
      %v4895 = vadd.f32 %v4767, %v4172
      %v4896 = vadd.f32 %v4768, %v4172
      %v4897 = vadd.f32 %v4769, %v4172
      %v4898 = vadd.f32 %v4770, %v4177
      %v4899 = vadd.f32 %v4771, %v4177
      %v4900 = vadd.f32 %v4772, %v4177
      %v4901 = vadd.f32 %v4773, %v4177
      %v4902 = vadd.f32 %v4774, %v4177
      %v4903 = vadd.f32 %v4775, %v4177
      %v4904 = vadd.f32 %v4776, %v4177
      %v4905 = vadd.f32 %v4777, %v4177
      %v4906 = vadd.f32 %v4778, %v4182
      %v4907 = vadd.f32 %v4779, %v4182
      %v4908 = vadd.f32 %v4780, %v4182
      %v4909 = vadd.f32 %v4781, %v4182
      %v4910 = vadd.f32 %v4782, %v4182
      %v4911 = vadd.f32 %v4783, %v4182
      %v4912 = vadd.f32 %v4784, %v4182
      %v4913 = vadd.f32 %v4785, %v4182
      %v4914 = vadd.f32 %v4786, %v4187
      %v4915 = vadd.f32 %v4787, %v4187
      %v4916 = vadd.f32 %v4788, %v4187
      %v4917 = vadd.f32 %v4789, %v4187
      %v4918 = vadd.f32 %v4790, %v4187
      %v4919 = vadd.f32 %v4791, %v4187
      %v4920 = vadd.f32 %v4792, %v4187
      %v4921 = vadd.f32 %v4793, %v4187
      %v4922 = vadd.f32 %v4794, %v4192
      %v4923 = vadd.f32 %v4795, %v4192
      %v4924 = vadd.f32 %v4796, %v4192
      %v4925 = vadd.f32 %v4797, %v4192
      %v4926 = vadd.f32 %v4798, %v4192
      %v4927 = vadd.f32 %v4799, %v4192
      %v4928 = vadd.f32 %v4800, %v4192
      %v4929 = vadd.f32 %v4801, %v4192
      %v4930 = vadd.f32 %v4802, %v4197
      %v4931 = vadd.f32 %v4803, %v4197
      %v4932 = vadd.f32 %v4804, %v4197
      %v4933 = vadd.f32 %v4805, %v4197
      %v4934 = vadd.f32 %v4806, %v4197
      %v4935 = vadd.f32 %v4807, %v4197
      %v4936 = vadd.f32 %v4808, %v4197
      %v4937 = vadd.f32 %v4809, %v4197
      %v4938 = vadd.f32 %v4810, %v4202
      %v4939 = vadd.f32 %v4811, %v4202
      %v4940 = vadd.f32 %v4812, %v4202
      %v4941 = vadd.f32 %v4813, %v4202
      %v4942 = vadd.f32 %v4814, %v4202
      %v4943 = vadd.f32 %v4815, %v4202
      %v4944 = vadd.f32 %v4816, %v4202
      %v4945 = vadd.f32 %v4817, %v4202
      %v4946 = vadd.f32 %v4818, %v4207
      %v4947 = vadd.f32 %v4819, %v4207
      %v4948 = vadd.f32 %v4820, %v4207
      %v4949 = vadd.f32 %v4821, %v4207
      %v4950 = vadd.f32 %v4822, %v4207
      %v4951 = vadd.f32 %v4823, %v4207
      %v4952 = vadd.f32 %v4824, %v4207
      %v4953 = vadd.f32 %v4825, %v4207
      %v4954 = vadd.f32 %v4826, %v4212
      %v4955 = vadd.f32 %v4827, %v4212
      %v4956 = vadd.f32 %v4828, %v4212
      %v4957 = vadd.f32 %v4829, %v4212
      %v4958 = vadd.f32 %v4830, %v4212
      %v4959 = vadd.f32 %v4831, %v4212
      %v4960 = vadd.f32 %v4832, %v4212
      %v4961 = vadd.f32 %v4833, %v4212
      %v4962 = vadd.f32 %v4834, %v4217
      %v4963 = vadd.f32 %v4835, %v4217
      %v4964 = vadd.f32 %v4836, %v4217
      %v4965 = vadd.f32 %v4837, %v4217
      %v4966 = vadd.f32 %v4838, %v4217
      %v4967 = vadd.f32 %v4839, %v4217
      %v4968 = vadd.f32 %v4840, %v4217
      %v4969 = vadd.f32 %v4841, %v4217
      %v4970 = vadd.f32 %v4842, %v4222
      %v4971 = vadd.f32 %v4843, %v4222
      %v4972 = vadd.f32 %v4844, %v4222
      %v4973 = vadd.f32 %v4845, %v4222
      %v4974 = vadd.f32 %v4846, %v4222
      %v4975 = vadd.f32 %v4847, %v4222
      %v4976 = vadd.f32 %v4848, %v4222
      %v4977 = vadd.f32 %v4849, %v4222
      %v4978 = vadd.f32 %v4850, %v4227
      %v4979 = vadd.f32 %v4851, %v4227
      %v4980 = vadd.f32 %v4852, %v4227
      %v4981 = vadd.f32 %v4853, %v4227
      %v4982 = vadd.f32 %v4854, %v4227
      %v4983 = vadd.f32 %v4855, %v4227
      %v4984 = vadd.f32 %v4856, %v4227
      %v4985 = vadd.f32 %v4857, %v4227
      %v4986 = vadd.f32 %v4858, %v4232
      %v4987 = vadd.f32 %v4859, %v4232
      %v4988 = vadd.f32 %v4860, %v4232
      %v4989 = vadd.f32 %v4861, %v4232
      %v4990 = vadd.f32 %v4862, %v4232
      %v4991 = vadd.f32 %v4863, %v4232
      %v4992 = vadd.f32 %v4864, %v4232
      %v4993 = vadd.f32 %v4865, %v4232
      %v4994 = vadd.f32 %v4866, %v4237
      %v4995 = vadd.f32 %v4867, %v4237
      %v4996 = vadd.f32 %v4868, %v4237
      %v4997 = vadd.f32 %v4869, %v4237
      %v4998 = vadd.f32 %v4870, %v4237
      %v4999 = vadd.f32 %v4871, %v4237
      %v5000 = vadd.f32 %v4872, %v4237
      %v5001 = vadd.f32 %v4873, %v4237
      %v5002 = vadd.f32 %v4874, %v4242
      %v5003 = vadd.f32 %v4875, %v4242
      %v5004 = vadd.f32 %v4876, %v4242
      %v5005 = vadd.f32 %v4877, %v4242
      %v5006 = vadd.f32 %v4878, %v4242
      %v5007 = vadd.f32 %v4879, %v4242
      %v5008 = vadd.f32 %v4880, %v4242
      %v5009 = vadd.f32 %v4881, %v4242
      %v5010 = vadd.f32 %v4882, %v4247
      %v5011 = vadd.f32 %v4883, %v4247
      %v5012 = vadd.f32 %v4884, %v4247
      %v5013 = vadd.f32 %v4885, %v4247
      %v5014 = vadd.f32 %v4886, %v4247
      %v5015 = vadd.f32 %v4887, %v4247
      %v5016 = vadd.f32 %v4888, %v4247
      %v5017 = vadd.f32 %v4889, %v4247
      %v5018 = vmax.f32 %v4890, 0.0
      %v5019 = vmax.f32 %v4891, 0.0
      %v5020 = vmax.f32 %v4892, 0.0
      %v5021 = vmax.f32 %v4893, 0.0
      %v5022 = vmax.f32 %v4894, 0.0
      %v5023 = vmax.f32 %v4895, 0.0
      %v5024 = vmax.f32 %v4896, 0.0
      %v5025 = vmax.f32 %v4897, 0.0
      %v5026 = vmax.f32 %v4898, 0.0
      %v5027 = vmax.f32 %v4899, 0.0
      %v5028 = vmax.f32 %v4900, 0.0
      %v5029 = vmax.f32 %v4901, 0.0
      %v5030 = vmax.f32 %v4902, 0.0
      %v5031 = vmax.f32 %v4903, 0.0
      %v5032 = vmax.f32 %v4904, 0.0
      %v5033 = vmax.f32 %v4905, 0.0
      %v5034 = vmax.f32 %v4906, 0.0
      %v5035 = vmax.f32 %v4907, 0.0
      %v5036 = vmax.f32 %v4908, 0.0
      %v5037 = vmax.f32 %v4909, 0.0
      %v5038 = vmax.f32 %v4910, 0.0
      %v5039 = vmax.f32 %v4911, 0.0
      %v5040 = vmax.f32 %v4912, 0.0
      %v5041 = vmax.f32 %v4913, 0.0
      %v5042 = vmax.f32 %v4914, 0.0
      %v5043 = vmax.f32 %v4915, 0.0
      %v5044 = vmax.f32 %v4916, 0.0
      %v5045 = vmax.f32 %v4917, 0.0
      %v5046 = vmax.f32 %v4918, 0.0
      %v5047 = vmax.f32 %v4919, 0.0
      %v5048 = vmax.f32 %v4920, 0.0
      %v5049 = vmax.f32 %v4921, 0.0
      %v5050 = vmax.f32 %v4922, 0.0
      %v5051 = vmax.f32 %v4923, 0.0
      %v5052 = vmax.f32 %v4924, 0.0
      %v5053 = vmax.f32 %v4925, 0.0
      %v5054 = vmax.f32 %v4926, 0.0
      %v5055 = vmax.f32 %v4927, 0.0
      %v5056 = vmax.f32 %v4928, 0.0
      %v5057 = vmax.f32 %v4929, 0.0
      %v5058 = vmax.f32 %v4930, 0.0
      %v5059 = vmax.f32 %v4931, 0.0
      %v5060 = vmax.f32 %v4932, 0.0
      %v5061 = vmax.f32 %v4933, 0.0
      %v5062 = vmax.f32 %v4934, 0.0
      %v5063 = vmax.f32 %v4935, 0.0
      %v5064 = vmax.f32 %v4936, 0.0
      %v5065 = vmax.f32 %v4937, 0.0
      %v5066 = vmax.f32 %v4938, 0.0
      %v5067 = vmax.f32 %v4939, 0.0
      %v5068 = vmax.f32 %v4940, 0.0
      %v5069 = vmax.f32 %v4941, 0.0
      %v5070 = vmax.f32 %v4942, 0.0
      %v5071 = vmax.f32 %v4943, 0.0
      %v5072 = vmax.f32 %v4944, 0.0
      %v5073 = vmax.f32 %v4945, 0.0
      %v5074 = vmax.f32 %v4946, 0.0
      %v5075 = vmax.f32 %v4947, 0.0
      %v5076 = vmax.f32 %v4948, 0.0
      %v5077 = vmax.f32 %v4949, 0.0
      %v5078 = vmax.f32 %v4950, 0.0
      %v5079 = vmax.f32 %v4951, 0.0
      %v5080 = vmax.f32 %v4952, 0.0
      %v5081 = vmax.f32 %v4953, 0.0
      %v5082 = vmax.f32 %v4954, 0.0
      %v5083 = vmax.f32 %v4955, 0.0
      %v5084 = vmax.f32 %v4956, 0.0
      %v5085 = vmax.f32 %v4957, 0.0
      %v5086 = vmax.f32 %v4958, 0.0
      %v5087 = vmax.f32 %v4959, 0.0
      %v5088 = vmax.f32 %v4960, 0.0
      %v5089 = vmax.f32 %v4961, 0.0
      %v5090 = vmax.f32 %v4962, 0.0
      %v5091 = vmax.f32 %v4963, 0.0
      %v5092 = vmax.f32 %v4964, 0.0
      %v5093 = vmax.f32 %v4965, 0.0
      %v5094 = vmax.f32 %v4966, 0.0
      %v5095 = vmax.f32 %v4967, 0.0
      %v5096 = vmax.f32 %v4968, 0.0
      %v5097 = vmax.f32 %v4969, 0.0
      %v5098 = vmax.f32 %v4970, 0.0
      %v5099 = vmax.f32 %v4971, 0.0
      %v5100 = vmax.f32 %v4972, 0.0
      %v5101 = vmax.f32 %v4973, 0.0
      %v5102 = vmax.f32 %v4974, 0.0
      %v5103 = vmax.f32 %v4975, 0.0
      %v5104 = vmax.f32 %v4976, 0.0
      %v5105 = vmax.f32 %v4977, 0.0
      %v5106 = vmax.f32 %v4978, 0.0
      %v5107 = vmax.f32 %v4979, 0.0
      %v5108 = vmax.f32 %v4980, 0.0
      %v5109 = vmax.f32 %v4981, 0.0
      %v5110 = vmax.f32 %v4982, 0.0
      %v5111 = vmax.f32 %v4983, 0.0
      %v5112 = vmax.f32 %v4984, 0.0
      %v5113 = vmax.f32 %v4985, 0.0
      %v5114 = vmax.f32 %v4986, 0.0
      %v5115 = vmax.f32 %v4987, 0.0
      %v5116 = vmax.f32 %v4988, 0.0
      %v5117 = vmax.f32 %v4989, 0.0
      %v5118 = vmax.f32 %v4990, 0.0
      %v5119 = vmax.f32 %v4991, 0.0
      %v5120 = vmax.f32 %v4992, 0.0
      %v5121 = vmax.f32 %v4993, 0.0
      %v5122 = vmax.f32 %v4994, 0.0
      %v5123 = vmax.f32 %v4995, 0.0
      %v5124 = vmax.f32 %v4996, 0.0
      %v5125 = vmax.f32 %v4997, 0.0
      %v5126 = vmax.f32 %v4998, 0.0
      %v5127 = vmax.f32 %v4999, 0.0
      %v5128 = vmax.f32 %v5000, 0.0
      %v5129 = vmax.f32 %v5001, 0.0
      %v5130 = vmax.f32 %v5002, 0.0
      %v5131 = vmax.f32 %v5003, 0.0
      %v5132 = vmax.f32 %v5004, 0.0
      %v5133 = vmax.f32 %v5005, 0.0
      %v5134 = vmax.f32 %v5006, 0.0
      %v5135 = vmax.f32 %v5007, 0.0
      %v5136 = vmax.f32 %v5008, 0.0
      %v5137 = vmax.f32 %v5009, 0.0
      %v5138 = vmax.f32 %v5010, 0.0
      %v5139 = vmax.f32 %v5011, 0.0
      %v5140 = vmax.f32 %v5012, 0.0
      %v5141 = vmax.f32 %v5013, 0.0
      %v5142 = vmax.f32 %v5014, 0.0
      %v5143 = vmax.f32 %v5015, 0.0
      %v5144 = vmax.f32 %v5016, 0.0
      %v5145 = vmax.f32 %v5017, 0.0
      %5146 = vst [vmem:[%s4633] sm:$0xff] %v5018
      %5147 = vst [vmem:[%s4633 + $0x8] sm:$0xff] %v5019
      %5148 = vst [vmem:[%s4633 + $0x10] sm:$0xff] %v5020
      %5149 = vst [vmem:[%s4633 + $0x18] sm:$0xff] %v5021
      %5150 = vst [vmem:[%s4633 + $0x20] sm:$0xff] %v5022
      %5151 = vst [vmem:[%s4633 + $0x28] sm:$0xff] %v5023
      %5152 = vst [vmem:[%s4633 + $0x30] sm:$0xff] %v5024
      %5153 = vst [vmem:[%s4633 + $0x38] sm:$0xff] %v5025
      %5154 = vst [vmem:[%s4633 + $0x40] sm:$0xff] %v5026
      %5155 = vst [vmem:[%s4633 + $0x48] sm:$0xff] %v5027
      %5156 = vst [vmem:[%s4633 + $0x50] sm:$0xff] %v5028
      %5157 = vst [vmem:[%s4633 + $0x58] sm:$0xff] %v5029
      %5158 = vst [vmem:[%s4633 + $0x60] sm:$0xff] %v5030
      %5159 = vst [vmem:[%s4633 + $0x68] sm:$0xff] %v5031
      %5160 = vst [vmem:[%s4633 + $0x70] sm:$0xff] %v5032
      %5161 = vst [vmem:[%s4633 + $0x78] sm:$0xff] %v5033
      %5162 = vst [vmem:[%s4633 + $0x80] sm:$0xff] %v5034
      %5163 = vst [vmem:[%s4633 + $0x88] sm:$0xff] %v5035
      %5164 = vst [vmem:[%s4633 + $0x90] sm:$0xff] %v5036
      %5165 = vst [vmem:[%s4633 + $0x98] sm:$0xff] %v5037
      %5166 = vst [vmem:[%s4633 + $0xa0] sm:$0xff] %v5038
      %5167 = vst [vmem:[%s4633 + $0xa8] sm:$0xff] %v5039
      %5168 = vst [vmem:[%s4633 + $0xb0] sm:$0xff] %v5040
      %5169 = vst [vmem:[%s4633 + $0xb8] sm:$0xff] %v5041
      %5170 = vst [vmem:[%s4633 + $0xc0] sm:$0xff] %v5042
      %5171 = vst [vmem:[%s4633 + $0xc8] sm:$0xff] %v5043
      %5172 = vst [vmem:[%s4633 + $0xd0] sm:$0xff] %v5044
      %5173 = vst [vmem:[%s4633 + $0xd8] sm:$0xff] %v5045
      %5174 = vst [vmem:[%s4633 + $0xe0] sm:$0xff] %v5046
      %5175 = vst [vmem:[%s4633 + $0xe8] sm:$0xff] %v5047
      %5176 = vst [vmem:[%s4633 + $0xf0] sm:$0xff] %v5048
      %5177 = vst [vmem:[%s4633 + $0xf8] sm:$0xff] %v5049
      %5178 = vst [vmem:[%s4633 + $0x100] sm:$0xff] %v5050
      %5179 = vst [vmem:[%s4633 + $0x108] sm:$0xff] %v5051
      %5180 = vst [vmem:[%s4633 + $0x110] sm:$0xff] %v5052
      %5181 = vst [vmem:[%s4633 + $0x118] sm:$0xff] %v5053
      %5182 = vst [vmem:[%s4633 + $0x120] sm:$0xff] %v5054
      %5183 = vst [vmem:[%s4633 + $0x128] sm:$0xff] %v5055
      %5184 = vst [vmem:[%s4633 + $0x130] sm:$0xff] %v5056
      %5185 = vst [vmem:[%s4633 + $0x138] sm:$0xff] %v5057
      %5186 = vst [vmem:[%s4633 + $0x140] sm:$0xff] %v5058
      %5187 = vst [vmem:[%s4633 + $0x148] sm:$0xff] %v5059
      %5188 = vst [vmem:[%s4633 + $0x150] sm:$0xff] %v5060
      %5189 = vst [vmem:[%s4633 + $0x158] sm:$0xff] %v5061
      %5190 = vst [vmem:[%s4633 + $0x160] sm:$0xff] %v5062
      %5191 = vst [vmem:[%s4633 + $0x168] sm:$0xff] %v5063
      %5192 = vst [vmem:[%s4633 + $0x170] sm:$0xff] %v5064
      %5193 = vst [vmem:[%s4633 + $0x178] sm:$0xff] %v5065
      %5194 = vst [vmem:[%s4633 + $0x180] sm:$0xff] %v5066
      %5195 = vst [vmem:[%s4633 + $0x188] sm:$0xff] %v5067
      %5196 = vst [vmem:[%s4633 + $0x190] sm:$0xff] %v5068
      %5197 = vst [vmem:[%s4633 + $0x198] sm:$0xff] %v5069
      %5198 = vst [vmem:[%s4633 + $0x1a0] sm:$0xff] %v5070
      %5199 = vst [vmem:[%s4633 + $0x1a8] sm:$0xff] %v5071
      %5200 = vst [vmem:[%s4633 + $0x1b0] sm:$0xff] %v5072
      %5201 = vst [vmem:[%s4633 + $0x1b8] sm:$0xff] %v5073
      %5202 = vst [vmem:[%s4633 + $0x1c0] sm:$0xff] %v5074
      %5203 = vst [vmem:[%s4633 + $0x1c8] sm:$0xff] %v5075
      %5204 = vst [vmem:[%s4633 + $0x1d0] sm:$0xff] %v5076
      %5205 = vst [vmem:[%s4633 + $0x1d8] sm:$0xff] %v5077
      %5206 = vst [vmem:[%s4633 + $0x1e0] sm:$0xff] %v5078
      %5207 = vst [vmem:[%s4633 + $0x1e8] sm:$0xff] %v5079
      %5208 = vst [vmem:[%s4633 + $0x1f0] sm:$0xff] %v5080
      %5209 = vst [vmem:[%s4633 + $0x1f8] sm:$0xff] %v5081
      %5210 = vst [vmem:[%s4633 + $0x200] sm:$0xff] %v5082
      %5211 = vst [vmem:[%s4633 + $0x208] sm:$0xff] %v5083
      %5212 = vst [vmem:[%s4633 + $0x210] sm:$0xff] %v5084
      %5213 = vst [vmem:[%s4633 + $0x218] sm:$0xff] %v5085
      %5214 = vst [vmem:[%s4633 + $0x220] sm:$0xff] %v5086
      %5215 = vst [vmem:[%s4633 + $0x228] sm:$0xff] %v5087
      %5216 = vst [vmem:[%s4633 + $0x230] sm:$0xff] %v5088
      %5217 = vst [vmem:[%s4633 + $0x238] sm:$0xff] %v5089
      %5218 = vst [vmem:[%s4633 + $0x240] sm:$0xff] %v5090
      %5219 = vst [vmem:[%s4633 + $0x248] sm:$0xff] %v5091
      %5220 = vst [vmem:[%s4633 + $0x250] sm:$0xff] %v5092
      %5221 = vst [vmem:[%s4633 + $0x258] sm:$0xff] %v5093
      %5222 = vst [vmem:[%s4633 + $0x260] sm:$0xff] %v5094
      %5223 = vst [vmem:[%s4633 + $0x268] sm:$0xff] %v5095
      %5224 = vst [vmem:[%s4633 + $0x270] sm:$0xff] %v5096
      %5225 = vst [vmem:[%s4633 + $0x278] sm:$0xff] %v5097
      %5226 = vst [vmem:[%s4633 + $0x280] sm:$0xff] %v5098
      %5227 = vst [vmem:[%s4633 + $0x288] sm:$0xff] %v5099
      %5228 = vst [vmem:[%s4633 + $0x290] sm:$0xff] %v5100
      %5229 = vst [vmem:[%s4633 + $0x298] sm:$0xff] %v5101
      %5230 = vst [vmem:[%s4633 + $0x2a0] sm:$0xff] %v5102
      %5231 = vst [vmem:[%s4633 + $0x2a8] sm:$0xff] %v5103
      %5232 = vst [vmem:[%s4633 + $0x2b0] sm:$0xff] %v5104
      %5233 = vst [vmem:[%s4633 + $0x2b8] sm:$0xff] %v5105
      %5234 = vst [vmem:[%s4633 + $0x2c0] sm:$0xff] %v5106
      %5235 = vst [vmem:[%s4633 + $0x2c8] sm:$0xff] %v5107
      %5236 = vst [vmem:[%s4633 + $0x2d0] sm:$0xff] %v5108
      %5237 = vst [vmem:[%s4633 + $0x2d8] sm:$0xff] %v5109
      %5238 = vst [vmem:[%s4633 + $0x2e0] sm:$0xff] %v5110
      %5239 = vst [vmem:[%s4633 + $0x2e8] sm:$0xff] %v5111
      %5240 = vst [vmem:[%s4633 + $0x2f0] sm:$0xff] %v5112
      %5241 = vst [vmem:[%s4633 + $0x2f8] sm:$0xff] %v5113
      %5242 = vst [vmem:[%s4633 + $0x300] sm:$0xff] %v5114
      %5243 = vst [vmem:[%s4633 + $0x308] sm:$0xff] %v5115
      %5244 = vst [vmem:[%s4633 + $0x310] sm:$0xff] %v5116
      %5245 = vst [vmem:[%s4633 + $0x318] sm:$0xff] %v5117
      %5246 = vst [vmem:[%s4633 + $0x320] sm:$0xff] %v5118
      %5247 = vst [vmem:[%s4633 + $0x328] sm:$0xff] %v5119
      %5248 = vst [vmem:[%s4633 + $0x330] sm:$0xff] %v5120
      %5249 = vst [vmem:[%s4633 + $0x338] sm:$0xff] %v5121
      %5250 = vst [vmem:[%s4633 + $0x340] sm:$0xff] %v5122
      %5251 = vst [vmem:[%s4633 + $0x348] sm:$0xff] %v5123
      %5252 = vst [vmem:[%s4633 + $0x350] sm:$0xff] %v5124
      %5253 = vst [vmem:[%s4633 + $0x358] sm:$0xff] %v5125
      %5254 = vst [vmem:[%s4633 + $0x360] sm:$0xff] %v5126
      %5255 = vst [vmem:[%s4633 + $0x368] sm:$0xff] %v5127
      %5256 = vst [vmem:[%s4633 + $0x370] sm:$0xff] %v5128
      %5257 = vst [vmem:[%s4633 + $0x378] sm:$0xff] %v5129
      %5258 = vst [vmem:[%s4633 + $0x380] sm:$0xff] %v5130
      %5259 = vst [vmem:[%s4633 + $0x388] sm:$0xff] %v5131
      %5260 = vst [vmem:[%s4633 + $0x390] sm:$0xff] %v5132
      %5261 = vst [vmem:[%s4633 + $0x398] sm:$0xff] %v5133
      %5262 = vst [vmem:[%s4633 + $0x3a0] sm:$0xff] %v5134
      %5263 = vst [vmem:[%s4633 + $0x3a8] sm:$0xff] %v5135
      %5264 = vst [vmem:[%s4633 + $0x3b0] sm:$0xff] %v5136
      %5265 = vst [vmem:[%s4633 + $0x3b8] sm:$0xff] %v5137
      %5266 = vst [vmem:[%s4633 + $0x3c0] sm:$0xff] %v5138
      %5267 = vst [vmem:[%s4633 + $0x3c8] sm:$0xff] %v5139
      %5268 = vst [vmem:[%s4633 + $0x3d0] sm:$0xff] %v5140
      %5269 = vst [vmem:[%s4633 + $0x3d8] sm:$0xff] %v5141
      %5270 = vst [vmem:[%s4633 + $0x3e0] sm:$0xff] %v5142
      %5271 = vst [vmem:[%s4633 + $0x3e8] sm:$0xff] %v5143
      %5272 = vst [vmem:[%s4633 + $0x3f0] sm:$0xff] %v5144
      %5273 = vst [vmem:[%s4633 + $0x3f8] sm:$0xff] %v5145
    $region29: #{tpu_custom_call.1} parent=1 // pred_fallthru
      _
    // Predicated region
    $region30: #{tpu_custom_call.1} parent=1 // pred_check
      _
    $region31: #{tpu_custom_call.1} parent=1 // pred_check_branch
      %5275 = sbr.rel (0) target = $region33
    $region32: #{tpu_custom_call.1} parent=1 // pred_region
      %s5277 = ssub.s32 32768, 32768
      %5278 = vsyncadd [#allocation6], %s5277
      %s5279 = sshll.u32 [#allocation7], 4
      %s5280 = int_to_ptr.vmem [resolvable:$true] %s5279
      %5285 = dma.vmem_to_hbm [thread:$0]  %s5280, 32768, %s4, [#allocation6], 1024, 1024, 64
    $region33: #{tpu_custom_call.1} parent=1 // pred_fallthru
      _
    // Predicated region
    $region34: #{tpu_custom_call.1} parent=1 // pred_check
      _
    $region35: #{tpu_custom_call.1} parent=1 // pred_check_branch
      %5287 = sbr.rel (0) target = $region37
    $region36: #{tpu_custom_call.1} parent=1 // pred_region
      %5288 = dma.done [#allocation6], 32768
    $region37: #{tpu_custom_call.1} parent=1 // pred_fallthru
      _
    %5289 = vsyncpa [#allocation5], 1
    %5290 = vsyncpa [#allocation6], 1

</llo_original>
